<compile_context>
chip_gen: v6e
topology: v6e:2x2x1
jax: 0.10.0
libtpu: 0.0.40
codegen_flags: <defaults>
</compile_context>

<pallas_src>
import functools
import math

import jax
import jax.numpy as jnp
from jax.experimental import pallas as pl
from jax.experimental.pallas import tpu as pltpu

LN_EPS = 1e-5   # nn.LayerNorm default eps (PyTorch default; verify vs. config)
GN_EPS = 1e-5   # per-head GroupNorm eps (affine=False, RetNet style)

_PARAM_ORDER = ("ln1_w", "ln1_b", "wq", "bq", "wk", "bk", "wv", "bv",
                "wg", "bg", "wo", "bo", "ln2_w", "ln2_b", "w1", "b1", "w2", "b2")
_BF16_PARAMS = frozenset({"wq", "wk", "wv", "wg", "wo", "w1", "w2"})


# --------------------------- shared layer math --------------------------------
# Used verbatim by both the Pallas kernel body and the pure-JAX reference so the
# two are op-for-op identical (same bf16 cast points, same precomputed mask).

def _layernorm(h, w, b, eps):
    mu = jnp.mean(h, axis=-1, keepdims=True)
    var = jnp.mean((h - mu) ** 2, axis=-1, keepdims=True)
    return (h - mu) * jax.lax.rsqrt(var + eps) * w + b


def make_decay_mask(num_heads, head_dim, seq_len):
    """(H, S, S) causal per-head decay mask with the 1/sqrt(hd) score scale
    folded in.  Standard RetNet gamma_h = 1 - 2^(-5-h).  Computed ONCE in the
    wrapper (plain XLA) -- not per grid step -- and DMA'd once (constant
    index_map).  Masked *before* the exp so no inf/NaN is ever produced."""
    h = jnp.arange(num_heads, dtype=jnp.float32)
    log_g = jnp.log1p(-jnp.exp2(-5.0 - h)).reshape(num_heads, 1, 1)  # log gamma_h
    n = jax.lax.broadcasted_iota(jnp.float32, (seq_len, seq_len), 0)
    m = jax.lax.broadcasted_iota(jnp.float32, (seq_len, seq_len), 1)
    causal = (n >= m)[None]
    diff = (n - m)[None]
    neg = jnp.float32(-1e30)                      # exp(-1e30) == 0
    mask = jnp.exp(jnp.where(causal, diff * log_g, neg))
    return mask * jnp.float32(1.0 / math.sqrt(head_dim))


def _layer_forward(x, mask, ln1_w, ln1_b, wq, bq, wk, bk, wv, bv, wg, bg, wo, bo,
                   ln2_w, ln2_b, w1, b1, w2, b2, *, num_heads, head_dim):
    """One RetNet decoder layer (parallel retention form).
    x: (Bb, S, D) f32, mask: (H, S, S) f32 (scale folded in)."""
    Bb, S, D = x.shape
    H, hd = num_heads, head_dim
    f32, bf16 = jnp.float32, jnp.bfloat16

    # bf16 MXU operands everywhere (no-op if already bf16), f32 accumulation.
    wq, wk, wv, wg, wo, w1, w2 = (w.astype(bf16)
                                  for w in (wq, wk, wv, wg, wo, w1, w2))

    # Merge batch rows: every per-token matmul runs with M = Bb*S.
    xt = x.reshape(Bb * S, D)

    # ---------------- multi-scale retention block (pre-norm) ----------------
    h1 = _layernorm(xt, ln1_w, ln1_b, LN_EPS)
    h1b = h1.astype(bf16)
    q = jnp.dot(h1b, wq, preferred_element_type=f32) + bq
    k = jnp.dot(h1b, wk, preferred_element_type=f32) + bk
    v = jnp.dot(h1b, wv, preferred_element_type=f32) + bv
    # TODO(synk): xpos relative-position rotation of q/k omitted.

    # Head split: lane-aligned slices stacked along a new MAJOR axis, batch
    # rows merged into it -> (H*Bb, S, hd).  Single bf16 cast per tensor before
    # the relayout (half the copy bytes); keeps (S, hd) tiles dense.
    def heads(t):
        tb = t.astype(bf16)
        return jnp.stack(
            [tb[:, i * hd:(i + 1) * hd].reshape(Bb, S, hd) for i in range(H)],
            axis=0).reshape(H * Bb, S, hd)

    qh, kh, vh = heads(q), heads(k), heads(v)

    scores = jnp.einsum("hnd,hmd->hnm", qh, kh, preferred_element_type=f32)
    # Decay + causal mask + 1/sqrt(hd) scale in one fused multiply; mask is a
    # constant kernel input (built once in the wrapper, DMA'd once).
    scores = (scores.reshape(H, Bb, S, S) * mask[:, None]).reshape(H * Bb, S, S)
    o = jnp.einsum("hnm,hmd->hnd", scores.astype(bf16), vh,
                   preferred_element_type=f32)            # (H*Bb, S, hd)

    # per-head group norm over head_dim (affine=False), vectorized.
    mu = jnp.mean(o, axis=-1, keepdims=True)
    var = jnp.mean((o - mu) ** 2, axis=-1, keepdims=True)
    o = (o - mu) * jax.lax.rsqrt(var + GN_EPS)

    o = o.reshape(H, Bb, S, hd)
    ret = jnp.concatenate([o[i] for i in range(H)], axis=-1).reshape(Bb * S, D)
    gate = jax.nn.silu(jnp.dot(h1b, wg, preferred_element_type=f32) + bg)
    msr = jnp.dot((ret * gate).astype(bf16), wo, preferred_element_type=f32) + bo
    xt = xt + msr

    # ---------------------- feed-forward block (pre-norm) -------------------
    h2 = _layernorm(xt, ln2_w, ln2_b, LN_EPS).astype(bf16)
    ff = jax.nn.silu(jnp.dot(h2, w1, preferred_element_type=f32) + b1)
    ff = jnp.dot(ff.astype(bf16), w2, preferred_element_type=f32) + b2
    return (xt + ff).reshape(Bb, S, D)


# ----------------------------- Pallas kernel ----------------------------------

def retnet_stack_kernel(num_heads, head_dim,
                        x_ref, mask_ref,
                        ln1_w_ref, ln1_b_ref, wq_ref, bq_ref, wk_ref, bk_ref,
                        wv_ref, bv_ref, wg_ref, bg_ref, wo_ref, bo_ref,
                        ln2_w_ref, ln2_b_ref, w1_ref, b1_ref, w2_ref, b2_ref,
                        out_ref):
    layer = pl.program_id(1)

    # Residual stream lives in the output block, revisited across the inner
    # ("arbitrary") layer axis; seed it from x at layer 0 only.
    @pl.when(layer == 0)
    def _():
        out_ref[...] = x_ref[...]

    x = out_ref[...].astype(jnp.float32)                  # (Bb, S, D)
    params = [r[0] for r in (ln1_w_ref, ln1_b_ref, wq_ref, bq_ref, wk_ref,
                             bk_ref, wv_ref, bv_ref, wg_ref, bg_ref, wo_ref,
                             bo_ref, ln2_w_ref, ln2_b_ref, w1_ref, b1_ref,
                             w2_ref, b2_ref)]
    y = _layer_forward(x, mask_ref[...], *params,
                       num_heads=num_heads, head_dim=head_dim)
    out_ref[...] = y.astype(out_ref.dtype)


# ------------------------------- wrapper ---------------------------------------

def _stack_layer_params(layer_params):
    stacked = []
    for name in _PARAM_ORDER:
        arr = jnp.stack([p[name] for p in layer_params], axis=0)   # (L, ...)
        if name in _BF16_PARAMS:
            arr = arr.astype(jnp.bfloat16)     # halve weight DMA / VMEM
        stacked.append(arr)
    return stacked


def _layer_param_spec(arr):
    block = (1,) + arr.shape[1:]
    ndim = arr.ndim

    def idx(b, l, _n=ndim):
        return (l,) + (0,) * (_n - 1)

    return pl.BlockSpec(block, idx)


def _pick_batch_block(batch, batch_block):
    if batch_block is not None:
        assert batch % batch_block == 0
        return batch_block
    if batch <= 1:
        return 1
    # Largest divisor of B that still leaves >= 2 batch chunks so the leading
    # "parallel" grid axis can shard across v7x's two TensorCores.
    for cand in range(batch // 2, 0, -1):
        if batch % cand == 0:
            return cand
    return 1


def retnet_encoder(x, layer_params, *, num_heads, head_dim, batch_block=None,
                   vmem_limit_bytes=32 * 1024 * 1024):
    """RetNetEncoder.forward (== forward_parallel), all layers in one kernel."""
    B, S, D = x.shape
    L = len(layer_params)
    H, hd = num_heads, head_dim
    assert H * hd == D
    Bb = _pick_batch_block(B, batch_block)
    FFN = layer_params[0]["w1"].shape[-1]

    # Constant (H, S, S) decay/causal mask (score scale folded in), f32 for
    # bit-fidelity with the reference; DMA'd into VMEM once (constant index_map).
    mask = make_decay_mask(H, hd, S)

    stacked = _stack_layer_params(layer_params)
    kernel = functools.partial(retnet_stack_kernel, H, hd)

    x_spec = pl.BlockSpec((Bb, S, D), lambda b, l: (b, 0, 0))
    mask_spec = pl.BlockSpec((H, S, S), lambda b, l: (0, 0, 0))
    out_spec = pl.BlockSpec((Bb, S, D), lambda b, l: (b, 0, 0))

    # Advisory cost hint: 2*M*K*N per matmul (q/k/v/g/wo + 2 FFN + retention).
    flops = 2 * B * L * S * (5 * D * D + 2 * D * FFN + 2 * S * D)
    weight_bytes = sum(a.size * a.dtype.itemsize for a in stacked)
    bytes_accessed = (2 * x.size * x.dtype.itemsize
                      + (B // Bb) * weight_bytes
                      + mask.size * mask.dtype.itemsize)
    cost = pl.CostEstimate(flops=flops,
                           transcendentals=B * L * S * (D + FFN),
                           bytes_accessed=bytes_accessed)

    return pl.pallas_call(
        kernel,
        out_shape=jax.ShapeDtypeStruct((B, S, D), x.dtype),
        grid=(B // Bb, L),
        in_specs=[x_spec, mask_spec] + [_layer_param_spec(a) for a in stacked],
        out_specs=out_spec,
        cost_estimate=cost,
        compiler_params=pltpu.CompilerParams(
            dimension_semantics=("parallel", "arbitrary"),
            # TODO(synk): re-derive per generation at production shapes: raise
            # toward ~100 MiB on v5e/v6e for bigger batch chunks / deeper
            # buffering; keep <= ~56 MiB on v7x and add the q-tile grid axis
            # once the H*Bb*S^2 scores stop fitting.  32 MiB is safe everywhere
            # and far above what these toy blocks use.
            vmem_limit_bytes=vmem_limit_bytes,
        ),
    )(x, mask, *stacked)


# -------------------------- pure-JAX reference --------------------------------

def _ref_encoder(x, layer_params, *, num_heads, head_dim):
    mask = make_decay_mask(num_heads, head_dim, x.shape[1])
    y = x.astype(jnp.float32)
    for p in layer_params:
        args = [p[name] for name in _PARAM_ORDER]
        y = _layer_forward(y, mask, *args,
                           num_heads=num_heads, head_dim=head_dim)
    return y.astype(x.dtype)


# ------------------------------- setup ----------------------------------------

def make_params(key, num_layers, d_model, ffn_dim):
    layers = []
    for li in range(num_layers):
        p, key = {}, jax.random.fold_in(key, li)
        keys = jax.random.split(key, 8)
        p["ln1_w"] = jnp.ones((1, d_model), jnp.float32)
        p["ln1_b"] = jnp.zeros((1, d_model), jnp.float32)
        p["ln2_w"] = jnp.ones((1, d_model), jnp.float32)
        p["ln2_b"] = jnp.zeros((1, d_model), jnp.float32)
        for i, name in enumerate(("wq", "wk", "wv", "wg", "wo")):
            p[name] = 0.05 * jax.random.normal(keys[i], (d_model, d_model), jnp.float32)
            p["b" + name[1]] = jnp.zeros((1, d_model), jnp.float32)
        p["w1"] = 0.05 * jax.random.normal(keys[5], (d_model, ffn_dim), jnp.float32)
        p["b1"] = jnp.zeros((1, ffn_dim), jnp.float32)
        p["w2"] = 0.05 * jax.random.normal(keys[6], (ffn_dim, d_model), jnp.float32)
        p["b2"] = jnp.zeros((1, d_model), jnp.float32)
        layers.append(p)
    return layers


if __name__ == "__main__":
    # Small but lane-aligned shapes (D, hd, S multiples of 128 keep every vreg
    # unmasked and the output slab lane-dense).  B=4 exercises the batched
    # block path (Bb=2 rows per step -> M=256 matmuls, 2 parallel chunks).
    B, S, D = 4, 128, 256       # batch, seq_len, d_model
    H, HD = 2, 128              # num_heads, head_dim  (H * HD == D)
    FFN = 512                   # dim_feedforward
    L = 2                       # num_layers

    key = jax.random.PRNGKey(0)
    kx, kp = jax.random.split(key)
    x = jax.random.normal(kx, (B, S, D), jnp.float32)
    layer_params = make_params(kp, L, D, FFN)

    out = retnet_encoder(x, layer_params, num_heads=H, head_dim=HD)
    out = jax.block_until_ready(out)

    ref = jax.block_until_ready(
        _ref_encoder(x, layer_params, num_heads=H, head_dim=HD))

    assert out.shape == (B, S, D)
    assert bool(jnp.all(jnp.isfinite(out)))
    max_err = float(jnp.max(jnp.abs(out - ref)))
    assert jnp.allclose(out, ref, rtol=1e-2, atol=1e-2), \
        f"mismatch vs JAX reference (max abs err {max_err})"

    print("KERNEL_OK")
</pallas_src>

<mosaic_0001>
module attributes {stable_mosaic.version = 11 : i64} {
  func.func @retnet_stack_kernel(%arg0: i32, %arg1: i32, %arg2: memref<2x128x256xf32, #tpu.memory_space<vmem>>, %arg3: memref<2x128x128xf32, #tpu.memory_space<vmem>>, %arg4: memref<1x1x256xf32, #tpu.memory_space<vmem>>, %arg5: memref<1x1x256xf32, #tpu.memory_space<vmem>>, %arg6: memref<1x256x256xbf16, #tpu.memory_space<vmem>>, %arg7: memref<1x1x256xf32, #tpu.memory_space<vmem>>, %arg8: memref<1x256x256xbf16, #tpu.memory_space<vmem>>, %arg9: memref<1x1x256xf32, #tpu.memory_space<vmem>>, %arg10: memref<1x256x256xbf16, #tpu.memory_space<vmem>>, %arg11: memref<1x1x256xf32, #tpu.memory_space<vmem>>, %arg12: memref<1x256x256xbf16, #tpu.memory_space<vmem>>, %arg13: memref<1x1x256xf32, #tpu.memory_space<vmem>>, %arg14: memref<1x256x256xbf16, #tpu.memory_space<vmem>>, %arg15: memref<1x1x256xf32, #tpu.memory_space<vmem>>, %arg16: memref<1x1x256xf32, #tpu.memory_space<vmem>>, %arg17: memref<1x1x256xf32, #tpu.memory_space<vmem>>, %arg18: memref<1x256x512xbf16, #tpu.memory_space<vmem>>, %arg19: memref<1x1x512xf32, #tpu.memory_space<vmem>>, %arg20: memref<1x512x256xbf16, #tpu.memory_space<vmem>>, %arg21: memref<1x1x256xf32, #tpu.memory_space<vmem>>, %arg22: memref<2x128x256xf32, #tpu.memory_space<vmem>>) attributes {dimension_semantics = [#tpu.dimension_semantics<parallel>, #tpu.dimension_semantics<arbitrary>], iteration_bounds = array<i64: 2, 2>, scalar_prefetch = 0 : i64, scratch_operands = 0 : i64, tpu.core_type = #tpu.core_type<tc>, window_params = [{transform_indices = @transform_0, window_bounds = array<i64: 2, 128, 256>}, {pipeline_mode = #tpu.pipeline_mode<synchronous>, transform_indices = @transform_1, window_bounds = array<i64: 2, 128, 128>}, {transform_indices = @transform_2, window_bounds = array<i64: 1, 1, 256>}, {transform_indices = @transform_3, window_bounds = array<i64: 1, 1, 256>}, {transform_indices = @transform_4, window_bounds = array<i64: 1, 256, 256>}, {transform_indices = @transform_5, window_bounds = array<i64: 1, 1, 256>}, {transform_indices = @transform_6, window_bounds = array<i64: 1, 256, 256>}, {transform_indices = @transform_7, window_bounds = array<i64: 1, 1, 256>}, {transform_indices = @transform_8, window_bounds = array<i64: 1, 256, 256>}, {transform_indices = @transform_9, window_bounds = array<i64: 1, 1, 256>}, {transform_indices = @transform_10, window_bounds = array<i64: 1, 256, 256>}, {transform_indices = @transform_11, window_bounds = array<i64: 1, 1, 256>}, {transform_indices = @transform_12, window_bounds = array<i64: 1, 256, 256>}, {transform_indices = @transform_13, window_bounds = array<i64: 1, 1, 256>}, {transform_indices = @transform_14, window_bounds = array<i64: 1, 1, 256>}, {transform_indices = @transform_15, window_bounds = array<i64: 1, 1, 256>}, {transform_indices = @transform_16, window_bounds = array<i64: 1, 256, 512>}, {transform_indices = @transform_17, window_bounds = array<i64: 1, 1, 512>}, {transform_indices = @transform_18, window_bounds = array<i64: 1, 512, 256>}, {transform_indices = @transform_19, window_bounds = array<i64: 1, 1, 256>}, {transform_indices = @transform_20, window_bounds = array<i64: 2, 128, 256>}]} {
    %c0_i32 = arith.constant 0 : i32
    %0 = arith.cmpi eq, %arg1, %c0_i32 : i32
    %1 = arith.extui %0 : i1 to i32
    %c0_i32_0 = arith.constant 0 : i32
    %2 = arith.cmpi ne, %1, %c0_i32_0 : i32
    scf.if %2 {
      %c0_88 = arith.constant 0 : index
      %c0_89 = arith.constant 0 : index
      %c0_90 = arith.constant 0 : index
      %188 = vector.load %arg2[%c0_88, %c0_89, %c0_90] : memref<2x128x256xf32, #tpu.memory_space<vmem>>, vector<2x128x256xf32>
      %c0_91 = arith.constant 0 : index
      %c0_92 = arith.constant 0 : index
      %c0_93 = arith.constant 0 : index
      %189 = vector.load %arg22[%c0_91, %c0_92, %c0_93] : memref<2x128x256xf32, #tpu.memory_space<vmem>>, vector<2x128x256xf32>
      tpu.vector_store %arg22[%c0_91, %c0_92, %c0_93], %188 {strides = array<i32>} : memref<2x128x256xf32, #tpu.memory_space<vmem>>, vector<2x128x256xf32>,
    } else {
    }
    %c0 = arith.constant 0 : index
    %c0_1 = arith.constant 0 : index
    %c0_2 = arith.constant 0 : index
    %3 = vector.load %arg22[%c0, %c0_1, %c0_2] : memref<2x128x256xf32, #tpu.memory_space<vmem>>, vector<2x128x256xf32>
    %c0_3 = arith.constant 0 : index
    %c0_4 = arith.constant 0 : index
    %c0_5 = arith.constant 0 : index
    %4 = vector.load %arg4[%c0_3, %c0_4, %c0_5] : memref<1x1x256xf32, #tpu.memory_space<vmem>>, vector<1x1x256xf32>
    %5 = vector.shape_cast %4 : vector<1x1x256xf32> to vector<1x256xf32>
    %c0_6 = arith.constant 0 : index
    %c0_7 = arith.constant 0 : index
    %c0_8 = arith.constant 0 : index
    %6 = vector.load %arg5[%c0_6, %c0_7, %c0_8] : memref<1x1x256xf32, #tpu.memory_space<vmem>>, vector<1x1x256xf32>
    %7 = vector.shape_cast %6 : vector<1x1x256xf32> to vector<1x256xf32>
    %c0_9 = arith.constant 0 : index
    %c0_10 = arith.constant 0 : index
    %c0_11 = arith.constant 0 : index
    %8 = vector.load %arg6[%c0_9, %c0_10, %c0_11] : memref<1x256x256xbf16, #tpu.memory_space<vmem>>, vector<1x256x256xbf16>
    %9 = vector.shape_cast %8 : vector<1x256x256xbf16> to vector<256x256xbf16>
    %c0_12 = arith.constant 0 : index
    %c0_13 = arith.constant 0 : index
    %c0_14 = arith.constant 0 : index
    %10 = vector.load %arg7[%c0_12, %c0_13, %c0_14] : memref<1x1x256xf32, #tpu.memory_space<vmem>>, vector<1x1x256xf32>
    %11 = vector.shape_cast %10 : vector<1x1x256xf32> to vector<1x256xf32>
    %c0_15 = arith.constant 0 : index
    %c0_16 = arith.constant 0 : index
    %c0_17 = arith.constant 0 : index
    %12 = vector.load %arg8[%c0_15, %c0_16, %c0_17] : memref<1x256x256xbf16, #tpu.memory_space<vmem>>, vector<1x256x256xbf16>
    %13 = vector.shape_cast %12 : vector<1x256x256xbf16> to vector<256x256xbf16>
    %c0_18 = arith.constant 0 : index
    %c0_19 = arith.constant 0 : index
    %c0_20 = arith.constant 0 : index
    %14 = vector.load %arg9[%c0_18, %c0_19, %c0_20] : memref<1x1x256xf32, #tpu.memory_space<vmem>>, vector<1x1x256xf32>
    %15 = vector.shape_cast %14 : vector<1x1x256xf32> to vector<1x256xf32>
    %c0_21 = arith.constant 0 : index
    %c0_22 = arith.constant 0 : index
    %c0_23 = arith.constant 0 : index
    %16 = vector.load %arg10[%c0_21, %c0_22, %c0_23] : memref<1x256x256xbf16, #tpu.memory_space<vmem>>, vector<1x256x256xbf16>
    %17 = vector.shape_cast %16 : vector<1x256x256xbf16> to vector<256x256xbf16>
    %c0_24 = arith.constant 0 : index
    %c0_25 = arith.constant 0 : index
    %c0_26 = arith.constant 0 : index
    %18 = vector.load %arg11[%c0_24, %c0_25, %c0_26] : memref<1x1x256xf32, #tpu.memory_space<vmem>>, vector<1x1x256xf32>
    %19 = vector.shape_cast %18 : vector<1x1x256xf32> to vector<1x256xf32>
    %c0_27 = arith.constant 0 : index
    %c0_28 = arith.constant 0 : index
    %c0_29 = arith.constant 0 : index
    %20 = vector.load %arg12[%c0_27, %c0_28, %c0_29] : memref<1x256x256xbf16, #tpu.memory_space<vmem>>, vector<1x256x256xbf16>
    %21 = vector.shape_cast %20 : vector<1x256x256xbf16> to vector<256x256xbf16>
    %c0_30 = arith.constant 0 : index
    %c0_31 = arith.constant 0 : index
    %c0_32 = arith.constant 0 : index
    %22 = vector.load %arg13[%c0_30, %c0_31, %c0_32] : memref<1x1x256xf32, #tpu.memory_space<vmem>>, vector<1x1x256xf32>
    %23 = vector.shape_cast %22 : vector<1x1x256xf32> to vector<1x256xf32>
    %c0_33 = arith.constant 0 : index
    %c0_34 = arith.constant 0 : index
    %c0_35 = arith.constant 0 : index
    %24 = vector.load %arg14[%c0_33, %c0_34, %c0_35] : memref<1x256x256xbf16, #tpu.memory_space<vmem>>, vector<1x256x256xbf16>
    %25 = vector.shape_cast %24 : vector<1x256x256xbf16> to vector<256x256xbf16>
    %c0_36 = arith.constant 0 : index
    %c0_37 = arith.constant 0 : index
    %c0_38 = arith.constant 0 : index
    %26 = vector.load %arg15[%c0_36, %c0_37, %c0_38] : memref<1x1x256xf32, #tpu.memory_space<vmem>>, vector<1x1x256xf32>
    %27 = vector.shape_cast %26 : vector<1x1x256xf32> to vector<1x256xf32>
    %c0_39 = arith.constant 0 : index
    %c0_40 = arith.constant 0 : index
    %c0_41 = arith.constant 0 : index
    %28 = vector.load %arg16[%c0_39, %c0_40, %c0_41] : memref<1x1x256xf32, #tpu.memory_space<vmem>>, vector<1x1x256xf32>
    %29 = vector.shape_cast %28 : vector<1x1x256xf32> to vector<1x256xf32>
    %c0_42 = arith.constant 0 : index
    %c0_43 = arith.constant 0 : index
    %c0_44 = arith.constant 0 : index
    %30 = vector.load %arg17[%c0_42, %c0_43, %c0_44] : memref<1x1x256xf32, #tpu.memory_space<vmem>>, vector<1x1x256xf32>
    %31 = vector.shape_cast %30 : vector<1x1x256xf32> to vector<1x256xf32>
    %c0_45 = arith.constant 0 : index
    %c0_46 = arith.constant 0 : index
    %c0_47 = arith.constant 0 : index
    %32 = vector.load %arg18[%c0_45, %c0_46, %c0_47] : memref<1x256x512xbf16, #tpu.memory_space<vmem>>, vector<1x256x512xbf16>
    %33 = vector.shape_cast %32 : vector<1x256x512xbf16> to vector<256x512xbf16>
    %c0_48 = arith.constant 0 : index
    %c0_49 = arith.constant 0 : index
    %c0_50 = arith.constant 0 : index
    %34 = vector.load %arg19[%c0_48, %c0_49, %c0_50] : memref<1x1x512xf32, #tpu.memory_space<vmem>>, vector<1x1x512xf32>
    %35 = vector.shape_cast %34 : vector<1x1x512xf32> to vector<1x512xf32>
    %c0_51 = arith.constant 0 : index
    %c0_52 = arith.constant 0 : index
    %c0_53 = arith.constant 0 : index
    %36 = vector.load %arg20[%c0_51, %c0_52, %c0_53] : memref<1x512x256xbf16, #tpu.memory_space<vmem>>, vector<1x512x256xbf16>
    %37 = vector.shape_cast %36 : vector<1x512x256xbf16> to vector<512x256xbf16>
    %c0_54 = arith.constant 0 : index
    %c0_55 = arith.constant 0 : index
    %c0_56 = arith.constant 0 : index
    %38 = vector.load %arg21[%c0_54, %c0_55, %c0_56] : memref<1x1x256xf32, #tpu.memory_space<vmem>>, vector<1x1x256xf32>
    %39 = vector.shape_cast %38 : vector<1x1x256xf32> to vector<1x256xf32>
    %c0_57 = arith.constant 0 : index
    %c0_58 = arith.constant 0 : index
    %c0_59 = arith.constant 0 : index
    %40 = vector.load %arg3[%c0_57, %c0_58, %c0_59] : memref<2x128x128xf32, #tpu.memory_space<vmem>>, vector<2x128x128xf32>
    %41 = vector.shape_cast %3 : vector<2x128x256xf32> to vector<256x256xf32>
    %cst = arith.constant dense<0.000000e+00> : vector<256xf32>
    %42 = vector.multi_reduction <add>, %41, %cst [1] : vector<256x256xf32> to vector<256xf32>
    %43 = vector.shape_cast %42 : vector<256xf32> to vector<256x1xf32>
    %cst_60 = arith.constant 2.560000e+02 : f32
    %44 = vector.broadcast %cst_60 : f32 to vector<256x1xf32>
    %45 = arith.divf %43, %44 : vector<256x1xf32>
    %46 = vector.broadcast %45 : vector<256x1xf32> to vector<256x256xf32>
    %47 = arith.subf %41, %46 : vector<256x256xf32>
    %48 = arith.mulf %47, %47 : vector<256x256xf32>
    %cst_61 = arith.constant dense<0.000000e+00> : vector<256xf32>
    %49 = vector.multi_reduction <add>, %48, %cst_61 [1] : vector<256x256xf32> to vector<256xf32>
    %50 = vector.shape_cast %49 : vector<256xf32> to vector<256x1xf32>
    %cst_62 = arith.constant 2.560000e+02 : f32
    %51 = vector.broadcast %cst_62 : f32 to vector<256x1xf32>
    %52 = arith.divf %50, %51 : vector<256x1xf32>
    %53 = vector.broadcast %45 : vector<256x1xf32> to vector<256x256xf32>
    %54 = arith.subf %41, %53 : vector<256x256xf32>
    %cst_63 = arith.constant 9.99999974E-6 : f32
    %55 = vector.broadcast %cst_63 : f32 to vector<256x1xf32>
    %56 = arith.addf %52, %55 : vector<256x1xf32>
    %57 = math.rsqrt %56 : vector<256x1xf32>
    %58 = vector.broadcast %57 : vector<256x1xf32> to vector<256x256xf32>
    %59 = arith.mulf %54, %58 : vector<256x256xf32>
    %60 = vector.broadcast %5 : vector<1x256xf32> to vector<256x256xf32>
    %61 = arith.mulf %59, %60 : vector<256x256xf32>
    %62 = vector.broadcast %7 : vector<1x256xf32> to vector<256x256xf32>
    %63 = arith.addf %61, %62 : vector<256x256xf32>
    %64 = arith.truncf %63 : vector<256x256xf32> to vector<256x256xbf16>
    %cst_64 = arith.constant dense<0.000000e+00> : vector<256x256xf32>
    %65 = tpu.matmul %64, %9, %cst_64 {dimension_numbers = #tpu.dot_dimension_numbers<[1], [0], [0], [1], [0, 0, 1, 1], [], []>} : vector<256x256xbf16>, vector<256x256xbf16>, vector<256x256xf32> -> vector<256x256xf32>
    %66 = vector.broadcast %11 : vector<1x256xf32> to vector<256x256xf32>
    %67 = arith.addf %65, %66 : vector<256x256xf32>
    %cst_65 = arith.constant dense<0.000000e+00> : vector<256x256xf32>
    %68 = tpu.matmul %64, %13, %cst_65 {dimension_numbers = #tpu.dot_dimension_numbers<[1], [0], [0], [1], [0, 0, 1, 1], [], []>} : vector<256x256xbf16>, vector<256x256xbf16>, vector<256x256xf32> -> vector<256x256xf32>
    %69 = vector.broadcast %15 : vector<1x256xf32> to vector<256x256xf32>
    %70 = arith.addf %68, %69 : vector<256x256xf32>
    %cst_66 = arith.constant dense<0.000000e+00> : vector<256x256xf32>
    %71 = tpu.matmul %64, %17, %cst_66 {dimension_numbers = #tpu.dot_dimension_numbers<[1], [0], [0], [1], [0, 0, 1, 1], [], []>} : vector<256x256xbf16>, vector<256x256xbf16>, vector<256x256xf32> -> vector<256x256xf32>
    %72 = vector.broadcast %19 : vector<1x256xf32> to vector<256x256xf32>
    %73 = arith.addf %71, %72 : vector<256x256xf32>
    %74 = arith.truncf %67 : vector<256x256xf32> to vector<256x256xbf16>
    %75 = vector.extract_strided_slice %74 {offsets = [0, 0], sizes = [256, 128], strides = [1, 1]} : vector<256x256xbf16> to vector<256x128xbf16>
    %76 = vector.shape_cast %75 : vector<256x128xbf16> to vector<2x128x128xbf16>
    %77 = vector.extract_strided_slice %74 {offsets = [0, 128], sizes = [256, 128], strides = [1, 1]} : vector<256x256xbf16> to vector<256x128xbf16>
    %78 = vector.shape_cast %77 : vector<256x128xbf16> to vector<2x128x128xbf16>
    %79 = vector.shape_cast %76 : vector<2x128x128xbf16> to vector<1x2x128x128xbf16>
    %80 = vector.shape_cast %78 : vector<2x128x128xbf16> to vector<1x2x128x128xbf16>
    %81 = tpu.concatenate %79, %80 in 0 : vector<1x2x128x128xbf16>, vector<1x2x128x128xbf16> -> vector<2x2x128x128xbf16>
    %82 = vector.shape_cast %81 : vector<2x2x128x128xbf16> to vector<4x128x128xbf16>
    %83 = arith.truncf %70 : vector<256x256xf32> to vector<256x256xbf16>
    %84 = vector.extract_strided_slice %83 {offsets = [0, 0], sizes = [256, 128], strides = [1, 1]} : vector<256x256xbf16> to vector<256x128xbf16>
    %85 = vector.shape_cast %84 : vector<256x128xbf16> to vector<2x128x128xbf16>
    %86 = vector.extract_strided_slice %83 {offsets = [0, 128], sizes = [256, 128], strides = [1, 1]} : vector<256x256xbf16> to vector<256x128xbf16>
    %87 = vector.shape_cast %86 : vector<256x128xbf16> to vector<2x128x128xbf16>
    %88 = vector.shape_cast %85 : vector<2x128x128xbf16> to vector<1x2x128x128xbf16>
    %89 = vector.shape_cast %87 : vector<2x128x128xbf16> to vector<1x2x128x128xbf16>
    %90 = tpu.concatenate %88, %89 in 0 : vector<1x2x128x128xbf16>, vector<1x2x128x128xbf16> -> vector<2x2x128x128xbf16>
    %91 = vector.shape_cast %90 : vector<2x2x128x128xbf16> to vector<4x128x128xbf16>
    %92 = arith.truncf %73 : vector<256x256xf32> to vector<256x256xbf16>
    %93 = vector.extract_strided_slice %92 {offsets = [0, 0], sizes = [256, 128], strides = [1, 1]} : vector<256x256xbf16> to vector<256x128xbf16>
    %94 = vector.shape_cast %93 : vector<256x128xbf16> to vector<2x128x128xbf16>
    %95 = vector.extract_strided_slice %92 {offsets = [0, 128], sizes = [256, 128], strides = [1, 1]} : vector<256x256xbf16> to vector<256x128xbf16>
    %96 = vector.shape_cast %95 : vector<256x128xbf16> to vector<2x128x128xbf16>
    %97 = vector.shape_cast %94 : vector<2x128x128xbf16> to vector<1x2x128x128xbf16>
    %98 = vector.shape_cast %96 : vector<2x128x128xbf16> to vector<1x2x128x128xbf16>
    %99 = tpu.concatenate %97, %98 in 0 : vector<1x2x128x128xbf16>, vector<1x2x128x128xbf16> -> vector<2x2x128x128xbf16>
    %100 = vector.shape_cast %99 : vector<2x2x128x128xbf16> to vector<4x128x128xbf16>
    "tpu.trace_start"() <{level = 10 : i32, message = "hnd,hmd->hnm"}> : () -> ()
    %cst_67 = arith.constant dense<0.000000e+00> : vector<4x128x128xf32>
    %101 = tpu.matmul %82, %91, %cst_67 {dimension_numbers = #tpu.dot_dimension_numbers<[2], [2], [1], [1], [0, 0, 0, 1, 1, 1], [0], [0]>} : vector<4x128x128xbf16>, vector<4x128x128xbf16>, vector<4x128x128xf32> -> vector<4x128x128xf32>
    "tpu.trace_stop"() : () -> ()
    %102 = vector.shape_cast %101 : vector<4x128x128xf32> to vector<2x2x128x128xf32>
    %103 = vector.shape_cast %40 : vector<2x128x128xf32> to vector<2x1x128x128xf32>
    %104 = vector.broadcast %103 : vector<2x1x128x128xf32> to vector<2x2x128x128xf32>
    %105 = arith.mulf %102, %104 : vector<2x2x128x128xf32>
    %106 = vector.shape_cast %105 : vector<2x2x128x128xf32> to vector<4x128x128xf32>
    %107 = arith.truncf %106 : vector<4x128x128xf32> to vector<4x128x128xbf16>
    "tpu.trace_start"() <{level = 10 : i32, message = "hnm,hmd->hnd"}> : () -> ()
    %cst_68 = arith.constant dense<0.000000e+00> : vector<4x128x128xf32>
    %108 = tpu.matmul %107, %100, %cst_68 {dimension_numbers = #tpu.dot_dimension_numbers<[2], [1], [1], [2], [0, 0, 0, 1, 1, 2], [0], [0]>} : vector<4x128x128xbf16>, vector<4x128x128xbf16>, vector<4x128x128xf32> -> vector<4x128x128xf32>
    "tpu.trace_stop"() : () -> ()
    %cst_69 = arith.constant dense<0.000000e+00> : vector<4x128xf32>
    %109 = vector.multi_reduction <add>, %108, %cst_69 [2] : vector<4x128x128xf32> to vector<4x128xf32>
    %110 = vector.shape_cast %109 : vector<4x128xf32> to vector<4x128x1xf32>
    %cst_70 = arith.constant 1.280000e+02 : f32
    %111 = vector.broadcast %cst_70 : f32 to vector<4x128x1xf32>
    %112 = arith.divf %110, %111 : vector<4x128x1xf32>
    %113 = vector.broadcast %112 : vector<4x128x1xf32> to vector<4x128x128xf32>
    %114 = arith.subf %108, %113 : vector<4x128x128xf32>
    %115 = arith.mulf %114, %114 : vector<4x128x128xf32>
    %cst_71 = arith.constant dense<0.000000e+00> : vector<4x128xf32>
    %116 = vector.multi_reduction <add>, %115, %cst_71 [2] : vector<4x128x128xf32> to vector<4x128xf32>
    %117 = vector.shape_cast %116 : vector<4x128xf32> to vector<4x128x1xf32>
    %cst_72 = arith.constant 1.280000e+02 : f32
    %118 = vector.broadcast %cst_72 : f32 to vector<4x128x1xf32>
    %119 = arith.divf %117, %118 : vector<4x128x1xf32>
    %120 = vector.broadcast %112 : vector<4x128x1xf32> to vector<4x128x128xf32>
    %121 = arith.subf %108, %120 : vector<4x128x128xf32>
    %cst_73 = arith.constant 9.99999974E-6 : f32
    %122 = vector.broadcast %cst_73 : f32 to vector<4x128x1xf32>
    %123 = arith.addf %119, %122 : vector<4x128x1xf32>
    %124 = math.rsqrt %123 : vector<4x128x1xf32>
    %125 = vector.broadcast %124 : vector<4x128x1xf32> to vector<4x128x128xf32>
    %126 = arith.mulf %121, %125 : vector<4x128x128xf32>
    %127 = vector.shape_cast %126 : vector<4x128x128xf32> to vector<2x2x128x128xf32>
    %128 = vector.extract_strided_slice %127 {offsets = [0, 0, 0, 0], sizes = [1, 2, 128, 128], strides = [1, 1, 1, 1]} : vector<2x2x128x128xf32> to vector<1x2x128x128xf32>
    %129 = vector.shape_cast %128 : vector<1x2x128x128xf32> to vector<2x128x128xf32>
    %130 = vector.extract_strided_slice %127 {offsets = [1, 0, 0, 0], sizes = [1, 2, 128, 128], strides = [1, 1, 1, 1]} : vector<2x2x128x128xf32> to vector<1x2x128x128xf32>
    %131 = vector.shape_cast %130 : vector<1x2x128x128xf32> to vector<2x128x128xf32>
    %132 = tpu.concatenate %129, %131 in 2 : vector<2x128x128xf32>, vector<2x128x128xf32> -> vector<2x128x256xf32>
    %133 = vector.shape_cast %132 : vector<2x128x256xf32> to vector<256x256xf32>
    %cst_74 = arith.constant dense<0.000000e+00> : vector<256x256xf32>
    %134 = tpu.matmul %64, %21, %cst_74 {dimension_numbers = #tpu.dot_dimension_numbers<[1], [0], [0], [1], [0, 0, 1, 1], [], []>} : vector<256x256xbf16>, vector<256x256xbf16>, vector<256x256xf32> -> vector<256x256xf32>
    %135 = vector.broadcast %23 : vector<1x256xf32> to vector<256x256xf32>
    %136 = arith.addf %134, %135 : vector<256x256xf32>
    %137 = arith.negf %136 : vector<256x256xf32>
    %138 = math.exp %137 : vector<256x256xf32>
    %cst_75 = arith.constant 1.000000e+00 : f32
    %139 = vector.broadcast %cst_75 : f32 to vector<256x256xf32>
    %140 = arith.addf %139, %138 : vector<256x256xf32>
    %141 = arith.divf %139, %140 : vector<256x256xf32>
    %142 = arith.mulf %136, %141 : vector<256x256xf32>
    %143 = arith.mulf %133, %142 : vector<256x256xf32>
    %144 = arith.truncf %143 : vector<256x256xf32> to vector<256x256xbf16>
    %cst_76 = arith.constant dense<0.000000e+00> : vector<256x256xf32>
    %145 = tpu.matmul %144, %25, %cst_76 {dimension_numbers = #tpu.dot_dimension_numbers<[1], [0], [0], [1], [0, 0, 1, 1], [], []>} : vector<256x256xbf16>, vector<256x256xbf16>, vector<256x256xf32> -> vector<256x256xf32>
    %146 = vector.broadcast %27 : vector<1x256xf32> to vector<256x256xf32>
    %147 = arith.addf %145, %146 : vector<256x256xf32>
    %148 = arith.addf %41, %147 : vector<256x256xf32>
    %cst_77 = arith.constant dense<0.000000e+00> : vector<256xf32>
    %149 = vector.multi_reduction <add>, %148, %cst_77 [1] : vector<256x256xf32> to vector<256xf32>
    %150 = vector.shape_cast %149 : vector<256xf32> to vector<256x1xf32>
    %cst_78 = arith.constant 2.560000e+02 : f32
    %151 = vector.broadcast %cst_78 : f32 to vector<256x1xf32>
    %152 = arith.divf %150, %151 : vector<256x1xf32>
    %153 = vector.broadcast %152 : vector<256x1xf32> to vector<256x256xf32>
    %154 = arith.subf %148, %153 : vector<256x256xf32>
    %155 = arith.mulf %154, %154 : vector<256x256xf32>
    %cst_79 = arith.constant dense<0.000000e+00> : vector<256xf32>
    %156 = vector.multi_reduction <add>, %155, %cst_79 [1] : vector<256x256xf32> to vector<256xf32>
    %157 = vector.shape_cast %156 : vector<256xf32> to vector<256x1xf32>
    %cst_80 = arith.constant 2.560000e+02 : f32
    %158 = vector.broadcast %cst_80 : f32 to vector<256x1xf32>
    %159 = arith.divf %157, %158 : vector<256x1xf32>
    %160 = vector.broadcast %152 : vector<256x1xf32> to vector<256x256xf32>
    %161 = arith.subf %148, %160 : vector<256x256xf32>
    %cst_81 = arith.constant 9.99999974E-6 : f32
    %162 = vector.broadcast %cst_81 : f32 to vector<256x1xf32>
    %163 = arith.addf %159, %162 : vector<256x1xf32>
    %164 = math.rsqrt %163 : vector<256x1xf32>
    %165 = vector.broadcast %164 : vector<256x1xf32> to vector<256x256xf32>
    %166 = arith.mulf %161, %165 : vector<256x256xf32>
    %167 = vector.broadcast %29 : vector<1x256xf32> to vector<256x256xf32>
    %168 = arith.mulf %166, %167 : vector<256x256xf32>
    %169 = vector.broadcast %31 : vector<1x256xf32> to vector<256x256xf32>
    %170 = arith.addf %168, %169 : vector<256x256xf32>
    %171 = arith.truncf %170 : vector<256x256xf32> to vector<256x256xbf16>
    %cst_82 = arith.constant dense<0.000000e+00> : vector<256x512xf32>
    %172 = tpu.matmul %171, %33, %cst_82 {dimension_numbers = #tpu.dot_dimension_numbers<[1], [0], [0], [1], [0, 0, 1, 1], [], []>} : vector<256x256xbf16>, vector<256x512xbf16>, vector<256x512xf32> -> vector<256x512xf32>
    %173 = vector.broadcast %35 : vector<1x512xf32> to vector<256x512xf32>
    %174 = arith.addf %172, %173 : vector<256x512xf32>
    %175 = arith.negf %174 : vector<256x512xf32>
    %176 = math.exp %175 : vector<256x512xf32>
    %cst_83 = arith.constant 1.000000e+00 : f32
    %177 = vector.broadcast %cst_83 : f32 to vector<256x512xf32>
    %178 = arith.addf %177, %176 : vector<256x512xf32>
    %179 = arith.divf %177, %178 : vector<256x512xf32>
    %180 = arith.mulf %174, %179 : vector<256x512xf32>
    %181 = arith.truncf %180 : vector<256x512xf32> to vector<256x512xbf16>
    %cst_84 = arith.constant dense<0.000000e+00> : vector<256x256xf32>
    %182 = tpu.matmul %181, %37, %cst_84 {dimension_numbers = #tpu.dot_dimension_numbers<[1], [0], [0], [1], [0, 0, 1, 1], [], []>} : vector<256x512xbf16>, vector<512x256xbf16>, vector<256x256xf32> -> vector<256x256xf32>
    %183 = vector.broadcast %39 : vector<1x256xf32> to vector<256x256xf32>
    %184 = arith.addf %182, %183 : vector<256x256xf32>
    %185 = arith.addf %148, %184 : vector<256x256xf32>
    %186 = vector.shape_cast %185 : vector<256x256xf32> to vector<2x128x256xf32>
    %c0_85 = arith.constant 0 : index
    %c0_86 = arith.constant 0 : index
    %c0_87 = arith.constant 0 : index
    %187 = vector.load %arg22[%c0_85, %c0_86, %c0_87] : memref<2x128x256xf32, #tpu.memory_space<vmem>>, vector<2x128x256xf32>
    tpu.vector_store %arg22[%c0_85, %c0_86, %c0_87], %186 {strides = array<i32>} : memref<2x128x256xf32, #tpu.memory_space<vmem>>, vector<2x128x256xf32>,
    return
  }
  func.func @transform_0(%arg0: i32, %arg1: i32) -> (i32, i32, i32) {
    %c0_i32 = arith.constant 0 : i32
    %c0_i32_0 = arith.constant 0 : i32
    %c0_i32_1 = arith.constant 0 : i32
    return %arg0, %c0_i32, %c0_i32_0 : i32, i32, i32
  }
  func.func @transform_1(%arg0: i32, %arg1: i32) -> (i32, i32, i32) {
    %c0_i32 = arith.constant 0 : i32
    %c0_i32_0 = arith.constant 0 : i32
    %c0_i32_1 = arith.constant 0 : i32
    %c0_i32_2 = arith.constant 0 : i32
    return %c0_i32, %c0_i32_0, %c0_i32_1 : i32, i32, i32
  }
  func.func @transform_2(%arg0: i32, %arg1: i32) -> (i32, i32, i32) {
    %c0_i32 = arith.constant 0 : i32
    %c0_i32_0 = arith.constant 0 : i32
    %c0_i32_1 = arith.constant 0 : i32
    return %arg1, %c0_i32, %c0_i32_0 : i32, i32, i32
  }
  func.func @transform_3(%arg0: i32, %arg1: i32) -> (i32, i32, i32) {
    %c0_i32 = arith.constant 0 : i32
    %c0_i32_0 = arith.constant 0 : i32
    %c0_i32_1 = arith.constant 0 : i32
    return %arg1, %c0_i32, %c0_i32_0 : i32, i32, i32
  }
  func.func @transform_4(%arg0: i32, %arg1: i32) -> (i32, i32, i32) {
    %c0_i32 = arith.constant 0 : i32
    %c0_i32_0 = arith.constant 0 : i32
    %c0_i32_1 = arith.constant 0 : i32
    return %arg1, %c0_i32, %c0_i32_0 : i32, i32, i32
  }
  func.func @transform_5(%arg0: i32, %arg1: i32) -> (i32, i32, i32) {
    %c0_i32 = arith.constant 0 : i32
    %c0_i32_0 = arith.constant 0 : i32
    %c0_i32_1 = arith.constant 0 : i32
    return %arg1, %c0_i32, %c0_i32_0 : i32, i32, i32
  }
  func.func @transform_6(%arg0: i32, %arg1: i32) -> (i32, i32, i32) {
    %c0_i32 = arith.constant 0 : i32
    %c0_i32_0 = arith.constant 0 : i32
    %c0_i32_1 = arith.constant 0 : i32
    return %arg1, %c0_i32, %c0_i32_0 : i32, i32, i32
  }
  func.func @transform_7(%arg0: i32, %arg1: i32) -> (i32, i32, i32) {
    %c0_i32 = arith.constant 0 : i32
    %c0_i32_0 = arith.constant 0 : i32
    %c0_i32_1 = arith.constant 0 : i32
    return %arg1, %c0_i32, %c0_i32_0 : i32, i32, i32
  }
  func.func @transform_8(%arg0: i32, %arg1: i32) -> (i32, i32, i32) {
    %c0_i32 = arith.constant 0 : i32
    %c0_i32_0 = arith.constant 0 : i32
    %c0_i32_1 = arith.constant 0 : i32
    return %arg1, %c0_i32, %c0_i32_0 : i32, i32, i32
  }
  func.func @transform_9(%arg0: i32, %arg1: i32) -> (i32, i32, i32) {
    %c0_i32 = arith.constant 0 : i32
    %c0_i32_0 = arith.constant 0 : i32
    %c0_i32_1 = arith.constant 0 : i32
    return %arg1, %c0_i32, %c0_i32_0 : i32, i32, i32
  }
  func.func @transform_10(%arg0: i32, %arg1: i32) -> (i32, i32, i32) {
    %c0_i32 = arith.constant 0 : i32
    %c0_i32_0 = arith.constant 0 : i32
    %c0_i32_1 = arith.constant 0 : i32
    return %arg1, %c0_i32, %c0_i32_0 : i32, i32, i32
  }
  func.func @transform_11(%arg0: i32, %arg1: i32) -> (i32, i32, i32) {
    %c0_i32 = arith.constant 0 : i32
    %c0_i32_0 = arith.constant 0 : i32
    %c0_i32_1 = arith.constant 0 : i32
    return %arg1, %c0_i32, %c0_i32_0 : i32, i32, i32
  }
  func.func @transform_12(%arg0: i32, %arg1: i32) -> (i32, i32, i32) {
    %c0_i32 = arith.constant 0 : i32
    %c0_i32_0 = arith.constant 0 : i32
    %c0_i32_1 = arith.constant 0 : i32
    return %arg1, %c0_i32, %c0_i32_0 : i32, i32, i32
  }
  func.func @transform_13(%arg0: i32, %arg1: i32) -> (i32, i32, i32) {
    %c0_i32 = arith.constant 0 : i32
    %c0_i32_0 = arith.constant 0 : i32
    %c0_i32_1 = arith.constant 0 : i32
    return %arg1, %c0_i32, %c0_i32_0 : i32, i32, i32
  }
  func.func @transform_14(%arg0: i32, %arg1: i32) -> (i32, i32, i32) {
    %c0_i32 = arith.constant 0 : i32
    %c0_i32_0 = arith.constant 0 : i32
    %c0_i32_1 = arith.constant 0 : i32
    return %arg1, %c0_i32, %c0_i32_0 : i32, i32, i32
  }
  func.func @transform_15(%arg0: i32, %arg1: i32) -> (i32, i32, i32) {
    %c0_i32 = arith.constant 0 : i32
    %c0_i32_0 = arith.constant 0 : i32
    %c0_i32_1 = arith.constant 0 : i32
    return %arg1, %c0_i32, %c0_i32_0 : i32, i32, i32
  }
  func.func @transform_16(%arg0: i32, %arg1: i32) -> (i32, i32, i32) {
    %c0_i32 = arith.constant 0 : i32
    %c0_i32_0 = arith.constant 0 : i32
    %c0_i32_1 = arith.constant 0 : i32
    return %arg1, %c0_i32, %c0_i32_0 : i32, i32, i32
  }
  func.func @transform_17(%arg0: i32, %arg1: i32) -> (i32, i32, i32) {
    %c0_i32 = arith.constant 0 : i32
    %c0_i32_0 = arith.constant 0 : i32
    %c0_i32_1 = arith.constant 0 : i32
    return %arg1, %c0_i32, %c0_i32_0 : i32, i32, i32
  }
  func.func @transform_18(%arg0: i32, %arg1: i32) -> (i32, i32, i32) {
    %c0_i32 = arith.constant 0 : i32
    %c0_i32_0 = arith.constant 0 : i32
    %c0_i32_1 = arith.constant 0 : i32
    return %arg1, %c0_i32, %c0_i32_0 : i32, i32, i32
  }
  func.func @transform_19(%arg0: i32, %arg1: i32) -> (i32, i32, i32) {
    %c0_i32 = arith.constant 0 : i32
    %c0_i32_0 = arith.constant 0 : i32
    %c0_i32_1 = arith.constant 0 : i32
    return %arg1, %c0_i32, %c0_i32_0 : i32, i32, i32
  }
  func.func @transform_20(%arg0: i32, %arg1: i32) -> (i32, i32, i32) {
    %c0_i32 = arith.constant 0 : i32
    %c0_i32_0 = arith.constant 0 : i32
    %c0_i32_1 = arith.constant 0 : i32
    return %arg0, %c0_i32, %c0_i32_0 : i32, i32, i32
  }
}

</mosaic_0001>

<llo_original>
// kernel: tpu_custom_call.1
$region0: #{tpu_custom_call.1}
  #allocation0 [shape = 'u32[]', space=smem, size = 0x4, offset = 0x4, fixed_abs, tag = 'smem constant byte address 0x4 - core index']
  #allocation1 [shape = 'u32[144,128]{1,0:T(1,128)}', space=vmem, size = 0x12000, scoped, tag = 'internal scratch']
  %s0 = inlined_call_operand.hbm [shape: f32[4,128,256], index: 0, kind: input, shape index: {}]
  %s1 = inlined_call_operand.hbm [shape: f32[2,128,128], index: 1, kind: input, shape index: {}]
  %s2 = inlined_call_operand.hbm [shape: f32[2,1,256], index: 2, kind: input, shape index: {}]
  %s3 = inlined_call_operand.vmem [shape: f32[2,1,256], index: 3, kind: input, shape index: {}]
  %s4 = inlined_call_operand.hbm [shape: bf16[2,256,256], index: 4, kind: input, shape index: {}]
  %s5 = inlined_call_operand.vmem [shape: f32[2,1,256], index: 5, kind: input, shape index: {}]
  %s6 = inlined_call_operand.hbm [shape: bf16[2,256,256], index: 6, kind: input, shape index: {}]
  %s7 = inlined_call_operand.hbm [shape: f32[2,1,256], index: 7, kind: input, shape index: {}]
  %s8 = inlined_call_operand.hbm [shape: bf16[2,256,256], index: 8, kind: input, shape index: {}]
  %s9 = inlined_call_operand.hbm [shape: f32[2,1,256], index: 9, kind: input, shape index: {}]
  %s10 = inlined_call_operand.hbm [shape: bf16[2,256,256], index: 10, kind: input, shape index: {}]
  %s11 = inlined_call_operand.vmem [shape: f32[2,1,256], index: 11, kind: input, shape index: {}]
  %s12 = inlined_call_operand.hbm [shape: bf16[2,256,256], index: 12, kind: input, shape index: {}]
  %s13 = inlined_call_operand.hbm [shape: f32[2,1,256], index: 13, kind: input, shape index: {}]
  %s14 = inlined_call_operand.vmem [shape: f32[2,1,256], index: 14, kind: input, shape index: {}]
  %s15 = inlined_call_operand.hbm [shape: f32[2,1,256], index: 15, kind: input, shape index: {}]
  %s16 = inlined_call_operand.hbm [shape: bf16[2,256,512], index: 16, kind: input, shape index: {}]
  %s17 = inlined_call_operand.vmem [shape: f32[2,1,512], index: 17, kind: input, shape index: {}]
  %s18 = inlined_call_operand.hbm [shape: bf16[2,512,256], index: 18, kind: input, shape index: {}]
  %s19 = inlined_call_operand.vmem [shape: f32[2,1,256], index: 19, kind: input, shape index: {}]
  %s20 = inlined_call_operand.hbm [shape: f32[4,128,256], index: 20, kind: output, shape index: {}]
  %s21 = sld [smem:[#allocation0]]
  $region173: #{tpu_custom_call.1} parent=0
    _
  %s23 = ssub.s32 1, %s21
  %s24 = scalar_select 0, %s23, %s21
  $region1: #{tpu_custom_call.1} parent=0
    #allocation2 [shape = 'u8[524288]{0}', space=vmem, size = 0x80000, scoped, tag = 'input window, operand 0']
    #allocation3 [shape = 's32[2]{0}', space=sflag, size = 0x8, scoped, tag = 'scoped memory for tpu_custom_call.1']
    #allocation4 [shape = 's32[2]{0}', space=sflag, size = 0x8, scoped, tag = 'scoped memory for tpu_custom_call.1']
    #allocation5 [shape = 'u8[131072]{0}', space=vmem, size = 0x20000, scoped, tag = 'input window, operand 1, single buffered']
    #allocation6 [shape = 's32[1]{0}', space=sflag, size = 0x4, scoped, tag = 'scoped memory for tpu_custom_call.1']
    #allocation7 [shape = 'u8[2048]{0}', space=vmem, size = 0x800, scoped, tag = 'input window, operand 2']
    #allocation8 [shape = 'u8[262144]{0}', space=vmem, size = 0x40000, scoped, tag = 'input window, operand 4']
    #allocation9 [shape = 'u8[262144]{0}', space=vmem, size = 0x40000, scoped, tag = 'input window, operand 6']
    #allocation10 [shape = 'u8[2048]{0}', space=vmem, size = 0x800, scoped, tag = 'input window, operand 7']
    #allocation11 [shape = 'u8[262144]{0}', space=vmem, size = 0x40000, scoped, tag = 'input window, operand 8']
    #allocation12 [shape = 'u8[2048]{0}', space=vmem, size = 0x800, scoped, tag = 'input window, operand 9']
    #allocation13 [shape = 'u8[262144]{0}', space=vmem, size = 0x40000, scoped, tag = 'input window, operand 10']
    #allocation14 [shape = 'u8[262144]{0}', space=vmem, size = 0x40000, scoped, tag = 'input window, operand 12']
    #allocation15 [shape = 'u8[2048]{0}', space=vmem, size = 0x800, scoped, tag = 'input window, operand 13']
    #allocation16 [shape = 'u8[2048]{0}', space=vmem, size = 0x800, scoped, tag = 'input window, operand 15']
    #allocation17 [shape = 'u8[524288]{0}', space=vmem, size = 0x80000, scoped, tag = 'input window, operand 16']
    #allocation18 [shape = 'u8[524288]{0}', space=vmem, size = 0x80000, scoped, tag = 'input window, operand 18']
    #allocation19 [shape = 'u8[524288]{0}', space=vmem, size = 0x80000, scoped, tag = 'output window, operand 0']
    %25 = vsyncpa [#allocation3], 0
    %s26 = scalar_lea.sflag [#allocation3], 1
    %27 = vsyncpa %s26, 0
    %28 = vsyncpa [#allocation6], 0
    %29 = vsyncpa [#allocation4], 0
    %s30 = scalar_lea.sflag [#allocation4], 1
    %31 = vsyncpa %s30, 0
    loop: start=0, step=1, limit=6
    $region2: #{tpu_custom_call.1} parent=1 // loop_pre_header
      _
    $region3: #{tpu_custom_call.1} parent=1 // loop_header
      %s33 = sphi 0, %s37
      %p34 = scmp.ge.s32.totalorder %s33, 6
      %s40 = sphi 0, %s52
      %s41 = sphi 0, %s48
      %s42 = sphi 0, %s40
      %s43 = sphi 0, %s41
      %s44 = sphi 0, %s42
      %s45 = sphi 0, %s43
      %s55 = sphi 0, %s57
      %s58 = sphi 0, %s55
      %s59 = sphi 0, %s58
      %s75 = sphi 0, %s59
      %s79 = sphi 0, %s79
      %s81 = sphi 0, %s79
      %s82 = sphi 0, %s81
      %s96 = sphi 0, %s82
      %s102 = sphi 0, %s104
      %s105 = sphi 0, %s102
      %s106 = sphi 0, %s105
      %s122 = sphi 0, %s106
      %s128 = sphi 0, %s130
      %s131 = sphi 0, %s128
      %s132 = sphi 0, %s131
      %s148 = sphi 0, %s132
      %s154 = sphi 0, %s156
      %s157 = sphi 0, %s154
      %s158 = sphi 0, %s157
      %s174 = sphi 0, %s158
      %s180 = sphi 0, %s182
      %s183 = sphi 0, %s180
      %s184 = sphi 0, %s183
      %s200 = sphi 0, %s184
      %s206 = sphi 0, %s208
      %s209 = sphi 0, %s206
      %s210 = sphi 0, %s209
      %s226 = sphi 0, %s210
      %s232 = sphi 0, %s234
      %s235 = sphi 0, %s232
      %s236 = sphi 0, %s235
      %s252 = sphi 0, %s236
      %s258 = sphi 0, %s260
      %s261 = sphi 0, %s258
      %s262 = sphi 0, %s261
      %s278 = sphi 0, %s262
      %s284 = sphi 0, %s286
      %s287 = sphi 0, %s284
      %s288 = sphi 0, %s287
      %s304 = sphi 0, %s288
      %s310 = sphi 0, %s312
      %s313 = sphi 0, %s310
      %s314 = sphi 0, %s313
      %s330 = sphi 0, %s314
      %s336 = sphi 0, %s338
      %s339 = sphi 0, %s336
      %s340 = sphi 0, %s339
      %s356 = sphi 0, %s340
      %s362 = sphi 0, %s364
      %s365 = sphi 0, %s362
      %s366 = sphi 0, %s365
      %s382 = sphi 0, %s366
      %s388 = sphi 0, %s390
      %s391 = sphi 0, %s388
      %s392 = sphi 0, %s391
      %s408 = sphi 0, %s392
      %s414 = sphi 0, %s416
      %s417 = sphi 0, %s414
      %s418 = sphi 0, %s417
      %s434 = sphi 0, %s418
      %s440 = sphi 0, %s442
      %s443 = sphi 0, %s440
      %s444 = sphi 0, %s443
      %s460 = sphi 0, %s444
      %s466 = sphi 0, %s468
      %s469 = sphi 0, %s466
      %s470 = sphi 0, %s469
      %s486 = sphi 0, %s470
      %s492 = sphi 0, %s494
      %s495 = sphi 0, %s492
      %s496 = sphi 0, %s495
      %s512 = sphi 0, %s496
      %s518 = sphi 0, %s520
      %s521 = sphi 0, %s518
      %s522 = sphi 0, %s521
      %s538 = sphi 0, %s522
      %s544 = sphi 0, %s546
      %s547 = sphi 0, %s544
      %s548 = sphi 0, %s547
      %s564 = sphi 0, %s548
      %s570 = sphi 0, %s572
      %s573 = sphi 0, %s570
      %s574 = sphi 0, %s573
      %s590 = sphi 0, %s574
    $region4: #{tpu_custom_call.1} parent=1 // loop_header_branch
      %36 = sbr.rel (%p34) target = $region8
    $region5: #{tpu_custom_call.1} parent=1 // loop_body
      %s38 = ssub.s32 %s33, 1
      %s39 = ssub.s32 %s33, 2
      %s46 = sadd.s32 1, %s41
      %p47 = scmp.ge.s32.totalorder %s46, 2
      %s48 = scalar_select %p47, 0, %s46
      %s49 = sadd.s32 1, %s40
      %s50 = scalar_select %p47, %s49, %s40
      %p51 = scmp.ge.s32.totalorder %s50, 2
      %s52 = scalar_select %p51, 0, %s50
      %s53 = ssub.s32 %s40, %s52
      %p54 = scmp.eq.s32.totalorder %s53, 0
      %s56 = sadd.s32 %s55, 1
      %s57 = scalar_select %p54, %s55, %s56
      %p60 = pneg %p54
      %p61 = scmp.eq.s32.totalorder %s33, 3
      %p62 = por %p60, %p61
      %p63 = scmp.ne.s32.totalorder %s55, %s58
      %p64 = scmp.eq.s32.totalorder %s33, 0
      %p65 = por %p63, %p64
      %p66 = scmp.ne.s32.totalorder %s55, %s58
      %p67 = scmp.eq.s32.totalorder %s38, 3
      %p68 = por %p66, %p67
      %p69 = scmp.ne.s32.totalorder %s58, %s59
      %p70 = scmp.eq.s32.totalorder %s38, 0
      %p71 = por %p69, %p70
      %p72 = scmp.ne.s32.totalorder %s58, %s59
      %p73 = scmp.eq.s32.totalorder %s39, 3
      %p74 = por %p72, %p73
      %p76 = scmp.ne.s32.totalorder %s59, %s75
      %p77 = scmp.eq.s32.totalorder %s39, 0
      %p78 = por %p76, %p77
      %s80 = sadd.s32 %s79, 1
      %p83 = scmp.eq.s32.totalorder %s33, 3
      %p84 = scmp.ne.s32.totalorder %s79, %s81
      %p85 = scmp.eq.s32.totalorder %s33, 0
      %p86 = por %p84, %p85
      %p87 = scmp.ne.s32.totalorder %s79, %s81
      %p88 = scmp.eq.s32.totalorder %s38, 3
      %p89 = por %p87, %p88
      %p90 = scmp.ne.s32.totalorder %s81, %s82
      %p91 = scmp.eq.s32.totalorder %s38, 0
      %p92 = por %p90, %p91
      %p93 = scmp.ne.s32.totalorder %s81, %s82
      %p94 = scmp.eq.s32.totalorder %s39, 3
      %p95 = por %p93, %p94
      %p97 = scmp.ne.s32.totalorder %s82, %s96
      %p98 = scmp.eq.s32.totalorder %s39, 0
      %p99 = por %p97, %p98
      %s100 = ssub.s32 %s41, %s48
      %p101 = scmp.eq.s32.totalorder %s100, 0
      %s103 = sadd.s32 %s102, 1
      %s104 = scalar_select %p101, %s102, %s103
      %p107 = pneg %p101
      %p108 = scmp.eq.s32.totalorder %s33, 3
      %p109 = por %p107, %p108
      %p110 = scmp.ne.s32.totalorder %s102, %s105
      %p111 = scmp.eq.s32.totalorder %s33, 0
      %p112 = por %p110, %p111
      %p113 = scmp.ne.s32.totalorder %s102, %s105
      %p114 = scmp.eq.s32.totalorder %s38, 3
      %p115 = por %p113, %p114
      %p116 = scmp.ne.s32.totalorder %s105, %s106
      %p117 = scmp.eq.s32.totalorder %s38, 0
      %p118 = por %p116, %p117
      %p119 = scmp.ne.s32.totalorder %s105, %s106
      %p120 = scmp.eq.s32.totalorder %s39, 3
      %p121 = por %p119, %p120
      %p123 = scmp.ne.s32.totalorder %s106, %s122
      %p124 = scmp.eq.s32.totalorder %s39, 0
      %p125 = por %p123, %p124
      %s126 = ssub.s32 %s41, %s48
      %p127 = scmp.eq.s32.totalorder %s126, 0
      %s129 = sadd.s32 %s128, 1
      %s130 = scalar_select %p127, %s128, %s129
      %p133 = pneg %p127
      %p134 = scmp.eq.s32.totalorder %s33, 3
      %p135 = por %p133, %p134
      %p136 = scmp.ne.s32.totalorder %s128, %s131
      %p137 = scmp.eq.s32.totalorder %s33, 0
      %p138 = por %p136, %p137
      %p139 = scmp.ne.s32.totalorder %s128, %s131
      %p140 = scmp.eq.s32.totalorder %s38, 3
      %p141 = por %p139, %p140
      %p142 = scmp.ne.s32.totalorder %s131, %s132
      %p143 = scmp.eq.s32.totalorder %s38, 0
      %p144 = por %p142, %p143
      %p145 = scmp.ne.s32.totalorder %s131, %s132
      %p146 = scmp.eq.s32.totalorder %s39, 3
      %p147 = por %p145, %p146
      %p149 = scmp.ne.s32.totalorder %s132, %s148
      %p150 = scmp.eq.s32.totalorder %s39, 0
      %p151 = por %p149, %p150
      %s152 = ssub.s32 %s41, %s48
      %p153 = scmp.eq.s32.totalorder %s152, 0
      %s155 = sadd.s32 %s154, 1
      %s156 = scalar_select %p153, %s154, %s155
      %p159 = pneg %p153
      %p160 = scmp.eq.s32.totalorder %s33, 3
      %p161 = por %p159, %p160
      %p162 = scmp.ne.s32.totalorder %s154, %s157
      %p163 = scmp.eq.s32.totalorder %s33, 0
      %p164 = por %p162, %p163
      %p165 = scmp.ne.s32.totalorder %s154, %s157
      %p166 = scmp.eq.s32.totalorder %s38, 3
      %p167 = por %p165, %p166
      %p168 = scmp.ne.s32.totalorder %s157, %s158
      %p169 = scmp.eq.s32.totalorder %s38, 0
      %p170 = por %p168, %p169
      %p171 = scmp.ne.s32.totalorder %s157, %s158
      %p172 = scmp.eq.s32.totalorder %s39, 3
      %p173 = por %p171, %p172
      %p175 = scmp.ne.s32.totalorder %s158, %s174
      %p176 = scmp.eq.s32.totalorder %s39, 0
      %p177 = por %p175, %p176
      %s178 = ssub.s32 %s41, %s48
      %p179 = scmp.eq.s32.totalorder %s178, 0
      %s181 = sadd.s32 %s180, 1
      %s182 = scalar_select %p179, %s180, %s181
      %p185 = pneg %p179
      %p186 = scmp.eq.s32.totalorder %s33, 3
      %p187 = por %p185, %p186
      %p188 = scmp.ne.s32.totalorder %s180, %s183
      %p189 = scmp.eq.s32.totalorder %s33, 0
      %p190 = por %p188, %p189
      %p191 = scmp.ne.s32.totalorder %s180, %s183
      %p192 = scmp.eq.s32.totalorder %s38, 3
      %p193 = por %p191, %p192
      %p194 = scmp.ne.s32.totalorder %s183, %s184
      %p195 = scmp.eq.s32.totalorder %s38, 0
      %p196 = por %p194, %p195
      %p197 = scmp.ne.s32.totalorder %s183, %s184
      %p198 = scmp.eq.s32.totalorder %s39, 3
      %p199 = por %p197, %p198
      %p201 = scmp.ne.s32.totalorder %s184, %s200
      %p202 = scmp.eq.s32.totalorder %s39, 0
      %p203 = por %p201, %p202
      %s204 = ssub.s32 %s41, %s48
      %p205 = scmp.eq.s32.totalorder %s204, 0
      %s207 = sadd.s32 %s206, 1
      %s208 = scalar_select %p205, %s206, %s207
      %p211 = pneg %p205
      %p212 = scmp.eq.s32.totalorder %s33, 3
      %p213 = por %p211, %p212
      %p214 = scmp.ne.s32.totalorder %s206, %s209
      %p215 = scmp.eq.s32.totalorder %s33, 0
      %p216 = por %p214, %p215
      %p217 = scmp.ne.s32.totalorder %s206, %s209
      %p218 = scmp.eq.s32.totalorder %s38, 3
      %p219 = por %p217, %p218
      %p220 = scmp.ne.s32.totalorder %s209, %s210
      %p221 = scmp.eq.s32.totalorder %s38, 0
      %p222 = por %p220, %p221
      %p223 = scmp.ne.s32.totalorder %s209, %s210
      %p224 = scmp.eq.s32.totalorder %s39, 3
      %p225 = por %p223, %p224
      %p227 = scmp.ne.s32.totalorder %s210, %s226
      %p228 = scmp.eq.s32.totalorder %s39, 0
      %p229 = por %p227, %p228
      %s230 = ssub.s32 %s41, %s48
      %p231 = scmp.eq.s32.totalorder %s230, 0
      %s233 = sadd.s32 %s232, 1
      %s234 = scalar_select %p231, %s232, %s233
      %p237 = pneg %p231
      %p238 = scmp.eq.s32.totalorder %s33, 3
      %p239 = por %p237, %p238
      %p240 = scmp.ne.s32.totalorder %s232, %s235
      %p241 = scmp.eq.s32.totalorder %s33, 0
      %p242 = por %p240, %p241
      %p243 = scmp.ne.s32.totalorder %s232, %s235
      %p244 = scmp.eq.s32.totalorder %s38, 3
      %p245 = por %p243, %p244
      %p246 = scmp.ne.s32.totalorder %s235, %s236
      %p247 = scmp.eq.s32.totalorder %s38, 0
      %p248 = por %p246, %p247
      %p249 = scmp.ne.s32.totalorder %s235, %s236
      %p250 = scmp.eq.s32.totalorder %s39, 3
      %p251 = por %p249, %p250
      %p253 = scmp.ne.s32.totalorder %s236, %s252
      %p254 = scmp.eq.s32.totalorder %s39, 0
      %p255 = por %p253, %p254
      %s256 = ssub.s32 %s41, %s48
      %p257 = scmp.eq.s32.totalorder %s256, 0
      %s259 = sadd.s32 %s258, 1
      %s260 = scalar_select %p257, %s258, %s259
      %p263 = pneg %p257
      %p264 = scmp.eq.s32.totalorder %s33, 3
      %p265 = por %p263, %p264
      %p266 = scmp.ne.s32.totalorder %s258, %s261
      %p267 = scmp.eq.s32.totalorder %s33, 0
      %p268 = por %p266, %p267
      %p269 = scmp.ne.s32.totalorder %s258, %s261
      %p270 = scmp.eq.s32.totalorder %s38, 3
      %p271 = por %p269, %p270
      %p272 = scmp.ne.s32.totalorder %s261, %s262
      %p273 = scmp.eq.s32.totalorder %s38, 0
      %p274 = por %p272, %p273
      %p275 = scmp.ne.s32.totalorder %s261, %s262
      %p276 = scmp.eq.s32.totalorder %s39, 3
      %p277 = por %p275, %p276
      %p279 = scmp.ne.s32.totalorder %s262, %s278
      %p280 = scmp.eq.s32.totalorder %s39, 0
      %p281 = por %p279, %p280
      %s282 = ssub.s32 %s41, %s48
      %p283 = scmp.eq.s32.totalorder %s282, 0
      %s285 = sadd.s32 %s284, 1
      %s286 = scalar_select %p283, %s284, %s285
      %p289 = pneg %p283
      %p290 = scmp.eq.s32.totalorder %s33, 3
      %p291 = por %p289, %p290
      %p292 = scmp.ne.s32.totalorder %s284, %s287
      %p293 = scmp.eq.s32.totalorder %s33, 0
      %p294 = por %p292, %p293
      %p295 = scmp.ne.s32.totalorder %s284, %s287
      %p296 = scmp.eq.s32.totalorder %s38, 3
      %p297 = por %p295, %p296
      %p298 = scmp.ne.s32.totalorder %s287, %s288
      %p299 = scmp.eq.s32.totalorder %s38, 0
      %p300 = por %p298, %p299
      %p301 = scmp.ne.s32.totalorder %s287, %s288
      %p302 = scmp.eq.s32.totalorder %s39, 3
      %p303 = por %p301, %p302
      %p305 = scmp.ne.s32.totalorder %s288, %s304
      %p306 = scmp.eq.s32.totalorder %s39, 0
      %p307 = por %p305, %p306
      %s308 = ssub.s32 %s41, %s48
      %p309 = scmp.eq.s32.totalorder %s308, 0
      %s311 = sadd.s32 %s310, 1
      %s312 = scalar_select %p309, %s310, %s311
      %p315 = pneg %p309
      %p316 = scmp.eq.s32.totalorder %s33, 3
      %p317 = por %p315, %p316
      %p318 = scmp.ne.s32.totalorder %s310, %s313
      %p319 = scmp.eq.s32.totalorder %s33, 0
      %p320 = por %p318, %p319
      %p321 = scmp.ne.s32.totalorder %s310, %s313
      %p322 = scmp.eq.s32.totalorder %s38, 3
      %p323 = por %p321, %p322
      %p324 = scmp.ne.s32.totalorder %s313, %s314
      %p325 = scmp.eq.s32.totalorder %s38, 0
      %p326 = por %p324, %p325
      %p327 = scmp.ne.s32.totalorder %s313, %s314
      %p328 = scmp.eq.s32.totalorder %s39, 3
      %p329 = por %p327, %p328
      %p331 = scmp.ne.s32.totalorder %s314, %s330
      %p332 = scmp.eq.s32.totalorder %s39, 0
      %p333 = por %p331, %p332
      %s334 = ssub.s32 %s41, %s48
      %p335 = scmp.eq.s32.totalorder %s334, 0
      %s337 = sadd.s32 %s336, 1
      %s338 = scalar_select %p335, %s336, %s337
      %p341 = pneg %p335
      %p342 = scmp.eq.s32.totalorder %s33, 3
      %p343 = por %p341, %p342
      %p344 = scmp.ne.s32.totalorder %s336, %s339
      %p345 = scmp.eq.s32.totalorder %s33, 0
      %p346 = por %p344, %p345
      %p347 = scmp.ne.s32.totalorder %s336, %s339
      %p348 = scmp.eq.s32.totalorder %s38, 3
      %p349 = por %p347, %p348
      %p350 = scmp.ne.s32.totalorder %s339, %s340
      %p351 = scmp.eq.s32.totalorder %s38, 0
      %p352 = por %p350, %p351
      %p353 = scmp.ne.s32.totalorder %s339, %s340
      %p354 = scmp.eq.s32.totalorder %s39, 3
      %p355 = por %p353, %p354
      %p357 = scmp.ne.s32.totalorder %s340, %s356
      %p358 = scmp.eq.s32.totalorder %s39, 0
      %p359 = por %p357, %p358
      %s360 = ssub.s32 %s41, %s48
      %p361 = scmp.eq.s32.totalorder %s360, 0
      %s363 = sadd.s32 %s362, 1
      %s364 = scalar_select %p361, %s362, %s363
      %p367 = pneg %p361
      %p368 = scmp.eq.s32.totalorder %s33, 3
      %p369 = por %p367, %p368
      %p370 = scmp.ne.s32.totalorder %s362, %s365
      %p371 = scmp.eq.s32.totalorder %s33, 0
      %p372 = por %p370, %p371
      %p373 = scmp.ne.s32.totalorder %s362, %s365
      %p374 = scmp.eq.s32.totalorder %s38, 3
      %p375 = por %p373, %p374
      %p376 = scmp.ne.s32.totalorder %s365, %s366
      %p377 = scmp.eq.s32.totalorder %s38, 0
      %p378 = por %p376, %p377
      %p379 = scmp.ne.s32.totalorder %s365, %s366
      %p380 = scmp.eq.s32.totalorder %s39, 3
      %p381 = por %p379, %p380
      %p383 = scmp.ne.s32.totalorder %s366, %s382
      %p384 = scmp.eq.s32.totalorder %s39, 0
      %p385 = por %p383, %p384
      %s386 = ssub.s32 %s41, %s48
      %p387 = scmp.eq.s32.totalorder %s386, 0
      %s389 = sadd.s32 %s388, 1
      %s390 = scalar_select %p387, %s388, %s389
      %p393 = pneg %p387
      %p394 = scmp.eq.s32.totalorder %s33, 3
      %p395 = por %p393, %p394
      %p396 = scmp.ne.s32.totalorder %s388, %s391
      %p397 = scmp.eq.s32.totalorder %s33, 0
      %p398 = por %p396, %p397
      %p399 = scmp.ne.s32.totalorder %s388, %s391
      %p400 = scmp.eq.s32.totalorder %s38, 3
      %p401 = por %p399, %p400
      %p402 = scmp.ne.s32.totalorder %s391, %s392
      %p403 = scmp.eq.s32.totalorder %s38, 0
      %p404 = por %p402, %p403
      %p405 = scmp.ne.s32.totalorder %s391, %s392
      %p406 = scmp.eq.s32.totalorder %s39, 3
      %p407 = por %p405, %p406
      %p409 = scmp.ne.s32.totalorder %s392, %s408
      %p410 = scmp.eq.s32.totalorder %s39, 0
      %p411 = por %p409, %p410
      %s412 = ssub.s32 %s41, %s48
      %p413 = scmp.eq.s32.totalorder %s412, 0
      %s415 = sadd.s32 %s414, 1
      %s416 = scalar_select %p413, %s414, %s415
      %p419 = pneg %p413
      %p420 = scmp.eq.s32.totalorder %s33, 3
      %p421 = por %p419, %p420
      %p422 = scmp.ne.s32.totalorder %s414, %s417
      %p423 = scmp.eq.s32.totalorder %s33, 0
      %p424 = por %p422, %p423
      %p425 = scmp.ne.s32.totalorder %s414, %s417
      %p426 = scmp.eq.s32.totalorder %s38, 3
      %p427 = por %p425, %p426
      %p428 = scmp.ne.s32.totalorder %s417, %s418
      %p429 = scmp.eq.s32.totalorder %s38, 0
      %p430 = por %p428, %p429
      %p431 = scmp.ne.s32.totalorder %s417, %s418
      %p432 = scmp.eq.s32.totalorder %s39, 3
      %p433 = por %p431, %p432
      %p435 = scmp.ne.s32.totalorder %s418, %s434
      %p436 = scmp.eq.s32.totalorder %s39, 0
      %p437 = por %p435, %p436
      %s438 = ssub.s32 %s41, %s48
      %p439 = scmp.eq.s32.totalorder %s438, 0
      %s441 = sadd.s32 %s440, 1
      %s442 = scalar_select %p439, %s440, %s441
      %p445 = pneg %p439
      %p446 = scmp.eq.s32.totalorder %s33, 3
      %p447 = por %p445, %p446
      %p448 = scmp.ne.s32.totalorder %s440, %s443
      %p449 = scmp.eq.s32.totalorder %s33, 0
      %p450 = por %p448, %p449
      %p451 = scmp.ne.s32.totalorder %s440, %s443
      %p452 = scmp.eq.s32.totalorder %s38, 3
      %p453 = por %p451, %p452
      %p454 = scmp.ne.s32.totalorder %s443, %s444
      %p455 = scmp.eq.s32.totalorder %s38, 0
      %p456 = por %p454, %p455
      %p457 = scmp.ne.s32.totalorder %s443, %s444
      %p458 = scmp.eq.s32.totalorder %s39, 3
      %p459 = por %p457, %p458
      %p461 = scmp.ne.s32.totalorder %s444, %s460
      %p462 = scmp.eq.s32.totalorder %s39, 0
      %p463 = por %p461, %p462
      %s464 = ssub.s32 %s41, %s48
      %p465 = scmp.eq.s32.totalorder %s464, 0
      %s467 = sadd.s32 %s466, 1
      %s468 = scalar_select %p465, %s466, %s467
      %p471 = pneg %p465
      %p472 = scmp.eq.s32.totalorder %s33, 3
      %p473 = por %p471, %p472
      %p474 = scmp.ne.s32.totalorder %s466, %s469
      %p475 = scmp.eq.s32.totalorder %s33, 0
      %p476 = por %p474, %p475
      %p477 = scmp.ne.s32.totalorder %s466, %s469
      %p478 = scmp.eq.s32.totalorder %s38, 3
      %p479 = por %p477, %p478
      %p480 = scmp.ne.s32.totalorder %s469, %s470
      %p481 = scmp.eq.s32.totalorder %s38, 0
      %p482 = por %p480, %p481
      %p483 = scmp.ne.s32.totalorder %s469, %s470
      %p484 = scmp.eq.s32.totalorder %s39, 3
      %p485 = por %p483, %p484
      %p487 = scmp.ne.s32.totalorder %s470, %s486
      %p488 = scmp.eq.s32.totalorder %s39, 0
      %p489 = por %p487, %p488
      %s490 = ssub.s32 %s41, %s48
      %p491 = scmp.eq.s32.totalorder %s490, 0
      %s493 = sadd.s32 %s492, 1
      %s494 = scalar_select %p491, %s492, %s493
      %p497 = pneg %p491
      %p498 = scmp.eq.s32.totalorder %s33, 3
      %p499 = por %p497, %p498
      %p500 = scmp.ne.s32.totalorder %s492, %s495
      %p501 = scmp.eq.s32.totalorder %s33, 0
      %p502 = por %p500, %p501
      %p503 = scmp.ne.s32.totalorder %s492, %s495
      %p504 = scmp.eq.s32.totalorder %s38, 3
      %p505 = por %p503, %p504
      %p506 = scmp.ne.s32.totalorder %s495, %s496
      %p507 = scmp.eq.s32.totalorder %s38, 0
      %p508 = por %p506, %p507
      %p509 = scmp.ne.s32.totalorder %s495, %s496
      %p510 = scmp.eq.s32.totalorder %s39, 3
      %p511 = por %p509, %p510
      %p513 = scmp.ne.s32.totalorder %s496, %s512
      %p514 = scmp.eq.s32.totalorder %s39, 0
      %p515 = por %p513, %p514
      %s516 = ssub.s32 %s41, %s48
      %p517 = scmp.eq.s32.totalorder %s516, 0
      %s519 = sadd.s32 %s518, 1
      %s520 = scalar_select %p517, %s518, %s519
      %p523 = pneg %p517
      %p524 = scmp.eq.s32.totalorder %s33, 3
      %p525 = por %p523, %p524
      %p526 = scmp.ne.s32.totalorder %s518, %s521
      %p527 = scmp.eq.s32.totalorder %s33, 0
      %p528 = por %p526, %p527
      %p529 = scmp.ne.s32.totalorder %s518, %s521
      %p530 = scmp.eq.s32.totalorder %s38, 3
      %p531 = por %p529, %p530
      %p532 = scmp.ne.s32.totalorder %s521, %s522
      %p533 = scmp.eq.s32.totalorder %s38, 0
      %p534 = por %p532, %p533
      %p535 = scmp.ne.s32.totalorder %s521, %s522
      %p536 = scmp.eq.s32.totalorder %s39, 3
      %p537 = por %p535, %p536
      %p539 = scmp.ne.s32.totalorder %s522, %s538
      %p540 = scmp.eq.s32.totalorder %s39, 0
      %p541 = por %p539, %p540
      %s542 = ssub.s32 %s41, %s48
      %p543 = scmp.eq.s32.totalorder %s542, 0
      %s545 = sadd.s32 %s544, 1
      %s546 = scalar_select %p543, %s544, %s545
      %p549 = pneg %p543
      %p550 = scmp.eq.s32.totalorder %s33, 3
      %p551 = por %p549, %p550
      %p552 = scmp.ne.s32.totalorder %s544, %s547
      %p553 = scmp.eq.s32.totalorder %s33, 0
      %p554 = por %p552, %p553
      %p555 = scmp.ne.s32.totalorder %s544, %s547
      %p556 = scmp.eq.s32.totalorder %s38, 3
      %p557 = por %p555, %p556
      %p558 = scmp.ne.s32.totalorder %s547, %s548
      %p559 = scmp.eq.s32.totalorder %s38, 0
      %p560 = por %p558, %p559
      %p561 = scmp.ne.s32.totalorder %s547, %s548
      %p562 = scmp.eq.s32.totalorder %s39, 3
      %p563 = por %p561, %p562
      %p565 = scmp.ne.s32.totalorder %s548, %s564
      %p566 = scmp.eq.s32.totalorder %s39, 0
      %p567 = por %p565, %p566
      %s568 = ssub.s32 %s40, %s52
      %p569 = scmp.eq.s32.totalorder %s568, 0
      %s571 = sadd.s32 %s570, 1
      %s572 = scalar_select %p569, %s570, %s571
      %p575 = pneg %p569
      %p576 = scmp.eq.s32.totalorder %s33, 3
      %p577 = por %p575, %p576
      %p578 = scmp.ne.s32.totalorder %s570, %s573
      %p579 = scmp.eq.s32.totalorder %s33, 0
      %p580 = por %p578, %p579
      %p581 = scmp.ne.s32.totalorder %s570, %s573
      %p582 = scmp.eq.s32.totalorder %s38, 3
      %p583 = por %p581, %p582
      %p584 = scmp.ne.s32.totalorder %s573, %s574
      %p585 = scmp.eq.s32.totalorder %s38, 0
      %p586 = por %p584, %p585
      %p587 = scmp.ne.s32.totalorder %s573, %s574
      %p588 = scmp.eq.s32.totalorder %s39, 3
      %p589 = por %p587, %p588
      %p591 = scmp.ne.s32.totalorder %s574, %s590
      %p592 = scmp.eq.s32.totalorder %s39, 0
      %p593 = por %p591, %p592
      %p594 = scmp.le.s32.totalorder 1, %s33
      %p595 = scmp.lt.s32.totalorder %s33, 5
      %p596 = pnand %p594, %p595
      %p597 = pneg %p596
      // Predicated region
      $region9: #{tpu_custom_call.1} parent=5 // pred_check
        _
      $region10: #{tpu_custom_call.1} parent=5 // pred_check_branch
        %599 = sbr.rel (%p596) target = $region12
      $region11: #{tpu_custom_call.1} parent=5 // pred_region
        %s600 = ssub.s32 %s33, 1
        // Predicated region
        $region13: #{tpu_custom_call.1} parent=11 // pred_check
          %p601 = pneg %p92
        $region14: #{tpu_custom_call.1} parent=11 // pred_check_branch
          %603 = sbr.rel (%p601) target = $region16
        $region15: #{tpu_custom_call.1} parent=11 // pred_region
          %s605 = ssub.s32 4096, 4096
          %606 = vsyncadd [#allocation6], %s605
          %s607 = sshll.u32 [#allocation5], 4
          %s608 = int_to_ptr.vmem [resolvable:$true] %s607
          %613 = dma.hbm_to_vmem [thread:$0]  %s1, 4096, %s608, [#allocation6], 128, 128, 8
        $region16: #{tpu_custom_call.1} parent=11 // pred_fallthru
          _
      $region12: #{tpu_custom_call.1} parent=5 // pred_fallthru
        _
      %p614 = scmp.lt.s32.totalorder %s33, 4
      // Predicated region
      $region17: #{tpu_custom_call.1} parent=5 // pred_check
        %p615 = pneg %p614
      $region18: #{tpu_custom_call.1} parent=5 // pred_check_branch
        %617 = sbr.rel (%p615) target = $region20
      $region19: #{tpu_custom_call.1} parent=5 // pred_region
        // Predicated region
        $region21: #{tpu_custom_call.1} parent=19 // pred_check
          %p618 = pneg %p65
        $region22: #{tpu_custom_call.1} parent=19 // pred_check_branch
          %620 = sbr.rel (%p618) target = $region24
        $region23: #{tpu_custom_call.1} parent=19 // pred_region
          %s621 = sand.u32 %s33, 1
          %s622 = scalar_lea.sflag [#allocation3], %s621
          %s623 = sand.u32 %s55, 1
          %s624 = smul.addr %s623, 512
          %s625 = scalar_lea.vmem [#allocation2], %s624
          %s626 = smul.u32 2, %s40
          %s628 = ssub.s32 8192, 8192
          %629 = vsyncadd %s622, %s628
          %s630 = smul.addr %s626, 32
          %s631 = smul.addr %s630, 128
          %s632 = scalar_lea.hbm %s0, %s631
          %s633 = sshll.u32 %s625, 4
          %s634 = int_to_ptr.vmem [resolvable:$true] %s633
          %639 = dma.hbm_to_vmem [thread:$0]  %s632, 8192, %s634, %s622, 256, 256, 16
        $region24: #{tpu_custom_call.1} parent=19 // pred_fallthru
          _
        // Predicated region
        $region25: #{tpu_custom_call.1} parent=19 // pred_check
          %p640 = pneg %p112
        $region26: #{tpu_custom_call.1} parent=19 // pred_check_branch
          %642 = sbr.rel (%p640) target = $region28
        $region27: #{tpu_custom_call.1} parent=19 // pred_region
          %s643 = sand.u32 %s33, 1
          %s644 = scalar_lea.sflag [#allocation3], %s643
          %s645 = sand.u32 %s102, 1
          %s646 = smul.addr %s645, 2
          %s647 = scalar_lea.vmem [#allocation7], %s646
          %s649 = ssub.s32 32, 32
          %650 = vsyncadd %s644, %s649
          %s651 = smul.addr %s41, 2
          %s652 = smul.addr %s651, 16
          %s653 = scalar_lea.hbm %s2, %s652
          %s655 = sshll.u32 %s647, 4
          %s656 = int_to_ptr.vmem [resolvable:$true] %s655
          %658 = dma.hbm_to_vmem [thread:$0]  %s653, 32, %s656, %s644
        $region28: #{tpu_custom_call.1} parent=19 // pred_fallthru
          _
        // Predicated region
        $region29: #{tpu_custom_call.1} parent=19 // pred_check
          %p659 = pneg %p138
        $region30: #{tpu_custom_call.1} parent=19 // pred_check_branch
          %661 = sbr.rel (%p659) target = $region32
        $region31: #{tpu_custom_call.1} parent=19 // pred_region
          %p662 = scmp.lt.s32.totalorder %s41, 1
          %s663 = scalar_select %p662, %s41, 1
          %s664 = smul.addr %s663, 2
          %s665 = scalar_lea.vmem %s3, %s664
        $region32: #{tpu_custom_call.1} parent=19 // pred_fallthru
          _
        // Predicated region
        $region33: #{tpu_custom_call.1} parent=19 // pred_check
          %p666 = pneg %p164
        $region34: #{tpu_custom_call.1} parent=19 // pred_check_branch
          %668 = sbr.rel (%p666) target = $region36
        $region35: #{tpu_custom_call.1} parent=19 // pred_region
          %s669 = sand.u32 %s33, 1
          %s670 = scalar_lea.sflag [#allocation3], %s669
          %s671 = sand.u32 %s154, 1
          %s672 = smul.addr %s671, 256
          %s673 = scalar_lea.vmem [#allocation8], %s672
          %s675 = ssub.s32 4096, 4096
          %676 = vsyncadd %s670, %s675
          %s677 = smul.addr %s41, 64
          %s678 = smul.addr %s677, 64
          %s679 = scalar_lea.hbm %s4, %s678
          %s680 = sshll.u32 %s673, 4
          %s681 = int_to_ptr.vmem [resolvable:$true] %s680
          %686 = dma.hbm_to_vmem [thread:$0]  %s679, 4096, %s681, %s670, 128, 128, 8
        $region36: #{tpu_custom_call.1} parent=19 // pred_fallthru
          _
        // Predicated region
        $region37: #{tpu_custom_call.1} parent=19 // pred_check
          %p687 = pneg %p190
        $region38: #{tpu_custom_call.1} parent=19 // pred_check_branch
          %689 = sbr.rel (%p687) target = $region40
        $region39: #{tpu_custom_call.1} parent=19 // pred_region
          %p690 = scmp.lt.s32.totalorder %s41, 1
          %s691 = scalar_select %p690, %s41, 1
          %s692 = smul.addr %s691, 2
          %s693 = scalar_lea.vmem %s5, %s692
        $region40: #{tpu_custom_call.1} parent=19 // pred_fallthru
          _
        // Predicated region
        $region41: #{tpu_custom_call.1} parent=19 // pred_check
          %p694 = pneg %p216
        $region42: #{tpu_custom_call.1} parent=19 // pred_check_branch
          %696 = sbr.rel (%p694) target = $region44
        $region43: #{tpu_custom_call.1} parent=19 // pred_region
          %s697 = sand.u32 %s33, 1
          %s698 = scalar_lea.sflag [#allocation3], %s697
          %s699 = sand.u32 %s206, 1
          %s700 = smul.addr %s699, 256
          %s701 = scalar_lea.vmem [#allocation9], %s700
          %s703 = ssub.s32 4096, 4096
          %704 = vsyncadd %s698, %s703
          %s705 = smul.addr %s41, 64
          %s706 = smul.addr %s705, 64
          %s707 = scalar_lea.hbm %s6, %s706
          %s708 = sshll.u32 %s701, 4
          %s709 = int_to_ptr.vmem [resolvable:$true] %s708
          %714 = dma.hbm_to_vmem [thread:$0]  %s707, 4096, %s709, %s698, 128, 128, 8
        $region44: #{tpu_custom_call.1} parent=19 // pred_fallthru
          _
        // Predicated region
        $region45: #{tpu_custom_call.1} parent=19 // pred_check
          %p715 = pneg %p242
        $region46: #{tpu_custom_call.1} parent=19 // pred_check_branch
          %717 = sbr.rel (%p715) target = $region48
        $region47: #{tpu_custom_call.1} parent=19 // pred_region
          %s718 = sand.u32 %s33, 1
          %s719 = scalar_lea.sflag [#allocation3], %s718
          %s720 = sand.u32 %s232, 1
          %s721 = smul.addr %s720, 2
          %s722 = scalar_lea.vmem [#allocation10], %s721
          %s724 = ssub.s32 32, 32
          %725 = vsyncadd %s719, %s724
          %s726 = smul.addr %s41, 2
          %s727 = smul.addr %s726, 16
          %s728 = scalar_lea.hbm %s7, %s727
          %s730 = sshll.u32 %s722, 4
          %s731 = int_to_ptr.vmem [resolvable:$true] %s730
          %733 = dma.hbm_to_vmem [thread:$0]  %s728, 32, %s731, %s719
        $region48: #{tpu_custom_call.1} parent=19 // pred_fallthru
          _
        // Predicated region
        $region49: #{tpu_custom_call.1} parent=19 // pred_check
          %p734 = pneg %p268
        $region50: #{tpu_custom_call.1} parent=19 // pred_check_branch
          %736 = sbr.rel (%p734) target = $region52
        $region51: #{tpu_custom_call.1} parent=19 // pred_region
          %s737 = sand.u32 %s33, 1
          %s738 = scalar_lea.sflag [#allocation3], %s737
          %s739 = sand.u32 %s258, 1
          %s740 = smul.addr %s739, 256
          %s741 = scalar_lea.vmem [#allocation11], %s740
          %s743 = ssub.s32 4096, 4096
          %744 = vsyncadd %s738, %s743
          %s745 = smul.addr %s41, 64
          %s746 = smul.addr %s745, 64
          %s747 = scalar_lea.hbm %s8, %s746
          %s748 = sshll.u32 %s741, 4
          %s749 = int_to_ptr.vmem [resolvable:$true] %s748
          %754 = dma.hbm_to_vmem [thread:$0]  %s747, 4096, %s749, %s738, 128, 128, 8
        $region52: #{tpu_custom_call.1} parent=19 // pred_fallthru
          _
        // Predicated region
        $region53: #{tpu_custom_call.1} parent=19 // pred_check
          %p755 = pneg %p294
        $region54: #{tpu_custom_call.1} parent=19 // pred_check_branch
          %757 = sbr.rel (%p755) target = $region56
        $region55: #{tpu_custom_call.1} parent=19 // pred_region
          %s758 = sand.u32 %s33, 1
          %s759 = scalar_lea.sflag [#allocation3], %s758
          %s760 = sand.u32 %s284, 1
          %s761 = smul.addr %s760, 2
          %s762 = scalar_lea.vmem [#allocation12], %s761
          %s764 = ssub.s32 32, 32
          %765 = vsyncadd %s759, %s764
          %s766 = smul.addr %s41, 2
          %s767 = smul.addr %s766, 16
          %s768 = scalar_lea.hbm %s9, %s767
          %s770 = sshll.u32 %s762, 4
          %s771 = int_to_ptr.vmem [resolvable:$true] %s770
          %773 = dma.hbm_to_vmem [thread:$0]  %s768, 32, %s771, %s759
        $region56: #{tpu_custom_call.1} parent=19 // pred_fallthru
          _
        // Predicated region
        $region57: #{tpu_custom_call.1} parent=19 // pred_check
          %p774 = pneg %p320
        $region58: #{tpu_custom_call.1} parent=19 // pred_check_branch
          %776 = sbr.rel (%p774) target = $region60
        $region59: #{tpu_custom_call.1} parent=19 // pred_region
          %s777 = sand.u32 %s33, 1
          %s778 = scalar_lea.sflag [#allocation3], %s777
          %s779 = sand.u32 %s310, 1
          %s780 = smul.addr %s779, 256
          %s781 = scalar_lea.vmem [#allocation13], %s780
          %s783 = ssub.s32 4096, 4096
          %784 = vsyncadd %s778, %s783
          %s785 = smul.addr %s41, 64
          %s786 = smul.addr %s785, 64
          %s787 = scalar_lea.hbm %s10, %s786
          %s788 = sshll.u32 %s781, 4
          %s789 = int_to_ptr.vmem [resolvable:$true] %s788
          %794 = dma.hbm_to_vmem [thread:$0]  %s787, 4096, %s789, %s778, 128, 128, 8
        $region60: #{tpu_custom_call.1} parent=19 // pred_fallthru
          _
        // Predicated region
        $region61: #{tpu_custom_call.1} parent=19 // pred_check
          %p795 = pneg %p346
        $region62: #{tpu_custom_call.1} parent=19 // pred_check_branch
          %797 = sbr.rel (%p795) target = $region64
        $region63: #{tpu_custom_call.1} parent=19 // pred_region
          %p798 = scmp.lt.s32.totalorder %s41, 1
          %s799 = scalar_select %p798, %s41, 1
          %s800 = smul.addr %s799, 2
          %s801 = scalar_lea.vmem %s11, %s800
        $region64: #{tpu_custom_call.1} parent=19 // pred_fallthru
          _
        // Predicated region
        $region65: #{tpu_custom_call.1} parent=19 // pred_check
          %p802 = pneg %p372
        $region66: #{tpu_custom_call.1} parent=19 // pred_check_branch
          %804 = sbr.rel (%p802) target = $region68
        $region67: #{tpu_custom_call.1} parent=19 // pred_region
          %s805 = sand.u32 %s33, 1
          %s806 = scalar_lea.sflag [#allocation3], %s805
          %s807 = sand.u32 %s362, 1
          %s808 = smul.addr %s807, 256
          %s809 = scalar_lea.vmem [#allocation14], %s808
          %s811 = ssub.s32 4096, 4096
          %812 = vsyncadd %s806, %s811
          %s813 = smul.addr %s41, 64
          %s814 = smul.addr %s813, 64
          %s815 = scalar_lea.hbm %s12, %s814
          %s816 = sshll.u32 %s809, 4
          %s817 = int_to_ptr.vmem [resolvable:$true] %s816
          %822 = dma.hbm_to_vmem [thread:$0]  %s815, 4096, %s817, %s806, 128, 128, 8
        $region68: #{tpu_custom_call.1} parent=19 // pred_fallthru
          _
        // Predicated region
        $region69: #{tpu_custom_call.1} parent=19 // pred_check
          %p823 = pneg %p398
        $region70: #{tpu_custom_call.1} parent=19 // pred_check_branch
          %825 = sbr.rel (%p823) target = $region72
        $region71: #{tpu_custom_call.1} parent=19 // pred_region
          %s826 = sand.u32 %s33, 1
          %s827 = scalar_lea.sflag [#allocation3], %s826
          %s828 = sand.u32 %s388, 1
          %s829 = smul.addr %s828, 2
          %s830 = scalar_lea.vmem [#allocation15], %s829
          %s832 = ssub.s32 32, 32
          %833 = vsyncadd %s827, %s832
          %s834 = smul.addr %s41, 2
          %s835 = smul.addr %s834, 16
          %s836 = scalar_lea.hbm %s13, %s835
          %s838 = sshll.u32 %s830, 4
          %s839 = int_to_ptr.vmem [resolvable:$true] %s838
          %841 = dma.hbm_to_vmem [thread:$0]  %s836, 32, %s839, %s827
        $region72: #{tpu_custom_call.1} parent=19 // pred_fallthru
          _
        // Predicated region
        $region73: #{tpu_custom_call.1} parent=19 // pred_check
          %p842 = pneg %p424
        $region74: #{tpu_custom_call.1} parent=19 // pred_check_branch
          %844 = sbr.rel (%p842) target = $region76
        $region75: #{tpu_custom_call.1} parent=19 // pred_region
          %p845 = scmp.lt.s32.totalorder %s41, 1
          %s846 = scalar_select %p845, %s41, 1
          %s847 = smul.addr %s846, 2
          %s848 = scalar_lea.vmem %s14, %s847
        $region76: #{tpu_custom_call.1} parent=19 // pred_fallthru
          _
        // Predicated region
        $region77: #{tpu_custom_call.1} parent=19 // pred_check
          %p849 = pneg %p450
        $region78: #{tpu_custom_call.1} parent=19 // pred_check_branch
          %851 = sbr.rel (%p849) target = $region80
        $region79: #{tpu_custom_call.1} parent=19 // pred_region
          %s852 = sand.u32 %s33, 1
          %s853 = scalar_lea.sflag [#allocation3], %s852
          %s854 = sand.u32 %s440, 1
          %s855 = smul.addr %s854, 2
          %s856 = scalar_lea.vmem [#allocation16], %s855
          %s858 = ssub.s32 32, 32
          %859 = vsyncadd %s853, %s858
          %s860 = smul.addr %s41, 2
          %s861 = smul.addr %s860, 16
          %s862 = scalar_lea.hbm %s15, %s861
          %s864 = sshll.u32 %s856, 4
          %s865 = int_to_ptr.vmem [resolvable:$true] %s864
          %867 = dma.hbm_to_vmem [thread:$0]  %s862, 32, %s865, %s853
        $region80: #{tpu_custom_call.1} parent=19 // pred_fallthru
          _
        // Predicated region
        $region81: #{tpu_custom_call.1} parent=19 // pred_check
          %p868 = pneg %p476
        $region82: #{tpu_custom_call.1} parent=19 // pred_check_branch
          %870 = sbr.rel (%p868) target = $region84
        $region83: #{tpu_custom_call.1} parent=19 // pred_region
          %s871 = sand.u32 %s33, 1
          %s872 = scalar_lea.sflag [#allocation3], %s871
          %s873 = sand.u32 %s466, 1
          %s874 = smul.addr %s873, 512
          %s875 = scalar_lea.vmem [#allocation17], %s874
          %s877 = ssub.s32 8192, 8192
          %878 = vsyncadd %s872, %s877
          %s879 = smul.addr %s41, 128
          %s880 = smul.addr %s879, 64
          %s881 = scalar_lea.hbm %s16, %s880
          %s882 = sshll.u32 %s875, 4
          %s883 = int_to_ptr.vmem [resolvable:$true] %s882
          %888 = dma.hbm_to_vmem [thread:$0]  %s881, 8192, %s883, %s872, 256, 256, 16
        $region84: #{tpu_custom_call.1} parent=19 // pred_fallthru
          _
        // Predicated region
        $region85: #{tpu_custom_call.1} parent=19 // pred_check
          %p889 = pneg %p502
        $region86: #{tpu_custom_call.1} parent=19 // pred_check_branch
          %891 = sbr.rel (%p889) target = $region88
        $region87: #{tpu_custom_call.1} parent=19 // pred_region
          %p892 = scmp.lt.s32.totalorder %s41, 1
          %s893 = scalar_select %p892, %s41, 1
          %s894 = smul.addr %s893, 4
          %s895 = scalar_lea.vmem %s17, %s894
        $region88: #{tpu_custom_call.1} parent=19 // pred_fallthru
          _
        // Predicated region
        $region89: #{tpu_custom_call.1} parent=19 // pred_check
          %p896 = pneg %p528
        $region90: #{tpu_custom_call.1} parent=19 // pred_check_branch
          %898 = sbr.rel (%p896) target = $region92
        $region91: #{tpu_custom_call.1} parent=19 // pred_region
          %s899 = sand.u32 %s33, 1
          %s900 = scalar_lea.sflag [#allocation3], %s899
          %s901 = sand.u32 %s518, 1
          %s902 = smul.addr %s901, 512
          %s903 = scalar_lea.vmem [#allocation18], %s902
          %s905 = ssub.s32 8192, 8192
          %906 = vsyncadd %s900, %s905
          %s907 = smul.addr %s41, 128
          %s908 = smul.addr %s907, 64
          %s909 = scalar_lea.hbm %s18, %s908
          %s910 = sshll.u32 %s903, 4
          %s911 = int_to_ptr.vmem [resolvable:$true] %s910
          %916 = dma.hbm_to_vmem [thread:$0]  %s909, 8192, %s911, %s900, 128, 128, 8
        $region92: #{tpu_custom_call.1} parent=19 // pred_fallthru
          _
        // Predicated region
        $region93: #{tpu_custom_call.1} parent=19 // pred_check
          %p917 = pneg %p554
        $region94: #{tpu_custom_call.1} parent=19 // pred_check_branch
          %919 = sbr.rel (%p917) target = $region96
        $region95: #{tpu_custom_call.1} parent=19 // pred_region
          %p920 = scmp.lt.s32.totalorder %s41, 1
          %s921 = scalar_select %p920, %s41, 1
          %s922 = smul.addr %s921, 2
          %s923 = scalar_lea.vmem %s19, %s922
        $region96: #{tpu_custom_call.1} parent=19 // pred_fallthru
          _
      $region20: #{tpu_custom_call.1} parent=5 // pred_fallthru
        _
      %p924 = scmp.le.s32.totalorder 1, %s33
      %p925 = scmp.lt.s32.totalorder %s33, 5
      %p926 = pnand %p924, %p925
      %p927 = pneg %p926
      // Predicated region
      $region97: #{tpu_custom_call.1} parent=5 // pred_check
        _
      $region98: #{tpu_custom_call.1} parent=5 // pred_check_branch
        %929 = sbr.rel (%p926) target = $region100
      $region99: #{tpu_custom_call.1} parent=5 // pred_region
        %s930 = ssub.s32 %s33, 1
        %s931 = sand.u32 %s38, 1
        %s932 = scalar_lea.sflag [#allocation3], %s931
        %s933 = sand.u32 %s58, 1
        %s934 = smul.addr %s933, 512
        %s935 = scalar_lea.vmem [#allocation2], %s934
        // Predicated region
        $region101: #{tpu_custom_call.1} parent=99 // pred_check
          %p936 = pneg %p71
        $region102: #{tpu_custom_call.1} parent=99 // pred_check_branch
          %938 = sbr.rel (%p936) target = $region104
        $region103: #{tpu_custom_call.1} parent=99 // pred_region
          %939 = dma.done %s932, 8192
        $region104: #{tpu_custom_call.1} parent=99 // pred_fallthru
          _
        // Predicated region
        $region105: #{tpu_custom_call.1} parent=99 // pred_check
          %p940 = pneg %p92
        $region106: #{tpu_custom_call.1} parent=99 // pred_check_branch
          %942 = sbr.rel (%p940) target = $region108
        $region107: #{tpu_custom_call.1} parent=99 // pred_region
          %943 = dma.done [#allocation6], 4096
        $region108: #{tpu_custom_call.1} parent=99 // pred_fallthru
          _
        %s944 = sand.u32 %s38, 1
        %s945 = scalar_lea.sflag [#allocation3], %s944
        %s946 = sand.u32 %s105, 1
        %s947 = smul.addr %s946, 2
        %s948 = scalar_lea.vmem [#allocation7], %s947
        // Predicated region
        $region109: #{tpu_custom_call.1} parent=99 // pred_check
          %p949 = pneg %p118
        $region110: #{tpu_custom_call.1} parent=99 // pred_check_branch
          %951 = sbr.rel (%p949) target = $region112
        $region111: #{tpu_custom_call.1} parent=99 // pred_region
          %952 = dma.done %s945, 32
        $region112: #{tpu_custom_call.1} parent=99 // pred_fallthru
          _
        %s953 = sand.u32 %s38, 1
        %s954 = scalar_lea.sflag [#allocation3], %s953
        %s955 = sand.u32 %s157, 1
        %s956 = smul.addr %s955, 256
        %s957 = scalar_lea.vmem [#allocation8], %s956
        // Predicated region
        $region113: #{tpu_custom_call.1} parent=99 // pred_check
          %p958 = pneg %p170
        $region114: #{tpu_custom_call.1} parent=99 // pred_check_branch
          %960 = sbr.rel (%p958) target = $region116
        $region115: #{tpu_custom_call.1} parent=99 // pred_region
          %961 = dma.done %s954, 4096
        $region116: #{tpu_custom_call.1} parent=99 // pred_fallthru
          _
        %s962 = sand.u32 %s38, 1
        %s963 = scalar_lea.sflag [#allocation3], %s962
        %s964 = sand.u32 %s209, 1
        %s965 = smul.addr %s964, 256
        %s966 = scalar_lea.vmem [#allocation9], %s965
        // Predicated region
        $region117: #{tpu_custom_call.1} parent=99 // pred_check
          %p967 = pneg %p222
        $region118: #{tpu_custom_call.1} parent=99 // pred_check_branch
          %969 = sbr.rel (%p967) target = $region120
        $region119: #{tpu_custom_call.1} parent=99 // pred_region
          %970 = dma.done %s963, 4096
        $region120: #{tpu_custom_call.1} parent=99 // pred_fallthru
          _
        %s971 = sand.u32 %s38, 1
        %s972 = scalar_lea.sflag [#allocation3], %s971
        %s973 = sand.u32 %s235, 1
        %s974 = smul.addr %s973, 2
        %s975 = scalar_lea.vmem [#allocation10], %s974
        // Predicated region
        $region121: #{tpu_custom_call.1} parent=99 // pred_check
          %p976 = pneg %p248
        $region122: #{tpu_custom_call.1} parent=99 // pred_check_branch
          %978 = sbr.rel (%p976) target = $region124
        $region123: #{tpu_custom_call.1} parent=99 // pred_region
          %979 = dma.done %s972, 32
        $region124: #{tpu_custom_call.1} parent=99 // pred_fallthru
          _
        %s980 = sand.u32 %s38, 1
        %s981 = scalar_lea.sflag [#allocation3], %s980
        %s982 = sand.u32 %s261, 1
        %s983 = smul.addr %s982, 256
        %s984 = scalar_lea.vmem [#allocation11], %s983
        // Predicated region
        $region125: #{tpu_custom_call.1} parent=99 // pred_check
          %p985 = pneg %p274
        $region126: #{tpu_custom_call.1} parent=99 // pred_check_branch
          %987 = sbr.rel (%p985) target = $region128
        $region127: #{tpu_custom_call.1} parent=99 // pred_region
          %988 = dma.done %s981, 4096
        $region128: #{tpu_custom_call.1} parent=99 // pred_fallthru
          _
        %s989 = sand.u32 %s38, 1
        %s990 = scalar_lea.sflag [#allocation3], %s989
        %s991 = sand.u32 %s287, 1
        %s992 = smul.addr %s991, 2
        %s993 = scalar_lea.vmem [#allocation12], %s992
        // Predicated region
        $region129: #{tpu_custom_call.1} parent=99 // pred_check
          %p994 = pneg %p300
        $region130: #{tpu_custom_call.1} parent=99 // pred_check_branch
          %996 = sbr.rel (%p994) target = $region132
        $region131: #{tpu_custom_call.1} parent=99 // pred_region
          %997 = dma.done %s990, 32
        $region132: #{tpu_custom_call.1} parent=99 // pred_fallthru
          _
        %s998 = sand.u32 %s38, 1
        %s999 = scalar_lea.sflag [#allocation3], %s998
        %s1000 = sand.u32 %s313, 1
        %s1001 = smul.addr %s1000, 256
        %s1002 = scalar_lea.vmem [#allocation13], %s1001
        // Predicated region
        $region133: #{tpu_custom_call.1} parent=99 // pred_check
          %p1003 = pneg %p326
        $region134: #{tpu_custom_call.1} parent=99 // pred_check_branch
          %1005 = sbr.rel (%p1003) target = $region136
        $region135: #{tpu_custom_call.1} parent=99 // pred_region
          %1006 = dma.done %s999, 4096
        $region136: #{tpu_custom_call.1} parent=99 // pred_fallthru
          _
        %s1007 = sand.u32 %s38, 1
        %s1008 = scalar_lea.sflag [#allocation3], %s1007
        %s1009 = sand.u32 %s365, 1
        %s1010 = smul.addr %s1009, 256
        %s1011 = scalar_lea.vmem [#allocation14], %s1010
        // Predicated region
        $region137: #{tpu_custom_call.1} parent=99 // pred_check
          %p1012 = pneg %p378
        $region138: #{tpu_custom_call.1} parent=99 // pred_check_branch
          %1014 = sbr.rel (%p1012) target = $region140
        $region139: #{tpu_custom_call.1} parent=99 // pred_region
          %1015 = dma.done %s1008, 4096
        $region140: #{tpu_custom_call.1} parent=99 // pred_fallthru
          _
        %s1016 = sand.u32 %s38, 1
        %s1017 = scalar_lea.sflag [#allocation3], %s1016
        %s1018 = sand.u32 %s391, 1
        %s1019 = smul.addr %s1018, 2
        %s1020 = scalar_lea.vmem [#allocation15], %s1019
        // Predicated region
        $region141: #{tpu_custom_call.1} parent=99 // pred_check
          %p1021 = pneg %p404
        $region142: #{tpu_custom_call.1} parent=99 // pred_check_branch
          %1023 = sbr.rel (%p1021) target = $region144
        $region143: #{tpu_custom_call.1} parent=99 // pred_region
          %1024 = dma.done %s1017, 32
        $region144: #{tpu_custom_call.1} parent=99 // pred_fallthru
          _
        %s1025 = sand.u32 %s38, 1
        %s1026 = scalar_lea.sflag [#allocation3], %s1025
        %s1027 = sand.u32 %s443, 1
        %s1028 = smul.addr %s1027, 2
        %s1029 = scalar_lea.vmem [#allocation16], %s1028
        // Predicated region
        $region145: #{tpu_custom_call.1} parent=99 // pred_check
          %p1030 = pneg %p456
        $region146: #{tpu_custom_call.1} parent=99 // pred_check_branch
          %1032 = sbr.rel (%p1030) target = $region148
        $region147: #{tpu_custom_call.1} parent=99 // pred_region
          %1033 = dma.done %s1026, 32
        $region148: #{tpu_custom_call.1} parent=99 // pred_fallthru
          _
        %s1034 = sand.u32 %s38, 1
        %s1035 = scalar_lea.sflag [#allocation3], %s1034
        %s1036 = sand.u32 %s469, 1
        %s1037 = smul.addr %s1036, 512
        %s1038 = scalar_lea.vmem [#allocation17], %s1037
        // Predicated region
        $region149: #{tpu_custom_call.1} parent=99 // pred_check
          %p1039 = pneg %p482
        $region150: #{tpu_custom_call.1} parent=99 // pred_check_branch
          %1041 = sbr.rel (%p1039) target = $region152
        $region151: #{tpu_custom_call.1} parent=99 // pred_region
          %1042 = dma.done %s1035, 8192
        $region152: #{tpu_custom_call.1} parent=99 // pred_fallthru
          _
        %s1043 = sand.u32 %s38, 1
        %s1044 = scalar_lea.sflag [#allocation3], %s1043
        %s1045 = sand.u32 %s521, 1
        %s1046 = smul.addr %s1045, 512
        %s1047 = scalar_lea.vmem [#allocation18], %s1046
        // Predicated region
        $region153: #{tpu_custom_call.1} parent=99 // pred_check
          %p1048 = pneg %p534
        $region154: #{tpu_custom_call.1} parent=99 // pred_check_branch
          %1050 = sbr.rel (%p1048) target = $region156
        $region155: #{tpu_custom_call.1} parent=99 // pred_region
          %1051 = dma.done %s1044, 8192
        $region156: #{tpu_custom_call.1} parent=99 // pred_fallthru
          _
        %s1052 = sand.u32 %s38, 1
        %s1053 = scalar_lea.sflag [#allocation3], %s1052
        %s1054 = sand.u32 %s58, 1
        %s1055 = smul.addr %s1054, 512
        %s1056 = scalar_lea.vmem [#allocation2], %s1055
        %p1057 = pneg %p71
        %p1058 = pneg %p68
        %p1059 = pneg %p92
        %p1060 = pneg %p89
        %s1061 = sand.u32 %s38, 1
        %s1062 = scalar_lea.sflag [#allocation3], %s1061
        %s1063 = sand.u32 %s105, 1
        %s1064 = smul.addr %s1063, 2
        %s1065 = scalar_lea.vmem [#allocation7], %s1064
        %p1066 = pneg %p118
        %p1067 = pneg %p115
        %p1068 = scmp.lt.s32.totalorder %s43, 1
        %s1069 = scalar_select %p1068, %s43, 1
        %s1070 = smul.addr %s1069, 2
        %s1071 = scalar_lea.vmem %s3, %s1070
        %p1072 = pneg %p144
        %p1073 = pneg %p141
        %s1074 = sand.u32 %s38, 1
        %s1075 = scalar_lea.sflag [#allocation3], %s1074
        %s1076 = sand.u32 %s157, 1
        %s1077 = smul.addr %s1076, 256
        %s1078 = scalar_lea.vmem [#allocation8], %s1077
        %p1079 = pneg %p170
        %p1080 = pneg %p167
        %p1081 = scmp.lt.s32.totalorder %s43, 1
        %s1082 = scalar_select %p1081, %s43, 1
        %s1083 = smul.addr %s1082, 2
        %s1084 = scalar_lea.vmem %s5, %s1083
        %p1085 = pneg %p196
        %p1086 = pneg %p193
        %s1087 = sand.u32 %s38, 1
        %s1088 = scalar_lea.sflag [#allocation3], %s1087
        %s1089 = sand.u32 %s209, 1
        %s1090 = smul.addr %s1089, 256
        %s1091 = scalar_lea.vmem [#allocation9], %s1090
        %p1092 = pneg %p222
        %p1093 = pneg %p219
        %s1094 = sand.u32 %s38, 1
        %s1095 = scalar_lea.sflag [#allocation3], %s1094
        %s1096 = sand.u32 %s235, 1
        %s1097 = smul.addr %s1096, 2
        %s1098 = scalar_lea.vmem [#allocation10], %s1097
        %p1099 = pneg %p248
        %p1100 = pneg %p245
        %s1101 = sand.u32 %s38, 1
        %s1102 = scalar_lea.sflag [#allocation3], %s1101
        %s1103 = sand.u32 %s261, 1
        %s1104 = smul.addr %s1103, 256
        %s1105 = scalar_lea.vmem [#allocation11], %s1104
        %p1106 = pneg %p274
        %p1107 = pneg %p271
        %s1108 = sand.u32 %s38, 1
        %s1109 = scalar_lea.sflag [#allocation3], %s1108
        %s1110 = sand.u32 %s287, 1
        %s1111 = smul.addr %s1110, 2
        %s1112 = scalar_lea.vmem [#allocation12], %s1111
        %p1113 = pneg %p300
        %p1114 = pneg %p297
        %s1115 = sand.u32 %s38, 1
        %s1116 = scalar_lea.sflag [#allocation3], %s1115
        %s1117 = sand.u32 %s313, 1
        %s1118 = smul.addr %s1117, 256
        %s1119 = scalar_lea.vmem [#allocation13], %s1118
        %p1120 = pneg %p326
        %p1121 = pneg %p323
        %p1122 = scmp.lt.s32.totalorder %s43, 1
        %s1123 = scalar_select %p1122, %s43, 1
        %s1124 = smul.addr %s1123, 2
        %s1125 = scalar_lea.vmem %s11, %s1124
        %p1126 = pneg %p352
        %p1127 = pneg %p349
        %s1128 = sand.u32 %s38, 1
        %s1129 = scalar_lea.sflag [#allocation3], %s1128
        %s1130 = sand.u32 %s365, 1
        %s1131 = smul.addr %s1130, 256
        %s1132 = scalar_lea.vmem [#allocation14], %s1131
        %p1133 = pneg %p378
        %p1134 = pneg %p375
        %s1135 = sand.u32 %s38, 1
        %s1136 = scalar_lea.sflag [#allocation3], %s1135
        %s1137 = sand.u32 %s391, 1
        %s1138 = smul.addr %s1137, 2
        %s1139 = scalar_lea.vmem [#allocation15], %s1138
        %p1140 = pneg %p404
        %p1141 = pneg %p401
        %p1142 = scmp.lt.s32.totalorder %s43, 1
        %s1143 = scalar_select %p1142, %s43, 1
        %s1144 = smul.addr %s1143, 2
        %s1145 = scalar_lea.vmem %s14, %s1144
        %p1146 = pneg %p430
        %p1147 = pneg %p427
        %s1148 = sand.u32 %s38, 1
        %s1149 = scalar_lea.sflag [#allocation3], %s1148
        %s1150 = sand.u32 %s443, 1
        %s1151 = smul.addr %s1150, 2
        %s1152 = scalar_lea.vmem [#allocation16], %s1151
        %p1153 = pneg %p456
        %p1154 = pneg %p453
        %s1155 = sand.u32 %s38, 1
        %s1156 = scalar_lea.sflag [#allocation3], %s1155
        %s1157 = sand.u32 %s469, 1
        %s1158 = smul.addr %s1157, 512
        %s1159 = scalar_lea.vmem [#allocation17], %s1158
        %p1160 = pneg %p482
        %p1161 = pneg %p479
        %p1162 = scmp.lt.s32.totalorder %s43, 1
        %s1163 = scalar_select %p1162, %s43, 1
        %s1164 = smul.addr %s1163, 4
        %s1165 = scalar_lea.vmem %s17, %s1164
        %p1166 = pneg %p508
        %p1167 = pneg %p505
        %s1168 = sand.u32 %s38, 1
        %s1169 = scalar_lea.sflag [#allocation3], %s1168
        %s1170 = sand.u32 %s521, 1
        %s1171 = smul.addr %s1170, 512
        %s1172 = scalar_lea.vmem [#allocation18], %s1171
        %p1173 = pneg %p534
        %p1174 = pneg %p531
        %p1175 = scmp.lt.s32.totalorder %s43, 1
        %s1176 = scalar_select %p1175, %s43, 1
        %s1177 = smul.addr %s1176, 2
        %s1178 = scalar_lea.vmem %s19, %s1177
        %p1179 = pneg %p560
        %p1180 = pneg %p557
        %p1181 = pneg %p586
        %p1182 = pneg %p583
        %s1183 = sand.u32 %s573, 1
        %s1184 = scalar_lea.sflag [#allocation4], %s1183
        %s1185 = sand.u32 %s573, 1
        %s1186 = smul.addr %s1185, 512
        %s1187 = scalar_lea.vmem [#allocation19], %s1186
        %s1188 = smul.u32 2, %s42
        %p1189 = scmp.lt.s32.totalorder %s43, 1
        %s1190 = scalar_select %p1189, %s43, 1
        %s1191 = smul.addr %s1190, 2
        %s1192 = scalar_lea.vmem %s3, %s1191
        %p1193 = scmp.lt.s32.totalorder %s43, 1
        %s1194 = scalar_select %p1193, %s43, 1
        %s1195 = smul.addr %s1194, 2
        %s1196 = scalar_lea.vmem %s5, %s1195
        %p1197 = scmp.lt.s32.totalorder %s43, 1
        %s1198 = scalar_select %p1197, %s43, 1
        %s1199 = smul.addr %s1198, 2
        %s1200 = scalar_lea.vmem %s11, %s1199
        %p1201 = scmp.lt.s32.totalorder %s43, 1
        %s1202 = scalar_select %p1201, %s43, 1
        %s1203 = smul.addr %s1202, 2
        %s1204 = scalar_lea.vmem %s14, %s1203
        %p1205 = scmp.lt.s32.totalorder %s43, 1
        %s1206 = scalar_select %p1205, %s43, 1
        %s1207 = smul.addr %s1206, 4
        %s1208 = scalar_lea.vmem %s17, %s1207
        %p1209 = scmp.lt.s32.totalorder %s43, 1
        %s1210 = scalar_select %p1209, %s43, 1
        %s1211 = smul.addr %s1210, 2
        %s1212 = scalar_lea.vmem %s19, %s1211
        %s1213 = smul.u32 2, %s42
        %p1215 = scmp.eq.s32.totalorder %s43, 0
        // Predicated region
        $region157: #{tpu_custom_call.1} parent=99 // pred_check
          %p1216 = pneg %p1215
        $region158: #{tpu_custom_call.1} parent=99 // pred_check_branch
          %1218 = sbr.rel (%p1216) target = $region160
        $region159: #{tpu_custom_call.1} parent=99 // pred_region
          %v1219 = vld [vmem:[%s935] sm:$0xff]
          %v1220 = vld [vmem:[%s935 + $0x8] sm:$0xff]
          %v1221 = vld [vmem:[%s935 + $0x10] sm:$0xff]
          %v1222 = vld [vmem:[%s935 + $0x18] sm:$0xff]
          %v1223 = vld [vmem:[%s935 + $0x20] sm:$0xff]
          %v1224 = vld [vmem:[%s935 + $0x28] sm:$0xff]
          %v1225 = vld [vmem:[%s935 + $0x30] sm:$0xff]
          %v1226 = vld [vmem:[%s935 + $0x38] sm:$0xff]
          %v1227 = vld [vmem:[%s935 + $0x40] sm:$0xff]
          %v1228 = vld [vmem:[%s935 + $0x48] sm:$0xff]
          %v1229 = vld [vmem:[%s935 + $0x50] sm:$0xff]
          %v1230 = vld [vmem:[%s935 + $0x58] sm:$0xff]
          %v1231 = vld [vmem:[%s935 + $0x60] sm:$0xff]
          %v1232 = vld [vmem:[%s935 + $0x68] sm:$0xff]
          %v1233 = vld [vmem:[%s935 + $0x70] sm:$0xff]
          %v1234 = vld [vmem:[%s935 + $0x78] sm:$0xff]
          %v1235 = vld [vmem:[%s935 + $0x80] sm:$0xff]
          %v1236 = vld [vmem:[%s935 + $0x88] sm:$0xff]
          %v1237 = vld [vmem:[%s935 + $0x90] sm:$0xff]
          %v1238 = vld [vmem:[%s935 + $0x98] sm:$0xff]
          %v1239 = vld [vmem:[%s935 + $0xa0] sm:$0xff]
          %v1240 = vld [vmem:[%s935 + $0xa8] sm:$0xff]
          %v1241 = vld [vmem:[%s935 + $0xb0] sm:$0xff]
          %v1242 = vld [vmem:[%s935 + $0xb8] sm:$0xff]
          %v1243 = vld [vmem:[%s935 + $0xc0] sm:$0xff]
          %v1244 = vld [vmem:[%s935 + $0xc8] sm:$0xff]
          %v1245 = vld [vmem:[%s935 + $0xd0] sm:$0xff]
          %v1246 = vld [vmem:[%s935 + $0xd8] sm:$0xff]
          %v1247 = vld [vmem:[%s935 + $0xe0] sm:$0xff]
          %v1248 = vld [vmem:[%s935 + $0xe8] sm:$0xff]
          %v1249 = vld [vmem:[%s935 + $0xf0] sm:$0xff]
          %v1250 = vld [vmem:[%s935 + $0xf8] sm:$0xff]
          %v1251 = vld [vmem:[%s935 + $0x100] sm:$0xff]
          %v1252 = vld [vmem:[%s935 + $0x108] sm:$0xff]
          %v1253 = vld [vmem:[%s935 + $0x110] sm:$0xff]
          %v1254 = vld [vmem:[%s935 + $0x118] sm:$0xff]
          %v1255 = vld [vmem:[%s935 + $0x120] sm:$0xff]
          %v1256 = vld [vmem:[%s935 + $0x128] sm:$0xff]
          %v1257 = vld [vmem:[%s935 + $0x130] sm:$0xff]
          %v1258 = vld [vmem:[%s935 + $0x138] sm:$0xff]
          %v1259 = vld [vmem:[%s935 + $0x140] sm:$0xff]
          %v1260 = vld [vmem:[%s935 + $0x148] sm:$0xff]
          %v1261 = vld [vmem:[%s935 + $0x150] sm:$0xff]
          %v1262 = vld [vmem:[%s935 + $0x158] sm:$0xff]
          %v1263 = vld [vmem:[%s935 + $0x160] sm:$0xff]
          %v1264 = vld [vmem:[%s935 + $0x168] sm:$0xff]
          %v1265 = vld [vmem:[%s935 + $0x170] sm:$0xff]
          %v1266 = vld [vmem:[%s935 + $0x178] sm:$0xff]
          %v1267 = vld [vmem:[%s935 + $0x180] sm:$0xff]
          %v1268 = vld [vmem:[%s935 + $0x188] sm:$0xff]
          %v1269 = vld [vmem:[%s935 + $0x190] sm:$0xff]
          %v1270 = vld [vmem:[%s935 + $0x198] sm:$0xff]
          %v1271 = vld [vmem:[%s935 + $0x1a0] sm:$0xff]
          %v1272 = vld [vmem:[%s935 + $0x1a8] sm:$0xff]
          %v1273 = vld [vmem:[%s935 + $0x1b0] sm:$0xff]
          %v1274 = vld [vmem:[%s935 + $0x1b8] sm:$0xff]
          %v1275 = vld [vmem:[%s935 + $0x1c0] sm:$0xff]
          %v1276 = vld [vmem:[%s935 + $0x1c8] sm:$0xff]
          %v1277 = vld [vmem:[%s935 + $0x1d0] sm:$0xff]
          %v1278 = vld [vmem:[%s935 + $0x1d8] sm:$0xff]
          %v1279 = vld [vmem:[%s935 + $0x1e0] sm:$0xff]
          %v1280 = vld [vmem:[%s935 + $0x1e8] sm:$0xff]
          %v1281 = vld [vmem:[%s935 + $0x1f0] sm:$0xff]
          %v1282 = vld [vmem:[%s935 + $0x1f8] sm:$0xff]
          %1283 = vst [vmem:[%s1187] sm:$0xff] %v1219
          %1284 = vst [vmem:[%s1187 + $0x8] sm:$0xff] %v1220
          %1285 = vst [vmem:[%s1187 + $0x10] sm:$0xff] %v1221
          %1286 = vst [vmem:[%s1187 + $0x18] sm:$0xff] %v1222
          %1287 = vst [vmem:[%s1187 + $0x20] sm:$0xff] %v1223
          %1288 = vst [vmem:[%s1187 + $0x28] sm:$0xff] %v1224
          %1289 = vst [vmem:[%s1187 + $0x30] sm:$0xff] %v1225
          %1290 = vst [vmem:[%s1187 + $0x38] sm:$0xff] %v1226
          %1291 = vst [vmem:[%s1187 + $0x40] sm:$0xff] %v1227
          %1292 = vst [vmem:[%s1187 + $0x48] sm:$0xff] %v1228
          %1293 = vst [vmem:[%s1187 + $0x50] sm:$0xff] %v1229
          %1294 = vst [vmem:[%s1187 + $0x58] sm:$0xff] %v1230
          %1295 = vst [vmem:[%s1187 + $0x60] sm:$0xff] %v1231
          %1296 = vst [vmem:[%s1187 + $0x68] sm:$0xff] %v1232
          %1297 = vst [vmem:[%s1187 + $0x70] sm:$0xff] %v1233
          %1298 = vst [vmem:[%s1187 + $0x78] sm:$0xff] %v1234
          %1299 = vst [vmem:[%s1187 + $0x80] sm:$0xff] %v1235
          %1300 = vst [vmem:[%s1187 + $0x88] sm:$0xff] %v1236
          %1301 = vst [vmem:[%s1187 + $0x90] sm:$0xff] %v1237
          %1302 = vst [vmem:[%s1187 + $0x98] sm:$0xff] %v1238
          %1303 = vst [vmem:[%s1187 + $0xa0] sm:$0xff] %v1239
          %1304 = vst [vmem:[%s1187 + $0xa8] sm:$0xff] %v1240
          %1305 = vst [vmem:[%s1187 + $0xb0] sm:$0xff] %v1241
          %1306 = vst [vmem:[%s1187 + $0xb8] sm:$0xff] %v1242
          %1307 = vst [vmem:[%s1187 + $0xc0] sm:$0xff] %v1243
          %1308 = vst [vmem:[%s1187 + $0xc8] sm:$0xff] %v1244
          %1309 = vst [vmem:[%s1187 + $0xd0] sm:$0xff] %v1245
          %1310 = vst [vmem:[%s1187 + $0xd8] sm:$0xff] %v1246
          %1311 = vst [vmem:[%s1187 + $0xe0] sm:$0xff] %v1247
          %1312 = vst [vmem:[%s1187 + $0xe8] sm:$0xff] %v1248
          %1313 = vst [vmem:[%s1187 + $0xf0] sm:$0xff] %v1249
          %1314 = vst [vmem:[%s1187 + $0xf8] sm:$0xff] %v1250
          %1315 = vst [vmem:[%s1187 + $0x100] sm:$0xff] %v1251
          %1316 = vst [vmem:[%s1187 + $0x108] sm:$0xff] %v1252
          %1317 = vst [vmem:[%s1187 + $0x110] sm:$0xff] %v1253
          %1318 = vst [vmem:[%s1187 + $0x118] sm:$0xff] %v1254
          %1319 = vst [vmem:[%s1187 + $0x120] sm:$0xff] %v1255
          %1320 = vst [vmem:[%s1187 + $0x128] sm:$0xff] %v1256
          %1321 = vst [vmem:[%s1187 + $0x130] sm:$0xff] %v1257
          %1322 = vst [vmem:[%s1187 + $0x138] sm:$0xff] %v1258
          %1323 = vst [vmem:[%s1187 + $0x140] sm:$0xff] %v1259
          %1324 = vst [vmem:[%s1187 + $0x148] sm:$0xff] %v1260
          %1325 = vst [vmem:[%s1187 + $0x150] sm:$0xff] %v1261
          %1326 = vst [vmem:[%s1187 + $0x158] sm:$0xff] %v1262
          %1327 = vst [vmem:[%s1187 + $0x160] sm:$0xff] %v1263
          %1328 = vst [vmem:[%s1187 + $0x168] sm:$0xff] %v1264
          %1329 = vst [vmem:[%s1187 + $0x170] sm:$0xff] %v1265
          %1330 = vst [vmem:[%s1187 + $0x178] sm:$0xff] %v1266
          %1331 = vst [vmem:[%s1187 + $0x180] sm:$0xff] %v1267
          %1332 = vst [vmem:[%s1187 + $0x188] sm:$0xff] %v1268
          %1333 = vst [vmem:[%s1187 + $0x190] sm:$0xff] %v1269
          %1334 = vst [vmem:[%s1187 + $0x198] sm:$0xff] %v1270
          %1335 = vst [vmem:[%s1187 + $0x1a0] sm:$0xff] %v1271
          %1336 = vst [vmem:[%s1187 + $0x1a8] sm:$0xff] %v1272
          %1337 = vst [vmem:[%s1187 + $0x1b0] sm:$0xff] %v1273
          %1338 = vst [vmem:[%s1187 + $0x1b8] sm:$0xff] %v1274
          %1339 = vst [vmem:[%s1187 + $0x1c0] sm:$0xff] %v1275
          %1340 = vst [vmem:[%s1187 + $0x1c8] sm:$0xff] %v1276
          %1341 = vst [vmem:[%s1187 + $0x1d0] sm:$0xff] %v1277
          %1342 = vst [vmem:[%s1187 + $0x1d8] sm:$0xff] %v1278
          %1343 = vst [vmem:[%s1187 + $0x1e0] sm:$0xff] %v1279
          %1344 = vst [vmem:[%s1187 + $0x1e8] sm:$0xff] %v1280
          %1345 = vst [vmem:[%s1187 + $0x1f0] sm:$0xff] %v1281
          %1346 = vst [vmem:[%s1187 + $0x1f8] sm:$0xff] %v1282
        $region160: #{tpu_custom_call.1} parent=99 // pred_fallthru
          _
        %v1347 = vld [vmem:[%s1187] sm:$0xff]
        %v1348 = vld [vmem:[%s1187 + $0x8] sm:$0xff]
        %v1349 = vld [vmem:[%s1187 + $0x10] sm:$0xff]
        %v1350 = vld [vmem:[%s1187 + $0x18] sm:$0xff]
        %v1351 = vld [vmem:[%s1187 + $0x20] sm:$0xff]
        %v1352 = vld [vmem:[%s1187 + $0x28] sm:$0xff]
        %v1353 = vld [vmem:[%s1187 + $0x30] sm:$0xff]
        %v1354 = vld [vmem:[%s1187 + $0x38] sm:$0xff]
        %v1355 = vld [vmem:[%s1187 + $0x40] sm:$0xff]
        %v1356 = vld [vmem:[%s1187 + $0x48] sm:$0xff]
        %v1357 = vld [vmem:[%s1187 + $0x50] sm:$0xff]
        %v1358 = vld [vmem:[%s1187 + $0x58] sm:$0xff]
        %v1359 = vld [vmem:[%s1187 + $0x60] sm:$0xff]
        %v1360 = vld [vmem:[%s1187 + $0x68] sm:$0xff]
        %v1361 = vld [vmem:[%s1187 + $0x70] sm:$0xff]
        %v1362 = vld [vmem:[%s1187 + $0x78] sm:$0xff]
        %v1363 = vld [vmem:[%s1187 + $0x80] sm:$0xff]
        %v1364 = vld [vmem:[%s1187 + $0x88] sm:$0xff]
        %v1365 = vld [vmem:[%s1187 + $0x90] sm:$0xff]
        %v1366 = vld [vmem:[%s1187 + $0x98] sm:$0xff]
        %v1367 = vld [vmem:[%s1187 + $0xa0] sm:$0xff]
        %v1368 = vld [vmem:[%s1187 + $0xa8] sm:$0xff]
        %v1369 = vld [vmem:[%s1187 + $0xb0] sm:$0xff]
        %v1370 = vld [vmem:[%s1187 + $0xb8] sm:$0xff]
        %v1371 = vld [vmem:[%s1187 + $0xc0] sm:$0xff]
        %v1372 = vld [vmem:[%s1187 + $0xc8] sm:$0xff]
        %v1373 = vld [vmem:[%s1187 + $0xd0] sm:$0xff]
        %v1374 = vld [vmem:[%s1187 + $0xd8] sm:$0xff]
        %v1375 = vld [vmem:[%s1187 + $0xe0] sm:$0xff]
        %v1376 = vld [vmem:[%s1187 + $0xe8] sm:$0xff]
        %v1377 = vld [vmem:[%s1187 + $0xf0] sm:$0xff]
        %v1378 = vld [vmem:[%s1187 + $0xf8] sm:$0xff]
        %v1379 = vld [vmem:[%s1187 + $0x100] sm:$0xff]
        %v1380 = vld [vmem:[%s1187 + $0x108] sm:$0xff]
        %v1381 = vld [vmem:[%s1187 + $0x110] sm:$0xff]
        %v1382 = vld [vmem:[%s1187 + $0x118] sm:$0xff]
        %v1383 = vld [vmem:[%s1187 + $0x120] sm:$0xff]
        %v1384 = vld [vmem:[%s1187 + $0x128] sm:$0xff]
        %v1385 = vld [vmem:[%s1187 + $0x130] sm:$0xff]
        %v1386 = vld [vmem:[%s1187 + $0x138] sm:$0xff]
        %v1387 = vld [vmem:[%s1187 + $0x140] sm:$0xff]
        %v1388 = vld [vmem:[%s1187 + $0x148] sm:$0xff]
        %v1389 = vld [vmem:[%s1187 + $0x150] sm:$0xff]
        %v1390 = vld [vmem:[%s1187 + $0x158] sm:$0xff]
        %v1391 = vld [vmem:[%s1187 + $0x160] sm:$0xff]
        %v1392 = vld [vmem:[%s1187 + $0x168] sm:$0xff]
        %v1393 = vld [vmem:[%s1187 + $0x170] sm:$0xff]
        %v1394 = vld [vmem:[%s1187 + $0x178] sm:$0xff]
        %v1395 = vld [vmem:[%s1187 + $0x180] sm:$0xff]
        %v1396 = vld [vmem:[%s1187 + $0x188] sm:$0xff]
        %v1397 = vld [vmem:[%s1187 + $0x190] sm:$0xff]
        %v1398 = vld [vmem:[%s1187 + $0x198] sm:$0xff]
        %v1399 = vld [vmem:[%s1187 + $0x1a0] sm:$0xff]
        %v1400 = vld [vmem:[%s1187 + $0x1a8] sm:$0xff]
        %v1401 = vld [vmem:[%s1187 + $0x1b0] sm:$0xff]
        %v1402 = vld [vmem:[%s1187 + $0x1b8] sm:$0xff]
        %v1403 = vld [vmem:[%s1187 + $0x1c0] sm:$0xff]
        %v1404 = vld [vmem:[%s1187 + $0x1c8] sm:$0xff]
        %v1405 = vld [vmem:[%s1187 + $0x1d0] sm:$0xff]
        %v1406 = vld [vmem:[%s1187 + $0x1d8] sm:$0xff]
        %v1407 = vld [vmem:[%s1187 + $0x1e0] sm:$0xff]
        %v1408 = vld [vmem:[%s1187 + $0x1e8] sm:$0xff]
        %v1409 = vld [vmem:[%s1187 + $0x1f0] sm:$0xff]
        %v1410 = vld [vmem:[%s1187 + $0x1f8] sm:$0xff]
        %v1411 = vld [vmem:[%s948] sm:$0x3]
        %v1412 = vld [vmem:[%s1192] sm:$0x3]
        %v1413 = vld [vmem:[%s957] sm:$0xff]
        %v1414 = vld [vmem:[%s957 + $0x8] sm:$0xff]
        %v1415 = vld [vmem:[%s957 + $0x10] sm:$0xff]
        %v1416 = vld [vmem:[%s957 + $0x18] sm:$0xff]
        %v1417 = vld [vmem:[%s957 + $0x20] sm:$0xff]
        %v1418 = vld [vmem:[%s957 + $0x28] sm:$0xff]
        %v1419 = vld [vmem:[%s957 + $0x30] sm:$0xff]
        %v1420 = vld [vmem:[%s957 + $0x38] sm:$0xff]
        %v1421 = vld [vmem:[%s957 + $0x40] sm:$0xff]
        %v1422 = vld [vmem:[%s957 + $0x48] sm:$0xff]
        %v1423 = vld [vmem:[%s957 + $0x50] sm:$0xff]
        %v1424 = vld [vmem:[%s957 + $0x58] sm:$0xff]
        %v1425 = vld [vmem:[%s957 + $0x60] sm:$0xff]
        %v1426 = vld [vmem:[%s957 + $0x68] sm:$0xff]
        %v1427 = vld [vmem:[%s957 + $0x70] sm:$0xff]
        %v1428 = vld [vmem:[%s957 + $0x78] sm:$0xff]
        %v1429 = vld [vmem:[%s957 + $0x80] sm:$0xff]
        %v1430 = vld [vmem:[%s957 + $0x88] sm:$0xff]
        %v1431 = vld [vmem:[%s957 + $0x90] sm:$0xff]
        %v1432 = vld [vmem:[%s957 + $0x98] sm:$0xff]
        %v1433 = vld [vmem:[%s957 + $0xa0] sm:$0xff]
        %v1434 = vld [vmem:[%s957 + $0xa8] sm:$0xff]
        %v1435 = vld [vmem:[%s957 + $0xb0] sm:$0xff]
        %v1436 = vld [vmem:[%s957 + $0xb8] sm:$0xff]
        %v1437 = vld [vmem:[%s957 + $0xc0] sm:$0xff]
        %v1438 = vld [vmem:[%s957 + $0xc8] sm:$0xff]
        %v1439 = vld [vmem:[%s957 + $0xd0] sm:$0xff]
        %v1440 = vld [vmem:[%s957 + $0xd8] sm:$0xff]
        %v1441 = vld [vmem:[%s957 + $0xe0] sm:$0xff]
        %v1442 = vld [vmem:[%s957 + $0xe8] sm:$0xff]
        %v1443 = vld [vmem:[%s957 + $0xf0] sm:$0xff]
        %v1444 = vld [vmem:[%s957 + $0xf8] sm:$0xff]
        %v1445 = vld [vmem:[%s1196] sm:$0x3]
        %v1446 = vld [vmem:[%s966] sm:$0xff]
        %v1447 = vld [vmem:[%s966 + $0x8] sm:$0xff]
        %v1448 = vld [vmem:[%s966 + $0x10] sm:$0xff]
        %v1449 = vld [vmem:[%s966 + $0x18] sm:$0xff]
        %v1450 = vld [vmem:[%s966 + $0x20] sm:$0xff]
        %v1451 = vld [vmem:[%s966 + $0x28] sm:$0xff]
        %v1452 = vld [vmem:[%s966 + $0x30] sm:$0xff]
        %v1453 = vld [vmem:[%s966 + $0x38] sm:$0xff]
        %v1454 = vld [vmem:[%s966 + $0x40] sm:$0xff]
        %v1455 = vld [vmem:[%s966 + $0x48] sm:$0xff]
        %v1456 = vld [vmem:[%s966 + $0x50] sm:$0xff]
        %v1457 = vld [vmem:[%s966 + $0x58] sm:$0xff]
        %v1458 = vld [vmem:[%s966 + $0x60] sm:$0xff]
        %v1459 = vld [vmem:[%s966 + $0x68] sm:$0xff]
        %v1460 = vld [vmem:[%s966 + $0x70] sm:$0xff]
        %v1461 = vld [vmem:[%s966 + $0x78] sm:$0xff]
        %v1462 = vld [vmem:[%s966 + $0x80] sm:$0xff]
        %v1463 = vld [vmem:[%s966 + $0x88] sm:$0xff]
        %v1464 = vld [vmem:[%s966 + $0x90] sm:$0xff]
        %v1465 = vld [vmem:[%s966 + $0x98] sm:$0xff]
        %v1466 = vld [vmem:[%s966 + $0xa0] sm:$0xff]
        %v1467 = vld [vmem:[%s966 + $0xa8] sm:$0xff]
        %v1468 = vld [vmem:[%s966 + $0xb0] sm:$0xff]
        %v1469 = vld [vmem:[%s966 + $0xb8] sm:$0xff]
        %v1470 = vld [vmem:[%s966 + $0xc0] sm:$0xff]
        %v1471 = vld [vmem:[%s966 + $0xc8] sm:$0xff]
        %v1472 = vld [vmem:[%s966 + $0xd0] sm:$0xff]
        %v1473 = vld [vmem:[%s966 + $0xd8] sm:$0xff]
        %v1474 = vld [vmem:[%s966 + $0xe0] sm:$0xff]
        %v1475 = vld [vmem:[%s966 + $0xe8] sm:$0xff]
        %v1476 = vld [vmem:[%s966 + $0xf0] sm:$0xff]
        %v1477 = vld [vmem:[%s966 + $0xf8] sm:$0xff]
        %v1478 = vld [vmem:[%s975] sm:$0x3]
        %v1479 = vld [vmem:[%s984] sm:$0xff]
        %v1480 = vld [vmem:[%s984 + $0x8] sm:$0xff]
        %v1481 = vld [vmem:[%s984 + $0x10] sm:$0xff]
        %v1482 = vld [vmem:[%s984 + $0x18] sm:$0xff]
        %v1483 = vld [vmem:[%s984 + $0x20] sm:$0xff]
        %v1484 = vld [vmem:[%s984 + $0x28] sm:$0xff]
        %v1485 = vld [vmem:[%s984 + $0x30] sm:$0xff]
        %v1486 = vld [vmem:[%s984 + $0x38] sm:$0xff]
        %v1487 = vld [vmem:[%s984 + $0x40] sm:$0xff]
        %v1488 = vld [vmem:[%s984 + $0x48] sm:$0xff]
        %v1489 = vld [vmem:[%s984 + $0x50] sm:$0xff]
        %v1490 = vld [vmem:[%s984 + $0x58] sm:$0xff]
        %v1491 = vld [vmem:[%s984 + $0x60] sm:$0xff]
        %v1492 = vld [vmem:[%s984 + $0x68] sm:$0xff]
        %v1493 = vld [vmem:[%s984 + $0x70] sm:$0xff]
        %v1494 = vld [vmem:[%s984 + $0x78] sm:$0xff]
        %v1495 = vld [vmem:[%s984 + $0x80] sm:$0xff]
        %v1496 = vld [vmem:[%s984 + $0x88] sm:$0xff]
        %v1497 = vld [vmem:[%s984 + $0x90] sm:$0xff]
        %v1498 = vld [vmem:[%s984 + $0x98] sm:$0xff]
        %v1499 = vld [vmem:[%s984 + $0xa0] sm:$0xff]
        %v1500 = vld [vmem:[%s984 + $0xa8] sm:$0xff]
        %v1501 = vld [vmem:[%s984 + $0xb0] sm:$0xff]
        %v1502 = vld [vmem:[%s984 + $0xb8] sm:$0xff]
        %v1503 = vld [vmem:[%s984 + $0xc0] sm:$0xff]
        %v1504 = vld [vmem:[%s984 + $0xc8] sm:$0xff]
        %v1505 = vld [vmem:[%s984 + $0xd0] sm:$0xff]
        %v1506 = vld [vmem:[%s984 + $0xd8] sm:$0xff]
        %v1507 = vld [vmem:[%s984 + $0xe0] sm:$0xff]
        %v1508 = vld [vmem:[%s984 + $0xe8] sm:$0xff]
        %v1509 = vld [vmem:[%s984 + $0xf0] sm:$0xff]
        %v1510 = vld [vmem:[%s984 + $0xf8] sm:$0xff]
        %v1511 = vld [vmem:[%s993] sm:$0x3]
        %v1512 = vld [vmem:[%s1002] sm:$0xff]
        %v1513 = vld [vmem:[%s1002 + $0x8] sm:$0xff]
        %v1514 = vld [vmem:[%s1002 + $0x10] sm:$0xff]
        %v1515 = vld [vmem:[%s1002 + $0x18] sm:$0xff]
        %v1516 = vld [vmem:[%s1002 + $0x20] sm:$0xff]
        %v1517 = vld [vmem:[%s1002 + $0x28] sm:$0xff]
        %v1518 = vld [vmem:[%s1002 + $0x30] sm:$0xff]
        %v1519 = vld [vmem:[%s1002 + $0x38] sm:$0xff]
        %v1520 = vld [vmem:[%s1002 + $0x40] sm:$0xff]
        %v1521 = vld [vmem:[%s1002 + $0x48] sm:$0xff]
        %v1522 = vld [vmem:[%s1002 + $0x50] sm:$0xff]
        %v1523 = vld [vmem:[%s1002 + $0x58] sm:$0xff]
        %v1524 = vld [vmem:[%s1002 + $0x60] sm:$0xff]
        %v1525 = vld [vmem:[%s1002 + $0x68] sm:$0xff]
        %v1526 = vld [vmem:[%s1002 + $0x70] sm:$0xff]
        %v1527 = vld [vmem:[%s1002 + $0x78] sm:$0xff]
        %v1528 = vld [vmem:[%s1002 + $0x80] sm:$0xff]
        %v1529 = vld [vmem:[%s1002 + $0x88] sm:$0xff]
        %v1530 = vld [vmem:[%s1002 + $0x90] sm:$0xff]
        %v1531 = vld [vmem:[%s1002 + $0x98] sm:$0xff]
        %v1532 = vld [vmem:[%s1002 + $0xa0] sm:$0xff]
        %v1533 = vld [vmem:[%s1002 + $0xa8] sm:$0xff]
        %v1534 = vld [vmem:[%s1002 + $0xb0] sm:$0xff]
        %v1535 = vld [vmem:[%s1002 + $0xb8] sm:$0xff]
        %v1536 = vld [vmem:[%s1002 + $0xc0] sm:$0xff]
        %v1537 = vld [vmem:[%s1002 + $0xc8] sm:$0xff]
        %v1538 = vld [vmem:[%s1002 + $0xd0] sm:$0xff]
        %v1539 = vld [vmem:[%s1002 + $0xd8] sm:$0xff]
        %v1540 = vld [vmem:[%s1002 + $0xe0] sm:$0xff]
        %v1541 = vld [vmem:[%s1002 + $0xe8] sm:$0xff]
        %v1542 = vld [vmem:[%s1002 + $0xf0] sm:$0xff]
        %v1543 = vld [vmem:[%s1002 + $0xf8] sm:$0xff]
        %v1544 = vld [vmem:[%s1200] sm:$0x3]
        %v1545 = vld [vmem:[%s1011] sm:$0xff]
        %v1546 = vld [vmem:[%s1011 + $0x8] sm:$0xff]
        %v1547 = vld [vmem:[%s1011 + $0x10] sm:$0xff]
        %v1548 = vld [vmem:[%s1011 + $0x18] sm:$0xff]
        %v1549 = vld [vmem:[%s1011 + $0x20] sm:$0xff]
        %v1550 = vld [vmem:[%s1011 + $0x28] sm:$0xff]
        %v1551 = vld [vmem:[%s1011 + $0x30] sm:$0xff]
        %v1552 = vld [vmem:[%s1011 + $0x38] sm:$0xff]
        %v1553 = vld [vmem:[%s1011 + $0x40] sm:$0xff]
        %v1554 = vld [vmem:[%s1011 + $0x48] sm:$0xff]
        %v1555 = vld [vmem:[%s1011 + $0x50] sm:$0xff]
        %v1556 = vld [vmem:[%s1011 + $0x58] sm:$0xff]
        %v1557 = vld [vmem:[%s1011 + $0x60] sm:$0xff]
        %v1558 = vld [vmem:[%s1011 + $0x68] sm:$0xff]
        %v1559 = vld [vmem:[%s1011 + $0x70] sm:$0xff]
        %v1560 = vld [vmem:[%s1011 + $0x78] sm:$0xff]
        %v1561 = vld [vmem:[%s1011 + $0x80] sm:$0xff]
        %v1562 = vld [vmem:[%s1011 + $0x88] sm:$0xff]
        %v1563 = vld [vmem:[%s1011 + $0x90] sm:$0xff]
        %v1564 = vld [vmem:[%s1011 + $0x98] sm:$0xff]
        %v1565 = vld [vmem:[%s1011 + $0xa0] sm:$0xff]
        %v1566 = vld [vmem:[%s1011 + $0xa8] sm:$0xff]
        %v1567 = vld [vmem:[%s1011 + $0xb0] sm:$0xff]
        %v1568 = vld [vmem:[%s1011 + $0xb8] sm:$0xff]
        %v1569 = vld [vmem:[%s1011 + $0xc0] sm:$0xff]
        %v1570 = vld [vmem:[%s1011 + $0xc8] sm:$0xff]
        %v1571 = vld [vmem:[%s1011 + $0xd0] sm:$0xff]
        %v1572 = vld [vmem:[%s1011 + $0xd8] sm:$0xff]
        %v1573 = vld [vmem:[%s1011 + $0xe0] sm:$0xff]
        %v1574 = vld [vmem:[%s1011 + $0xe8] sm:$0xff]
        %v1575 = vld [vmem:[%s1011 + $0xf0] sm:$0xff]
        %v1576 = vld [vmem:[%s1011 + $0xf8] sm:$0xff]
        %v1577 = vld [vmem:[%s1020] sm:$0x3]
        %v1578 = vld [vmem:[%s1204] sm:$0x3]
        %v1579 = vld [vmem:[%s1029] sm:$0x3]
        %v1580 = vld [vmem:[%s1038] sm:$0xff]
        %v1581 = vld [vmem:[%s1038 + $0x8] sm:$0xff]
        %v1582 = vld [vmem:[%s1038 + $0x10] sm:$0xff]
        %v1583 = vld [vmem:[%s1038 + $0x18] sm:$0xff]
        %v1584 = vld [vmem:[%s1038 + $0x20] sm:$0xff]
        %v1585 = vld [vmem:[%s1038 + $0x28] sm:$0xff]
        %v1586 = vld [vmem:[%s1038 + $0x30] sm:$0xff]
        %v1587 = vld [vmem:[%s1038 + $0x38] sm:$0xff]
        %v1588 = vld [vmem:[%s1038 + $0x40] sm:$0xff]
        %v1589 = vld [vmem:[%s1038 + $0x48] sm:$0xff]
        %v1590 = vld [vmem:[%s1038 + $0x50] sm:$0xff]
        %v1591 = vld [vmem:[%s1038 + $0x58] sm:$0xff]
        %v1592 = vld [vmem:[%s1038 + $0x60] sm:$0xff]
        %v1593 = vld [vmem:[%s1038 + $0x68] sm:$0xff]
        %v1594 = vld [vmem:[%s1038 + $0x70] sm:$0xff]
        %v1595 = vld [vmem:[%s1038 + $0x78] sm:$0xff]
        %v1596 = vld [vmem:[%s1038 + $0x80] sm:$0xff]
        %v1597 = vld [vmem:[%s1038 + $0x88] sm:$0xff]
        %v1598 = vld [vmem:[%s1038 + $0x90] sm:$0xff]
        %v1599 = vld [vmem:[%s1038 + $0x98] sm:$0xff]
        %v1600 = vld [vmem:[%s1038 + $0xa0] sm:$0xff]
        %v1601 = vld [vmem:[%s1038 + $0xa8] sm:$0xff]
        %v1602 = vld [vmem:[%s1038 + $0xb0] sm:$0xff]
        %v1603 = vld [vmem:[%s1038 + $0xb8] sm:$0xff]
        %v1604 = vld [vmem:[%s1038 + $0xc0] sm:$0xff]
        %v1605 = vld [vmem:[%s1038 + $0xc8] sm:$0xff]
        %v1606 = vld [vmem:[%s1038 + $0xd0] sm:$0xff]
        %v1607 = vld [vmem:[%s1038 + $0xd8] sm:$0xff]
        %v1608 = vld [vmem:[%s1038 + $0xe0] sm:$0xff]
        %v1609 = vld [vmem:[%s1038 + $0xe8] sm:$0xff]
        %v1610 = vld [vmem:[%s1038 + $0xf0] sm:$0xff]
        %v1611 = vld [vmem:[%s1038 + $0xf8] sm:$0xff]
        %v1612 = vld [vmem:[%s1038 + $0x100] sm:$0xff]
        %v1613 = vld [vmem:[%s1038 + $0x108] sm:$0xff]
        %v1614 = vld [vmem:[%s1038 + $0x110] sm:$0xff]
        %v1615 = vld [vmem:[%s1038 + $0x118] sm:$0xff]
        %v1616 = vld [vmem:[%s1038 + $0x120] sm:$0xff]
        %v1617 = vld [vmem:[%s1038 + $0x128] sm:$0xff]
        %v1618 = vld [vmem:[%s1038 + $0x130] sm:$0xff]
        %v1619 = vld [vmem:[%s1038 + $0x138] sm:$0xff]
        %v1620 = vld [vmem:[%s1038 + $0x140] sm:$0xff]
        %v1621 = vld [vmem:[%s1038 + $0x148] sm:$0xff]
        %v1622 = vld [vmem:[%s1038 + $0x150] sm:$0xff]
        %v1623 = vld [vmem:[%s1038 + $0x158] sm:$0xff]
        %v1624 = vld [vmem:[%s1038 + $0x160] sm:$0xff]
        %v1625 = vld [vmem:[%s1038 + $0x168] sm:$0xff]
        %v1626 = vld [vmem:[%s1038 + $0x170] sm:$0xff]
        %v1627 = vld [vmem:[%s1038 + $0x178] sm:$0xff]
        %v1628 = vld [vmem:[%s1038 + $0x180] sm:$0xff]
        %v1629 = vld [vmem:[%s1038 + $0x188] sm:$0xff]
        %v1630 = vld [vmem:[%s1038 + $0x190] sm:$0xff]
        %v1631 = vld [vmem:[%s1038 + $0x198] sm:$0xff]
        %v1632 = vld [vmem:[%s1038 + $0x1a0] sm:$0xff]
        %v1633 = vld [vmem:[%s1038 + $0x1a8] sm:$0xff]
        %v1634 = vld [vmem:[%s1038 + $0x1b0] sm:$0xff]
        %v1635 = vld [vmem:[%s1038 + $0x1b8] sm:$0xff]
        %v1636 = vld [vmem:[%s1038 + $0x1c0] sm:$0xff]
        %v1637 = vld [vmem:[%s1038 + $0x1c8] sm:$0xff]
        %v1638 = vld [vmem:[%s1038 + $0x1d0] sm:$0xff]
        %v1639 = vld [vmem:[%s1038 + $0x1d8] sm:$0xff]
        %v1640 = vld [vmem:[%s1038 + $0x1e0] sm:$0xff]
        %v1641 = vld [vmem:[%s1038 + $0x1e8] sm:$0xff]
        %v1642 = vld [vmem:[%s1038 + $0x1f0] sm:$0xff]
        %v1643 = vld [vmem:[%s1038 + $0x1f8] sm:$0xff]
        %v1644 = vld [vmem:[%s1208] sm:$0xf]
        %v1645 = vld [vmem:[%s1047] sm:$0xff]
        %v1646 = vld [vmem:[%s1047 + $0x8] sm:$0xff]
        %v1647 = vld [vmem:[%s1047 + $0x10] sm:$0xff]
        %v1648 = vld [vmem:[%s1047 + $0x18] sm:$0xff]
        %v1649 = vld [vmem:[%s1047 + $0x20] sm:$0xff]
        %v1650 = vld [vmem:[%s1047 + $0x28] sm:$0xff]
        %v1651 = vld [vmem:[%s1047 + $0x30] sm:$0xff]
        %v1652 = vld [vmem:[%s1047 + $0x38] sm:$0xff]
        %v1653 = vld [vmem:[%s1047 + $0x40] sm:$0xff]
        %v1654 = vld [vmem:[%s1047 + $0x48] sm:$0xff]
        %v1655 = vld [vmem:[%s1047 + $0x50] sm:$0xff]
        %v1656 = vld [vmem:[%s1047 + $0x58] sm:$0xff]
        %v1657 = vld [vmem:[%s1047 + $0x60] sm:$0xff]
        %v1658 = vld [vmem:[%s1047 + $0x68] sm:$0xff]
        %v1659 = vld [vmem:[%s1047 + $0x70] sm:$0xff]
        %v1660 = vld [vmem:[%s1047 + $0x78] sm:$0xff]
        %v1661 = vld [vmem:[%s1047 + $0x80] sm:$0xff]
        %v1662 = vld [vmem:[%s1047 + $0x88] sm:$0xff]
        %v1663 = vld [vmem:[%s1047 + $0x90] sm:$0xff]
        %v1664 = vld [vmem:[%s1047 + $0x98] sm:$0xff]
        %v1665 = vld [vmem:[%s1047 + $0xa0] sm:$0xff]
        %v1666 = vld [vmem:[%s1047 + $0xa8] sm:$0xff]
        %v1667 = vld [vmem:[%s1047 + $0xb0] sm:$0xff]
        %v1668 = vld [vmem:[%s1047 + $0xb8] sm:$0xff]
        %v1669 = vld [vmem:[%s1047 + $0xc0] sm:$0xff]
        %v1670 = vld [vmem:[%s1047 + $0xc8] sm:$0xff]
        %v1671 = vld [vmem:[%s1047 + $0xd0] sm:$0xff]
        %v1672 = vld [vmem:[%s1047 + $0xd8] sm:$0xff]
        %v1673 = vld [vmem:[%s1047 + $0xe0] sm:$0xff]
        %v1674 = vld [vmem:[%s1047 + $0xe8] sm:$0xff]
        %v1675 = vld [vmem:[%s1047 + $0xf0] sm:$0xff]
        %v1676 = vld [vmem:[%s1047 + $0xf8] sm:$0xff]
        %v1677 = vld [vmem:[%s1047 + $0x100] sm:$0xff]
        %v1678 = vld [vmem:[%s1047 + $0x108] sm:$0xff]
        %v1679 = vld [vmem:[%s1047 + $0x110] sm:$0xff]
        %v1680 = vld [vmem:[%s1047 + $0x118] sm:$0xff]
        %v1681 = vld [vmem:[%s1047 + $0x120] sm:$0xff]
        %v1682 = vld [vmem:[%s1047 + $0x128] sm:$0xff]
        %v1683 = vld [vmem:[%s1047 + $0x130] sm:$0xff]
        %v1684 = vld [vmem:[%s1047 + $0x138] sm:$0xff]
        %v1685 = vld [vmem:[%s1047 + $0x140] sm:$0xff]
        %v1686 = vld [vmem:[%s1047 + $0x148] sm:$0xff]
        %v1687 = vld [vmem:[%s1047 + $0x150] sm:$0xff]
        %v1688 = vld [vmem:[%s1047 + $0x158] sm:$0xff]
        %v1689 = vld [vmem:[%s1047 + $0x160] sm:$0xff]
        %v1690 = vld [vmem:[%s1047 + $0x168] sm:$0xff]
        %v1691 = vld [vmem:[%s1047 + $0x170] sm:$0xff]
        %v1692 = vld [vmem:[%s1047 + $0x178] sm:$0xff]
        %v1693 = vld [vmem:[%s1047 + $0x180] sm:$0xff]
        %v1694 = vld [vmem:[%s1047 + $0x188] sm:$0xff]
        %v1695 = vld [vmem:[%s1047 + $0x190] sm:$0xff]
        %v1696 = vld [vmem:[%s1047 + $0x198] sm:$0xff]
        %v1697 = vld [vmem:[%s1047 + $0x1a0] sm:$0xff]
        %v1698 = vld [vmem:[%s1047 + $0x1a8] sm:$0xff]
        %v1699 = vld [vmem:[%s1047 + $0x1b0] sm:$0xff]
        %v1700 = vld [vmem:[%s1047 + $0x1b8] sm:$0xff]
        %v1701 = vld [vmem:[%s1047 + $0x1c0] sm:$0xff]
        %v1702 = vld [vmem:[%s1047 + $0x1c8] sm:$0xff]
        %v1703 = vld [vmem:[%s1047 + $0x1d0] sm:$0xff]
        %v1704 = vld [vmem:[%s1047 + $0x1d8] sm:$0xff]
        %v1705 = vld [vmem:[%s1047 + $0x1e0] sm:$0xff]
        %v1706 = vld [vmem:[%s1047 + $0x1e8] sm:$0xff]
        %v1707 = vld [vmem:[%s1047 + $0x1f0] sm:$0xff]
        %v1708 = vld [vmem:[%s1047 + $0x1f8] sm:$0xff]
        %v1709 = vld [vmem:[%s1212] sm:$0x3]
        %v1710 = vld [vmem:[#allocation5] sm:$0xff]
        %v1711 = vld [vmem:[#allocation5 + $0x8] sm:$0xff]
        %v1712 = vld [vmem:[#allocation5 + $0x10] sm:$0xff]
        %v1713 = vld [vmem:[#allocation5 + $0x18] sm:$0xff]
        %v1714 = vld [vmem:[#allocation5 + $0x20] sm:$0xff]
        %v1715 = vld [vmem:[#allocation5 + $0x28] sm:$0xff]
        %v1716 = vld [vmem:[#allocation5 + $0x30] sm:$0xff]
        %v1717 = vld [vmem:[#allocation5 + $0x38] sm:$0xff]
        %v1718 = vld [vmem:[#allocation5 + $0x40] sm:$0xff]
        %v1719 = vld [vmem:[#allocation5 + $0x48] sm:$0xff]
        %v1720 = vld [vmem:[#allocation5 + $0x50] sm:$0xff]
        %v1721 = vld [vmem:[#allocation5 + $0x58] sm:$0xff]
        %v1722 = vld [vmem:[#allocation5 + $0x60] sm:$0xff]
        %v1723 = vld [vmem:[#allocation5 + $0x68] sm:$0xff]
        %v1724 = vld [vmem:[#allocation5 + $0x70] sm:$0xff]
        %v1725 = vld [vmem:[#allocation5 + $0x78] sm:$0xff]
        %v1726 = vld [vmem:[#allocation5 + $0x80] sm:$0xff]
        %v1727 = vld [vmem:[#allocation5 + $0x88] sm:$0xff]
        %v1728 = vld [vmem:[#allocation5 + $0x90] sm:$0xff]
        %v1729 = vld [vmem:[#allocation5 + $0x98] sm:$0xff]
        %v1730 = vld [vmem:[#allocation5 + $0xa0] sm:$0xff]
        %v1731 = vld [vmem:[#allocation5 + $0xa8] sm:$0xff]
        %v1732 = vld [vmem:[#allocation5 + $0xb0] sm:$0xff]
        %v1733 = vld [vmem:[#allocation5 + $0xb8] sm:$0xff]
        %v1734 = vld [vmem:[#allocation5 + $0xc0] sm:$0xff]
        %v1735 = vld [vmem:[#allocation5 + $0xc8] sm:$0xff]
        %v1736 = vld [vmem:[#allocation5 + $0xd0] sm:$0xff]
        %v1737 = vld [vmem:[#allocation5 + $0xd8] sm:$0xff]
        %v1738 = vld [vmem:[#allocation5 + $0xe0] sm:$0xff]
        %v1739 = vld [vmem:[#allocation5 + $0xe8] sm:$0xff]
        %v1740 = vld [vmem:[#allocation5 + $0xf0] sm:$0xff]
        %v1741 = vld [vmem:[#allocation5 + $0xf8] sm:$0xff]
        %v1742 = vadd.f32 %v1347, %v1348
        %1743 = vadd.xlane.f32.xlu0 %v1742
        %v1744 = vpop.xlane.xlu0 %1743
        %v1745 = vadd.f32 %v1349, %v1350
        %1746 = vadd.xlane.f32.xlu0 %v1745
        %v1747 = vpop.xlane.xlu0 %1746
        %v1748 = vadd.f32 %v1351, %v1352
        %1749 = vadd.xlane.f32.xlu0 %v1748
        %v1750 = vpop.xlane.xlu0 %1749
        %v1751 = vadd.f32 %v1353, %v1354
        %1752 = vadd.xlane.f32.xlu0 %v1751
        %v1753 = vpop.xlane.xlu0 %1752
        %v1754 = vadd.f32 %v1355, %v1356
        %1755 = vadd.xlane.f32.xlu0 %v1754
        %v1756 = vpop.xlane.xlu0 %1755
        %v1757 = vadd.f32 %v1357, %v1358
        %1758 = vadd.xlane.f32.xlu0 %v1757
        %v1759 = vpop.xlane.xlu0 %1758
        %v1760 = vadd.f32 %v1359, %v1360
        %1761 = vadd.xlane.f32.xlu0 %v1760
        %v1762 = vpop.xlane.xlu0 %1761
        %v1763 = vadd.f32 %v1361, %v1362
        %1764 = vadd.xlane.f32.xlu0 %v1763
        %v1765 = vpop.xlane.xlu0 %1764
        %v1766 = vadd.f32 %v1363, %v1364
        %1767 = vadd.xlane.f32.xlu0 %v1766
        %v1768 = vpop.xlane.xlu0 %1767
        %v1769 = vadd.f32 %v1365, %v1366
        %1770 = vadd.xlane.f32.xlu0 %v1769
        %v1771 = vpop.xlane.xlu0 %1770
        %v1772 = vadd.f32 %v1367, %v1368
        %1773 = vadd.xlane.f32.xlu0 %v1772
        %v1774 = vpop.xlane.xlu0 %1773
        %v1775 = vadd.f32 %v1369, %v1370
        %1776 = vadd.xlane.f32.xlu0 %v1775
        %v1777 = vpop.xlane.xlu0 %1776
        %v1778 = vadd.f32 %v1371, %v1372
        %1779 = vadd.xlane.f32.xlu0 %v1778
        %v1780 = vpop.xlane.xlu0 %1779
        %v1781 = vadd.f32 %v1373, %v1374
        %1782 = vadd.xlane.f32.xlu0 %v1781
        %v1783 = vpop.xlane.xlu0 %1782
        %v1784 = vadd.f32 %v1375, %v1376
        %1785 = vadd.xlane.f32.xlu0 %v1784
        %v1786 = vpop.xlane.xlu0 %1785
        %v1787 = vadd.f32 %v1377, %v1378
        %1788 = vadd.xlane.f32.xlu0 %v1787
        %v1789 = vpop.xlane.xlu0 %1788
        %v1790 = vadd.f32 %v1379, %v1380
        %1791 = vadd.xlane.f32.xlu0 %v1790
        %v1792 = vpop.xlane.xlu0 %1791
        %v1793 = vadd.f32 %v1381, %v1382
        %1794 = vadd.xlane.f32.xlu0 %v1793
        %v1795 = vpop.xlane.xlu0 %1794
        %v1796 = vadd.f32 %v1383, %v1384
        %1797 = vadd.xlane.f32.xlu0 %v1796
        %v1798 = vpop.xlane.xlu0 %1797
        %v1799 = vadd.f32 %v1385, %v1386
        %1800 = vadd.xlane.f32.xlu0 %v1799
        %v1801 = vpop.xlane.xlu0 %1800
        %v1802 = vadd.f32 %v1387, %v1388
        %1803 = vadd.xlane.f32.xlu0 %v1802
        %v1804 = vpop.xlane.xlu0 %1803
        %v1805 = vadd.f32 %v1389, %v1390
        %1806 = vadd.xlane.f32.xlu0 %v1805
        %v1807 = vpop.xlane.xlu0 %1806
        %v1808 = vadd.f32 %v1391, %v1392
        %1809 = vadd.xlane.f32.xlu0 %v1808
        %v1810 = vpop.xlane.xlu0 %1809
        %v1811 = vadd.f32 %v1393, %v1394
        %1812 = vadd.xlane.f32.xlu0 %v1811
        %v1813 = vpop.xlane.xlu0 %1812
        %v1814 = vadd.f32 %v1395, %v1396
        %1815 = vadd.xlane.f32.xlu0 %v1814
        %v1816 = vpop.xlane.xlu0 %1815
        %v1817 = vadd.f32 %v1397, %v1398
        %1818 = vadd.xlane.f32.xlu0 %v1817
        %v1819 = vpop.xlane.xlu0 %1818
        %v1820 = vadd.f32 %v1399, %v1400
        %1821 = vadd.xlane.f32.xlu0 %v1820
        %v1822 = vpop.xlane.xlu0 %1821
        %v1823 = vadd.f32 %v1401, %v1402
        %1824 = vadd.xlane.f32.xlu0 %v1823
        %v1825 = vpop.xlane.xlu0 %1824
        %v1826 = vadd.f32 %v1403, %v1404
        %1827 = vadd.xlane.f32.xlu0 %v1826
        %v1828 = vpop.xlane.xlu0 %1827
        %v1829 = vadd.f32 %v1405, %v1406
        %1830 = vadd.xlane.f32.xlu0 %v1829
        %v1831 = vpop.xlane.xlu0 %1830
        %v1832 = vadd.f32 %v1407, %v1408
        %1833 = vadd.xlane.f32.xlu0 %v1832
        %v1834 = vpop.xlane.xlu0 %1833
        %v1835 = vadd.f32 %v1409, %v1410
        %1836 = vadd.xlane.f32.xlu0 %v1835
        %v1837 = vpop.xlane.xlu0 %1836
        %v1838 = vrcp.pop 256.0
        %v1839 = vmul.f32 %v1744, %v1838
        %v1840 = vmul.f32 %v1747, %v1838
        %v1841 = vmul.f32 %v1750, %v1838
        %v1842 = vmul.f32 %v1753, %v1838
        %v1843 = vmul.f32 %v1756, %v1838
        %v1844 = vmul.f32 %v1759, %v1838
        %v1845 = vmul.f32 %v1762, %v1838
        %v1846 = vmul.f32 %v1765, %v1838
        %v1847 = vmul.f32 %v1768, %v1838
        %v1848 = vmul.f32 %v1771, %v1838
        %v1849 = vmul.f32 %v1774, %v1838
        %v1850 = vmul.f32 %v1777, %v1838
        %v1851 = vmul.f32 %v1780, %v1838
        %v1852 = vmul.f32 %v1783, %v1838
        %v1853 = vmul.f32 %v1786, %v1838
        %v1854 = vmul.f32 %v1789, %v1838
        %v1855 = vmul.f32 %v1792, %v1838
        %v1856 = vmul.f32 %v1795, %v1838
        %v1857 = vmul.f32 %v1798, %v1838
        %v1858 = vmul.f32 %v1801, %v1838
        %v1859 = vmul.f32 %v1804, %v1838
        %v1860 = vmul.f32 %v1807, %v1838
        %v1861 = vmul.f32 %v1810, %v1838
        %v1862 = vmul.f32 %v1813, %v1838
        %v1863 = vmul.f32 %v1816, %v1838
        %v1864 = vmul.f32 %v1819, %v1838
        %v1865 = vmul.f32 %v1822, %v1838
        %v1866 = vmul.f32 %v1825, %v1838
        %v1867 = vmul.f32 %v1828, %v1838
        %v1868 = vmul.f32 %v1831, %v1838
        %v1869 = vmul.f32 %v1834, %v1838
        %v1870 = vmul.f32 %v1837, %v1838
        %v1871 = vsub.f32 %v1347, %v1839
        %v1872 = vsub.f32 %v1348, %v1839
        %v1873 = vsub.f32 %v1349, %v1840
        %v1874 = vsub.f32 %v1350, %v1840
        %v1875 = vsub.f32 %v1351, %v1841
        %v1876 = vsub.f32 %v1352, %v1841
        %v1877 = vsub.f32 %v1353, %v1842
        %v1878 = vsub.f32 %v1354, %v1842
        %v1879 = vsub.f32 %v1355, %v1843
        %v1880 = vsub.f32 %v1356, %v1843
        %v1881 = vsub.f32 %v1357, %v1844
        %v1882 = vsub.f32 %v1358, %v1844
        %v1883 = vsub.f32 %v1359, %v1845
        %v1884 = vsub.f32 %v1360, %v1845
        %v1885 = vsub.f32 %v1361, %v1846
        %v1886 = vsub.f32 %v1362, %v1846
        %v1887 = vsub.f32 %v1363, %v1847
        %v1888 = vsub.f32 %v1364, %v1847
        %v1889 = vsub.f32 %v1365, %v1848
        %v1890 = vsub.f32 %v1366, %v1848
        %v1891 = vsub.f32 %v1367, %v1849
        %v1892 = vsub.f32 %v1368, %v1849
        %v1893 = vsub.f32 %v1369, %v1850
        %v1894 = vsub.f32 %v1370, %v1850
        %v1895 = vsub.f32 %v1371, %v1851
        %v1896 = vsub.f32 %v1372, %v1851
        %v1897 = vsub.f32 %v1373, %v1852
        %v1898 = vsub.f32 %v1374, %v1852
        %v1899 = vsub.f32 %v1375, %v1853
        %v1900 = vsub.f32 %v1376, %v1853
        %v1901 = vsub.f32 %v1377, %v1854
        %v1902 = vsub.f32 %v1378, %v1854
        %v1903 = vsub.f32 %v1379, %v1855
        %v1904 = vsub.f32 %v1380, %v1855
        %v1905 = vsub.f32 %v1381, %v1856
        %v1906 = vsub.f32 %v1382, %v1856
        %v1907 = vsub.f32 %v1383, %v1857
        %v1908 = vsub.f32 %v1384, %v1857
        %v1909 = vsub.f32 %v1385, %v1858
        %v1910 = vsub.f32 %v1386, %v1858
        %v1911 = vsub.f32 %v1387, %v1859
        %v1912 = vsub.f32 %v1388, %v1859
        %v1913 = vsub.f32 %v1389, %v1860
        %v1914 = vsub.f32 %v1390, %v1860
        %v1915 = vsub.f32 %v1391, %v1861
        %v1916 = vsub.f32 %v1392, %v1861
        %v1917 = vsub.f32 %v1393, %v1862
        %v1918 = vsub.f32 %v1394, %v1862
        %v1919 = vsub.f32 %v1395, %v1863
        %v1920 = vsub.f32 %v1396, %v1863
        %v1921 = vsub.f32 %v1397, %v1864
        %v1922 = vsub.f32 %v1398, %v1864
        %v1923 = vsub.f32 %v1399, %v1865
        %v1924 = vsub.f32 %v1400, %v1865
        %v1925 = vsub.f32 %v1401, %v1866
        %v1926 = vsub.f32 %v1402, %v1866
        %v1927 = vsub.f32 %v1403, %v1867
        %v1928 = vsub.f32 %v1404, %v1867
        %v1929 = vsub.f32 %v1405, %v1868
        %v1930 = vsub.f32 %v1406, %v1868
        %v1931 = vsub.f32 %v1407, %v1869
        %v1932 = vsub.f32 %v1408, %v1869
        %v1933 = vsub.f32 %v1409, %v1870
        %v1934 = vsub.f32 %v1410, %v1870
        %v1935 = vmul.f32 %v1871, %v1871
        %v1936 = vmul.f32 %v1872, %v1872
        %v1937 = vmul.f32 %v1873, %v1873
        %v1938 = vmul.f32 %v1874, %v1874
        %v1939 = vmul.f32 %v1875, %v1875
        %v1940 = vmul.f32 %v1876, %v1876
        %v1941 = vmul.f32 %v1877, %v1877
        %v1942 = vmul.f32 %v1878, %v1878
        %v1943 = vmul.f32 %v1879, %v1879
        %v1944 = vmul.f32 %v1880, %v1880
        %v1945 = vmul.f32 %v1881, %v1881
        %v1946 = vmul.f32 %v1882, %v1882
        %v1947 = vmul.f32 %v1883, %v1883
        %v1948 = vmul.f32 %v1884, %v1884
        %v1949 = vmul.f32 %v1885, %v1885
        %v1950 = vmul.f32 %v1886, %v1886
        %v1951 = vmul.f32 %v1887, %v1887
        %v1952 = vmul.f32 %v1888, %v1888
        %v1953 = vmul.f32 %v1889, %v1889
        %v1954 = vmul.f32 %v1890, %v1890
        %v1955 = vmul.f32 %v1891, %v1891
        %v1956 = vmul.f32 %v1892, %v1892
        %v1957 = vmul.f32 %v1893, %v1893
        %v1958 = vmul.f32 %v1894, %v1894
        %v1959 = vmul.f32 %v1895, %v1895
        %v1960 = vmul.f32 %v1896, %v1896
        %v1961 = vmul.f32 %v1897, %v1897
        %v1962 = vmul.f32 %v1898, %v1898
        %v1963 = vmul.f32 %v1899, %v1899
        %v1964 = vmul.f32 %v1900, %v1900
        %v1965 = vmul.f32 %v1901, %v1901
        %v1966 = vmul.f32 %v1902, %v1902
        %v1967 = vmul.f32 %v1903, %v1903
        %v1968 = vmul.f32 %v1904, %v1904
        %v1969 = vmul.f32 %v1905, %v1905
        %v1970 = vmul.f32 %v1906, %v1906
        %v1971 = vmul.f32 %v1907, %v1907
        %v1972 = vmul.f32 %v1908, %v1908
        %v1973 = vmul.f32 %v1909, %v1909
        %v1974 = vmul.f32 %v1910, %v1910
        %v1975 = vmul.f32 %v1911, %v1911
        %v1976 = vmul.f32 %v1912, %v1912
        %v1977 = vmul.f32 %v1913, %v1913
        %v1978 = vmul.f32 %v1914, %v1914
        %v1979 = vmul.f32 %v1915, %v1915
        %v1980 = vmul.f32 %v1916, %v1916
        %v1981 = vmul.f32 %v1917, %v1917
        %v1982 = vmul.f32 %v1918, %v1918
        %v1983 = vmul.f32 %v1919, %v1919
        %v1984 = vmul.f32 %v1920, %v1920
        %v1985 = vmul.f32 %v1921, %v1921
        %v1986 = vmul.f32 %v1922, %v1922
        %v1987 = vmul.f32 %v1923, %v1923
        %v1988 = vmul.f32 %v1924, %v1924
        %v1989 = vmul.f32 %v1925, %v1925
        %v1990 = vmul.f32 %v1926, %v1926
        %v1991 = vmul.f32 %v1927, %v1927
        %v1992 = vmul.f32 %v1928, %v1928
        %v1993 = vmul.f32 %v1929, %v1929
        %v1994 = vmul.f32 %v1930, %v1930
        %v1995 = vmul.f32 %v1931, %v1931
        %v1996 = vmul.f32 %v1932, %v1932
        %v1997 = vmul.f32 %v1933, %v1933
        %v1998 = vmul.f32 %v1934, %v1934
        %v1999 = vadd.f32 %v1935, %v1936
        %2000 = vadd.xlane.f32.xlu0 %v1999
        %v2001 = vpop.xlane.xlu0 %2000
        %v2002 = vadd.f32 %v1937, %v1938
        %2003 = vadd.xlane.f32.xlu0 %v2002
        %v2004 = vpop.xlane.xlu0 %2003
        %v2005 = vadd.f32 %v1939, %v1940
        %2006 = vadd.xlane.f32.xlu0 %v2005
        %v2007 = vpop.xlane.xlu0 %2006
        %v2008 = vadd.f32 %v1941, %v1942
        %2009 = vadd.xlane.f32.xlu0 %v2008
        %v2010 = vpop.xlane.xlu0 %2009
        %v2011 = vadd.f32 %v1943, %v1944
        %2012 = vadd.xlane.f32.xlu0 %v2011
        %v2013 = vpop.xlane.xlu0 %2012
        %v2014 = vadd.f32 %v1945, %v1946
        %2015 = vadd.xlane.f32.xlu0 %v2014
        %v2016 = vpop.xlane.xlu0 %2015
        %v2017 = vadd.f32 %v1947, %v1948
        %2018 = vadd.xlane.f32.xlu0 %v2017
        %v2019 = vpop.xlane.xlu0 %2018
        %v2020 = vadd.f32 %v1949, %v1950
        %2021 = vadd.xlane.f32.xlu0 %v2020
        %v2022 = vpop.xlane.xlu0 %2021
        %v2023 = vadd.f32 %v1951, %v1952
        %2024 = vadd.xlane.f32.xlu0 %v2023
        %v2025 = vpop.xlane.xlu0 %2024
        %v2026 = vadd.f32 %v1953, %v1954
        %2027 = vadd.xlane.f32.xlu0 %v2026
        %v2028 = vpop.xlane.xlu0 %2027
        %v2029 = vadd.f32 %v1955, %v1956
        %2030 = vadd.xlane.f32.xlu0 %v2029
        %v2031 = vpop.xlane.xlu0 %2030
        %v2032 = vadd.f32 %v1957, %v1958
        %2033 = vadd.xlane.f32.xlu0 %v2032
        %v2034 = vpop.xlane.xlu0 %2033
        %v2035 = vadd.f32 %v1959, %v1960
        %2036 = vadd.xlane.f32.xlu0 %v2035
        %v2037 = vpop.xlane.xlu0 %2036
        %v2038 = vadd.f32 %v1961, %v1962
        %2039 = vadd.xlane.f32.xlu0 %v2038
        %v2040 = vpop.xlane.xlu0 %2039
        %v2041 = vadd.f32 %v1963, %v1964
        %2042 = vadd.xlane.f32.xlu0 %v2041
        %v2043 = vpop.xlane.xlu0 %2042
        %v2044 = vadd.f32 %v1965, %v1966
        %2045 = vadd.xlane.f32.xlu0 %v2044
        %v2046 = vpop.xlane.xlu0 %2045
        %v2047 = vadd.f32 %v1967, %v1968
        %2048 = vadd.xlane.f32.xlu0 %v2047
        %v2049 = vpop.xlane.xlu0 %2048
        %v2050 = vadd.f32 %v1969, %v1970
        %2051 = vadd.xlane.f32.xlu0 %v2050
        %v2052 = vpop.xlane.xlu0 %2051
        %v2053 = vadd.f32 %v1971, %v1972
        %2054 = vadd.xlane.f32.xlu0 %v2053
        %v2055 = vpop.xlane.xlu0 %2054
        %v2056 = vadd.f32 %v1973, %v1974
        %2057 = vadd.xlane.f32.xlu0 %v2056
        %v2058 = vpop.xlane.xlu0 %2057
        %v2059 = vadd.f32 %v1975, %v1976
        %2060 = vadd.xlane.f32.xlu0 %v2059
        %v2061 = vpop.xlane.xlu0 %2060
        %v2062 = vadd.f32 %v1977, %v1978
        %2063 = vadd.xlane.f32.xlu0 %v2062
        %v2064 = vpop.xlane.xlu0 %2063
        %v2065 = vadd.f32 %v1979, %v1980
        %2066 = vadd.xlane.f32.xlu0 %v2065
        %v2067 = vpop.xlane.xlu0 %2066
        %v2068 = vadd.f32 %v1981, %v1982
        %2069 = vadd.xlane.f32.xlu0 %v2068
        %v2070 = vpop.xlane.xlu0 %2069
        %v2071 = vadd.f32 %v1983, %v1984
        %2072 = vadd.xlane.f32.xlu0 %v2071
        %v2073 = vpop.xlane.xlu0 %2072
        %v2074 = vadd.f32 %v1985, %v1986
        %2075 = vadd.xlane.f32.xlu0 %v2074
        %v2076 = vpop.xlane.xlu0 %2075
        %v2077 = vadd.f32 %v1987, %v1988
        %2078 = vadd.xlane.f32.xlu0 %v2077
        %v2079 = vpop.xlane.xlu0 %2078
        %v2080 = vadd.f32 %v1989, %v1990
        %2081 = vadd.xlane.f32.xlu0 %v2080
        %v2082 = vpop.xlane.xlu0 %2081
        %v2083 = vadd.f32 %v1991, %v1992
        %2084 = vadd.xlane.f32.xlu0 %v2083
        %v2085 = vpop.xlane.xlu0 %2084
        %v2086 = vadd.f32 %v1993, %v1994
        %2087 = vadd.xlane.f32.xlu0 %v2086
        %v2088 = vpop.xlane.xlu0 %2087
        %v2089 = vadd.f32 %v1995, %v1996
        %2090 = vadd.xlane.f32.xlu0 %v2089
        %v2091 = vpop.xlane.xlu0 %2090
        %v2092 = vadd.f32 %v1997, %v1998
        %2093 = vadd.xlane.f32.xlu0 %v2092
        %v2094 = vpop.xlane.xlu0 %2093
        %v2095 = vmul.f32 %v2001, %v1838
        %v2096 = vmul.f32 %v2004, %v1838
        %v2097 = vmul.f32 %v2007, %v1838
        %v2098 = vmul.f32 %v2010, %v1838
        %v2099 = vmul.f32 %v2013, %v1838
        %v2100 = vmul.f32 %v2016, %v1838
        %v2101 = vmul.f32 %v2019, %v1838
        %v2102 = vmul.f32 %v2022, %v1838
        %v2103 = vmul.f32 %v2025, %v1838
        %v2104 = vmul.f32 %v2028, %v1838
        %v2105 = vmul.f32 %v2031, %v1838
        %v2106 = vmul.f32 %v2034, %v1838
        %v2107 = vmul.f32 %v2037, %v1838
        %v2108 = vmul.f32 %v2040, %v1838
        %v2109 = vmul.f32 %v2043, %v1838
        %v2110 = vmul.f32 %v2046, %v1838
        %v2111 = vmul.f32 %v2049, %v1838
        %v2112 = vmul.f32 %v2052, %v1838
        %v2113 = vmul.f32 %v2055, %v1838
        %v2114 = vmul.f32 %v2058, %v1838
        %v2115 = vmul.f32 %v2061, %v1838
        %v2116 = vmul.f32 %v2064, %v1838
        %v2117 = vmul.f32 %v2067, %v1838
        %v2118 = vmul.f32 %v2070, %v1838
        %v2119 = vmul.f32 %v2073, %v1838
        %v2120 = vmul.f32 %v2076, %v1838
        %v2121 = vmul.f32 %v2079, %v1838
        %v2122 = vmul.f32 %v2082, %v1838
        %v2123 = vmul.f32 %v2085, %v1838
        %v2124 = vmul.f32 %v2088, %v1838
        %v2125 = vmul.f32 %v2091, %v1838
        %v2126 = vmul.f32 %v2094, %v1838
        %v2127 = vadd.f32 %v2095, 1e-05
        %v2128 = vadd.f32 %v2096, 1e-05
        %v2129 = vadd.f32 %v2097, 1e-05
        %v2130 = vadd.f32 %v2098, 1e-05
        %v2131 = vadd.f32 %v2099, 1e-05
        %v2132 = vadd.f32 %v2100, 1e-05
        %v2133 = vadd.f32 %v2101, 1e-05
        %v2134 = vadd.f32 %v2102, 1e-05
        %v2135 = vadd.f32 %v2103, 1e-05
        %v2136 = vadd.f32 %v2104, 1e-05
        %v2137 = vadd.f32 %v2105, 1e-05
        %v2138 = vadd.f32 %v2106, 1e-05
        %v2139 = vadd.f32 %v2107, 1e-05
        %v2140 = vadd.f32 %v2108, 1e-05
        %v2141 = vadd.f32 %v2109, 1e-05
        %v2142 = vadd.f32 %v2110, 1e-05
        %v2143 = vadd.f32 %v2111, 1e-05
        %v2144 = vadd.f32 %v2112, 1e-05
        %v2145 = vadd.f32 %v2113, 1e-05
        %v2146 = vadd.f32 %v2114, 1e-05
        %v2147 = vadd.f32 %v2115, 1e-05
        %v2148 = vadd.f32 %v2116, 1e-05
        %v2149 = vadd.f32 %v2117, 1e-05
        %v2150 = vadd.f32 %v2118, 1e-05
        %v2151 = vadd.f32 %v2119, 1e-05
        %v2152 = vadd.f32 %v2120, 1e-05
        %v2153 = vadd.f32 %v2121, 1e-05
        %v2154 = vadd.f32 %v2122, 1e-05
        %v2155 = vadd.f32 %v2123, 1e-05
        %v2156 = vadd.f32 %v2124, 1e-05
        %v2157 = vadd.f32 %v2125, 1e-05
        %v2158 = vadd.f32 %v2126, 1e-05
        %v2159 = vrsqrt.pop %v2127
        %v2160 = vrsqrt.pop %v2128
        %v2161 = vrsqrt.pop %v2129
        %v2162 = vrsqrt.pop %v2130
        %v2163 = vrsqrt.pop %v2131
        %v2164 = vrsqrt.pop %v2132
        %v2165 = vrsqrt.pop %v2133
        %v2166 = vrsqrt.pop %v2134
        %v2167 = vrsqrt.pop %v2135
        %v2168 = vrsqrt.pop %v2136
        %v2169 = vrsqrt.pop %v2137
        %v2170 = vrsqrt.pop %v2138
        %v2171 = vrsqrt.pop %v2139
        %v2172 = vrsqrt.pop %v2140
        %v2173 = vrsqrt.pop %v2141
        %v2174 = vrsqrt.pop %v2142
        %v2175 = vrsqrt.pop %v2143
        %v2176 = vrsqrt.pop %v2144
        %v2177 = vrsqrt.pop %v2145
        %v2178 = vrsqrt.pop %v2146
        %v2179 = vrsqrt.pop %v2147
        %v2180 = vrsqrt.pop %v2148
        %v2181 = vrsqrt.pop %v2149
        %v2182 = vrsqrt.pop %v2150
        %v2183 = vrsqrt.pop %v2151
        %v2184 = vrsqrt.pop %v2152
        %v2185 = vrsqrt.pop %v2153
        %v2186 = vrsqrt.pop %v2154
        %v2187 = vrsqrt.pop %v2155
        %v2188 = vrsqrt.pop %v2156
        %v2189 = vrsqrt.pop %v2157
        %v2190 = vrsqrt.pop %v2158
        %v2191 = vmul.f32 %v1871, %v2159
        %v2192 = vmul.f32 %v1872, %v2159
        %v2193 = vmul.f32 %v1873, %v2160
        %v2194 = vmul.f32 %v1874, %v2160
        %v2195 = vmul.f32 %v1875, %v2161
        %v2196 = vmul.f32 %v1876, %v2161
        %v2197 = vmul.f32 %v1877, %v2162
        %v2198 = vmul.f32 %v1878, %v2162
        %v2199 = vmul.f32 %v1879, %v2163
        %v2200 = vmul.f32 %v1880, %v2163
        %v2201 = vmul.f32 %v1881, %v2164
        %v2202 = vmul.f32 %v1882, %v2164
        %v2203 = vmul.f32 %v1883, %v2165
        %v2204 = vmul.f32 %v1884, %v2165
        %v2205 = vmul.f32 %v1885, %v2166
        %v2206 = vmul.f32 %v1886, %v2166
        %v2207 = vmul.f32 %v1887, %v2167
        %v2208 = vmul.f32 %v1888, %v2167
        %v2209 = vmul.f32 %v1889, %v2168
        %v2210 = vmul.f32 %v1890, %v2168
        %v2211 = vmul.f32 %v1891, %v2169
        %v2212 = vmul.f32 %v1892, %v2169
        %v2213 = vmul.f32 %v1893, %v2170
        %v2214 = vmul.f32 %v1894, %v2170
        %v2215 = vmul.f32 %v1895, %v2171
        %v2216 = vmul.f32 %v1896, %v2171
        %v2217 = vmul.f32 %v1897, %v2172
        %v2218 = vmul.f32 %v1898, %v2172
        %v2219 = vmul.f32 %v1899, %v2173
        %v2220 = vmul.f32 %v1900, %v2173
        %v2221 = vmul.f32 %v1901, %v2174
        %v2222 = vmul.f32 %v1902, %v2174
        %v2223 = vmul.f32 %v1903, %v2175
        %v2224 = vmul.f32 %v1904, %v2175
        %v2225 = vmul.f32 %v1905, %v2176
        %v2226 = vmul.f32 %v1906, %v2176
        %v2227 = vmul.f32 %v1907, %v2177
        %v2228 = vmul.f32 %v1908, %v2177
        %v2229 = vmul.f32 %v1909, %v2178
        %v2230 = vmul.f32 %v1910, %v2178
        %v2231 = vmul.f32 %v1911, %v2179
        %v2232 = vmul.f32 %v1912, %v2179
        %v2233 = vmul.f32 %v1913, %v2180
        %v2234 = vmul.f32 %v1914, %v2180
        %v2235 = vmul.f32 %v1915, %v2181
        %v2236 = vmul.f32 %v1916, %v2181
        %v2237 = vmul.f32 %v1917, %v2182
        %v2238 = vmul.f32 %v1918, %v2182
        %v2239 = vmul.f32 %v1919, %v2183
        %v2240 = vmul.f32 %v1920, %v2183
        %v2241 = vmul.f32 %v1921, %v2184
        %v2242 = vmul.f32 %v1922, %v2184
        %v2243 = vmul.f32 %v1923, %v2185
        %v2244 = vmul.f32 %v1924, %v2185
        %v2245 = vmul.f32 %v1925, %v2186
        %v2246 = vmul.f32 %v1926, %v2186
        %v2247 = vmul.f32 %v1927, %v2187
        %v2248 = vmul.f32 %v1928, %v2187
        %v2249 = vmul.f32 %v1929, %v2188
        %v2250 = vmul.f32 %v1930, %v2188
        %v2251 = vmul.f32 %v1931, %v2189
        %v2252 = vmul.f32 %v1932, %v2189
        %v2253 = vmul.f32 %v1933, %v2190
        %v2254 = vmul.f32 %v1934, %v2190
        %v2256 = vlaneseq
        %v2257 = vshrl.u32 %v2256, 7
        %v2258 = vsub.s32 0, %v2257
        %v2259 = vrot.slane %v1411, %v2258
        %v2260 = vlaneseq
        %v2261 = vshrl.u32 %v2260, 7
        %v2262 = vsub.s32 1, %v2261
        %v2263 = vrot.slane %v1411, %v2262
        %v2266 = vmul.f32 %v2191, %v2259
        %v2267 = vmul.f32 %v2192, %v2263
        %v2268 = vmul.f32 %v2193, %v2259
        %v2269 = vmul.f32 %v2194, %v2263
        %v2270 = vmul.f32 %v2195, %v2259
        %v2271 = vmul.f32 %v2196, %v2263
        %v2272 = vmul.f32 %v2197, %v2259
        %v2273 = vmul.f32 %v2198, %v2263
        %v2274 = vmul.f32 %v2199, %v2259
        %v2275 = vmul.f32 %v2200, %v2263
        %v2276 = vmul.f32 %v2201, %v2259
        %v2277 = vmul.f32 %v2202, %v2263
        %v2278 = vmul.f32 %v2203, %v2259
        %v2279 = vmul.f32 %v2204, %v2263
        %v2280 = vmul.f32 %v2205, %v2259
        %v2281 = vmul.f32 %v2206, %v2263
        %v2282 = vmul.f32 %v2207, %v2259
        %v2283 = vmul.f32 %v2208, %v2263
        %v2284 = vmul.f32 %v2209, %v2259
        %v2285 = vmul.f32 %v2210, %v2263
        %v2286 = vmul.f32 %v2211, %v2259
        %v2287 = vmul.f32 %v2212, %v2263
        %v2288 = vmul.f32 %v2213, %v2259
        %v2289 = vmul.f32 %v2214, %v2263
        %v2290 = vmul.f32 %v2215, %v2259
        %v2291 = vmul.f32 %v2216, %v2263
        %v2292 = vmul.f32 %v2217, %v2259
        %v2293 = vmul.f32 %v2218, %v2263
        %v2294 = vmul.f32 %v2219, %v2259
        %v2295 = vmul.f32 %v2220, %v2263
        %v2296 = vmul.f32 %v2221, %v2259
        %v2297 = vmul.f32 %v2222, %v2263
        %v2298 = vmul.f32 %v2223, %v2259
        %v2299 = vmul.f32 %v2224, %v2263
        %v2300 = vmul.f32 %v2225, %v2259
        %v2301 = vmul.f32 %v2226, %v2263
        %v2302 = vmul.f32 %v2227, %v2259
        %v2303 = vmul.f32 %v2228, %v2263
        %v2304 = vmul.f32 %v2229, %v2259
        %v2305 = vmul.f32 %v2230, %v2263
        %v2306 = vmul.f32 %v2231, %v2259
        %v2307 = vmul.f32 %v2232, %v2263
        %v2308 = vmul.f32 %v2233, %v2259
        %v2309 = vmul.f32 %v2234, %v2263
        %v2310 = vmul.f32 %v2235, %v2259
        %v2311 = vmul.f32 %v2236, %v2263
        %v2312 = vmul.f32 %v2237, %v2259
        %v2313 = vmul.f32 %v2238, %v2263
        %v2314 = vmul.f32 %v2239, %v2259
        %v2315 = vmul.f32 %v2240, %v2263
        %v2316 = vmul.f32 %v2241, %v2259
        %v2317 = vmul.f32 %v2242, %v2263
        %v2318 = vmul.f32 %v2243, %v2259
        %v2319 = vmul.f32 %v2244, %v2263
        %v2320 = vmul.f32 %v2245, %v2259
        %v2321 = vmul.f32 %v2246, %v2263
        %v2322 = vmul.f32 %v2247, %v2259
        %v2323 = vmul.f32 %v2248, %v2263
        %v2324 = vmul.f32 %v2249, %v2259
        %v2325 = vmul.f32 %v2250, %v2263
        %v2326 = vmul.f32 %v2251, %v2259
        %v2327 = vmul.f32 %v2252, %v2263
        %v2328 = vmul.f32 %v2253, %v2259
        %v2329 = vmul.f32 %v2254, %v2263
        %v2331 = vlaneseq
        %v2332 = vshrl.u32 %v2331, 7
        %v2333 = vsub.s32 0, %v2332
        %v2334 = vrot.slane %v1412, %v2333
        %v2335 = vlaneseq
        %v2336 = vshrl.u32 %v2335, 7
        %v2337 = vsub.s32 1, %v2336
        %v2338 = vrot.slane %v1412, %v2337
        %v2341 = vadd.f32 %v2266, %v2334
        %v2342 = vadd.f32 %v2267, %v2338
        %v2343 = vadd.f32 %v2268, %v2334
        %v2344 = vadd.f32 %v2269, %v2338
        %v2345 = vadd.f32 %v2270, %v2334
        %v2346 = vadd.f32 %v2271, %v2338
        %v2347 = vadd.f32 %v2272, %v2334
        %v2348 = vadd.f32 %v2273, %v2338
        %v2349 = vadd.f32 %v2274, %v2334
        %v2350 = vadd.f32 %v2275, %v2338
        %v2351 = vadd.f32 %v2276, %v2334
        %v2352 = vadd.f32 %v2277, %v2338
        %v2353 = vadd.f32 %v2278, %v2334
        %v2354 = vadd.f32 %v2279, %v2338
        %v2355 = vadd.f32 %v2280, %v2334
        %v2356 = vadd.f32 %v2281, %v2338
        %v2357 = vadd.f32 %v2282, %v2334
        %v2358 = vadd.f32 %v2283, %v2338
        %v2359 = vadd.f32 %v2284, %v2334
        %v2360 = vadd.f32 %v2285, %v2338
        %v2361 = vadd.f32 %v2286, %v2334
        %v2362 = vadd.f32 %v2287, %v2338
        %v2363 = vadd.f32 %v2288, %v2334
        %v2364 = vadd.f32 %v2289, %v2338
        %v2365 = vadd.f32 %v2290, %v2334
        %v2366 = vadd.f32 %v2291, %v2338
        %v2367 = vadd.f32 %v2292, %v2334
        %v2368 = vadd.f32 %v2293, %v2338
        %v2369 = vadd.f32 %v2294, %v2334
        %v2370 = vadd.f32 %v2295, %v2338
        %v2371 = vadd.f32 %v2296, %v2334
        %v2372 = vadd.f32 %v2297, %v2338
        %v2373 = vadd.f32 %v2298, %v2334
        %v2374 = vadd.f32 %v2299, %v2338
        %v2375 = vadd.f32 %v2300, %v2334
        %v2376 = vadd.f32 %v2301, %v2338
        %v2377 = vadd.f32 %v2302, %v2334
        %v2378 = vadd.f32 %v2303, %v2338
        %v2379 = vadd.f32 %v2304, %v2334
        %v2380 = vadd.f32 %v2305, %v2338
        %v2381 = vadd.f32 %v2306, %v2334
        %v2382 = vadd.f32 %v2307, %v2338
        %v2383 = vadd.f32 %v2308, %v2334
        %v2384 = vadd.f32 %v2309, %v2338
        %v2385 = vadd.f32 %v2310, %v2334
        %v2386 = vadd.f32 %v2311, %v2338
        %v2387 = vadd.f32 %v2312, %v2334
        %v2388 = vadd.f32 %v2313, %v2338
        %v2389 = vadd.f32 %v2314, %v2334
        %v2390 = vadd.f32 %v2315, %v2338
        %v2391 = vadd.f32 %v2316, %v2334
        %v2392 = vadd.f32 %v2317, %v2338
        %v2393 = vadd.f32 %v2318, %v2334
        %v2394 = vadd.f32 %v2319, %v2338
        %v2395 = vadd.f32 %v2320, %v2334
        %v2396 = vadd.f32 %v2321, %v2338
        %v2397 = vadd.f32 %v2322, %v2334
        %v2398 = vadd.f32 %v2323, %v2338
        %v2399 = vadd.f32 %v2324, %v2334
        %v2400 = vadd.f32 %v2325, %v2338
        %v2401 = vadd.f32 %v2326, %v2334
        %v2402 = vadd.f32 %v2327, %v2338
        %v2403 = vadd.f32 %v2328, %v2334
        %v2404 = vadd.f32 %v2329, %v2338
        %v2405 = vpack.c.bf16 %v2343, %v2341
        %v2406 = vpack.c.bf16 %v2344, %v2342
        %v2407 = vpack.c.bf16 %v2347, %v2345
        %v2408 = vpack.c.bf16 %v2348, %v2346
        %v2409 = vpack.c.bf16 %v2351, %v2349
        %v2410 = vpack.c.bf16 %v2352, %v2350
        %v2411 = vpack.c.bf16 %v2355, %v2353
        %v2412 = vpack.c.bf16 %v2356, %v2354
        %v2413 = vpack.c.bf16 %v2359, %v2357
        %v2414 = vpack.c.bf16 %v2360, %v2358
        %v2415 = vpack.c.bf16 %v2363, %v2361
        %v2416 = vpack.c.bf16 %v2364, %v2362
        %v2417 = vpack.c.bf16 %v2367, %v2365
        %v2418 = vpack.c.bf16 %v2368, %v2366
        %v2419 = vpack.c.bf16 %v2371, %v2369
        %v2420 = vpack.c.bf16 %v2372, %v2370
        %v2421 = vpack.c.bf16 %v2375, %v2373
        %v2422 = vpack.c.bf16 %v2376, %v2374
        %v2423 = vpack.c.bf16 %v2379, %v2377
        %v2424 = vpack.c.bf16 %v2380, %v2378
        %v2425 = vpack.c.bf16 %v2383, %v2381
        %v2426 = vpack.c.bf16 %v2384, %v2382
        %v2427 = vpack.c.bf16 %v2387, %v2385
        %v2428 = vpack.c.bf16 %v2388, %v2386
        %v2429 = vpack.c.bf16 %v2391, %v2389
        %v2430 = vpack.c.bf16 %v2392, %v2390
        %v2431 = vpack.c.bf16 %v2395, %v2393
        %v2432 = vpack.c.bf16 %v2396, %v2394
        %v2433 = vpack.c.bf16 %v2399, %v2397
        %v2434 = vpack.c.bf16 %v2400, %v2398
        %v2435 = vpack.c.bf16 %v2403, %v2401
        %v2436 = vpack.c.bf16 %v2404, %v2402
        %v2438 = vlaneseq
        %v2439 = vshrl.u32 %v2438, 7
        %v2440 = vsub.s32 0, %v2439
        %v2441 = vrot.slane %v1445, %v2440
        %v2442 = vlaneseq
        %v2443 = vshrl.u32 %v2442, 7
        %v2444 = vsub.s32 1, %v2443
        %v2445 = vrot.slane %v1445, %v2444
        %v2480 = vunpack.c.l.b16 %v1413
        %v2481 = vunpack.c.h.b16 %v1413
        %v2482 = vunpack.c.l.b16 %v1414
        %v2483 = vunpack.c.h.b16 %v1414
        %v2484 = vunpack.c.l.b16 %v1415
        %v2485 = vunpack.c.h.b16 %v1415
        %v2486 = vunpack.c.l.b16 %v1416
        %v2487 = vunpack.c.h.b16 %v1416
        %v2488 = vunpack.c.l.b16 %v1417
        %v2489 = vunpack.c.h.b16 %v1417
        %v2490 = vunpack.c.l.b16 %v1418
        %v2491 = vunpack.c.h.b16 %v1418
        %v2492 = vunpack.c.l.b16 %v1419
        %v2493 = vunpack.c.h.b16 %v1419
        %v2494 = vunpack.c.l.b16 %v1420
        %v2495 = vunpack.c.h.b16 %v1420
        %v2496 = vunpack.c.l.b16 %v1421
        %v2497 = vunpack.c.h.b16 %v1421
        %v2498 = vunpack.c.l.b16 %v1422
        %v2499 = vunpack.c.h.b16 %v1422
        %v2500 = vunpack.c.l.b16 %v1423
        %v2501 = vunpack.c.h.b16 %v1423
        %v2502 = vunpack.c.l.b16 %v1424
        %v2503 = vunpack.c.h.b16 %v1424
        %v2504 = vunpack.c.l.b16 %v1425
        %v2505 = vunpack.c.h.b16 %v1425
        %v2506 = vunpack.c.l.b16 %v1426
        %v2507 = vunpack.c.h.b16 %v1426
        %v2508 = vunpack.c.l.b16 %v1427
        %v2509 = vunpack.c.h.b16 %v1427
        %v2510 = vunpack.c.l.b16 %v1428
        %v2511 = vunpack.c.h.b16 %v1428
        %v2512 = vunpack.c.l.b16 %v1429
        %v2513 = vunpack.c.h.b16 %v1429
        %v2514 = vunpack.c.l.b16 %v1430
        %v2515 = vunpack.c.h.b16 %v1430
        %v2516 = vunpack.c.l.b16 %v1431
        %v2517 = vunpack.c.h.b16 %v1431
        %v2518 = vunpack.c.l.b16 %v1432
        %v2519 = vunpack.c.h.b16 %v1432
        %v2520 = vunpack.c.l.b16 %v1433
        %v2521 = vunpack.c.h.b16 %v1433
        %v2522 = vunpack.c.l.b16 %v1434
        %v2523 = vunpack.c.h.b16 %v1434
        %v2524 = vunpack.c.l.b16 %v1435
        %v2525 = vunpack.c.h.b16 %v1435
        %v2526 = vunpack.c.l.b16 %v1436
        %v2527 = vunpack.c.h.b16 %v1436
        %v2528 = vunpack.c.l.b16 %v1437
        %v2529 = vunpack.c.h.b16 %v1437
        %v2530 = vunpack.c.l.b16 %v1438
        %v2531 = vunpack.c.h.b16 %v1438
        %v2532 = vunpack.c.l.b16 %v1439
        %v2533 = vunpack.c.h.b16 %v1439
        %v2534 = vunpack.c.l.b16 %v1440
        %v2535 = vunpack.c.h.b16 %v1440
        %v2536 = vunpack.c.l.b16 %v1441
        %v2537 = vunpack.c.h.b16 %v1441
        %v2538 = vunpack.c.l.b16 %v1442
        %v2539 = vunpack.c.h.b16 %v1442
        %v2540 = vunpack.c.l.b16 %v1443
        %v2541 = vunpack.c.h.b16 %v1443
        %v2542 = vunpack.c.l.b16 %v1444
        %v2543 = vunpack.c.h.b16 %v1444
        %v2544 = vpack.c.b16 %v2482, %v2480
        %v2545 = vpack.c.b16 %v2483, %v2481
        %v2546 = vpack.c.b16 %v2486, %v2484
        %v2547 = vpack.c.b16 %v2487, %v2485
        %v2548 = vpack.c.b16 %v2490, %v2488
        %v2549 = vpack.c.b16 %v2491, %v2489
        %v2550 = vpack.c.b16 %v2494, %v2492
        %v2551 = vpack.c.b16 %v2495, %v2493
        %v2552 = vpack.c.b16 %v2498, %v2496
        %v2553 = vpack.c.b16 %v2499, %v2497
        %v2554 = vpack.c.b16 %v2502, %v2500
        %v2555 = vpack.c.b16 %v2503, %v2501
        %v2556 = vpack.c.b16 %v2506, %v2504
        %v2557 = vpack.c.b16 %v2507, %v2505
        %v2558 = vpack.c.b16 %v2510, %v2508
        %v2559 = vpack.c.b16 %v2511, %v2509
        %v2560 = vpack.c.b16 %v2514, %v2512
        %v2561 = vpack.c.b16 %v2515, %v2513
        %v2562 = vpack.c.b16 %v2518, %v2516
        %v2563 = vpack.c.b16 %v2519, %v2517
        %v2564 = vpack.c.b16 %v2522, %v2520
        %v2565 = vpack.c.b16 %v2523, %v2521
        %v2566 = vpack.c.b16 %v2526, %v2524
        %v2567 = vpack.c.b16 %v2527, %v2525
        %v2568 = vpack.c.b16 %v2530, %v2528
        %v2569 = vpack.c.b16 %v2531, %v2529
        %v2570 = vpack.c.b16 %v2534, %v2532
        %v2571 = vpack.c.b16 %v2535, %v2533
        %v2572 = vpack.c.b16 %v2538, %v2536
        %v2573 = vpack.c.b16 %v2539, %v2537
        %v2574 = vpack.c.b16 %v2542, %v2540
        %v2575 = vpack.c.b16 %v2543, %v2541
        %2608 = vmatprep.subr.bf16.mxu0 %v2559
        %2609 = vmatpush1.bf16.msra.mxu0 %v2558
        %2610 = vmatprep.subr.bf16.mxu0 %v2557
        %2611 = vmatpush1.bf16.msra.mxu0 %v2556
        %2612 = vmatprep.subr.bf16.mxu0 %v2555
        %2613 = vmatpush1.bf16.msra.mxu0 %v2554
        %2614 = vmatprep.subr.bf16.mxu0 %v2553
        %2615 = vmatpush1.bf16.msra.mxu0 %v2552
        %2616 = vmatprep.subr.bf16.mxu0 %v2551
        %2617 = vmatpush1.bf16.msra.mxu0 %v2550
        %2618 = vmatprep.subr.bf16.mxu0 %v2549
        %2619 = vmatpush1.bf16.msra.mxu0 %v2548
        %2620 = vmatprep.subr.bf16.mxu0 %v2547
        %2621 = vmatpush1.bf16.msra.mxu0 %v2546
        %2622 = vmatprep.subr.bf16.mxu0 %v2545
        %2623 = vmatpush1.bf16.msra.mxu0 %v2544
        %2624 = vmatprep.subr.bf16.mxu0 %v2575
        %2625 = vmatpush2.bf16.msra.mxu0 %v2574
        %2626 = vmatprep.subr.bf16.mxu0 %v2573
        %2627 = vmatpush2.bf16.msra.mxu0 %v2572
        %2628 = vmatprep.subr.bf16.mxu0 %v2571
        %2629 = vmatpush2.bf16.msra.mxu0 %v2570
        %2630 = vmatprep.subr.bf16.mxu0 %v2569
        %2631 = vmatpush2.bf16.msra.mxu0 %v2568
        %2632 = vmatprep.subr.bf16.mxu0 %v2567
        %2633 = vmatpush2.bf16.msra.mxu0 %v2566
        %2634 = vmatprep.subr.bf16.mxu0 %v2565
        %2635 = vmatpush2.bf16.msra.mxu0 %v2564
        %2636 = vmatprep.subr.bf16.mxu0 %v2563
        %2637 = vmatpush2.bf16.msra.mxu0 %v2562
        %2638 = vmatprep.subr.bf16.mxu0 %v2561
        %2639 = vmatpush2.bf16.msra.mxu0 %v2560
        %2640 = vmatprep.mubr.bf16.mxu0 %v2406
        %2641 = vmatmul.mubr.bf16.gmra.mxu0 %v2405
        %v2642 = vpop.f32.mrf.mxu0
        %v2643 = vadd.f32 %v2441, %v2642
        %v2644 = vpop.f32.mrf.mxu0
        %v2645 = vadd.f32 %v2445, %v2644
        %v2646 = vpop.f32.mrf.mxu0
        %v2647 = vadd.f32 %v2441, %v2646
        %v2648 = vpop.f32.mrf.mxu0
        %v2649 = vadd.f32 %v2445, %v2648
        %2650 = vmatprep.mubr.bf16.mxu0 %v2408
        %2651 = vmatmul.mubr.bf16.gmra.mxu0 %v2407
        %v2652 = vpop.f32.mrf.mxu0
        %v2653 = vadd.f32 %v2441, %v2652
        %v2654 = vpop.f32.mrf.mxu0
        %v2655 = vadd.f32 %v2445, %v2654
        %v2656 = vpop.f32.mrf.mxu0
        %v2657 = vadd.f32 %v2441, %v2656
        %v2658 = vpop.f32.mrf.mxu0
        %v2659 = vadd.f32 %v2445, %v2658
        %2660 = vmatprep.mubr.bf16.mxu0 %v2410
        %2661 = vmatmul.mubr.bf16.gmra.mxu0 %v2409
        %v2662 = vpop.f32.mrf.mxu0
        %v2663 = vadd.f32 %v2441, %v2662
        %v2664 = vpop.f32.mrf.mxu0
        %v2665 = vadd.f32 %v2445, %v2664
        %v2666 = vpop.f32.mrf.mxu0
        %v2667 = vadd.f32 %v2441, %v2666
        %v2668 = vpop.f32.mrf.mxu0
        %v2669 = vadd.f32 %v2445, %v2668
        %2670 = vmatprep.mubr.bf16.mxu0 %v2412
        %2671 = vmatmul.mubr.bf16.gmra.mxu0 %v2411
        %v2672 = vpop.f32.mrf.mxu0
        %v2673 = vadd.f32 %v2441, %v2672
        %v2674 = vpop.f32.mrf.mxu0
        %v2675 = vadd.f32 %v2445, %v2674
        %v2676 = vpop.f32.mrf.mxu0
        %v2677 = vadd.f32 %v2441, %v2676
        %v2678 = vpop.f32.mrf.mxu0
        %v2679 = vadd.f32 %v2445, %v2678
        %2680 = vmatprep.mubr.bf16.mxu0 %v2414
        %2681 = vmatmul.mubr.bf16.gmra.mxu0 %v2413
        %v2682 = vpop.f32.mrf.mxu0
        %v2683 = vadd.f32 %v2441, %v2682
        %v2684 = vpop.f32.mrf.mxu0
        %v2685 = vadd.f32 %v2445, %v2684
        %v2686 = vpop.f32.mrf.mxu0
        %v2687 = vadd.f32 %v2441, %v2686
        %v2688 = vpop.f32.mrf.mxu0
        %v2689 = vadd.f32 %v2445, %v2688
        %2690 = vmatprep.mubr.bf16.mxu0 %v2416
        %2691 = vmatmul.mubr.bf16.gmra.mxu0 %v2415
        %v2692 = vpop.f32.mrf.mxu0
        %v2693 = vadd.f32 %v2441, %v2692
        %v2694 = vpop.f32.mrf.mxu0
        %v2695 = vadd.f32 %v2445, %v2694
        %v2696 = vpop.f32.mrf.mxu0
        %v2697 = vadd.f32 %v2441, %v2696
        %v2698 = vpop.f32.mrf.mxu0
        %v2699 = vadd.f32 %v2445, %v2698
        %2700 = vmatprep.mubr.bf16.mxu0 %v2418
        %2701 = vmatmul.mubr.bf16.gmra.mxu0 %v2417
        %v2702 = vpop.f32.mrf.mxu0
        %v2703 = vadd.f32 %v2441, %v2702
        %v2704 = vpop.f32.mrf.mxu0
        %v2705 = vadd.f32 %v2445, %v2704
        %v2706 = vpop.f32.mrf.mxu0
        %v2707 = vadd.f32 %v2441, %v2706
        %v2708 = vpop.f32.mrf.mxu0
        %v2709 = vadd.f32 %v2445, %v2708
        %2710 = vmatprep.mubr.bf16.mxu0 %v2420
        %2711 = vmatmul.mubr.bf16.gmra.mxu0 %v2419
        %v2712 = vpop.f32.mrf.mxu0
        %v2713 = vadd.f32 %v2441, %v2712
        %v2714 = vpop.f32.mrf.mxu0
        %v2715 = vadd.f32 %v2445, %v2714
        %v2716 = vpop.f32.mrf.mxu0
        %v2717 = vadd.f32 %v2441, %v2716
        %v2718 = vpop.f32.mrf.mxu0
        %v2719 = vadd.f32 %v2445, %v2718
        %2720 = vmatprep.mubr.bf16.mxu0 %v2422
        %2721 = vmatmul.mubr.bf16.gmra.mxu0 %v2421
        %v2722 = vpop.f32.mrf.mxu0
        %v2723 = vadd.f32 %v2441, %v2722
        %v2724 = vpop.f32.mrf.mxu0
        %v2725 = vadd.f32 %v2445, %v2724
        %v2726 = vpop.f32.mrf.mxu0
        %v2727 = vadd.f32 %v2441, %v2726
        %v2728 = vpop.f32.mrf.mxu0
        %v2729 = vadd.f32 %v2445, %v2728
        %2730 = vmatprep.mubr.bf16.mxu0 %v2424
        %2731 = vmatmul.mubr.bf16.gmra.mxu0 %v2423
        %v2732 = vpop.f32.mrf.mxu0
        %v2733 = vadd.f32 %v2441, %v2732
        %v2734 = vpop.f32.mrf.mxu0
        %v2735 = vadd.f32 %v2445, %v2734
        %v2736 = vpop.f32.mrf.mxu0
        %v2737 = vadd.f32 %v2441, %v2736
        %v2738 = vpop.f32.mrf.mxu0
        %v2739 = vadd.f32 %v2445, %v2738
        %2740 = vmatprep.mubr.bf16.mxu0 %v2426
        %2741 = vmatmul.mubr.bf16.gmra.mxu0 %v2425
        %v2742 = vpop.f32.mrf.mxu0
        %v2743 = vadd.f32 %v2441, %v2742
        %v2744 = vpop.f32.mrf.mxu0
        %v2745 = vadd.f32 %v2445, %v2744
        %v2746 = vpop.f32.mrf.mxu0
        %v2747 = vadd.f32 %v2441, %v2746
        %v2748 = vpop.f32.mrf.mxu0
        %v2749 = vadd.f32 %v2445, %v2748
        %2750 = vmatprep.mubr.bf16.mxu0 %v2428
        %2751 = vmatmul.mubr.bf16.gmra.mxu0 %v2427
        %v2752 = vpop.f32.mrf.mxu0
        %v2753 = vadd.f32 %v2441, %v2752
        %v2754 = vpop.f32.mrf.mxu0
        %v2755 = vadd.f32 %v2445, %v2754
        %v2756 = vpop.f32.mrf.mxu0
        %v2757 = vadd.f32 %v2441, %v2756
        %v2758 = vpop.f32.mrf.mxu0
        %v2759 = vadd.f32 %v2445, %v2758
        %2760 = vmatprep.mubr.bf16.mxu0 %v2430
        %2761 = vmatmul.mubr.bf16.gmra.mxu0 %v2429
        %v2762 = vpop.f32.mrf.mxu0
        %v2763 = vadd.f32 %v2441, %v2762
        %v2764 = vpop.f32.mrf.mxu0
        %v2765 = vadd.f32 %v2445, %v2764
        %v2766 = vpop.f32.mrf.mxu0
        %v2767 = vadd.f32 %v2441, %v2766
        %v2768 = vpop.f32.mrf.mxu0
        %v2769 = vadd.f32 %v2445, %v2768
        %2770 = vmatprep.mubr.bf16.mxu0 %v2432
        %2771 = vmatmul.mubr.bf16.gmra.mxu0 %v2431
        %v2772 = vpop.f32.mrf.mxu0
        %v2773 = vadd.f32 %v2441, %v2772
        %v2774 = vpop.f32.mrf.mxu0
        %v2775 = vadd.f32 %v2445, %v2774
        %v2776 = vpop.f32.mrf.mxu0
        %v2777 = vadd.f32 %v2441, %v2776
        %v2778 = vpop.f32.mrf.mxu0
        %v2779 = vadd.f32 %v2445, %v2778
        %2780 = vmatprep.mubr.bf16.mxu0 %v2434
        %2781 = vmatmul.mubr.bf16.gmra.mxu0 %v2433
        %v2782 = vpop.f32.mrf.mxu0
        %v2783 = vadd.f32 %v2441, %v2782
        %v2784 = vpop.f32.mrf.mxu0
        %v2785 = vadd.f32 %v2445, %v2784
        %v2786 = vpop.f32.mrf.mxu0
        %v2787 = vadd.f32 %v2441, %v2786
        %v2788 = vpop.f32.mrf.mxu0
        %v2789 = vadd.f32 %v2445, %v2788
        %2790 = vmatprep.mubr.bf16.mxu0 %v2436
        %2791 = vmatmul.mubr.bf16.gmra.mxu0 %v2435
        %v2792 = vpop.f32.mrf.mxu0
        %v2793 = vadd.f32 %v2441, %v2792
        %v2794 = vpop.f32.mrf.mxu0
        %v2795 = vadd.f32 %v2445, %v2794
        %v2796 = vpop.f32.mrf.mxu0
        %v2797 = vadd.f32 %v2441, %v2796
        %v2798 = vpop.f32.mrf.mxu0
        %v2799 = vadd.f32 %v2445, %v2798
        %2800 = vdwg.mxu0
        %v2802 = vlaneseq
        %v2803 = vshrl.u32 %v2802, 7
        %v2804 = vsub.s32 0, %v2803
        %v2805 = vrot.slane %v1478, %v2804
        %v2806 = vlaneseq
        %v2807 = vshrl.u32 %v2806, 7
        %v2808 = vsub.s32 1, %v2807
        %v2809 = vrot.slane %v1478, %v2808
        %v2844 = vunpack.c.l.b16 %v1446
        %v2845 = vunpack.c.h.b16 %v1446
        %v2846 = vunpack.c.l.b16 %v1447
        %v2847 = vunpack.c.h.b16 %v1447
        %v2848 = vunpack.c.l.b16 %v1448
        %v2849 = vunpack.c.h.b16 %v1448
        %v2850 = vunpack.c.l.b16 %v1449
        %v2851 = vunpack.c.h.b16 %v1449
        %v2852 = vunpack.c.l.b16 %v1450
        %v2853 = vunpack.c.h.b16 %v1450
        %v2854 = vunpack.c.l.b16 %v1451
        %v2855 = vunpack.c.h.b16 %v1451
        %v2856 = vunpack.c.l.b16 %v1452
        %v2857 = vunpack.c.h.b16 %v1452
        %v2858 = vunpack.c.l.b16 %v1453
        %v2859 = vunpack.c.h.b16 %v1453
        %v2860 = vunpack.c.l.b16 %v1454
        %v2861 = vunpack.c.h.b16 %v1454
        %v2862 = vunpack.c.l.b16 %v1455
        %v2863 = vunpack.c.h.b16 %v1455
        %v2864 = vunpack.c.l.b16 %v1456
        %v2865 = vunpack.c.h.b16 %v1456
        %v2866 = vunpack.c.l.b16 %v1457
        %v2867 = vunpack.c.h.b16 %v1457
        %v2868 = vunpack.c.l.b16 %v1458
        %v2869 = vunpack.c.h.b16 %v1458
        %v2870 = vunpack.c.l.b16 %v1459
        %v2871 = vunpack.c.h.b16 %v1459
        %v2872 = vunpack.c.l.b16 %v1460
        %v2873 = vunpack.c.h.b16 %v1460
        %v2874 = vunpack.c.l.b16 %v1461
        %v2875 = vunpack.c.h.b16 %v1461
        %v2876 = vunpack.c.l.b16 %v1462
        %v2877 = vunpack.c.h.b16 %v1462
        %v2878 = vunpack.c.l.b16 %v1463
        %v2879 = vunpack.c.h.b16 %v1463
        %v2880 = vunpack.c.l.b16 %v1464
        %v2881 = vunpack.c.h.b16 %v1464
        %v2882 = vunpack.c.l.b16 %v1465
        %v2883 = vunpack.c.h.b16 %v1465
        %v2884 = vunpack.c.l.b16 %v1466
        %v2885 = vunpack.c.h.b16 %v1466
        %v2886 = vunpack.c.l.b16 %v1467
        %v2887 = vunpack.c.h.b16 %v1467
        %v2888 = vunpack.c.l.b16 %v1468
        %v2889 = vunpack.c.h.b16 %v1468
        %v2890 = vunpack.c.l.b16 %v1469
        %v2891 = vunpack.c.h.b16 %v1469
        %v2892 = vunpack.c.l.b16 %v1470
        %v2893 = vunpack.c.h.b16 %v1470
        %v2894 = vunpack.c.l.b16 %v1471
        %v2895 = vunpack.c.h.b16 %v1471
        %v2896 = vunpack.c.l.b16 %v1472
        %v2897 = vunpack.c.h.b16 %v1472
        %v2898 = vunpack.c.l.b16 %v1473
        %v2899 = vunpack.c.h.b16 %v1473
        %v2900 = vunpack.c.l.b16 %v1474
        %v2901 = vunpack.c.h.b16 %v1474
        %v2902 = vunpack.c.l.b16 %v1475
        %v2903 = vunpack.c.h.b16 %v1475
        %v2904 = vunpack.c.l.b16 %v1476
        %v2905 = vunpack.c.h.b16 %v1476
        %v2906 = vunpack.c.l.b16 %v1477
        %v2907 = vunpack.c.h.b16 %v1477
        %v2908 = vpack.c.b16 %v2846, %v2844
        %v2909 = vpack.c.b16 %v2847, %v2845
        %v2910 = vpack.c.b16 %v2850, %v2848
        %v2911 = vpack.c.b16 %v2851, %v2849
        %v2912 = vpack.c.b16 %v2854, %v2852
        %v2913 = vpack.c.b16 %v2855, %v2853
        %v2914 = vpack.c.b16 %v2858, %v2856
        %v2915 = vpack.c.b16 %v2859, %v2857
        %v2916 = vpack.c.b16 %v2862, %v2860
        %v2917 = vpack.c.b16 %v2863, %v2861
        %v2918 = vpack.c.b16 %v2866, %v2864
        %v2919 = vpack.c.b16 %v2867, %v2865
        %v2920 = vpack.c.b16 %v2870, %v2868
        %v2921 = vpack.c.b16 %v2871, %v2869
        %v2922 = vpack.c.b16 %v2874, %v2872
        %v2923 = vpack.c.b16 %v2875, %v2873
        %v2924 = vpack.c.b16 %v2878, %v2876
        %v2925 = vpack.c.b16 %v2879, %v2877
        %v2926 = vpack.c.b16 %v2882, %v2880
        %v2927 = vpack.c.b16 %v2883, %v2881
        %v2928 = vpack.c.b16 %v2886, %v2884
        %v2929 = vpack.c.b16 %v2887, %v2885
        %v2930 = vpack.c.b16 %v2890, %v2888
        %v2931 = vpack.c.b16 %v2891, %v2889
        %v2932 = vpack.c.b16 %v2894, %v2892
        %v2933 = vpack.c.b16 %v2895, %v2893
        %v2934 = vpack.c.b16 %v2898, %v2896
        %v2935 = vpack.c.b16 %v2899, %v2897
        %v2936 = vpack.c.b16 %v2902, %v2900
        %v2937 = vpack.c.b16 %v2903, %v2901
        %v2938 = vpack.c.b16 %v2906, %v2904
        %v2939 = vpack.c.b16 %v2907, %v2905
        %2972 = vmatprep.subr.bf16.mxu0 %v2923
        %2973 = vmatpush1.bf16.msra.mxu0 %v2922
        %2974 = vmatprep.subr.bf16.mxu0 %v2921
        %2975 = vmatpush1.bf16.msra.mxu0 %v2920
        %2976 = vmatprep.subr.bf16.mxu0 %v2919
        %2977 = vmatpush1.bf16.msra.mxu0 %v2918
        %2978 = vmatprep.subr.bf16.mxu0 %v2917
        %2979 = vmatpush1.bf16.msra.mxu0 %v2916
        %2980 = vmatprep.subr.bf16.mxu0 %v2915
        %2981 = vmatpush1.bf16.msra.mxu0 %v2914
        %2982 = vmatprep.subr.bf16.mxu0 %v2913
        %2983 = vmatpush1.bf16.msra.mxu0 %v2912
        %2984 = vmatprep.subr.bf16.mxu0 %v2911
        %2985 = vmatpush1.bf16.msra.mxu0 %v2910
        %2986 = vmatprep.subr.bf16.mxu0 %v2909
        %2987 = vmatpush1.bf16.msra.mxu0 %v2908
        %2988 = vmatprep.subr.bf16.mxu0 %v2939
        %2989 = vmatpush2.bf16.msra.mxu0 %v2938
        %2990 = vmatprep.subr.bf16.mxu0 %v2937
        %2991 = vmatpush2.bf16.msra.mxu0 %v2936
        %2992 = vmatprep.subr.bf16.mxu0 %v2935
        %2993 = vmatpush2.bf16.msra.mxu0 %v2934
        %2994 = vmatprep.subr.bf16.mxu0 %v2933
        %2995 = vmatpush2.bf16.msra.mxu0 %v2932
        %2996 = vmatprep.subr.bf16.mxu0 %v2931
        %2997 = vmatpush2.bf16.msra.mxu0 %v2930
        %2998 = vmatprep.subr.bf16.mxu0 %v2929
        %2999 = vmatpush2.bf16.msra.mxu0 %v2928
        %3000 = vmatprep.subr.bf16.mxu0 %v2927
        %3001 = vmatpush2.bf16.msra.mxu0 %v2926
        %3002 = vmatprep.subr.bf16.mxu0 %v2925
        %3003 = vmatpush2.bf16.msra.mxu0 %v2924
        %3004 = vmatprep.mubr.bf16.mxu0 %v2406
        %3005 = vmatmul.mubr.bf16.gmra.mxu0 %v2405
        %v3006 = vpop.f32.mrf.mxu0
        %v3007 = vadd.f32 %v2805, %v3006
        %v3008 = vpop.f32.mrf.mxu0
        %v3009 = vadd.f32 %v2809, %v3008
        %v3010 = vpop.f32.mrf.mxu0
        %v3011 = vadd.f32 %v2805, %v3010
        %v3012 = vpop.f32.mrf.mxu0
        %v3013 = vadd.f32 %v2809, %v3012
        %3014 = vmatprep.mubr.bf16.mxu0 %v2408
        %3015 = vmatmul.mubr.bf16.gmra.mxu0 %v2407
        %v3016 = vpop.f32.mrf.mxu0
        %v3017 = vadd.f32 %v2805, %v3016
        %v3018 = vpop.f32.mrf.mxu0
        %v3019 = vadd.f32 %v2809, %v3018
        %v3020 = vpop.f32.mrf.mxu0
        %v3021 = vadd.f32 %v2805, %v3020
        %v3022 = vpop.f32.mrf.mxu0
        %v3023 = vadd.f32 %v2809, %v3022
        %3024 = vmatprep.mubr.bf16.mxu0 %v2410
        %3025 = vmatmul.mubr.bf16.gmra.mxu0 %v2409
        %v3026 = vpop.f32.mrf.mxu0
        %v3027 = vadd.f32 %v2805, %v3026
        %v3028 = vpop.f32.mrf.mxu0
        %v3029 = vadd.f32 %v2809, %v3028
        %v3030 = vpop.f32.mrf.mxu0
        %v3031 = vadd.f32 %v2805, %v3030
        %v3032 = vpop.f32.mrf.mxu0
        %v3033 = vadd.f32 %v2809, %v3032
        %3034 = vmatprep.mubr.bf16.mxu0 %v2412
        %3035 = vmatmul.mubr.bf16.gmra.mxu0 %v2411
        %v3036 = vpop.f32.mrf.mxu0
        %v3037 = vadd.f32 %v2805, %v3036
        %v3038 = vpop.f32.mrf.mxu0
        %v3039 = vadd.f32 %v2809, %v3038
        %v3040 = vpop.f32.mrf.mxu0
        %v3041 = vadd.f32 %v2805, %v3040
        %v3042 = vpop.f32.mrf.mxu0
        %v3043 = vadd.f32 %v2809, %v3042
        %3044 = vmatprep.mubr.bf16.mxu0 %v2414
        %3045 = vmatmul.mubr.bf16.gmra.mxu0 %v2413
        %v3046 = vpop.f32.mrf.mxu0
        %v3047 = vadd.f32 %v2805, %v3046
        %v3048 = vpop.f32.mrf.mxu0
        %v3049 = vadd.f32 %v2809, %v3048
        %v3050 = vpop.f32.mrf.mxu0
        %v3051 = vadd.f32 %v2805, %v3050
        %v3052 = vpop.f32.mrf.mxu0
        %v3053 = vadd.f32 %v2809, %v3052
        %3054 = vmatprep.mubr.bf16.mxu0 %v2416
        %3055 = vmatmul.mubr.bf16.gmra.mxu0 %v2415
        %v3056 = vpop.f32.mrf.mxu0
        %v3057 = vadd.f32 %v2805, %v3056
        %v3058 = vpop.f32.mrf.mxu0
        %v3059 = vadd.f32 %v2809, %v3058
        %v3060 = vpop.f32.mrf.mxu0
        %v3061 = vadd.f32 %v2805, %v3060
        %v3062 = vpop.f32.mrf.mxu0
        %v3063 = vadd.f32 %v2809, %v3062
        %3064 = vmatprep.mubr.bf16.mxu0 %v2418
        %3065 = vmatmul.mubr.bf16.gmra.mxu0 %v2417
        %v3066 = vpop.f32.mrf.mxu0
        %v3067 = vadd.f32 %v2805, %v3066
        %v3068 = vpop.f32.mrf.mxu0
        %v3069 = vadd.f32 %v2809, %v3068
        %v3070 = vpop.f32.mrf.mxu0
        %v3071 = vadd.f32 %v2805, %v3070
        %v3072 = vpop.f32.mrf.mxu0
        %v3073 = vadd.f32 %v2809, %v3072
        %3074 = vmatprep.mubr.bf16.mxu0 %v2420
        %3075 = vmatmul.mubr.bf16.gmra.mxu0 %v2419
        %v3076 = vpop.f32.mrf.mxu0
        %v3077 = vadd.f32 %v2805, %v3076
        %v3078 = vpop.f32.mrf.mxu0
        %v3079 = vadd.f32 %v2809, %v3078
        %v3080 = vpop.f32.mrf.mxu0
        %v3081 = vadd.f32 %v2805, %v3080
        %v3082 = vpop.f32.mrf.mxu0
        %v3083 = vadd.f32 %v2809, %v3082
        %3084 = vmatprep.mubr.bf16.mxu0 %v2422
        %3085 = vmatmul.mubr.bf16.gmra.mxu0 %v2421
        %v3086 = vpop.f32.mrf.mxu0
        %v3087 = vadd.f32 %v2805, %v3086
        %v3088 = vpop.f32.mrf.mxu0
        %v3089 = vadd.f32 %v2809, %v3088
        %v3090 = vpop.f32.mrf.mxu0
        %v3091 = vadd.f32 %v2805, %v3090
        %v3092 = vpop.f32.mrf.mxu0
        %v3093 = vadd.f32 %v2809, %v3092
        %3094 = vmatprep.mubr.bf16.mxu0 %v2424
        %3095 = vmatmul.mubr.bf16.gmra.mxu0 %v2423
        %v3096 = vpop.f32.mrf.mxu0
        %v3097 = vadd.f32 %v2805, %v3096
        %v3098 = vpop.f32.mrf.mxu0
        %v3099 = vadd.f32 %v2809, %v3098
        %v3100 = vpop.f32.mrf.mxu0
        %v3101 = vadd.f32 %v2805, %v3100
        %v3102 = vpop.f32.mrf.mxu0
        %v3103 = vadd.f32 %v2809, %v3102
        %3104 = vmatprep.mubr.bf16.mxu0 %v2426
        %3105 = vmatmul.mubr.bf16.gmra.mxu0 %v2425
        %v3106 = vpop.f32.mrf.mxu0
        %v3107 = vadd.f32 %v2805, %v3106
        %v3108 = vpop.f32.mrf.mxu0
        %v3109 = vadd.f32 %v2809, %v3108
        %v3110 = vpop.f32.mrf.mxu0
        %v3111 = vadd.f32 %v2805, %v3110
        %v3112 = vpop.f32.mrf.mxu0
        %v3113 = vadd.f32 %v2809, %v3112
        %3114 = vmatprep.mubr.bf16.mxu0 %v2428
        %3115 = vmatmul.mubr.bf16.gmra.mxu0 %v2427
        %v3116 = vpop.f32.mrf.mxu0
        %v3117 = vadd.f32 %v2805, %v3116
        %v3118 = vpop.f32.mrf.mxu0
        %v3119 = vadd.f32 %v2809, %v3118
        %v3120 = vpop.f32.mrf.mxu0
        %v3121 = vadd.f32 %v2805, %v3120
        %v3122 = vpop.f32.mrf.mxu0
        %v3123 = vadd.f32 %v2809, %v3122
        %3124 = vmatprep.mubr.bf16.mxu0 %v2430
        %3125 = vmatmul.mubr.bf16.gmra.mxu0 %v2429
        %v3126 = vpop.f32.mrf.mxu0
        %v3127 = vadd.f32 %v2805, %v3126
        %v3128 = vpop.f32.mrf.mxu0
        %v3129 = vadd.f32 %v2809, %v3128
        %v3130 = vpop.f32.mrf.mxu0
        %v3131 = vadd.f32 %v2805, %v3130
        %v3132 = vpop.f32.mrf.mxu0
        %v3133 = vadd.f32 %v2809, %v3132
        %3134 = vmatprep.mubr.bf16.mxu0 %v2432
        %3135 = vmatmul.mubr.bf16.gmra.mxu0 %v2431
        %v3136 = vpop.f32.mrf.mxu0
        %v3137 = vadd.f32 %v2805, %v3136
        %v3138 = vpop.f32.mrf.mxu0
        %v3139 = vadd.f32 %v2809, %v3138
        %v3140 = vpop.f32.mrf.mxu0
        %v3141 = vadd.f32 %v2805, %v3140
        %v3142 = vpop.f32.mrf.mxu0
        %v3143 = vadd.f32 %v2809, %v3142
        %3144 = vmatprep.mubr.bf16.mxu0 %v2434
        %3145 = vmatmul.mubr.bf16.gmra.mxu0 %v2433
        %v3146 = vpop.f32.mrf.mxu0
        %v3147 = vadd.f32 %v2805, %v3146
        %v3148 = vpop.f32.mrf.mxu0
        %v3149 = vadd.f32 %v2809, %v3148
        %v3150 = vpop.f32.mrf.mxu0
        %v3151 = vadd.f32 %v2805, %v3150
        %v3152 = vpop.f32.mrf.mxu0
        %v3153 = vadd.f32 %v2809, %v3152
        %3154 = vmatprep.mubr.bf16.mxu0 %v2436
        %3155 = vmatmul.mubr.bf16.gmra.mxu0 %v2435
        %v3156 = vpop.f32.mrf.mxu0
        %v3157 = vadd.f32 %v2805, %v3156
        %v3158 = vpop.f32.mrf.mxu0
        %v3159 = vadd.f32 %v2809, %v3158
        %v3160 = vpop.f32.mrf.mxu0
        %v3161 = vadd.f32 %v2805, %v3160
        %v3162 = vpop.f32.mrf.mxu0
        %v3163 = vadd.f32 %v2809, %v3162
        %3164 = vdwg.mxu0
        %v3166 = vlaneseq
        %v3167 = vshrl.u32 %v3166, 7
        %v3168 = vsub.s32 0, %v3167
        %v3169 = vrot.slane %v1511, %v3168
        %v3170 = vlaneseq
        %v3171 = vshrl.u32 %v3170, 7
        %v3172 = vsub.s32 1, %v3171
        %v3173 = vrot.slane %v1511, %v3172
        %v3208 = vunpack.c.l.b16 %v1479
        %v3209 = vunpack.c.h.b16 %v1479
        %v3210 = vunpack.c.l.b16 %v1480
        %v3211 = vunpack.c.h.b16 %v1480
        %v3212 = vunpack.c.l.b16 %v1481
        %v3213 = vunpack.c.h.b16 %v1481
        %v3214 = vunpack.c.l.b16 %v1482
        %v3215 = vunpack.c.h.b16 %v1482
        %v3216 = vunpack.c.l.b16 %v1483
        %v3217 = vunpack.c.h.b16 %v1483
        %v3218 = vunpack.c.l.b16 %v1484
        %v3219 = vunpack.c.h.b16 %v1484
        %v3220 = vunpack.c.l.b16 %v1485
        %v3221 = vunpack.c.h.b16 %v1485
        %v3222 = vunpack.c.l.b16 %v1486
        %v3223 = vunpack.c.h.b16 %v1486
        %v3224 = vunpack.c.l.b16 %v1487
        %v3225 = vunpack.c.h.b16 %v1487
        %v3226 = vunpack.c.l.b16 %v1488
        %v3227 = vunpack.c.h.b16 %v1488
        %v3228 = vunpack.c.l.b16 %v1489
        %v3229 = vunpack.c.h.b16 %v1489
        %v3230 = vunpack.c.l.b16 %v1490
        %v3231 = vunpack.c.h.b16 %v1490
        %v3232 = vunpack.c.l.b16 %v1491
        %v3233 = vunpack.c.h.b16 %v1491
        %v3234 = vunpack.c.l.b16 %v1492
        %v3235 = vunpack.c.h.b16 %v1492
        %v3236 = vunpack.c.l.b16 %v1493
        %v3237 = vunpack.c.h.b16 %v1493
        %v3238 = vunpack.c.l.b16 %v1494
        %v3239 = vunpack.c.h.b16 %v1494
        %v3240 = vunpack.c.l.b16 %v1495
        %v3241 = vunpack.c.h.b16 %v1495
        %v3242 = vunpack.c.l.b16 %v1496
        %v3243 = vunpack.c.h.b16 %v1496
        %v3244 = vunpack.c.l.b16 %v1497
        %v3245 = vunpack.c.h.b16 %v1497
        %v3246 = vunpack.c.l.b16 %v1498
        %v3247 = vunpack.c.h.b16 %v1498
        %v3248 = vunpack.c.l.b16 %v1499
        %v3249 = vunpack.c.h.b16 %v1499
        %v3250 = vunpack.c.l.b16 %v1500
        %v3251 = vunpack.c.h.b16 %v1500
        %v3252 = vunpack.c.l.b16 %v1501
        %v3253 = vunpack.c.h.b16 %v1501
        %v3254 = vunpack.c.l.b16 %v1502
        %v3255 = vunpack.c.h.b16 %v1502
        %v3256 = vunpack.c.l.b16 %v1503
        %v3257 = vunpack.c.h.b16 %v1503
        %v3258 = vunpack.c.l.b16 %v1504
        %v3259 = vunpack.c.h.b16 %v1504
        %v3260 = vunpack.c.l.b16 %v1505
        %v3261 = vunpack.c.h.b16 %v1505
        %v3262 = vunpack.c.l.b16 %v1506
        %v3263 = vunpack.c.h.b16 %v1506
        %v3264 = vunpack.c.l.b16 %v1507
        %v3265 = vunpack.c.h.b16 %v1507
        %v3266 = vunpack.c.l.b16 %v1508
        %v3267 = vunpack.c.h.b16 %v1508
        %v3268 = vunpack.c.l.b16 %v1509
        %v3269 = vunpack.c.h.b16 %v1509
        %v3270 = vunpack.c.l.b16 %v1510
        %v3271 = vunpack.c.h.b16 %v1510
        %v3272 = vpack.c.b16 %v3210, %v3208
        %v3273 = vpack.c.b16 %v3211, %v3209
        %v3274 = vpack.c.b16 %v3214, %v3212
        %v3275 = vpack.c.b16 %v3215, %v3213
        %v3276 = vpack.c.b16 %v3218, %v3216
        %v3277 = vpack.c.b16 %v3219, %v3217
        %v3278 = vpack.c.b16 %v3222, %v3220
        %v3279 = vpack.c.b16 %v3223, %v3221
        %v3280 = vpack.c.b16 %v3226, %v3224
        %v3281 = vpack.c.b16 %v3227, %v3225
        %v3282 = vpack.c.b16 %v3230, %v3228
        %v3283 = vpack.c.b16 %v3231, %v3229
        %v3284 = vpack.c.b16 %v3234, %v3232
        %v3285 = vpack.c.b16 %v3235, %v3233
        %v3286 = vpack.c.b16 %v3238, %v3236
        %v3287 = vpack.c.b16 %v3239, %v3237
        %v3288 = vpack.c.b16 %v3242, %v3240
        %v3289 = vpack.c.b16 %v3243, %v3241
        %v3290 = vpack.c.b16 %v3246, %v3244
        %v3291 = vpack.c.b16 %v3247, %v3245
        %v3292 = vpack.c.b16 %v3250, %v3248
        %v3293 = vpack.c.b16 %v3251, %v3249
        %v3294 = vpack.c.b16 %v3254, %v3252
        %v3295 = vpack.c.b16 %v3255, %v3253
        %v3296 = vpack.c.b16 %v3258, %v3256
        %v3297 = vpack.c.b16 %v3259, %v3257
        %v3298 = vpack.c.b16 %v3262, %v3260
        %v3299 = vpack.c.b16 %v3263, %v3261
        %v3300 = vpack.c.b16 %v3266, %v3264
        %v3301 = vpack.c.b16 %v3267, %v3265
        %v3302 = vpack.c.b16 %v3270, %v3268
        %v3303 = vpack.c.b16 %v3271, %v3269
        %3336 = vmatprep.subr.bf16.mxu0 %v3287
        %3337 = vmatpush1.bf16.msra.mxu0 %v3286
        %3338 = vmatprep.subr.bf16.mxu0 %v3285
        %3339 = vmatpush1.bf16.msra.mxu0 %v3284
        %3340 = vmatprep.subr.bf16.mxu0 %v3283
        %3341 = vmatpush1.bf16.msra.mxu0 %v3282
        %3342 = vmatprep.subr.bf16.mxu0 %v3281
        %3343 = vmatpush1.bf16.msra.mxu0 %v3280
        %3344 = vmatprep.subr.bf16.mxu0 %v3279
        %3345 = vmatpush1.bf16.msra.mxu0 %v3278
        %3346 = vmatprep.subr.bf16.mxu0 %v3277
        %3347 = vmatpush1.bf16.msra.mxu0 %v3276
        %3348 = vmatprep.subr.bf16.mxu0 %v3275
        %3349 = vmatpush1.bf16.msra.mxu0 %v3274
        %3350 = vmatprep.subr.bf16.mxu0 %v3273
        %3351 = vmatpush1.bf16.msra.mxu0 %v3272
        %3352 = vmatprep.subr.bf16.mxu0 %v3303
        %3353 = vmatpush2.bf16.msra.mxu0 %v3302
        %3354 = vmatprep.subr.bf16.mxu0 %v3301
        %3355 = vmatpush2.bf16.msra.mxu0 %v3300
        %3356 = vmatprep.subr.bf16.mxu0 %v3299
        %3357 = vmatpush2.bf16.msra.mxu0 %v3298
        %3358 = vmatprep.subr.bf16.mxu0 %v3297
        %3359 = vmatpush2.bf16.msra.mxu0 %v3296
        %3360 = vmatprep.subr.bf16.mxu0 %v3295
        %3361 = vmatpush2.bf16.msra.mxu0 %v3294
        %3362 = vmatprep.subr.bf16.mxu0 %v3293
        %3363 = vmatpush2.bf16.msra.mxu0 %v3292
        %3364 = vmatprep.subr.bf16.mxu0 %v3291
        %3365 = vmatpush2.bf16.msra.mxu0 %v3290
        %3366 = vmatprep.subr.bf16.mxu0 %v3289
        %3367 = vmatpush2.bf16.msra.mxu0 %v3288
        %3368 = vmatprep.mubr.bf16.mxu0 %v2406
        %3369 = vmatmul.mubr.bf16.gmra.mxu0 %v2405
        %v3370 = vpop.f32.mrf.mxu0
        %v3371 = vadd.f32 %v3169, %v3370
        %v3372 = vpop.f32.mrf.mxu0
        %v3373 = vadd.f32 %v3173, %v3372
        %v3374 = vpop.f32.mrf.mxu0
        %v3375 = vadd.f32 %v3169, %v3374
        %v3376 = vpop.f32.mrf.mxu0
        %v3377 = vadd.f32 %v3173, %v3376
        %3378 = vmatprep.mubr.bf16.mxu0 %v2408
        %3379 = vmatmul.mubr.bf16.gmra.mxu0 %v2407
        %v3380 = vpop.f32.mrf.mxu0
        %v3381 = vadd.f32 %v3169, %v3380
        %v3382 = vpop.f32.mrf.mxu0
        %v3383 = vadd.f32 %v3173, %v3382
        %v3384 = vpop.f32.mrf.mxu0
        %v3385 = vadd.f32 %v3169, %v3384
        %v3386 = vpop.f32.mrf.mxu0
        %v3387 = vadd.f32 %v3173, %v3386
        %3388 = vmatprep.mubr.bf16.mxu0 %v2410
        %3389 = vmatmul.mubr.bf16.gmra.mxu0 %v2409
        %v3390 = vpop.f32.mrf.mxu0
        %v3391 = vadd.f32 %v3169, %v3390
        %v3392 = vpop.f32.mrf.mxu0
        %v3393 = vadd.f32 %v3173, %v3392
        %v3394 = vpop.f32.mrf.mxu0
        %v3395 = vadd.f32 %v3169, %v3394
        %v3396 = vpop.f32.mrf.mxu0
        %v3397 = vadd.f32 %v3173, %v3396
        %3398 = vmatprep.mubr.bf16.mxu0 %v2412
        %3399 = vmatmul.mubr.bf16.gmra.mxu0 %v2411
        %v3400 = vpop.f32.mrf.mxu0
        %v3401 = vadd.f32 %v3169, %v3400
        %v3402 = vpop.f32.mrf.mxu0
        %v3403 = vadd.f32 %v3173, %v3402
        %v3404 = vpop.f32.mrf.mxu0
        %v3405 = vadd.f32 %v3169, %v3404
        %v3406 = vpop.f32.mrf.mxu0
        %v3407 = vadd.f32 %v3173, %v3406
        %3408 = vmatprep.mubr.bf16.mxu0 %v2414
        %3409 = vmatmul.mubr.bf16.gmra.mxu0 %v2413
        %v3410 = vpop.f32.mrf.mxu0
        %v3411 = vadd.f32 %v3169, %v3410
        %v3412 = vpop.f32.mrf.mxu0
        %v3413 = vadd.f32 %v3173, %v3412
        %v3414 = vpop.f32.mrf.mxu0
        %v3415 = vadd.f32 %v3169, %v3414
        %v3416 = vpop.f32.mrf.mxu0
        %v3417 = vadd.f32 %v3173, %v3416
        %3418 = vmatprep.mubr.bf16.mxu0 %v2416
        %3419 = vmatmul.mubr.bf16.gmra.mxu0 %v2415
        %v3420 = vpop.f32.mrf.mxu0
        %v3421 = vadd.f32 %v3169, %v3420
        %v3422 = vpop.f32.mrf.mxu0
        %v3423 = vadd.f32 %v3173, %v3422
        %v3424 = vpop.f32.mrf.mxu0
        %v3425 = vadd.f32 %v3169, %v3424
        %v3426 = vpop.f32.mrf.mxu0
        %v3427 = vadd.f32 %v3173, %v3426
        %3428 = vmatprep.mubr.bf16.mxu0 %v2418
        %3429 = vmatmul.mubr.bf16.gmra.mxu0 %v2417
        %v3430 = vpop.f32.mrf.mxu0
        %v3431 = vadd.f32 %v3169, %v3430
        %v3432 = vpop.f32.mrf.mxu0
        %v3433 = vadd.f32 %v3173, %v3432
        %v3434 = vpop.f32.mrf.mxu0
        %v3435 = vadd.f32 %v3169, %v3434
        %v3436 = vpop.f32.mrf.mxu0
        %v3437 = vadd.f32 %v3173, %v3436
        %3438 = vmatprep.mubr.bf16.mxu0 %v2420
        %3439 = vmatmul.mubr.bf16.gmra.mxu0 %v2419
        %v3440 = vpop.f32.mrf.mxu0
        %v3441 = vadd.f32 %v3169, %v3440
        %v3442 = vpop.f32.mrf.mxu0
        %v3443 = vadd.f32 %v3173, %v3442
        %v3444 = vpop.f32.mrf.mxu0
        %v3445 = vadd.f32 %v3169, %v3444
        %v3446 = vpop.f32.mrf.mxu0
        %v3447 = vadd.f32 %v3173, %v3446
        %3448 = vmatprep.mubr.bf16.mxu0 %v2422
        %3449 = vmatmul.mubr.bf16.gmra.mxu0 %v2421
        %v3450 = vpop.f32.mrf.mxu0
        %v3451 = vadd.f32 %v3169, %v3450
        %v3452 = vpop.f32.mrf.mxu0
        %v3453 = vadd.f32 %v3173, %v3452
        %v3454 = vpop.f32.mrf.mxu0
        %v3455 = vadd.f32 %v3169, %v3454
        %v3456 = vpop.f32.mrf.mxu0
        %v3457 = vadd.f32 %v3173, %v3456
        %3458 = vmatprep.mubr.bf16.mxu0 %v2424
        %3459 = vmatmul.mubr.bf16.gmra.mxu0 %v2423
        %v3460 = vpop.f32.mrf.mxu0
        %v3461 = vadd.f32 %v3169, %v3460
        %v3462 = vpop.f32.mrf.mxu0
        %v3463 = vadd.f32 %v3173, %v3462
        %v3464 = vpop.f32.mrf.mxu0
        %v3465 = vadd.f32 %v3169, %v3464
        %v3466 = vpop.f32.mrf.mxu0
        %v3467 = vadd.f32 %v3173, %v3466
        %3468 = vmatprep.mubr.bf16.mxu0 %v2426
        %3469 = vmatmul.mubr.bf16.gmra.mxu0 %v2425
        %v3470 = vpop.f32.mrf.mxu0
        %v3471 = vadd.f32 %v3169, %v3470
        %v3472 = vpop.f32.mrf.mxu0
        %v3473 = vadd.f32 %v3173, %v3472
        %v3474 = vpop.f32.mrf.mxu0
        %v3475 = vadd.f32 %v3169, %v3474
        %v3476 = vpop.f32.mrf.mxu0
        %v3477 = vadd.f32 %v3173, %v3476
        %3478 = vmatprep.mubr.bf16.mxu0 %v2428
        %3479 = vmatmul.mubr.bf16.gmra.mxu0 %v2427
        %v3480 = vpop.f32.mrf.mxu0
        %v3481 = vadd.f32 %v3169, %v3480
        %v3482 = vpop.f32.mrf.mxu0
        %v3483 = vadd.f32 %v3173, %v3482
        %v3484 = vpop.f32.mrf.mxu0
        %v3485 = vadd.f32 %v3169, %v3484
        %v3486 = vpop.f32.mrf.mxu0
        %v3487 = vadd.f32 %v3173, %v3486
        %3488 = vmatprep.mubr.bf16.mxu0 %v2430
        %3489 = vmatmul.mubr.bf16.gmra.mxu0 %v2429
        %v3490 = vpop.f32.mrf.mxu0
        %v3491 = vadd.f32 %v3169, %v3490
        %v3492 = vpop.f32.mrf.mxu0
        %v3493 = vadd.f32 %v3173, %v3492
        %v3494 = vpop.f32.mrf.mxu0
        %v3495 = vadd.f32 %v3169, %v3494
        %v3496 = vpop.f32.mrf.mxu0
        %v3497 = vadd.f32 %v3173, %v3496
        %3498 = vmatprep.mubr.bf16.mxu0 %v2432
        %3499 = vmatmul.mubr.bf16.gmra.mxu0 %v2431
        %v3500 = vpop.f32.mrf.mxu0
        %v3501 = vadd.f32 %v3169, %v3500
        %v3502 = vpop.f32.mrf.mxu0
        %v3503 = vadd.f32 %v3173, %v3502
        %v3504 = vpop.f32.mrf.mxu0
        %v3505 = vadd.f32 %v3169, %v3504
        %v3506 = vpop.f32.mrf.mxu0
        %v3507 = vadd.f32 %v3173, %v3506
        %3508 = vmatprep.mubr.bf16.mxu0 %v2434
        %3509 = vmatmul.mubr.bf16.gmra.mxu0 %v2433
        %v3510 = vpop.f32.mrf.mxu0
        %v3511 = vadd.f32 %v3169, %v3510
        %v3512 = vpop.f32.mrf.mxu0
        %v3513 = vadd.f32 %v3173, %v3512
        %v3514 = vpop.f32.mrf.mxu0
        %v3515 = vadd.f32 %v3169, %v3514
        %v3516 = vpop.f32.mrf.mxu0
        %v3517 = vadd.f32 %v3173, %v3516
        %3518 = vmatprep.mubr.bf16.mxu0 %v2436
        %3519 = vmatmul.mubr.bf16.gmra.mxu0 %v2435
        %v3520 = vpop.f32.mrf.mxu0
        %v3521 = vadd.f32 %v3169, %v3520
        %v3522 = vpop.f32.mrf.mxu0
        %v3523 = vadd.f32 %v3173, %v3522
        %v3524 = vpop.f32.mrf.mxu0
        %v3525 = vadd.f32 %v3169, %v3524
        %v3526 = vpop.f32.mrf.mxu0
        %v3527 = vadd.f32 %v3173, %v3526
        %3528 = vdwg.mxu0
        %v3529 = vpack.c.bf16 %v2647, %v2643
        %v3530 = vpack.c.bf16 %v2649, %v2645
        %v3531 = vpack.c.bf16 %v2657, %v2653
        %v3532 = vpack.c.bf16 %v2659, %v2655
        %v3533 = vpack.c.bf16 %v2667, %v2663
        %v3534 = vpack.c.bf16 %v2669, %v2665
        %v3535 = vpack.c.bf16 %v2677, %v2673
        %v3536 = vpack.c.bf16 %v2679, %v2675
        %v3537 = vpack.c.bf16 %v2687, %v2683
        %v3538 = vpack.c.bf16 %v2689, %v2685
        %v3539 = vpack.c.bf16 %v2697, %v2693
        %v3540 = vpack.c.bf16 %v2699, %v2695
        %v3541 = vpack.c.bf16 %v2707, %v2703
        %v3542 = vpack.c.bf16 %v2709, %v2705
        %v3543 = vpack.c.bf16 %v2717, %v2713
        %v3544 = vpack.c.bf16 %v2719, %v2715
        %v3545 = vpack.c.bf16 %v2727, %v2723
        %v3546 = vpack.c.bf16 %v2729, %v2725
        %v3547 = vpack.c.bf16 %v2737, %v2733
        %v3548 = vpack.c.bf16 %v2739, %v2735
        %v3549 = vpack.c.bf16 %v2747, %v2743
        %v3550 = vpack.c.bf16 %v2749, %v2745
        %v3551 = vpack.c.bf16 %v2757, %v2753
        %v3552 = vpack.c.bf16 %v2759, %v2755
        %v3553 = vpack.c.bf16 %v2767, %v2763
        %v3554 = vpack.c.bf16 %v2769, %v2765
        %v3555 = vpack.c.bf16 %v2777, %v2773
        %v3556 = vpack.c.bf16 %v2779, %v2775
        %v3557 = vpack.c.bf16 %v2787, %v2783
        %v3558 = vpack.c.bf16 %v2789, %v2785
        %v3559 = vpack.c.bf16 %v2797, %v2793
        %v3560 = vpack.c.bf16 %v2799, %v2795
        %v3561 = vpack.c.bf16 %v3011, %v3007
        %v3562 = vpack.c.bf16 %v3013, %v3009
        %v3563 = vpack.c.bf16 %v3021, %v3017
        %v3564 = vpack.c.bf16 %v3023, %v3019
        %v3565 = vpack.c.bf16 %v3031, %v3027
        %v3566 = vpack.c.bf16 %v3033, %v3029
        %v3567 = vpack.c.bf16 %v3041, %v3037
        %v3568 = vpack.c.bf16 %v3043, %v3039
        %v3569 = vpack.c.bf16 %v3051, %v3047
        %v3570 = vpack.c.bf16 %v3053, %v3049
        %v3571 = vpack.c.bf16 %v3061, %v3057
        %v3572 = vpack.c.bf16 %v3063, %v3059
        %v3573 = vpack.c.bf16 %v3071, %v3067
        %v3574 = vpack.c.bf16 %v3073, %v3069
        %v3575 = vpack.c.bf16 %v3081, %v3077
        %v3576 = vpack.c.bf16 %v3083, %v3079
        %v3577 = vpack.c.bf16 %v3091, %v3087
        %v3578 = vpack.c.bf16 %v3093, %v3089
        %v3579 = vpack.c.bf16 %v3101, %v3097
        %v3580 = vpack.c.bf16 %v3103, %v3099
        %v3581 = vpack.c.bf16 %v3111, %v3107
        %v3582 = vpack.c.bf16 %v3113, %v3109
        %v3583 = vpack.c.bf16 %v3121, %v3117
        %v3584 = vpack.c.bf16 %v3123, %v3119
        %v3585 = vpack.c.bf16 %v3131, %v3127
        %v3586 = vpack.c.bf16 %v3133, %v3129
        %v3587 = vpack.c.bf16 %v3141, %v3137
        %v3588 = vpack.c.bf16 %v3143, %v3139
        %v3589 = vpack.c.bf16 %v3151, %v3147
        %v3590 = vpack.c.bf16 %v3153, %v3149
        %v3591 = vpack.c.bf16 %v3161, %v3157
        %v3592 = vpack.c.bf16 %v3163, %v3159
        %v3593 = vpack.c.bf16 %v3375, %v3371
        %v3594 = vpack.c.bf16 %v3377, %v3373
        %v3595 = vpack.c.bf16 %v3385, %v3381
        %v3596 = vpack.c.bf16 %v3387, %v3383
        %v3597 = vpack.c.bf16 %v3395, %v3391
        %v3598 = vpack.c.bf16 %v3397, %v3393
        %v3599 = vpack.c.bf16 %v3405, %v3401
        %v3600 = vpack.c.bf16 %v3407, %v3403
        %v3601 = vpack.c.bf16 %v3415, %v3411
        %v3602 = vpack.c.bf16 %v3417, %v3413
        %v3603 = vpack.c.bf16 %v3425, %v3421
        %v3604 = vpack.c.bf16 %v3427, %v3423
        %v3605 = vpack.c.bf16 %v3435, %v3431
        %v3606 = vpack.c.bf16 %v3437, %v3433
        %v3607 = vpack.c.bf16 %v3445, %v3441
        %v3608 = vpack.c.bf16 %v3447, %v3443
        %v3609 = vpack.c.bf16 %v3455, %v3451
        %v3610 = vpack.c.bf16 %v3457, %v3453
        %v3611 = vpack.c.bf16 %v3465, %v3461
        %v3612 = vpack.c.bf16 %v3467, %v3463
        %v3613 = vpack.c.bf16 %v3475, %v3471
        %v3614 = vpack.c.bf16 %v3477, %v3473
        %v3615 = vpack.c.bf16 %v3485, %v3481
        %v3616 = vpack.c.bf16 %v3487, %v3483
        %v3617 = vpack.c.bf16 %v3495, %v3491
        %v3618 = vpack.c.bf16 %v3497, %v3493
        %v3619 = vpack.c.bf16 %v3505, %v3501
        %v3620 = vpack.c.bf16 %v3507, %v3503
        %v3621 = vpack.c.bf16 %v3515, %v3511
        %v3622 = vpack.c.bf16 %v3517, %v3513
        %v3623 = vpack.c.bf16 %v3525, %v3521
        %v3624 = vpack.c.bf16 %v3527, %v3523
        %3625 = vmatprep.subr.bf16.mxu0 0
        %3626 = vmatpush1.bf16.xpose.msra.mxu0 %v3575
        %3627 = vmatprep.subr.bf16.mxu0 0
        %3628 = vmatpush1.bf16.xpose.msra.mxu0 %v3573
        %3629 = vmatprep.subr.bf16.mxu0 0
        %3630 = vmatpush1.bf16.xpose.msra.mxu0 %v3571
        %3631 = vmatprep.subr.bf16.mxu0 0
        %3632 = vmatpush1.bf16.xpose.msra.mxu0 %v3569
        %3633 = vmatprep.subr.bf16.mxu0 0
        %3634 = vmatpush1.bf16.xpose.msra.mxu0 %v3567
        %3635 = vmatprep.subr.bf16.mxu0 0
        %3636 = vmatpush1.bf16.xpose.msra.mxu0 %v3565
        %3637 = vmatprep.subr.bf16.mxu0 0
        %3638 = vmatpush1.bf16.xpose.msra.mxu0 %v3563
        %3639 = vmatprep.subr.bf16.mxu0 0
        %3640 = vmatpush1.bf16.xpose.msra.mxu0 %v3561
        %3641 = vmatprep.subr.bf16.mxu0 0
        %3642 = vmatpush2.bf16.xpose.msra.mxu0 0
        %3643 = vmatprep.subr.bf16.mxu0 0
        %3644 = vmatpush2.bf16.xpose.msra.mxu0 0
        %3645 = vmatprep.subr.bf16.mxu0 0
        %3646 = vmatpush2.bf16.xpose.msra.mxu0 0
        %3647 = vmatprep.subr.bf16.mxu0 0
        %3648 = vmatpush2.bf16.xpose.msra.mxu0 0
        %3649 = vmatprep.subr.bf16.mxu0 0
        %3650 = vmatpush2.bf16.xpose.msra.mxu0 0
        %3651 = vmatprep.subr.bf16.mxu0 0
        %3652 = vmatpush2.bf16.xpose.msra.mxu0 0
        %3653 = vmatprep.subr.bf16.mxu0 0
        %3654 = vmatpush2.bf16.xpose.msra.mxu0 0
        %3655 = vmatprep.subr.bf16.mxu0 0
        %3656 = vmatpush2.bf16.xpose.msra.mxu0 0
        %3657 = vmatprep.mubr.bf16.mxu0 0
        %3658 = vmatmul.mubr.bf16.gmra.mxu0 %v3529
        %v3659 = vpop.f32.mrf.mxu0
        %v3660 = vadd.f32 0.0, %v3659
        %v3661 = vpop.f32.mrf.mxu0
        %v3662 = vpop.f32.mrf.mxu0
        %v3663 = vadd.f32 0.0, %v3662
        %v3664 = vpop.f32.mrf.mxu0
        %3665 = vmatprep.mubr.bf16.mxu0 0
        %3666 = vmatmul.mubr.bf16.gmra.mxu0 %v3531
        %v3667 = vpop.f32.mrf.mxu0
        %v3668 = vadd.f32 0.0, %v3667
        %v3669 = vpop.f32.mrf.mxu0
        %v3670 = vpop.f32.mrf.mxu0
        %v3671 = vadd.f32 0.0, %v3670
        %v3672 = vpop.f32.mrf.mxu0
        %3673 = vmatprep.mubr.bf16.mxu0 0
        %3674 = vmatmul.mubr.bf16.gmra.mxu0 %v3533
        %v3675 = vpop.f32.mrf.mxu0
        %v3676 = vadd.f32 0.0, %v3675
        %v3677 = vpop.f32.mrf.mxu0
        %v3678 = vpop.f32.mrf.mxu0
        %v3679 = vadd.f32 0.0, %v3678
        %v3680 = vpop.f32.mrf.mxu0
        %3681 = vmatprep.mubr.bf16.mxu0 0
        %3682 = vmatmul.mubr.bf16.gmra.mxu0 %v3535
        %v3683 = vpop.f32.mrf.mxu0
        %v3684 = vadd.f32 0.0, %v3683
        %v3685 = vpop.f32.mrf.mxu0
        %v3686 = vpop.f32.mrf.mxu0
        %v3687 = vadd.f32 0.0, %v3686
        %v3688 = vpop.f32.mrf.mxu0
        %3689 = vmatprep.mubr.bf16.mxu0 0
        %3690 = vmatmul.mubr.bf16.gmra.mxu0 %v3537
        %v3691 = vpop.f32.mrf.mxu0
        %v3692 = vadd.f32 0.0, %v3691
        %v3693 = vpop.f32.mrf.mxu0
        %v3694 = vpop.f32.mrf.mxu0
        %v3695 = vadd.f32 0.0, %v3694
        %v3696 = vpop.f32.mrf.mxu0
        %3697 = vmatprep.mubr.bf16.mxu0 0
        %3698 = vmatmul.mubr.bf16.gmra.mxu0 %v3539
        %v3699 = vpop.f32.mrf.mxu0
        %v3700 = vadd.f32 0.0, %v3699
        %v3701 = vpop.f32.mrf.mxu0
        %v3702 = vpop.f32.mrf.mxu0
        %v3703 = vadd.f32 0.0, %v3702
        %v3704 = vpop.f32.mrf.mxu0
        %3705 = vmatprep.mubr.bf16.mxu0 0
        %3706 = vmatmul.mubr.bf16.gmra.mxu0 %v3541
        %v3707 = vpop.f32.mrf.mxu0
        %v3708 = vadd.f32 0.0, %v3707
        %v3709 = vpop.f32.mrf.mxu0
        %v3710 = vpop.f32.mrf.mxu0
        %v3711 = vadd.f32 0.0, %v3710
        %v3712 = vpop.f32.mrf.mxu0
        %3713 = vmatprep.mubr.bf16.mxu0 0
        %3714 = vmatmul.mubr.bf16.gmra.mxu0 %v3543
        %v3715 = vpop.f32.mrf.mxu0
        %v3716 = vadd.f32 0.0, %v3715
        %v3717 = vpop.f32.mrf.mxu0
        %v3718 = vpop.f32.mrf.mxu0
        %v3719 = vadd.f32 0.0, %v3718
        %v3720 = vpop.f32.mrf.mxu0
        %3721 = vdwg.mxu0
        %3722 = vmatprep.subr.bf16.mxu0 0
        %3723 = vmatpush1.bf16.xpose.msra.mxu0 %v3591
        %3724 = vmatprep.subr.bf16.mxu0 0
        %3725 = vmatpush1.bf16.xpose.msra.mxu0 %v3589
        %3726 = vmatprep.subr.bf16.mxu0 0
        %3727 = vmatpush1.bf16.xpose.msra.mxu0 %v3587
        %3728 = vmatprep.subr.bf16.mxu0 0
        %3729 = vmatpush1.bf16.xpose.msra.mxu0 %v3585
        %3730 = vmatprep.subr.bf16.mxu0 0
        %3731 = vmatpush1.bf16.xpose.msra.mxu0 %v3583
        %3732 = vmatprep.subr.bf16.mxu0 0
        %3733 = vmatpush1.bf16.xpose.msra.mxu0 %v3581
        %3734 = vmatprep.subr.bf16.mxu0 0
        %3735 = vmatpush1.bf16.xpose.msra.mxu0 %v3579
        %3736 = vmatprep.subr.bf16.mxu0 0
        %3737 = vmatpush1.bf16.xpose.msra.mxu0 %v3577
        %3738 = vmatprep.subr.bf16.mxu0 0
        %3739 = vmatpush2.bf16.xpose.msra.mxu0 0
        %3740 = vmatprep.subr.bf16.mxu0 0
        %3741 = vmatpush2.bf16.xpose.msra.mxu0 0
        %3742 = vmatprep.subr.bf16.mxu0 0
        %3743 = vmatpush2.bf16.xpose.msra.mxu0 0
        %3744 = vmatprep.subr.bf16.mxu0 0
        %3745 = vmatpush2.bf16.xpose.msra.mxu0 0
        %3746 = vmatprep.subr.bf16.mxu0 0
        %3747 = vmatpush2.bf16.xpose.msra.mxu0 0
        %3748 = vmatprep.subr.bf16.mxu0 0
        %3749 = vmatpush2.bf16.xpose.msra.mxu0 0
        %3750 = vmatprep.subr.bf16.mxu0 0
        %3751 = vmatpush2.bf16.xpose.msra.mxu0 0
        %3752 = vmatprep.subr.bf16.mxu0 0
        %3753 = vmatpush2.bf16.xpose.msra.mxu0 0
        %3754 = vmatprep.mubr.bf16.mxu0 0
        %3755 = vmatmul.mubr.bf16.gmra.mxu0 %v3545
        %v3756 = vpop.f32.mrf.mxu0
        %v3757 = vadd.f32 0.0, %v3756
        %v3758 = vpop.f32.mrf.mxu0
        %v3759 = vpop.f32.mrf.mxu0
        %v3760 = vadd.f32 0.0, %v3759
        %v3761 = vpop.f32.mrf.mxu0
        %3762 = vmatprep.mubr.bf16.mxu0 0
        %3763 = vmatmul.mubr.bf16.gmra.mxu0 %v3547
        %v3764 = vpop.f32.mrf.mxu0
        %v3765 = vadd.f32 0.0, %v3764
        %v3766 = vpop.f32.mrf.mxu0
        %v3767 = vpop.f32.mrf.mxu0
        %v3768 = vadd.f32 0.0, %v3767
        %v3769 = vpop.f32.mrf.mxu0
        %3770 = vmatprep.mubr.bf16.mxu0 0
        %3771 = vmatmul.mubr.bf16.gmra.mxu0 %v3549
        %v3772 = vpop.f32.mrf.mxu0
        %v3773 = vadd.f32 0.0, %v3772
        %v3774 = vpop.f32.mrf.mxu0
        %v3775 = vpop.f32.mrf.mxu0
        %v3776 = vadd.f32 0.0, %v3775
        %v3777 = vpop.f32.mrf.mxu0
        %3778 = vmatprep.mubr.bf16.mxu0 0
        %3779 = vmatmul.mubr.bf16.gmra.mxu0 %v3551
        %v3780 = vpop.f32.mrf.mxu0
        %v3781 = vadd.f32 0.0, %v3780
        %v3782 = vpop.f32.mrf.mxu0
        %v3783 = vpop.f32.mrf.mxu0
        %v3784 = vadd.f32 0.0, %v3783
        %v3785 = vpop.f32.mrf.mxu0
        %3786 = vmatprep.mubr.bf16.mxu0 0
        %3787 = vmatmul.mubr.bf16.gmra.mxu0 %v3553
        %v3788 = vpop.f32.mrf.mxu0
        %v3789 = vadd.f32 0.0, %v3788
        %v3790 = vpop.f32.mrf.mxu0
        %v3791 = vpop.f32.mrf.mxu0
        %v3792 = vadd.f32 0.0, %v3791
        %v3793 = vpop.f32.mrf.mxu0
        %3794 = vmatprep.mubr.bf16.mxu0 0
        %3795 = vmatmul.mubr.bf16.gmra.mxu0 %v3555
        %v3796 = vpop.f32.mrf.mxu0
        %v3797 = vadd.f32 0.0, %v3796
        %v3798 = vpop.f32.mrf.mxu0
        %v3799 = vpop.f32.mrf.mxu0
        %v3800 = vadd.f32 0.0, %v3799
        %v3801 = vpop.f32.mrf.mxu0
        %3802 = vmatprep.mubr.bf16.mxu0 0
        %3803 = vmatmul.mubr.bf16.gmra.mxu0 %v3557
        %v3804 = vpop.f32.mrf.mxu0
        %v3805 = vadd.f32 0.0, %v3804
        %v3806 = vpop.f32.mrf.mxu0
        %v3807 = vpop.f32.mrf.mxu0
        %v3808 = vadd.f32 0.0, %v3807
        %v3809 = vpop.f32.mrf.mxu0
        %3810 = vmatprep.mubr.bf16.mxu0 0
        %3811 = vmatmul.mubr.bf16.gmra.mxu0 %v3559
        %v3812 = vpop.f32.mrf.mxu0
        %v3813 = vadd.f32 0.0, %v3812
        %v3814 = vpop.f32.mrf.mxu0
        %v3815 = vpop.f32.mrf.mxu0
        %v3816 = vadd.f32 0.0, %v3815
        %v3817 = vpop.f32.mrf.mxu0
        %3818 = vdwg.mxu0
        %3819 = vmatprep.subr.bf16.mxu0 0
        %3820 = vmatpush1.bf16.xpose.msra.mxu0 %v3576
        %3821 = vmatprep.subr.bf16.mxu0 0
        %3822 = vmatpush1.bf16.xpose.msra.mxu0 %v3574
        %3823 = vmatprep.subr.bf16.mxu0 0
        %3824 = vmatpush1.bf16.xpose.msra.mxu0 %v3572
        %3825 = vmatprep.subr.bf16.mxu0 0
        %3826 = vmatpush1.bf16.xpose.msra.mxu0 %v3570
        %3827 = vmatprep.subr.bf16.mxu0 0
        %3828 = vmatpush1.bf16.xpose.msra.mxu0 %v3568
        %3829 = vmatprep.subr.bf16.mxu0 0
        %3830 = vmatpush1.bf16.xpose.msra.mxu0 %v3566
        %3831 = vmatprep.subr.bf16.mxu0 0
        %3832 = vmatpush1.bf16.xpose.msra.mxu0 %v3564
        %3833 = vmatprep.subr.bf16.mxu0 0
        %3834 = vmatpush1.bf16.xpose.msra.mxu0 %v3562
        %3835 = vmatprep.subr.bf16.mxu0 0
        %3836 = vmatpush2.bf16.xpose.msra.mxu0 0
        %3837 = vmatprep.subr.bf16.mxu0 0
        %3838 = vmatpush2.bf16.xpose.msra.mxu0 0
        %3839 = vmatprep.subr.bf16.mxu0 0
        %3840 = vmatpush2.bf16.xpose.msra.mxu0 0
        %3841 = vmatprep.subr.bf16.mxu0 0
        %3842 = vmatpush2.bf16.xpose.msra.mxu0 0
        %3843 = vmatprep.subr.bf16.mxu0 0
        %3844 = vmatpush2.bf16.xpose.msra.mxu0 0
        %3845 = vmatprep.subr.bf16.mxu0 0
        %3846 = vmatpush2.bf16.xpose.msra.mxu0 0
        %3847 = vmatprep.subr.bf16.mxu0 0
        %3848 = vmatpush2.bf16.xpose.msra.mxu0 0
        %3849 = vmatprep.subr.bf16.mxu0 0
        %3850 = vmatpush2.bf16.xpose.msra.mxu0 0
        %3851 = vmatprep.mubr.bf16.mxu0 0
        %3852 = vmatmul.mubr.bf16.gmra.mxu0 %v3530
        %v3853 = vpop.f32.mrf.mxu0
        %v3854 = vadd.f32 0.0, %v3853
        %v3855 = vpop.f32.mrf.mxu0
        %v3856 = vpop.f32.mrf.mxu0
        %v3857 = vadd.f32 0.0, %v3856
        %v3858 = vpop.f32.mrf.mxu0
        %3859 = vmatprep.mubr.bf16.mxu0 0
        %3860 = vmatmul.mubr.bf16.gmra.mxu0 %v3532
        %v3861 = vpop.f32.mrf.mxu0
        %v3862 = vadd.f32 0.0, %v3861
        %v3863 = vpop.f32.mrf.mxu0
        %v3864 = vpop.f32.mrf.mxu0
        %v3865 = vadd.f32 0.0, %v3864
        %v3866 = vpop.f32.mrf.mxu0
        %3867 = vmatprep.mubr.bf16.mxu0 0
        %3868 = vmatmul.mubr.bf16.gmra.mxu0 %v3534
        %v3869 = vpop.f32.mrf.mxu0
        %v3870 = vadd.f32 0.0, %v3869
        %v3871 = vpop.f32.mrf.mxu0
        %v3872 = vpop.f32.mrf.mxu0
        %v3873 = vadd.f32 0.0, %v3872
        %v3874 = vpop.f32.mrf.mxu0
        %3875 = vmatprep.mubr.bf16.mxu0 0
        %3876 = vmatmul.mubr.bf16.gmra.mxu0 %v3536
        %v3877 = vpop.f32.mrf.mxu0
        %v3878 = vadd.f32 0.0, %v3877
        %v3879 = vpop.f32.mrf.mxu0
        %v3880 = vpop.f32.mrf.mxu0
        %v3881 = vadd.f32 0.0, %v3880
        %v3882 = vpop.f32.mrf.mxu0
        %3883 = vmatprep.mubr.bf16.mxu0 0
        %3884 = vmatmul.mubr.bf16.gmra.mxu0 %v3538
        %v3885 = vpop.f32.mrf.mxu0
        %v3886 = vadd.f32 0.0, %v3885
        %v3887 = vpop.f32.mrf.mxu0
        %v3888 = vpop.f32.mrf.mxu0
        %v3889 = vadd.f32 0.0, %v3888
        %v3890 = vpop.f32.mrf.mxu0
        %3891 = vmatprep.mubr.bf16.mxu0 0
        %3892 = vmatmul.mubr.bf16.gmra.mxu0 %v3540
        %v3893 = vpop.f32.mrf.mxu0
        %v3894 = vadd.f32 0.0, %v3893
        %v3895 = vpop.f32.mrf.mxu0
        %v3896 = vpop.f32.mrf.mxu0
        %v3897 = vadd.f32 0.0, %v3896
        %v3898 = vpop.f32.mrf.mxu0
        %3899 = vmatprep.mubr.bf16.mxu0 0
        %3900 = vmatmul.mubr.bf16.gmra.mxu0 %v3542
        %v3901 = vpop.f32.mrf.mxu0
        %v3902 = vadd.f32 0.0, %v3901
        %v3903 = vpop.f32.mrf.mxu0
        %v3904 = vpop.f32.mrf.mxu0
        %v3905 = vadd.f32 0.0, %v3904
        %v3906 = vpop.f32.mrf.mxu0
        %3907 = vmatprep.mubr.bf16.mxu0 0
        %3908 = vmatmul.mubr.bf16.gmra.mxu0 %v3544
        %v3909 = vpop.f32.mrf.mxu0
        %v3910 = vadd.f32 0.0, %v3909
        %v3911 = vpop.f32.mrf.mxu0
        %v3912 = vpop.f32.mrf.mxu0
        %v3913 = vadd.f32 0.0, %v3912
        %v3914 = vpop.f32.mrf.mxu0
        %3915 = vdwg.mxu0
        %3916 = vmatprep.subr.bf16.mxu0 0
        %3917 = vmatpush1.bf16.xpose.msra.mxu0 %v3592
        %3918 = vmatprep.subr.bf16.mxu0 0
        %3919 = vmatpush1.bf16.xpose.msra.mxu0 %v3590
        %3920 = vmatprep.subr.bf16.mxu0 0
        %3921 = vmatpush1.bf16.xpose.msra.mxu0 %v3588
        %3922 = vmatprep.subr.bf16.mxu0 0
        %3923 = vmatpush1.bf16.xpose.msra.mxu0 %v3586
        %3924 = vmatprep.subr.bf16.mxu0 0
        %3925 = vmatpush1.bf16.xpose.msra.mxu0 %v3584
        %3926 = vmatprep.subr.bf16.mxu0 0
        %3927 = vmatpush1.bf16.xpose.msra.mxu0 %v3582
        %3928 = vmatprep.subr.bf16.mxu0 0
        %3929 = vmatpush1.bf16.xpose.msra.mxu0 %v3580
        %3930 = vmatprep.subr.bf16.mxu0 0
        %3931 = vmatpush1.bf16.xpose.msra.mxu0 %v3578
        %3932 = vmatprep.subr.bf16.mxu0 0
        %3933 = vmatpush2.bf16.xpose.msra.mxu0 0
        %3934 = vmatprep.subr.bf16.mxu0 0
        %3935 = vmatpush2.bf16.xpose.msra.mxu0 0
        %3936 = vmatprep.subr.bf16.mxu0 0
        %3937 = vmatpush2.bf16.xpose.msra.mxu0 0
        %3938 = vmatprep.subr.bf16.mxu0 0
        %3939 = vmatpush2.bf16.xpose.msra.mxu0 0
        %3940 = vmatprep.subr.bf16.mxu0 0
        %3941 = vmatpush2.bf16.xpose.msra.mxu0 0
        %3942 = vmatprep.subr.bf16.mxu0 0
        %3943 = vmatpush2.bf16.xpose.msra.mxu0 0
        %3944 = vmatprep.subr.bf16.mxu0 0
        %3945 = vmatpush2.bf16.xpose.msra.mxu0 0
        %3946 = vmatprep.subr.bf16.mxu0 0
        %3947 = vmatpush2.bf16.xpose.msra.mxu0 0
        %3948 = vmatprep.mubr.bf16.mxu0 0
        %3949 = vmatmul.mubr.bf16.gmra.mxu0 %v3546
        %v3950 = vpop.f32.mrf.mxu0
        %v3951 = vadd.f32 0.0, %v3950
        %v3952 = vpop.f32.mrf.mxu0
        %v3953 = vpop.f32.mrf.mxu0
        %v3954 = vadd.f32 0.0, %v3953
        %v3955 = vpop.f32.mrf.mxu0
        %3956 = vmatprep.mubr.bf16.mxu0 0
        %3957 = vmatmul.mubr.bf16.gmra.mxu0 %v3548
        %v3958 = vpop.f32.mrf.mxu0
        %v3959 = vadd.f32 0.0, %v3958
        %v3960 = vpop.f32.mrf.mxu0
        %v3961 = vpop.f32.mrf.mxu0
        %v3962 = vadd.f32 0.0, %v3961
        %v3963 = vpop.f32.mrf.mxu0
        %3964 = vmatprep.mubr.bf16.mxu0 0
        %3965 = vmatmul.mubr.bf16.gmra.mxu0 %v3550
        %v3966 = vpop.f32.mrf.mxu0
        %v3967 = vadd.f32 0.0, %v3966
        %v3968 = vpop.f32.mrf.mxu0
        %v3969 = vpop.f32.mrf.mxu0
        %v3970 = vadd.f32 0.0, %v3969
        %v3971 = vpop.f32.mrf.mxu0
        %3972 = vmatprep.mubr.bf16.mxu0 0
        %3973 = vmatmul.mubr.bf16.gmra.mxu0 %v3552
        %v3974 = vpop.f32.mrf.mxu0
        %v3975 = vadd.f32 0.0, %v3974
        %v3976 = vpop.f32.mrf.mxu0
        %v3977 = vpop.f32.mrf.mxu0
        %v3978 = vadd.f32 0.0, %v3977
        %v3979 = vpop.f32.mrf.mxu0
        %3980 = vmatprep.mubr.bf16.mxu0 0
        %3981 = vmatmul.mubr.bf16.gmra.mxu0 %v3554
        %v3982 = vpop.f32.mrf.mxu0
        %v3983 = vadd.f32 0.0, %v3982
        %v3984 = vpop.f32.mrf.mxu0
        %v3985 = vpop.f32.mrf.mxu0
        %v3986 = vadd.f32 0.0, %v3985
        %v3987 = vpop.f32.mrf.mxu0
        %3988 = vmatprep.mubr.bf16.mxu0 0
        %3989 = vmatmul.mubr.bf16.gmra.mxu0 %v3556
        %v3990 = vpop.f32.mrf.mxu0
        %v3991 = vadd.f32 0.0, %v3990
        %v3992 = vpop.f32.mrf.mxu0
        %v3993 = vpop.f32.mrf.mxu0
        %v3994 = vadd.f32 0.0, %v3993
        %v3995 = vpop.f32.mrf.mxu0
        %3996 = vmatprep.mubr.bf16.mxu0 0
        %3997 = vmatmul.mubr.bf16.gmra.mxu0 %v3558
        %v3998 = vpop.f32.mrf.mxu0
        %v3999 = vadd.f32 0.0, %v3998
        %v4000 = vpop.f32.mrf.mxu0
        %v4001 = vpop.f32.mrf.mxu0
        %v4002 = vadd.f32 0.0, %v4001
        %v4003 = vpop.f32.mrf.mxu0
        %4004 = vmatprep.mubr.bf16.mxu0 0
        %4005 = vmatmul.mubr.bf16.gmra.mxu0 %v3560
        %v4006 = vpop.f32.mrf.mxu0
        %v4007 = vadd.f32 0.0, %v4006
        %v4008 = vpop.f32.mrf.mxu0
        %v4009 = vpop.f32.mrf.mxu0
        %v4010 = vadd.f32 0.0, %v4009
        %v4011 = vpop.f32.mrf.mxu0
        %4012 = vdwg.mxu0
        %v4013 = vmul.f32 %v3660, %v1710
        %v4014 = vmul.f32 %v3663, %v1711
        %v4015 = vmul.f32 %v3668, %v1712
        %v4016 = vmul.f32 %v3671, %v1713
        %v4017 = vmul.f32 %v3676, %v1714
        %v4018 = vmul.f32 %v3679, %v1715
        %v4019 = vmul.f32 %v3684, %v1716
        %v4020 = vmul.f32 %v3687, %v1717
        %v4021 = vmul.f32 %v3692, %v1718
        %v4022 = vmul.f32 %v3695, %v1719
        %v4023 = vmul.f32 %v3700, %v1720
        %v4024 = vmul.f32 %v3703, %v1721
        %v4025 = vmul.f32 %v3708, %v1722
        %v4026 = vmul.f32 %v3711, %v1723
        %v4027 = vmul.f32 %v3716, %v1724
        %v4028 = vmul.f32 %v3719, %v1725
        %v4029 = vmul.f32 %v3757, %v1710
        %v4030 = vmul.f32 %v3760, %v1711
        %v4031 = vmul.f32 %v3765, %v1712
        %v4032 = vmul.f32 %v3768, %v1713
        %v4033 = vmul.f32 %v3773, %v1714
        %v4034 = vmul.f32 %v3776, %v1715
        %v4035 = vmul.f32 %v3781, %v1716
        %v4036 = vmul.f32 %v3784, %v1717
        %v4037 = vmul.f32 %v3789, %v1718
        %v4038 = vmul.f32 %v3792, %v1719
        %v4039 = vmul.f32 %v3797, %v1720
        %v4040 = vmul.f32 %v3800, %v1721
        %v4041 = vmul.f32 %v3805, %v1722
        %v4042 = vmul.f32 %v3808, %v1723
        %v4043 = vmul.f32 %v3813, %v1724
        %v4044 = vmul.f32 %v3816, %v1725
        %v4045 = vmul.f32 %v3854, %v1726
        %v4046 = vmul.f32 %v3857, %v1727
        %v4047 = vmul.f32 %v3862, %v1728
        %v4048 = vmul.f32 %v3865, %v1729
        %v4049 = vmul.f32 %v3870, %v1730
        %v4050 = vmul.f32 %v3873, %v1731
        %v4051 = vmul.f32 %v3878, %v1732
        %v4052 = vmul.f32 %v3881, %v1733
        %v4053 = vmul.f32 %v3886, %v1734
        %v4054 = vmul.f32 %v3889, %v1735
        %v4055 = vmul.f32 %v3894, %v1736
        %v4056 = vmul.f32 %v3897, %v1737
        %v4057 = vmul.f32 %v3902, %v1738
        %v4058 = vmul.f32 %v3905, %v1739
        %v4059 = vmul.f32 %v3910, %v1740
        %v4060 = vmul.f32 %v3913, %v1741
        %v4061 = vmul.f32 %v3951, %v1726
        %v4062 = vmul.f32 %v3954, %v1727
        %v4063 = vmul.f32 %v3959, %v1728
        %v4064 = vmul.f32 %v3962, %v1729
        %v4065 = vmul.f32 %v3967, %v1730
        %v4066 = vmul.f32 %v3970, %v1731
        %v4067 = vmul.f32 %v3975, %v1732
        %v4068 = vmul.f32 %v3978, %v1733
        %v4069 = vmul.f32 %v3983, %v1734
        %v4070 = vmul.f32 %v3986, %v1735
        %v4071 = vmul.f32 %v3991, %v1736
        %v4072 = vmul.f32 %v3994, %v1737
        %v4073 = vmul.f32 %v3999, %v1738
        %v4074 = vmul.f32 %v4002, %v1739
        %v4075 = vmul.f32 %v4007, %v1740
        %v4076 = vmul.f32 %v4010, %v1741
        %v4077 = vpack.c.bf16 %v4014, %v4013
        %v4078 = vpack.c.bf16 %v4016, %v4015
        %v4079 = vpack.c.bf16 %v4018, %v4017
        %v4080 = vpack.c.bf16 %v4020, %v4019
        %v4081 = vpack.c.bf16 %v4022, %v4021
        %v4082 = vpack.c.bf16 %v4024, %v4023
        %v4083 = vpack.c.bf16 %v4026, %v4025
        %v4084 = vpack.c.bf16 %v4028, %v4027
        %v4085 = vpack.c.bf16 %v4030, %v4029
        %v4086 = vpack.c.bf16 %v4032, %v4031
        %v4087 = vpack.c.bf16 %v4034, %v4033
        %v4088 = vpack.c.bf16 %v4036, %v4035
        %v4089 = vpack.c.bf16 %v4038, %v4037
        %v4090 = vpack.c.bf16 %v4040, %v4039
        %v4091 = vpack.c.bf16 %v4042, %v4041
        %v4092 = vpack.c.bf16 %v4044, %v4043
        %v4093 = vpack.c.bf16 %v4046, %v4045
        %v4094 = vpack.c.bf16 %v4048, %v4047
        %v4095 = vpack.c.bf16 %v4050, %v4049
        %v4096 = vpack.c.bf16 %v4052, %v4051
        %v4097 = vpack.c.bf16 %v4054, %v4053
        %v4098 = vpack.c.bf16 %v4056, %v4055
        %v4099 = vpack.c.bf16 %v4058, %v4057
        %v4100 = vpack.c.bf16 %v4060, %v4059
        %v4101 = vpack.c.bf16 %v4062, %v4061
        %v4102 = vpack.c.bf16 %v4064, %v4063
        %v4103 = vpack.c.bf16 %v4066, %v4065
        %v4104 = vpack.c.bf16 %v4068, %v4067
        %v4105 = vpack.c.bf16 %v4070, %v4069
        %v4106 = vpack.c.bf16 %v4072, %v4071
        %v4107 = vpack.c.bf16 %v4074, %v4073
        %v4108 = vpack.c.bf16 %v4076, %v4075
        %4109 = vmatprep.subr.bf16.mxu0 0
        %4110 = vmatpush1.bf16.msra.mxu0 %v3607
        %4111 = vmatprep.subr.bf16.mxu0 0
        %4112 = vmatpush1.bf16.msra.mxu0 %v3605
        %4113 = vmatprep.subr.bf16.mxu0 0
        %4114 = vmatpush1.bf16.msra.mxu0 %v3603
        %4115 = vmatprep.subr.bf16.mxu0 0
        %4116 = vmatpush1.bf16.msra.mxu0 %v3601
        %4117 = vmatprep.subr.bf16.mxu0 0
        %4118 = vmatpush1.bf16.msra.mxu0 %v3599
        %4119 = vmatprep.subr.bf16.mxu0 0
        %4120 = vmatpush1.bf16.msra.mxu0 %v3597
        %4121 = vmatprep.subr.bf16.mxu0 0
        %4122 = vmatpush1.bf16.msra.mxu0 %v3595
        %4123 = vmatprep.subr.bf16.mxu0 0
        %4124 = vmatpush1.bf16.msra.mxu0 %v3593
        %4125 = vmatprep.subr.bf16.mxu0 0
        %4126 = vmatpush2.bf16.msra.mxu0 0
        %4127 = vmatprep.subr.bf16.mxu0 0
        %4128 = vmatpush2.bf16.msra.mxu0 0
        %4129 = vmatprep.subr.bf16.mxu0 0
        %4130 = vmatpush2.bf16.msra.mxu0 0
        %4131 = vmatprep.subr.bf16.mxu0 0
        %4132 = vmatpush2.bf16.msra.mxu0 0
        %4133 = vmatprep.subr.bf16.mxu0 0
        %4134 = vmatpush2.bf16.msra.mxu0 0
        %4135 = vmatprep.subr.bf16.mxu0 0
        %4136 = vmatpush2.bf16.msra.mxu0 0
        %4137 = vmatprep.subr.bf16.mxu0 0
        %4138 = vmatpush2.bf16.msra.mxu0 0
        %4139 = vmatprep.subr.bf16.mxu0 0
        %4140 = vmatpush2.bf16.msra.mxu0 0
        %4141 = vmatprep.mubr.bf16.mxu0 0
        %4142 = vmatmul.mubr.bf16.gmra.mxu0 %v4077
        %v4143 = vpop.f32.mrf.mxu0
        %v4144 = vadd.f32 0.0, %v4143
        %v4145 = vpop.f32.mrf.mxu0
        %v4146 = vpop.f32.mrf.mxu0
        %v4147 = vadd.f32 0.0, %v4146
        %v4148 = vpop.f32.mrf.mxu0
        %4149 = vmatprep.mubr.bf16.mxu0 0
        %4150 = vmatmul.mubr.bf16.gmra.mxu0 %v4078
        %v4151 = vpop.f32.mrf.mxu0
        %v4152 = vadd.f32 0.0, %v4151
        %v4153 = vpop.f32.mrf.mxu0
        %v4154 = vpop.f32.mrf.mxu0
        %v4155 = vadd.f32 0.0, %v4154
        %v4156 = vpop.f32.mrf.mxu0
        %4157 = vmatprep.mubr.bf16.mxu0 0
        %4158 = vmatmul.mubr.bf16.gmra.mxu0 %v4079
        %v4159 = vpop.f32.mrf.mxu0
        %v4160 = vadd.f32 0.0, %v4159
        %v4161 = vpop.f32.mrf.mxu0
        %v4162 = vpop.f32.mrf.mxu0
        %v4163 = vadd.f32 0.0, %v4162
        %v4164 = vpop.f32.mrf.mxu0
        %4165 = vmatprep.mubr.bf16.mxu0 0
        %4166 = vmatmul.mubr.bf16.gmra.mxu0 %v4080
        %v4167 = vpop.f32.mrf.mxu0
        %v4168 = vadd.f32 0.0, %v4167
        %v4169 = vpop.f32.mrf.mxu0
        %v4170 = vpop.f32.mrf.mxu0
        %v4171 = vadd.f32 0.0, %v4170
        %v4172 = vpop.f32.mrf.mxu0
        %4173 = vmatprep.mubr.bf16.mxu0 0
        %4174 = vmatmul.mubr.bf16.gmra.mxu0 %v4081
        %v4175 = vpop.f32.mrf.mxu0
        %v4176 = vadd.f32 0.0, %v4175
        %v4177 = vpop.f32.mrf.mxu0
        %v4178 = vpop.f32.mrf.mxu0
        %v4179 = vadd.f32 0.0, %v4178
        %v4180 = vpop.f32.mrf.mxu0
        %4181 = vmatprep.mubr.bf16.mxu0 0
        %4182 = vmatmul.mubr.bf16.gmra.mxu0 %v4082
        %v4183 = vpop.f32.mrf.mxu0
        %v4184 = vadd.f32 0.0, %v4183
        %v4185 = vpop.f32.mrf.mxu0
        %v4186 = vpop.f32.mrf.mxu0
        %v4187 = vadd.f32 0.0, %v4186
        %v4188 = vpop.f32.mrf.mxu0
        %4189 = vmatprep.mubr.bf16.mxu0 0
        %4190 = vmatmul.mubr.bf16.gmra.mxu0 %v4083
        %v4191 = vpop.f32.mrf.mxu0
        %v4192 = vadd.f32 0.0, %v4191
        %v4193 = vpop.f32.mrf.mxu0
        %v4194 = vpop.f32.mrf.mxu0
        %v4195 = vadd.f32 0.0, %v4194
        %v4196 = vpop.f32.mrf.mxu0
        %4197 = vmatprep.mubr.bf16.mxu0 0
        %4198 = vmatmul.mubr.bf16.gmra.mxu0 %v4084
        %v4199 = vpop.f32.mrf.mxu0
        %v4200 = vadd.f32 0.0, %v4199
        %v4201 = vpop.f32.mrf.mxu0
        %v4202 = vpop.f32.mrf.mxu0
        %v4203 = vadd.f32 0.0, %v4202
        %v4204 = vpop.f32.mrf.mxu0
        %4205 = vdwg.mxu0
        %4206 = vmatprep.subr.bf16.mxu0 0
        %4207 = vmatpush1.bf16.msra.mxu0 %v3623
        %4208 = vmatprep.subr.bf16.mxu0 0
        %4209 = vmatpush1.bf16.msra.mxu0 %v3621
        %4210 = vmatprep.subr.bf16.mxu0 0
        %4211 = vmatpush1.bf16.msra.mxu0 %v3619
        %4212 = vmatprep.subr.bf16.mxu0 0
        %4213 = vmatpush1.bf16.msra.mxu0 %v3617
        %4214 = vmatprep.subr.bf16.mxu0 0
        %4215 = vmatpush1.bf16.msra.mxu0 %v3615
        %4216 = vmatprep.subr.bf16.mxu0 0
        %4217 = vmatpush1.bf16.msra.mxu0 %v3613
        %4218 = vmatprep.subr.bf16.mxu0 0
        %4219 = vmatpush1.bf16.msra.mxu0 %v3611
        %4220 = vmatprep.subr.bf16.mxu0 0
        %4221 = vmatpush1.bf16.msra.mxu0 %v3609
        %4222 = vmatprep.subr.bf16.mxu0 0
        %4223 = vmatpush2.bf16.msra.mxu0 0
        %4224 = vmatprep.subr.bf16.mxu0 0
        %4225 = vmatpush2.bf16.msra.mxu0 0
        %4226 = vmatprep.subr.bf16.mxu0 0
        %4227 = vmatpush2.bf16.msra.mxu0 0
        %4228 = vmatprep.subr.bf16.mxu0 0
        %4229 = vmatpush2.bf16.msra.mxu0 0
        %4230 = vmatprep.subr.bf16.mxu0 0
        %4231 = vmatpush2.bf16.msra.mxu0 0
        %4232 = vmatprep.subr.bf16.mxu0 0
        %4233 = vmatpush2.bf16.msra.mxu0 0
        %4234 = vmatprep.subr.bf16.mxu0 0
        %4235 = vmatpush2.bf16.msra.mxu0 0
        %4236 = vmatprep.subr.bf16.mxu0 0
        %4237 = vmatpush2.bf16.msra.mxu0 0
        %4238 = vmatprep.mubr.bf16.mxu0 0
        %4239 = vmatmul.mubr.bf16.gmra.mxu0 %v4085
        %v4240 = vpop.f32.mrf.mxu0
        %v4241 = vadd.f32 0.0, %v4240
        %v4242 = vpop.f32.mrf.mxu0
        %v4243 = vpop.f32.mrf.mxu0
        %v4244 = vadd.f32 0.0, %v4243
        %v4245 = vpop.f32.mrf.mxu0
        %4246 = vmatprep.mubr.bf16.mxu0 0
        %4247 = vmatmul.mubr.bf16.gmra.mxu0 %v4086
        %v4248 = vpop.f32.mrf.mxu0
        %v4249 = vadd.f32 0.0, %v4248
        %v4250 = vpop.f32.mrf.mxu0
        %v4251 = vpop.f32.mrf.mxu0
        %v4252 = vadd.f32 0.0, %v4251
        %v4253 = vpop.f32.mrf.mxu0
        %4254 = vmatprep.mubr.bf16.mxu0 0
        %4255 = vmatmul.mubr.bf16.gmra.mxu0 %v4087
        %v4256 = vpop.f32.mrf.mxu0
        %v4257 = vadd.f32 0.0, %v4256
        %v4258 = vpop.f32.mrf.mxu0
        %v4259 = vpop.f32.mrf.mxu0
        %v4260 = vadd.f32 0.0, %v4259
        %v4261 = vpop.f32.mrf.mxu0
        %4262 = vmatprep.mubr.bf16.mxu0 0
        %4263 = vmatmul.mubr.bf16.gmra.mxu0 %v4088
        %v4264 = vpop.f32.mrf.mxu0
        %v4265 = vadd.f32 0.0, %v4264
        %v4266 = vpop.f32.mrf.mxu0
        %v4267 = vpop.f32.mrf.mxu0
        %v4268 = vadd.f32 0.0, %v4267
        %v4269 = vpop.f32.mrf.mxu0
        %4270 = vmatprep.mubr.bf16.mxu0 0
        %4271 = vmatmul.mubr.bf16.gmra.mxu0 %v4089
        %v4272 = vpop.f32.mrf.mxu0
        %v4273 = vadd.f32 0.0, %v4272
        %v4274 = vpop.f32.mrf.mxu0
        %v4275 = vpop.f32.mrf.mxu0
        %v4276 = vadd.f32 0.0, %v4275
        %v4277 = vpop.f32.mrf.mxu0
        %4278 = vmatprep.mubr.bf16.mxu0 0
        %4279 = vmatmul.mubr.bf16.gmra.mxu0 %v4090
        %v4280 = vpop.f32.mrf.mxu0
        %v4281 = vadd.f32 0.0, %v4280
        %v4282 = vpop.f32.mrf.mxu0
        %v4283 = vpop.f32.mrf.mxu0
        %v4284 = vadd.f32 0.0, %v4283
        %v4285 = vpop.f32.mrf.mxu0
        %4286 = vmatprep.mubr.bf16.mxu0 0
        %4287 = vmatmul.mubr.bf16.gmra.mxu0 %v4091
        %v4288 = vpop.f32.mrf.mxu0
        %v4289 = vadd.f32 0.0, %v4288
        %v4290 = vpop.f32.mrf.mxu0
        %v4291 = vpop.f32.mrf.mxu0
        %v4292 = vadd.f32 0.0, %v4291
        %v4293 = vpop.f32.mrf.mxu0
        %4294 = vmatprep.mubr.bf16.mxu0 0
        %4295 = vmatmul.mubr.bf16.gmra.mxu0 %v4092
        %v4296 = vpop.f32.mrf.mxu0
        %v4297 = vadd.f32 0.0, %v4296
        %v4298 = vpop.f32.mrf.mxu0
        %v4299 = vpop.f32.mrf.mxu0
        %v4300 = vadd.f32 0.0, %v4299
        %v4301 = vpop.f32.mrf.mxu0
        %4302 = vdwg.mxu0
        %4303 = vmatprep.subr.bf16.mxu0 0
        %4304 = vmatpush1.bf16.msra.mxu0 %v3608
        %4305 = vmatprep.subr.bf16.mxu0 0
        %4306 = vmatpush1.bf16.msra.mxu0 %v3606
        %4307 = vmatprep.subr.bf16.mxu0 0
        %4308 = vmatpush1.bf16.msra.mxu0 %v3604
        %4309 = vmatprep.subr.bf16.mxu0 0
        %4310 = vmatpush1.bf16.msra.mxu0 %v3602
        %4311 = vmatprep.subr.bf16.mxu0 0
        %4312 = vmatpush1.bf16.msra.mxu0 %v3600
        %4313 = vmatprep.subr.bf16.mxu0 0
        %4314 = vmatpush1.bf16.msra.mxu0 %v3598
        %4315 = vmatprep.subr.bf16.mxu0 0
        %4316 = vmatpush1.bf16.msra.mxu0 %v3596
        %4317 = vmatprep.subr.bf16.mxu0 0
        %4318 = vmatpush1.bf16.msra.mxu0 %v3594
        %4319 = vmatprep.subr.bf16.mxu0 0
        %4320 = vmatpush2.bf16.msra.mxu0 0
        %4321 = vmatprep.subr.bf16.mxu0 0
        %4322 = vmatpush2.bf16.msra.mxu0 0
        %4323 = vmatprep.subr.bf16.mxu0 0
        %4324 = vmatpush2.bf16.msra.mxu0 0
        %4325 = vmatprep.subr.bf16.mxu0 0
        %4326 = vmatpush2.bf16.msra.mxu0 0
        %4327 = vmatprep.subr.bf16.mxu0 0
        %4328 = vmatpush2.bf16.msra.mxu0 0
        %4329 = vmatprep.subr.bf16.mxu0 0
        %4330 = vmatpush2.bf16.msra.mxu0 0
        %4331 = vmatprep.subr.bf16.mxu0 0
        %4332 = vmatpush2.bf16.msra.mxu0 0
        %4333 = vmatprep.subr.bf16.mxu0 0
        %4334 = vmatpush2.bf16.msra.mxu0 0
        %4335 = vmatprep.mubr.bf16.mxu0 0
        %4336 = vmatmul.mubr.bf16.gmra.mxu0 %v4093
        %v4337 = vpop.f32.mrf.mxu0
        %v4338 = vadd.f32 0.0, %v4337
        %v4339 = vpop.f32.mrf.mxu0
        %v4340 = vpop.f32.mrf.mxu0
        %v4341 = vadd.f32 0.0, %v4340
        %v4342 = vpop.f32.mrf.mxu0
        %4343 = vmatprep.mubr.bf16.mxu0 0
        %4344 = vmatmul.mubr.bf16.gmra.mxu0 %v4094
        %v4345 = vpop.f32.mrf.mxu0
        %v4346 = vadd.f32 0.0, %v4345
        %v4347 = vpop.f32.mrf.mxu0
        %v4348 = vpop.f32.mrf.mxu0
        %v4349 = vadd.f32 0.0, %v4348
        %v4350 = vpop.f32.mrf.mxu0
        %4351 = vmatprep.mubr.bf16.mxu0 0
        %4352 = vmatmul.mubr.bf16.gmra.mxu0 %v4095
        %v4353 = vpop.f32.mrf.mxu0
        %v4354 = vadd.f32 0.0, %v4353
        %v4355 = vpop.f32.mrf.mxu0
        %v4356 = vpop.f32.mrf.mxu0
        %v4357 = vadd.f32 0.0, %v4356
        %v4358 = vpop.f32.mrf.mxu0
        %4359 = vmatprep.mubr.bf16.mxu0 0
        %4360 = vmatmul.mubr.bf16.gmra.mxu0 %v4096
        %v4361 = vpop.f32.mrf.mxu0
        %v4362 = vadd.f32 0.0, %v4361
        %v4363 = vpop.f32.mrf.mxu0
        %v4364 = vpop.f32.mrf.mxu0
        %v4365 = vadd.f32 0.0, %v4364
        %v4366 = vpop.f32.mrf.mxu0
        %4367 = vmatprep.mubr.bf16.mxu0 0
        %4368 = vmatmul.mubr.bf16.gmra.mxu0 %v4097
        %v4369 = vpop.f32.mrf.mxu0
        %v4370 = vadd.f32 0.0, %v4369
        %v4371 = vpop.f32.mrf.mxu0
        %v4372 = vpop.f32.mrf.mxu0
        %v4373 = vadd.f32 0.0, %v4372
        %v4374 = vpop.f32.mrf.mxu0
        %4375 = vmatprep.mubr.bf16.mxu0 0
        %4376 = vmatmul.mubr.bf16.gmra.mxu0 %v4098
        %v4377 = vpop.f32.mrf.mxu0
        %v4378 = vadd.f32 0.0, %v4377
        %v4379 = vpop.f32.mrf.mxu0
        %v4380 = vpop.f32.mrf.mxu0
        %v4381 = vadd.f32 0.0, %v4380
        %v4382 = vpop.f32.mrf.mxu0
        %4383 = vmatprep.mubr.bf16.mxu0 0
        %4384 = vmatmul.mubr.bf16.gmra.mxu0 %v4099
        %v4385 = vpop.f32.mrf.mxu0
        %v4386 = vadd.f32 0.0, %v4385
        %v4387 = vpop.f32.mrf.mxu0
        %v4388 = vpop.f32.mrf.mxu0
        %v4389 = vadd.f32 0.0, %v4388
        %v4390 = vpop.f32.mrf.mxu0
        %4391 = vmatprep.mubr.bf16.mxu0 0
        %4392 = vmatmul.mubr.bf16.gmra.mxu0 %v4100
        %v4393 = vpop.f32.mrf.mxu0
        %v4394 = vadd.f32 0.0, %v4393
        %v4395 = vpop.f32.mrf.mxu0
        %v4396 = vpop.f32.mrf.mxu0
        %v4397 = vadd.f32 0.0, %v4396
        %v4398 = vpop.f32.mrf.mxu0
        %4399 = vdwg.mxu0
        %4400 = vmatprep.subr.bf16.mxu0 0
        %4401 = vmatpush1.bf16.msra.mxu0 %v3624
        %4402 = vmatprep.subr.bf16.mxu0 0
        %4403 = vmatpush1.bf16.msra.mxu0 %v3622
        %4404 = vmatprep.subr.bf16.mxu0 0
        %4405 = vmatpush1.bf16.msra.mxu0 %v3620
        %4406 = vmatprep.subr.bf16.mxu0 0
        %4407 = vmatpush1.bf16.msra.mxu0 %v3618
        %4408 = vmatprep.subr.bf16.mxu0 0
        %4409 = vmatpush1.bf16.msra.mxu0 %v3616
        %4410 = vmatprep.subr.bf16.mxu0 0
        %4411 = vmatpush1.bf16.msra.mxu0 %v3614
        %4412 = vmatprep.subr.bf16.mxu0 0
        %4413 = vmatpush1.bf16.msra.mxu0 %v3612
        %4414 = vmatprep.subr.bf16.mxu0 0
        %4415 = vmatpush1.bf16.msra.mxu0 %v3610
        %4416 = vmatprep.subr.bf16.mxu0 0
        %4417 = vmatpush2.bf16.msra.mxu0 0
        %4418 = vmatprep.subr.bf16.mxu0 0
        %4419 = vmatpush2.bf16.msra.mxu0 0
        %4420 = vmatprep.subr.bf16.mxu0 0
        %4421 = vmatpush2.bf16.msra.mxu0 0
        %4422 = vmatprep.subr.bf16.mxu0 0
        %4423 = vmatpush2.bf16.msra.mxu0 0
        %4424 = vmatprep.subr.bf16.mxu0 0
        %4425 = vmatpush2.bf16.msra.mxu0 0
        %4426 = vmatprep.subr.bf16.mxu0 0
        %4427 = vmatpush2.bf16.msra.mxu0 0
        %4428 = vmatprep.subr.bf16.mxu0 0
        %4429 = vmatpush2.bf16.msra.mxu0 0
        %4430 = vmatprep.subr.bf16.mxu0 0
        %4431 = vmatpush2.bf16.msra.mxu0 0
        %4432 = vmatprep.mubr.bf16.mxu0 0
        %4433 = vmatmul.mubr.bf16.gmra.mxu0 %v4101
        %v4434 = vpop.f32.mrf.mxu0
        %v4435 = vadd.f32 0.0, %v4434
        %v4436 = vpop.f32.mrf.mxu0
        %v4437 = vpop.f32.mrf.mxu0
        %v4438 = vadd.f32 0.0, %v4437
        %v4439 = vpop.f32.mrf.mxu0
        %4440 = vmatprep.mubr.bf16.mxu0 0
        %4441 = vmatmul.mubr.bf16.gmra.mxu0 %v4102
        %v4442 = vpop.f32.mrf.mxu0
        %v4443 = vadd.f32 0.0, %v4442
        %v4444 = vpop.f32.mrf.mxu0
        %v4445 = vpop.f32.mrf.mxu0
        %v4446 = vadd.f32 0.0, %v4445
        %v4447 = vpop.f32.mrf.mxu0
        %4448 = vmatprep.mubr.bf16.mxu0 0
        %4449 = vmatmul.mubr.bf16.gmra.mxu0 %v4103
        %v4450 = vpop.f32.mrf.mxu0
        %v4451 = vadd.f32 0.0, %v4450
        %v4452 = vpop.f32.mrf.mxu0
        %v4453 = vpop.f32.mrf.mxu0
        %v4454 = vadd.f32 0.0, %v4453
        %v4455 = vpop.f32.mrf.mxu0
        %4456 = vmatprep.mubr.bf16.mxu0 0
        %4457 = vmatmul.mubr.bf16.gmra.mxu0 %v4104
        %v4458 = vpop.f32.mrf.mxu0
        %v4459 = vadd.f32 0.0, %v4458
        %v4460 = vpop.f32.mrf.mxu0
        %v4461 = vpop.f32.mrf.mxu0
        %v4462 = vadd.f32 0.0, %v4461
        %v4463 = vpop.f32.mrf.mxu0
        %4464 = vmatprep.mubr.bf16.mxu0 0
        %4465 = vmatmul.mubr.bf16.gmra.mxu0 %v4105
        %v4466 = vpop.f32.mrf.mxu0
        %v4467 = vadd.f32 0.0, %v4466
        %v4468 = vpop.f32.mrf.mxu0
        %v4469 = vpop.f32.mrf.mxu0
        %v4470 = vadd.f32 0.0, %v4469
        %v4471 = vpop.f32.mrf.mxu0
        %4472 = vmatprep.mubr.bf16.mxu0 0
        %4473 = vmatmul.mubr.bf16.gmra.mxu0 %v4106
        %v4474 = vpop.f32.mrf.mxu0
        %v4475 = vadd.f32 0.0, %v4474
        %v4476 = vpop.f32.mrf.mxu0
        %v4477 = vpop.f32.mrf.mxu0
        %v4478 = vadd.f32 0.0, %v4477
        %v4479 = vpop.f32.mrf.mxu0
        %4480 = vmatprep.mubr.bf16.mxu0 0
        %4481 = vmatmul.mubr.bf16.gmra.mxu0 %v4107
        %v4482 = vpop.f32.mrf.mxu0
        %v4483 = vadd.f32 0.0, %v4482
        %v4484 = vpop.f32.mrf.mxu0
        %v4485 = vpop.f32.mrf.mxu0
        %v4486 = vadd.f32 0.0, %v4485
        %v4487 = vpop.f32.mrf.mxu0
        %4488 = vmatprep.mubr.bf16.mxu0 0
        %4489 = vmatmul.mubr.bf16.gmra.mxu0 %v4108
        %v4490 = vpop.f32.mrf.mxu0
        %v4491 = vadd.f32 0.0, %v4490
        %v4492 = vpop.f32.mrf.mxu0
        %v4493 = vpop.f32.mrf.mxu0
        %v4494 = vadd.f32 0.0, %v4493
        %v4495 = vpop.f32.mrf.mxu0
        %4496 = vdwg.mxu0
        %4497 = vadd.xlane.f32.xlu0 %v4144
        %v4498 = vpop.xlane.xlu0 %4497
        %4499 = vadd.xlane.f32.xlu0 %v4147
        %v4500 = vpop.xlane.xlu0 %4499
        %4501 = vadd.xlane.f32.xlu0 %v4152
        %v4502 = vpop.xlane.xlu0 %4501
        %4503 = vadd.xlane.f32.xlu0 %v4155
        %v4504 = vpop.xlane.xlu0 %4503
        %4505 = vadd.xlane.f32.xlu0 %v4160
        %v4506 = vpop.xlane.xlu0 %4505
        %4507 = vadd.xlane.f32.xlu0 %v4163
        %v4508 = vpop.xlane.xlu0 %4507
        %4509 = vadd.xlane.f32.xlu0 %v4168
        %v4510 = vpop.xlane.xlu0 %4509
        %4511 = vadd.xlane.f32.xlu0 %v4171
        %v4512 = vpop.xlane.xlu0 %4511
        %4513 = vadd.xlane.f32.xlu0 %v4176
        %v4514 = vpop.xlane.xlu0 %4513
        %4515 = vadd.xlane.f32.xlu0 %v4179
        %v4516 = vpop.xlane.xlu0 %4515
        %4517 = vadd.xlane.f32.xlu0 %v4184
        %v4518 = vpop.xlane.xlu0 %4517
        %4519 = vadd.xlane.f32.xlu0 %v4187
        %v4520 = vpop.xlane.xlu0 %4519
        %4521 = vadd.xlane.f32.xlu0 %v4192
        %v4522 = vpop.xlane.xlu0 %4521
        %4523 = vadd.xlane.f32.xlu0 %v4195
        %v4524 = vpop.xlane.xlu0 %4523
        %4525 = vadd.xlane.f32.xlu0 %v4200
        %v4526 = vpop.xlane.xlu0 %4525
        %4527 = vadd.xlane.f32.xlu0 %v4203
        %v4528 = vpop.xlane.xlu0 %4527
        %4529 = vadd.xlane.f32.xlu0 %v4241
        %v4530 = vpop.xlane.xlu0 %4529
        %4531 = vadd.xlane.f32.xlu0 %v4244
        %v4532 = vpop.xlane.xlu0 %4531
        %4533 = vadd.xlane.f32.xlu0 %v4249
        %v4534 = vpop.xlane.xlu0 %4533
        %4535 = vadd.xlane.f32.xlu0 %v4252
        %v4536 = vpop.xlane.xlu0 %4535
        %4537 = vadd.xlane.f32.xlu0 %v4257
        %v4538 = vpop.xlane.xlu0 %4537
        %4539 = vadd.xlane.f32.xlu0 %v4260
        %v4540 = vpop.xlane.xlu0 %4539
        %4541 = vadd.xlane.f32.xlu0 %v4265
        %v4542 = vpop.xlane.xlu0 %4541
        %4543 = vadd.xlane.f32.xlu0 %v4268
        %v4544 = vpop.xlane.xlu0 %4543
        %4545 = vadd.xlane.f32.xlu0 %v4273
        %v4546 = vpop.xlane.xlu0 %4545
        %4547 = vadd.xlane.f32.xlu0 %v4276
        %v4548 = vpop.xlane.xlu0 %4547
        %4549 = vadd.xlane.f32.xlu0 %v4281
        %v4550 = vpop.xlane.xlu0 %4549
        %4551 = vadd.xlane.f32.xlu0 %v4284
        %v4552 = vpop.xlane.xlu0 %4551
        %4553 = vadd.xlane.f32.xlu0 %v4289
        %v4554 = vpop.xlane.xlu0 %4553
        %4555 = vadd.xlane.f32.xlu0 %v4292
        %v4556 = vpop.xlane.xlu0 %4555
        %4557 = vadd.xlane.f32.xlu0 %v4297
        %v4558 = vpop.xlane.xlu0 %4557
        %4559 = vadd.xlane.f32.xlu0 %v4300
        %v4560 = vpop.xlane.xlu0 %4559
        %4561 = vadd.xlane.f32.xlu0 %v4338
        %v4562 = vpop.xlane.xlu0 %4561
        %4563 = vadd.xlane.f32.xlu0 %v4341
        %v4564 = vpop.xlane.xlu0 %4563
        %4565 = vadd.xlane.f32.xlu0 %v4346
        %v4566 = vpop.xlane.xlu0 %4565
        %4567 = vadd.xlane.f32.xlu0 %v4349
        %v4568 = vpop.xlane.xlu0 %4567
        %4569 = vadd.xlane.f32.xlu0 %v4354
        %v4570 = vpop.xlane.xlu0 %4569
        %4571 = vadd.xlane.f32.xlu0 %v4357
        %v4572 = vpop.xlane.xlu0 %4571
        %4573 = vadd.xlane.f32.xlu0 %v4362
        %v4574 = vpop.xlane.xlu0 %4573
        %4575 = vadd.xlane.f32.xlu0 %v4365
        %v4576 = vpop.xlane.xlu0 %4575
        %4577 = vadd.xlane.f32.xlu0 %v4370
        %v4578 = vpop.xlane.xlu0 %4577
        %4579 = vadd.xlane.f32.xlu0 %v4373
        %v4580 = vpop.xlane.xlu0 %4579
        %4581 = vadd.xlane.f32.xlu0 %v4378
        %v4582 = vpop.xlane.xlu0 %4581
        %4583 = vadd.xlane.f32.xlu0 %v4381
        %v4584 = vpop.xlane.xlu0 %4583
        %4585 = vadd.xlane.f32.xlu0 %v4386
        %v4586 = vpop.xlane.xlu0 %4585
        %4587 = vadd.xlane.f32.xlu0 %v4389
        %v4588 = vpop.xlane.xlu0 %4587
        %4589 = vadd.xlane.f32.xlu0 %v4394
        %v4590 = vpop.xlane.xlu0 %4589
        %4591 = vadd.xlane.f32.xlu0 %v4397
        %v4592 = vpop.xlane.xlu0 %4591
        %4593 = vadd.xlane.f32.xlu0 %v4435
        %v4594 = vpop.xlane.xlu0 %4593
        %4595 = vadd.xlane.f32.xlu0 %v4438
        %v4596 = vpop.xlane.xlu0 %4595
        %4597 = vadd.xlane.f32.xlu0 %v4443
        %v4598 = vpop.xlane.xlu0 %4597
        %4599 = vadd.xlane.f32.xlu0 %v4446
        %v4600 = vpop.xlane.xlu0 %4599
        %4601 = vadd.xlane.f32.xlu0 %v4451
        %v4602 = vpop.xlane.xlu0 %4601
        %4603 = vadd.xlane.f32.xlu0 %v4454
        %v4604 = vpop.xlane.xlu0 %4603
        %4605 = vadd.xlane.f32.xlu0 %v4459
        %v4606 = vpop.xlane.xlu0 %4605
        %4607 = vadd.xlane.f32.xlu0 %v4462
        %v4608 = vpop.xlane.xlu0 %4607
        %4609 = vadd.xlane.f32.xlu0 %v4467
        %v4610 = vpop.xlane.xlu0 %4609
        %4611 = vadd.xlane.f32.xlu0 %v4470
        %v4612 = vpop.xlane.xlu0 %4611
        %4613 = vadd.xlane.f32.xlu0 %v4475
        %v4614 = vpop.xlane.xlu0 %4613
        %4615 = vadd.xlane.f32.xlu0 %v4478
        %v4616 = vpop.xlane.xlu0 %4615
        %4617 = vadd.xlane.f32.xlu0 %v4483
        %v4618 = vpop.xlane.xlu0 %4617
        %4619 = vadd.xlane.f32.xlu0 %v4486
        %v4620 = vpop.xlane.xlu0 %4619
        %4621 = vadd.xlane.f32.xlu0 %v4491
        %v4622 = vpop.xlane.xlu0 %4621
        %4623 = vadd.xlane.f32.xlu0 %v4494
        %v4624 = vpop.xlane.xlu0 %4623
        %v4625 = vrcp.pop 128.0
        %v4626 = vmul.f32 %v4498, %v4625
        %v4627 = vmul.f32 %v4500, %v4625
        %v4628 = vmul.f32 %v4502, %v4625
        %v4629 = vmul.f32 %v4504, %v4625
        %v4630 = vmul.f32 %v4506, %v4625
        %v4631 = vmul.f32 %v4508, %v4625
        %v4632 = vmul.f32 %v4510, %v4625
        %v4633 = vmul.f32 %v4512, %v4625
        %v4634 = vmul.f32 %v4514, %v4625
        %v4635 = vmul.f32 %v4516, %v4625
        %v4636 = vmul.f32 %v4518, %v4625
        %v4637 = vmul.f32 %v4520, %v4625
        %v4638 = vmul.f32 %v4522, %v4625
        %v4639 = vmul.f32 %v4524, %v4625
        %v4640 = vmul.f32 %v4526, %v4625
        %v4641 = vmul.f32 %v4528, %v4625
        %v4642 = vmul.f32 %v4530, %v4625
        %v4643 = vmul.f32 %v4532, %v4625
        %v4644 = vmul.f32 %v4534, %v4625
        %v4645 = vmul.f32 %v4536, %v4625
        %v4646 = vmul.f32 %v4538, %v4625
        %v4647 = vmul.f32 %v4540, %v4625
        %v4648 = vmul.f32 %v4542, %v4625
        %v4649 = vmul.f32 %v4544, %v4625
        %v4650 = vmul.f32 %v4546, %v4625
        %v4651 = vmul.f32 %v4548, %v4625
        %v4652 = vmul.f32 %v4550, %v4625
        %v4653 = vmul.f32 %v4552, %v4625
        %v4654 = vmul.f32 %v4554, %v4625
        %v4655 = vmul.f32 %v4556, %v4625
        %v4656 = vmul.f32 %v4558, %v4625
        %v4657 = vmul.f32 %v4560, %v4625
        %v4658 = vmul.f32 %v4562, %v4625
        %v4659 = vmul.f32 %v4564, %v4625
        %v4660 = vmul.f32 %v4566, %v4625
        %v4661 = vmul.f32 %v4568, %v4625
        %v4662 = vmul.f32 %v4570, %v4625
        %v4663 = vmul.f32 %v4572, %v4625
        %v4664 = vmul.f32 %v4574, %v4625
        %v4665 = vmul.f32 %v4576, %v4625
        %v4666 = vmul.f32 %v4578, %v4625
        %v4667 = vmul.f32 %v4580, %v4625
        %v4668 = vmul.f32 %v4582, %v4625
        %v4669 = vmul.f32 %v4584, %v4625
        %v4670 = vmul.f32 %v4586, %v4625
        %v4671 = vmul.f32 %v4588, %v4625
        %v4672 = vmul.f32 %v4590, %v4625
        %v4673 = vmul.f32 %v4592, %v4625
        %v4674 = vmul.f32 %v4594, %v4625
        %v4675 = vmul.f32 %v4596, %v4625
        %v4676 = vmul.f32 %v4598, %v4625
        %v4677 = vmul.f32 %v4600, %v4625
        %v4678 = vmul.f32 %v4602, %v4625
        %v4679 = vmul.f32 %v4604, %v4625
        %v4680 = vmul.f32 %v4606, %v4625
        %v4681 = vmul.f32 %v4608, %v4625
        %v4682 = vmul.f32 %v4610, %v4625
        %v4683 = vmul.f32 %v4612, %v4625
        %v4684 = vmul.f32 %v4614, %v4625
        %v4685 = vmul.f32 %v4616, %v4625
        %v4686 = vmul.f32 %v4618, %v4625
        %v4687 = vmul.f32 %v4620, %v4625
        %v4688 = vmul.f32 %v4622, %v4625
        %v4689 = vmul.f32 %v4624, %v4625
        %v4690 = vsub.f32 %v4144, %v4626
        %v4691 = vsub.f32 %v4147, %v4627
        %v4692 = vsub.f32 %v4152, %v4628
        %v4693 = vsub.f32 %v4155, %v4629
        %v4694 = vsub.f32 %v4160, %v4630
        %v4695 = vsub.f32 %v4163, %v4631
        %v4696 = vsub.f32 %v4168, %v4632
        %v4697 = vsub.f32 %v4171, %v4633
        %v4698 = vsub.f32 %v4176, %v4634
        %v4699 = vsub.f32 %v4179, %v4635
        %v4700 = vsub.f32 %v4184, %v4636
        %v4701 = vsub.f32 %v4187, %v4637
        %v4702 = vsub.f32 %v4192, %v4638
        %v4703 = vsub.f32 %v4195, %v4639
        %v4704 = vsub.f32 %v4200, %v4640
        %v4705 = vsub.f32 %v4203, %v4641
        %v4706 = vsub.f32 %v4241, %v4642
        %v4707 = vsub.f32 %v4244, %v4643
        %v4708 = vsub.f32 %v4249, %v4644
        %v4709 = vsub.f32 %v4252, %v4645
        %v4710 = vsub.f32 %v4257, %v4646
        %v4711 = vsub.f32 %v4260, %v4647
        %v4712 = vsub.f32 %v4265, %v4648
        %v4713 = vsub.f32 %v4268, %v4649
        %v4714 = vsub.f32 %v4273, %v4650
        %v4715 = vsub.f32 %v4276, %v4651
        %v4716 = vsub.f32 %v4281, %v4652
        %v4717 = vsub.f32 %v4284, %v4653
        %v4718 = vsub.f32 %v4289, %v4654
        %v4719 = vsub.f32 %v4292, %v4655
        %v4720 = vsub.f32 %v4297, %v4656
        %v4721 = vsub.f32 %v4300, %v4657
        %v4722 = vsub.f32 %v4338, %v4658
        %v4723 = vsub.f32 %v4341, %v4659
        %v4724 = vsub.f32 %v4346, %v4660
        %v4725 = vsub.f32 %v4349, %v4661
        %v4726 = vsub.f32 %v4354, %v4662
        %v4727 = vsub.f32 %v4357, %v4663
        %v4728 = vsub.f32 %v4362, %v4664
        %v4729 = vsub.f32 %v4365, %v4665
        %v4730 = vsub.f32 %v4370, %v4666
        %v4731 = vsub.f32 %v4373, %v4667
        %v4732 = vsub.f32 %v4378, %v4668
        %v4733 = vsub.f32 %v4381, %v4669
        %v4734 = vsub.f32 %v4386, %v4670
        %v4735 = vsub.f32 %v4389, %v4671
        %v4736 = vsub.f32 %v4394, %v4672
        %v4737 = vsub.f32 %v4397, %v4673
        %v4738 = vsub.f32 %v4435, %v4674
        %v4739 = vsub.f32 %v4438, %v4675
        %v4740 = vsub.f32 %v4443, %v4676
        %v4741 = vsub.f32 %v4446, %v4677
        %v4742 = vsub.f32 %v4451, %v4678
        %v4743 = vsub.f32 %v4454, %v4679
        %v4744 = vsub.f32 %v4459, %v4680
        %v4745 = vsub.f32 %v4462, %v4681
        %v4746 = vsub.f32 %v4467, %v4682
        %v4747 = vsub.f32 %v4470, %v4683
        %v4748 = vsub.f32 %v4475, %v4684
        %v4749 = vsub.f32 %v4478, %v4685
        %v4750 = vsub.f32 %v4483, %v4686
        %v4751 = vsub.f32 %v4486, %v4687
        %v4752 = vsub.f32 %v4491, %v4688
        %v4753 = vsub.f32 %v4494, %v4689
        %v4754 = vmul.f32 %v4690, %v4690
        %v4755 = vmul.f32 %v4691, %v4691
        %v4756 = vmul.f32 %v4692, %v4692
        %v4757 = vmul.f32 %v4693, %v4693
        %v4758 = vmul.f32 %v4694, %v4694
        %v4759 = vmul.f32 %v4695, %v4695
        %v4760 = vmul.f32 %v4696, %v4696
        %v4761 = vmul.f32 %v4697, %v4697
        %v4762 = vmul.f32 %v4698, %v4698
        %v4763 = vmul.f32 %v4699, %v4699
        %v4764 = vmul.f32 %v4700, %v4700
        %v4765 = vmul.f32 %v4701, %v4701
        %v4766 = vmul.f32 %v4702, %v4702
        %v4767 = vmul.f32 %v4703, %v4703
        %v4768 = vmul.f32 %v4704, %v4704
        %v4769 = vmul.f32 %v4705, %v4705
        %v4770 = vmul.f32 %v4706, %v4706
        %v4771 = vmul.f32 %v4707, %v4707
        %v4772 = vmul.f32 %v4708, %v4708
        %v4773 = vmul.f32 %v4709, %v4709
        %v4774 = vmul.f32 %v4710, %v4710
        %v4775 = vmul.f32 %v4711, %v4711
        %v4776 = vmul.f32 %v4712, %v4712
        %v4777 = vmul.f32 %v4713, %v4713
        %v4778 = vmul.f32 %v4714, %v4714
        %v4779 = vmul.f32 %v4715, %v4715
        %v4780 = vmul.f32 %v4716, %v4716
        %v4781 = vmul.f32 %v4717, %v4717
        %v4782 = vmul.f32 %v4718, %v4718
        %v4783 = vmul.f32 %v4719, %v4719
        %v4784 = vmul.f32 %v4720, %v4720
        %v4785 = vmul.f32 %v4721, %v4721
        %v4786 = vmul.f32 %v4722, %v4722
        %v4787 = vmul.f32 %v4723, %v4723
        %v4788 = vmul.f32 %v4724, %v4724
        %v4789 = vmul.f32 %v4725, %v4725
        %v4790 = vmul.f32 %v4726, %v4726
        %v4791 = vmul.f32 %v4727, %v4727
        %v4792 = vmul.f32 %v4728, %v4728
        %v4793 = vmul.f32 %v4729, %v4729
        %v4794 = vmul.f32 %v4730, %v4730
        %v4795 = vmul.f32 %v4731, %v4731
        %v4796 = vmul.f32 %v4732, %v4732
        %v4797 = vmul.f32 %v4733, %v4733
        %v4798 = vmul.f32 %v4734, %v4734
        %v4799 = vmul.f32 %v4735, %v4735
        %v4800 = vmul.f32 %v4736, %v4736
        %v4801 = vmul.f32 %v4737, %v4737
        %v4802 = vmul.f32 %v4738, %v4738
        %v4803 = vmul.f32 %v4739, %v4739
        %v4804 = vmul.f32 %v4740, %v4740
        %v4805 = vmul.f32 %v4741, %v4741
        %v4806 = vmul.f32 %v4742, %v4742
        %v4807 = vmul.f32 %v4743, %v4743
        %v4808 = vmul.f32 %v4744, %v4744
        %v4809 = vmul.f32 %v4745, %v4745
        %v4810 = vmul.f32 %v4746, %v4746
        %v4811 = vmul.f32 %v4747, %v4747
        %v4812 = vmul.f32 %v4748, %v4748
        %v4813 = vmul.f32 %v4749, %v4749
        %v4814 = vmul.f32 %v4750, %v4750
        %v4815 = vmul.f32 %v4751, %v4751
        %v4816 = vmul.f32 %v4752, %v4752
        %v4817 = vmul.f32 %v4753, %v4753
        %4818 = vadd.xlane.f32.xlu0 %v4754
        %v4819 = vpop.xlane.xlu0 %4818
        %4820 = vadd.xlane.f32.xlu0 %v4755
        %v4821 = vpop.xlane.xlu0 %4820
        %4822 = vadd.xlane.f32.xlu0 %v4756
        %v4823 = vpop.xlane.xlu0 %4822
        %4824 = vadd.xlane.f32.xlu0 %v4757
        %v4825 = vpop.xlane.xlu0 %4824
        %4826 = vadd.xlane.f32.xlu0 %v4758
        %v4827 = vpop.xlane.xlu0 %4826
        %4828 = vadd.xlane.f32.xlu0 %v4759
        %v4829 = vpop.xlane.xlu0 %4828
        %4830 = vadd.xlane.f32.xlu0 %v4760
        %v4831 = vpop.xlane.xlu0 %4830
        %4832 = vadd.xlane.f32.xlu0 %v4761
        %v4833 = vpop.xlane.xlu0 %4832
        %4834 = vadd.xlane.f32.xlu0 %v4762
        %v4835 = vpop.xlane.xlu0 %4834
        %4836 = vadd.xlane.f32.xlu0 %v4763
        %v4837 = vpop.xlane.xlu0 %4836
        %4838 = vadd.xlane.f32.xlu0 %v4764
        %v4839 = vpop.xlane.xlu0 %4838
        %4840 = vadd.xlane.f32.xlu0 %v4765
        %v4841 = vpop.xlane.xlu0 %4840
        %4842 = vadd.xlane.f32.xlu0 %v4766
        %v4843 = vpop.xlane.xlu0 %4842
        %4844 = vadd.xlane.f32.xlu0 %v4767
        %v4845 = vpop.xlane.xlu0 %4844
        %4846 = vadd.xlane.f32.xlu0 %v4768
        %v4847 = vpop.xlane.xlu0 %4846
        %4848 = vadd.xlane.f32.xlu0 %v4769
        %v4849 = vpop.xlane.xlu0 %4848
        %4850 = vadd.xlane.f32.xlu0 %v4770
        %v4851 = vpop.xlane.xlu0 %4850
        %4852 = vadd.xlane.f32.xlu0 %v4771
        %v4853 = vpop.xlane.xlu0 %4852
        %4854 = vadd.xlane.f32.xlu0 %v4772
        %v4855 = vpop.xlane.xlu0 %4854
        %4856 = vadd.xlane.f32.xlu0 %v4773
        %v4857 = vpop.xlane.xlu0 %4856
        %4858 = vadd.xlane.f32.xlu0 %v4774
        %v4859 = vpop.xlane.xlu0 %4858
        %4860 = vadd.xlane.f32.xlu0 %v4775
        %v4861 = vpop.xlane.xlu0 %4860
        %4862 = vadd.xlane.f32.xlu0 %v4776
        %v4863 = vpop.xlane.xlu0 %4862
        %4864 = vadd.xlane.f32.xlu0 %v4777
        %v4865 = vpop.xlane.xlu0 %4864
        %4866 = vadd.xlane.f32.xlu0 %v4778
        %v4867 = vpop.xlane.xlu0 %4866
        %4868 = vadd.xlane.f32.xlu0 %v4779
        %v4869 = vpop.xlane.xlu0 %4868
        %4870 = vadd.xlane.f32.xlu0 %v4780
        %v4871 = vpop.xlane.xlu0 %4870
        %4872 = vadd.xlane.f32.xlu0 %v4781
        %v4873 = vpop.xlane.xlu0 %4872
        %4874 = vadd.xlane.f32.xlu0 %v4782
        %v4875 = vpop.xlane.xlu0 %4874
        %4876 = vadd.xlane.f32.xlu0 %v4783
        %v4877 = vpop.xlane.xlu0 %4876
        %4878 = vadd.xlane.f32.xlu0 %v4784
        %v4879 = vpop.xlane.xlu0 %4878
        %4880 = vadd.xlane.f32.xlu0 %v4785
        %v4881 = vpop.xlane.xlu0 %4880
        %4882 = vadd.xlane.f32.xlu0 %v4786
        %v4883 = vpop.xlane.xlu0 %4882
        %4884 = vadd.xlane.f32.xlu0 %v4787
        %v4885 = vpop.xlane.xlu0 %4884
        %4886 = vadd.xlane.f32.xlu0 %v4788
        %v4887 = vpop.xlane.xlu0 %4886
        %4888 = vadd.xlane.f32.xlu0 %v4789
        %v4889 = vpop.xlane.xlu0 %4888
        %4890 = vadd.xlane.f32.xlu0 %v4790
        %v4891 = vpop.xlane.xlu0 %4890
        %4892 = vadd.xlane.f32.xlu0 %v4791
        %v4893 = vpop.xlane.xlu0 %4892
        %4894 = vadd.xlane.f32.xlu0 %v4792
        %v4895 = vpop.xlane.xlu0 %4894
        %4896 = vadd.xlane.f32.xlu0 %v4793
        %v4897 = vpop.xlane.xlu0 %4896
        %4898 = vadd.xlane.f32.xlu0 %v4794
        %v4899 = vpop.xlane.xlu0 %4898
        %4900 = vadd.xlane.f32.xlu0 %v4795
        %v4901 = vpop.xlane.xlu0 %4900
        %4902 = vadd.xlane.f32.xlu0 %v4796
        %v4903 = vpop.xlane.xlu0 %4902
        %4904 = vadd.xlane.f32.xlu0 %v4797
        %v4905 = vpop.xlane.xlu0 %4904
        %4906 = vadd.xlane.f32.xlu0 %v4798
        %v4907 = vpop.xlane.xlu0 %4906
        %4908 = vadd.xlane.f32.xlu0 %v4799
        %v4909 = vpop.xlane.xlu0 %4908
        %4910 = vadd.xlane.f32.xlu0 %v4800
        %v4911 = vpop.xlane.xlu0 %4910
        %4912 = vadd.xlane.f32.xlu0 %v4801
        %v4913 = vpop.xlane.xlu0 %4912
        %4914 = vadd.xlane.f32.xlu0 %v4802
        %v4915 = vpop.xlane.xlu0 %4914
        %4916 = vadd.xlane.f32.xlu0 %v4803
        %v4917 = vpop.xlane.xlu0 %4916
        %4918 = vadd.xlane.f32.xlu0 %v4804
        %v4919 = vpop.xlane.xlu0 %4918
        %4920 = vadd.xlane.f32.xlu0 %v4805
        %v4921 = vpop.xlane.xlu0 %4920
        %4922 = vadd.xlane.f32.xlu0 %v4806
        %v4923 = vpop.xlane.xlu0 %4922
        %4924 = vadd.xlane.f32.xlu0 %v4807
        %v4925 = vpop.xlane.xlu0 %4924
        %4926 = vadd.xlane.f32.xlu0 %v4808
        %v4927 = vpop.xlane.xlu0 %4926
        %4928 = vadd.xlane.f32.xlu0 %v4809
        %v4929 = vpop.xlane.xlu0 %4928
        %4930 = vadd.xlane.f32.xlu0 %v4810
        %v4931 = vpop.xlane.xlu0 %4930
        %4932 = vadd.xlane.f32.xlu0 %v4811
        %v4933 = vpop.xlane.xlu0 %4932
        %4934 = vadd.xlane.f32.xlu0 %v4812
        %v4935 = vpop.xlane.xlu0 %4934
        %4936 = vadd.xlane.f32.xlu0 %v4813
        %v4937 = vpop.xlane.xlu0 %4936
        %4938 = vadd.xlane.f32.xlu0 %v4814
        %v4939 = vpop.xlane.xlu0 %4938
        %4940 = vadd.xlane.f32.xlu0 %v4815
        %v4941 = vpop.xlane.xlu0 %4940
        %4942 = vadd.xlane.f32.xlu0 %v4816
        %v4943 = vpop.xlane.xlu0 %4942
        %4944 = vadd.xlane.f32.xlu0 %v4817
        %v4945 = vpop.xlane.xlu0 %4944
        %v4946 = vmul.f32 %v4819, %v4625
        %v4947 = vmul.f32 %v4821, %v4625
        %v4948 = vmul.f32 %v4823, %v4625
        %v4949 = vmul.f32 %v4825, %v4625
        %v4950 = vmul.f32 %v4827, %v4625
        %v4951 = vmul.f32 %v4829, %v4625
        %v4952 = vmul.f32 %v4831, %v4625
        %v4953 = vmul.f32 %v4833, %v4625
        %v4954 = vmul.f32 %v4835, %v4625
        %v4955 = vmul.f32 %v4837, %v4625
        %v4956 = vmul.f32 %v4839, %v4625
        %v4957 = vmul.f32 %v4841, %v4625
        %v4958 = vmul.f32 %v4843, %v4625
        %v4959 = vmul.f32 %v4845, %v4625
        %v4960 = vmul.f32 %v4847, %v4625
        %v4961 = vmul.f32 %v4849, %v4625
        %v4962 = vmul.f32 %v4851, %v4625
        %v4963 = vmul.f32 %v4853, %v4625
        %v4964 = vmul.f32 %v4855, %v4625
        %v4965 = vmul.f32 %v4857, %v4625
        %v4966 = vmul.f32 %v4859, %v4625
        %v4967 = vmul.f32 %v4861, %v4625
        %v4968 = vmul.f32 %v4863, %v4625
        %v4969 = vmul.f32 %v4865, %v4625
        %v4970 = vmul.f32 %v4867, %v4625
        %v4971 = vmul.f32 %v4869, %v4625
        %v4972 = vmul.f32 %v4871, %v4625
        %v4973 = vmul.f32 %v4873, %v4625
        %v4974 = vmul.f32 %v4875, %v4625
        %v4975 = vmul.f32 %v4877, %v4625
        %v4976 = vmul.f32 %v4879, %v4625
        %v4977 = vmul.f32 %v4881, %v4625
        %v4978 = vmul.f32 %v4883, %v4625
        %v4979 = vmul.f32 %v4885, %v4625
        %v4980 = vmul.f32 %v4887, %v4625
        %v4981 = vmul.f32 %v4889, %v4625
        %v4982 = vmul.f32 %v4891, %v4625
        %v4983 = vmul.f32 %v4893, %v4625
        %v4984 = vmul.f32 %v4895, %v4625
        %v4985 = vmul.f32 %v4897, %v4625
        %v4986 = vmul.f32 %v4899, %v4625
        %v4987 = vmul.f32 %v4901, %v4625
        %v4988 = vmul.f32 %v4903, %v4625
        %v4989 = vmul.f32 %v4905, %v4625
        %v4990 = vmul.f32 %v4907, %v4625
        %v4991 = vmul.f32 %v4909, %v4625
        %v4992 = vmul.f32 %v4911, %v4625
        %v4993 = vmul.f32 %v4913, %v4625
        %v4994 = vmul.f32 %v4915, %v4625
        %v4995 = vmul.f32 %v4917, %v4625
        %v4996 = vmul.f32 %v4919, %v4625
        %v4997 = vmul.f32 %v4921, %v4625
        %v4998 = vmul.f32 %v4923, %v4625
        %v4999 = vmul.f32 %v4925, %v4625
        %v5000 = vmul.f32 %v4927, %v4625
        %v5001 = vmul.f32 %v4929, %v4625
        %v5002 = vmul.f32 %v4931, %v4625
        %v5003 = vmul.f32 %v4933, %v4625
        %v5004 = vmul.f32 %v4935, %v4625
        %v5005 = vmul.f32 %v4937, %v4625
        %v5006 = vmul.f32 %v4939, %v4625
        %v5007 = vmul.f32 %v4941, %v4625
        %v5008 = vmul.f32 %v4943, %v4625
        %v5009 = vmul.f32 %v4945, %v4625
        %v5010 = vadd.f32 %v4946, 1e-05
        %v5011 = vadd.f32 %v4947, 1e-05
        %v5012 = vadd.f32 %v4948, 1e-05
        %v5013 = vadd.f32 %v4949, 1e-05
        %v5014 = vadd.f32 %v4950, 1e-05
        %v5015 = vadd.f32 %v4951, 1e-05
        %v5016 = vadd.f32 %v4952, 1e-05
        %v5017 = vadd.f32 %v4953, 1e-05
        %v5018 = vadd.f32 %v4954, 1e-05
        %v5019 = vadd.f32 %v4955, 1e-05
        %v5020 = vadd.f32 %v4956, 1e-05
        %v5021 = vadd.f32 %v4957, 1e-05
        %v5022 = vadd.f32 %v4958, 1e-05
        %v5023 = vadd.f32 %v4959, 1e-05
        %v5024 = vadd.f32 %v4960, 1e-05
        %v5025 = vadd.f32 %v4961, 1e-05
        %v5026 = vadd.f32 %v4962, 1e-05
        %v5027 = vadd.f32 %v4963, 1e-05
        %v5028 = vadd.f32 %v4964, 1e-05
        %v5029 = vadd.f32 %v4965, 1e-05
        %v5030 = vadd.f32 %v4966, 1e-05
        %v5031 = vadd.f32 %v4967, 1e-05
        %v5032 = vadd.f32 %v4968, 1e-05
        %v5033 = vadd.f32 %v4969, 1e-05
        %v5034 = vadd.f32 %v4970, 1e-05
        %v5035 = vadd.f32 %v4971, 1e-05
        %v5036 = vadd.f32 %v4972, 1e-05
        %v5037 = vadd.f32 %v4973, 1e-05
        %v5038 = vadd.f32 %v4974, 1e-05
        %v5039 = vadd.f32 %v4975, 1e-05
        %v5040 = vadd.f32 %v4976, 1e-05
        %v5041 = vadd.f32 %v4977, 1e-05
        %v5042 = vadd.f32 %v4978, 1e-05
        %v5043 = vadd.f32 %v4979, 1e-05
        %v5044 = vadd.f32 %v4980, 1e-05
        %v5045 = vadd.f32 %v4981, 1e-05
        %v5046 = vadd.f32 %v4982, 1e-05
        %v5047 = vadd.f32 %v4983, 1e-05
        %v5048 = vadd.f32 %v4984, 1e-05
        %v5049 = vadd.f32 %v4985, 1e-05
        %v5050 = vadd.f32 %v4986, 1e-05
        %v5051 = vadd.f32 %v4987, 1e-05
        %v5052 = vadd.f32 %v4988, 1e-05
        %v5053 = vadd.f32 %v4989, 1e-05
        %v5054 = vadd.f32 %v4990, 1e-05
        %v5055 = vadd.f32 %v4991, 1e-05
        %v5056 = vadd.f32 %v4992, 1e-05
        %v5057 = vadd.f32 %v4993, 1e-05
        %v5058 = vadd.f32 %v4994, 1e-05
        %v5059 = vadd.f32 %v4995, 1e-05
        %v5060 = vadd.f32 %v4996, 1e-05
        %v5061 = vadd.f32 %v4997, 1e-05
        %v5062 = vadd.f32 %v4998, 1e-05
        %v5063 = vadd.f32 %v4999, 1e-05
        %v5064 = vadd.f32 %v5000, 1e-05
        %v5065 = vadd.f32 %v5001, 1e-05
        %v5066 = vadd.f32 %v5002, 1e-05
        %v5067 = vadd.f32 %v5003, 1e-05
        %v5068 = vadd.f32 %v5004, 1e-05
        %v5069 = vadd.f32 %v5005, 1e-05
        %v5070 = vadd.f32 %v5006, 1e-05
        %v5071 = vadd.f32 %v5007, 1e-05
        %v5072 = vadd.f32 %v5008, 1e-05
        %v5073 = vadd.f32 %v5009, 1e-05
        %v5074 = vrsqrt.pop %v5010
        %v5075 = vrsqrt.pop %v5011
        %v5076 = vrsqrt.pop %v5012
        %v5077 = vrsqrt.pop %v5013
        %v5078 = vrsqrt.pop %v5014
        %v5079 = vrsqrt.pop %v5015
        %v5080 = vrsqrt.pop %v5016
        %v5081 = vrsqrt.pop %v5017
        %v5082 = vrsqrt.pop %v5018
        %v5083 = vrsqrt.pop %v5019
        %v5084 = vrsqrt.pop %v5020
        %v5085 = vrsqrt.pop %v5021
        %v5086 = vrsqrt.pop %v5022
        %v5087 = vrsqrt.pop %v5023
        %v5088 = vrsqrt.pop %v5024
        %v5089 = vrsqrt.pop %v5025
        %v5090 = vrsqrt.pop %v5026
        %v5091 = vrsqrt.pop %v5027
        %v5092 = vrsqrt.pop %v5028
        %v5093 = vrsqrt.pop %v5029
        %v5094 = vrsqrt.pop %v5030
        %v5095 = vrsqrt.pop %v5031
        %v5096 = vrsqrt.pop %v5032
        %v5097 = vrsqrt.pop %v5033
        %v5098 = vrsqrt.pop %v5034
        %v5099 = vrsqrt.pop %v5035
        %v5100 = vrsqrt.pop %v5036
        %v5101 = vrsqrt.pop %v5037
        %v5102 = vrsqrt.pop %v5038
        %v5103 = vrsqrt.pop %v5039
        %v5104 = vrsqrt.pop %v5040
        %v5105 = vrsqrt.pop %v5041
        %v5106 = vrsqrt.pop %v5042
        %v5107 = vrsqrt.pop %v5043
        %v5108 = vrsqrt.pop %v5044
        %v5109 = vrsqrt.pop %v5045
        %v5110 = vrsqrt.pop %v5046
        %v5111 = vrsqrt.pop %v5047
        %v5112 = vrsqrt.pop %v5048
        %v5113 = vrsqrt.pop %v5049
        %v5114 = vrsqrt.pop %v5050
        %v5115 = vrsqrt.pop %v5051
        %v5116 = vrsqrt.pop %v5052
        %v5117 = vrsqrt.pop %v5053
        %v5118 = vrsqrt.pop %v5054
        %v5119 = vrsqrt.pop %v5055
        %v5120 = vrsqrt.pop %v5056
        %v5121 = vrsqrt.pop %v5057
        %v5122 = vrsqrt.pop %v5058
        %v5123 = vrsqrt.pop %v5059
        %v5124 = vrsqrt.pop %v5060
        %v5125 = vrsqrt.pop %v5061
        %v5126 = vrsqrt.pop %v5062
        %v5127 = vrsqrt.pop %v5063
        %v5128 = vrsqrt.pop %v5064
        %v5129 = vrsqrt.pop %v5065
        %v5130 = vrsqrt.pop %v5066
        %v5131 = vrsqrt.pop %v5067
        %v5132 = vrsqrt.pop %v5068
        %v5133 = vrsqrt.pop %v5069
        %v5134 = vrsqrt.pop %v5070
        %v5135 = vrsqrt.pop %v5071
        %v5136 = vrsqrt.pop %v5072
        %v5137 = vrsqrt.pop %v5073
        %v5138 = vmul.f32 %v4690, %v5074
        %v5139 = vmul.f32 %v4691, %v5075
        %v5140 = vmul.f32 %v4692, %v5076
        %v5141 = vmul.f32 %v4693, %v5077
        %v5142 = vmul.f32 %v4694, %v5078
        %v5143 = vmul.f32 %v4695, %v5079
        %v5144 = vmul.f32 %v4696, %v5080
        %v5145 = vmul.f32 %v4697, %v5081
        %v5146 = vmul.f32 %v4698, %v5082
        %v5147 = vmul.f32 %v4699, %v5083
        %v5148 = vmul.f32 %v4700, %v5084
        %v5149 = vmul.f32 %v4701, %v5085
        %v5150 = vmul.f32 %v4702, %v5086
        %v5151 = vmul.f32 %v4703, %v5087
        %v5152 = vmul.f32 %v4704, %v5088
        %v5153 = vmul.f32 %v4705, %v5089
        %v5154 = vmul.f32 %v4706, %v5090
        %v5155 = vmul.f32 %v4707, %v5091
        %v5156 = vmul.f32 %v4708, %v5092
        %v5157 = vmul.f32 %v4709, %v5093
        %v5158 = vmul.f32 %v4710, %v5094
        %v5159 = vmul.f32 %v4711, %v5095
        %v5160 = vmul.f32 %v4712, %v5096
        %v5161 = vmul.f32 %v4713, %v5097
        %v5162 = vmul.f32 %v4714, %v5098
        %v5163 = vmul.f32 %v4715, %v5099
        %v5164 = vmul.f32 %v4716, %v5100
        %v5165 = vmul.f32 %v4717, %v5101
        %v5166 = vmul.f32 %v4718, %v5102
        %v5167 = vmul.f32 %v4719, %v5103
        %v5168 = vmul.f32 %v4720, %v5104
        %v5169 = vmul.f32 %v4721, %v5105
        %v5170 = vmul.f32 %v4722, %v5106
        %v5171 = vmul.f32 %v4723, %v5107
        %v5172 = vmul.f32 %v4724, %v5108
        %v5173 = vmul.f32 %v4725, %v5109
        %v5174 = vmul.f32 %v4726, %v5110
        %v5175 = vmul.f32 %v4727, %v5111
        %v5176 = vmul.f32 %v4728, %v5112
        %v5177 = vmul.f32 %v4729, %v5113
        %v5178 = vmul.f32 %v4730, %v5114
        %v5179 = vmul.f32 %v4731, %v5115
        %v5180 = vmul.f32 %v4732, %v5116
        %v5181 = vmul.f32 %v4733, %v5117
        %v5182 = vmul.f32 %v4734, %v5118
        %v5183 = vmul.f32 %v4735, %v5119
        %v5184 = vmul.f32 %v4736, %v5120
        %v5185 = vmul.f32 %v4737, %v5121
        %v5186 = vmul.f32 %v4738, %v5122
        %v5187 = vmul.f32 %v4739, %v5123
        %v5188 = vmul.f32 %v4740, %v5124
        %v5189 = vmul.f32 %v4741, %v5125
        %v5190 = vmul.f32 %v4742, %v5126
        %v5191 = vmul.f32 %v4743, %v5127
        %v5192 = vmul.f32 %v4744, %v5128
        %v5193 = vmul.f32 %v4745, %v5129
        %v5194 = vmul.f32 %v4746, %v5130
        %v5195 = vmul.f32 %v4747, %v5131
        %v5196 = vmul.f32 %v4748, %v5132
        %v5197 = vmul.f32 %v4749, %v5133
        %v5198 = vmul.f32 %v4750, %v5134
        %v5199 = vmul.f32 %v4751, %v5135
        %v5200 = vmul.f32 %v4752, %v5136
        %v5201 = vmul.f32 %v4753, %v5137
        %v5203 = vlaneseq
        %v5204 = vshrl.u32 %v5203, 7
        %v5205 = vsub.s32 0, %v5204
        %v5206 = vrot.slane %v1544, %v5205
        %v5207 = vlaneseq
        %v5208 = vshrl.u32 %v5207, 7
        %v5209 = vsub.s32 1, %v5208
        %v5210 = vrot.slane %v1544, %v5209
        %v5245 = vunpack.c.l.b16 %v1512
        %v5246 = vunpack.c.h.b16 %v1512
        %v5247 = vunpack.c.l.b16 %v1513
        %v5248 = vunpack.c.h.b16 %v1513
        %v5249 = vunpack.c.l.b16 %v1514
        %v5250 = vunpack.c.h.b16 %v1514
        %v5251 = vunpack.c.l.b16 %v1515
        %v5252 = vunpack.c.h.b16 %v1515
        %v5253 = vunpack.c.l.b16 %v1516
        %v5254 = vunpack.c.h.b16 %v1516
        %v5255 = vunpack.c.l.b16 %v1517
        %v5256 = vunpack.c.h.b16 %v1517
        %v5257 = vunpack.c.l.b16 %v1518
        %v5258 = vunpack.c.h.b16 %v1518
        %v5259 = vunpack.c.l.b16 %v1519
        %v5260 = vunpack.c.h.b16 %v1519
        %v5261 = vunpack.c.l.b16 %v1520
        %v5262 = vunpack.c.h.b16 %v1520
        %v5263 = vunpack.c.l.b16 %v1521
        %v5264 = vunpack.c.h.b16 %v1521
        %v5265 = vunpack.c.l.b16 %v1522
        %v5266 = vunpack.c.h.b16 %v1522
        %v5267 = vunpack.c.l.b16 %v1523
        %v5268 = vunpack.c.h.b16 %v1523
        %v5269 = vunpack.c.l.b16 %v1524
        %v5270 = vunpack.c.h.b16 %v1524
        %v5271 = vunpack.c.l.b16 %v1525
        %v5272 = vunpack.c.h.b16 %v1525
        %v5273 = vunpack.c.l.b16 %v1526
        %v5274 = vunpack.c.h.b16 %v1526
        %v5275 = vunpack.c.l.b16 %v1527
        %v5276 = vunpack.c.h.b16 %v1527
        %v5277 = vunpack.c.l.b16 %v1528
        %v5278 = vunpack.c.h.b16 %v1528
        %v5279 = vunpack.c.l.b16 %v1529
        %v5280 = vunpack.c.h.b16 %v1529
        %v5281 = vunpack.c.l.b16 %v1530
        %v5282 = vunpack.c.h.b16 %v1530
        %v5283 = vunpack.c.l.b16 %v1531
        %v5284 = vunpack.c.h.b16 %v1531
        %v5285 = vunpack.c.l.b16 %v1532
        %v5286 = vunpack.c.h.b16 %v1532
        %v5287 = vunpack.c.l.b16 %v1533
        %v5288 = vunpack.c.h.b16 %v1533
        %v5289 = vunpack.c.l.b16 %v1534
        %v5290 = vunpack.c.h.b16 %v1534
        %v5291 = vunpack.c.l.b16 %v1535
        %v5292 = vunpack.c.h.b16 %v1535
        %v5293 = vunpack.c.l.b16 %v1536
        %v5294 = vunpack.c.h.b16 %v1536
        %v5295 = vunpack.c.l.b16 %v1537
        %v5296 = vunpack.c.h.b16 %v1537
        %v5297 = vunpack.c.l.b16 %v1538
        %v5298 = vunpack.c.h.b16 %v1538
        %v5299 = vunpack.c.l.b16 %v1539
        %v5300 = vunpack.c.h.b16 %v1539
        %v5301 = vunpack.c.l.b16 %v1540
        %v5302 = vunpack.c.h.b16 %v1540
        %v5303 = vunpack.c.l.b16 %v1541
        %v5304 = vunpack.c.h.b16 %v1541
        %v5305 = vunpack.c.l.b16 %v1542
        %v5306 = vunpack.c.h.b16 %v1542
        %v5307 = vunpack.c.l.b16 %v1543
        %v5308 = vunpack.c.h.b16 %v1543
        %v5309 = vpack.c.b16 %v5247, %v5245
        %v5310 = vpack.c.b16 %v5248, %v5246
        %v5311 = vpack.c.b16 %v5251, %v5249
        %v5312 = vpack.c.b16 %v5252, %v5250
        %v5313 = vpack.c.b16 %v5255, %v5253
        %v5314 = vpack.c.b16 %v5256, %v5254
        %v5315 = vpack.c.b16 %v5259, %v5257
        %v5316 = vpack.c.b16 %v5260, %v5258
        %v5317 = vpack.c.b16 %v5263, %v5261
        %v5318 = vpack.c.b16 %v5264, %v5262
        %v5319 = vpack.c.b16 %v5267, %v5265
        %v5320 = vpack.c.b16 %v5268, %v5266
        %v5321 = vpack.c.b16 %v5271, %v5269
        %v5322 = vpack.c.b16 %v5272, %v5270
        %v5323 = vpack.c.b16 %v5275, %v5273
        %v5324 = vpack.c.b16 %v5276, %v5274
        %v5325 = vpack.c.b16 %v5279, %v5277
        %v5326 = vpack.c.b16 %v5280, %v5278
        %v5327 = vpack.c.b16 %v5283, %v5281
        %v5328 = vpack.c.b16 %v5284, %v5282
        %v5329 = vpack.c.b16 %v5287, %v5285
        %v5330 = vpack.c.b16 %v5288, %v5286
        %v5331 = vpack.c.b16 %v5291, %v5289
        %v5332 = vpack.c.b16 %v5292, %v5290
        %v5333 = vpack.c.b16 %v5295, %v5293
        %v5334 = vpack.c.b16 %v5296, %v5294
        %v5335 = vpack.c.b16 %v5299, %v5297
        %v5336 = vpack.c.b16 %v5300, %v5298
        %v5337 = vpack.c.b16 %v5303, %v5301
        %v5338 = vpack.c.b16 %v5304, %v5302
        %v5339 = vpack.c.b16 %v5307, %v5305
        %v5340 = vpack.c.b16 %v5308, %v5306
        %5373 = vmatprep.subr.bf16.mxu0 %v5324
        %5374 = vmatpush1.bf16.msra.mxu0 %v5323
        %5375 = vmatprep.subr.bf16.mxu0 %v5322
        %5376 = vmatpush1.bf16.msra.mxu0 %v5321
        %5377 = vmatprep.subr.bf16.mxu0 %v5320
        %5378 = vmatpush1.bf16.msra.mxu0 %v5319
        %5379 = vmatprep.subr.bf16.mxu0 %v5318
        %5380 = vmatpush1.bf16.msra.mxu0 %v5317
        %5381 = vmatprep.subr.bf16.mxu0 %v5316
        %5382 = vmatpush1.bf16.msra.mxu0 %v5315
        %5383 = vmatprep.subr.bf16.mxu0 %v5314
        %5384 = vmatpush1.bf16.msra.mxu0 %v5313
        %5385 = vmatprep.subr.bf16.mxu0 %v5312
        %5386 = vmatpush1.bf16.msra.mxu0 %v5311
        %5387 = vmatprep.subr.bf16.mxu0 %v5310
        %5388 = vmatpush1.bf16.msra.mxu0 %v5309
        %5389 = vmatprep.subr.bf16.mxu0 %v5340
        %5390 = vmatpush2.bf16.msra.mxu0 %v5339
        %5391 = vmatprep.subr.bf16.mxu0 %v5338
        %5392 = vmatpush2.bf16.msra.mxu0 %v5337
        %5393 = vmatprep.subr.bf16.mxu0 %v5336
        %5394 = vmatpush2.bf16.msra.mxu0 %v5335
        %5395 = vmatprep.subr.bf16.mxu0 %v5334
        %5396 = vmatpush2.bf16.msra.mxu0 %v5333
        %5397 = vmatprep.subr.bf16.mxu0 %v5332
        %5398 = vmatpush2.bf16.msra.mxu0 %v5331
        %5399 = vmatprep.subr.bf16.mxu0 %v5330
        %5400 = vmatpush2.bf16.msra.mxu0 %v5329
        %5401 = vmatprep.subr.bf16.mxu0 %v5328
        %5402 = vmatpush2.bf16.msra.mxu0 %v5327
        %5403 = vmatprep.subr.bf16.mxu0 %v5326
        %5404 = vmatpush2.bf16.msra.mxu0 %v5325
        %5405 = vmatprep.mubr.bf16.mxu0 %v2406
        %5406 = vmatmul.mubr.bf16.gmra.mxu0 %v2405
        %v5407 = vpop.f32.mrf.mxu0
        %v5408 = vadd.f32 %v5206, %v5407
        %v5409 = vpop.f32.mrf.mxu0
        %v5410 = vadd.f32 %v5210, %v5409
        %v5411 = vpop.f32.mrf.mxu0
        %v5412 = vadd.f32 %v5206, %v5411
        %v5413 = vpop.f32.mrf.mxu0
        %v5414 = vadd.f32 %v5210, %v5413
        %5415 = vmatprep.mubr.bf16.mxu0 %v2408
        %5416 = vmatmul.mubr.bf16.gmra.mxu0 %v2407
        %v5417 = vpop.f32.mrf.mxu0
        %v5418 = vadd.f32 %v5206, %v5417
        %v5419 = vpop.f32.mrf.mxu0
        %v5420 = vadd.f32 %v5210, %v5419
        %v5421 = vpop.f32.mrf.mxu0
        %v5422 = vadd.f32 %v5206, %v5421
        %v5423 = vpop.f32.mrf.mxu0
        %v5424 = vadd.f32 %v5210, %v5423
        %5425 = vmatprep.mubr.bf16.mxu0 %v2410
        %5426 = vmatmul.mubr.bf16.gmra.mxu0 %v2409
        %v5427 = vpop.f32.mrf.mxu0
        %v5428 = vadd.f32 %v5206, %v5427
        %v5429 = vpop.f32.mrf.mxu0
        %v5430 = vadd.f32 %v5210, %v5429
        %v5431 = vpop.f32.mrf.mxu0
        %v5432 = vadd.f32 %v5206, %v5431
        %v5433 = vpop.f32.mrf.mxu0
        %v5434 = vadd.f32 %v5210, %v5433
        %5435 = vmatprep.mubr.bf16.mxu0 %v2412
        %5436 = vmatmul.mubr.bf16.gmra.mxu0 %v2411
        %v5437 = vpop.f32.mrf.mxu0
        %v5438 = vadd.f32 %v5206, %v5437
        %v5439 = vpop.f32.mrf.mxu0
        %v5440 = vadd.f32 %v5210, %v5439
        %v5441 = vpop.f32.mrf.mxu0
        %v5442 = vadd.f32 %v5206, %v5441
        %v5443 = vpop.f32.mrf.mxu0
        %v5444 = vadd.f32 %v5210, %v5443
        %5445 = vmatprep.mubr.bf16.mxu0 %v2414
        %5446 = vmatmul.mubr.bf16.gmra.mxu0 %v2413
        %v5447 = vpop.f32.mrf.mxu0
        %v5448 = vadd.f32 %v5206, %v5447
        %v5449 = vpop.f32.mrf.mxu0
        %v5450 = vadd.f32 %v5210, %v5449
        %v5451 = vpop.f32.mrf.mxu0
        %v5452 = vadd.f32 %v5206, %v5451
        %v5453 = vpop.f32.mrf.mxu0
        %v5454 = vadd.f32 %v5210, %v5453
        %5455 = vmatprep.mubr.bf16.mxu0 %v2416
        %5456 = vmatmul.mubr.bf16.gmra.mxu0 %v2415
        %v5457 = vpop.f32.mrf.mxu0
        %v5458 = vadd.f32 %v5206, %v5457
        %v5459 = vpop.f32.mrf.mxu0
        %v5460 = vadd.f32 %v5210, %v5459
        %v5461 = vpop.f32.mrf.mxu0
        %v5462 = vadd.f32 %v5206, %v5461
        %v5463 = vpop.f32.mrf.mxu0
        %v5464 = vadd.f32 %v5210, %v5463
        %5465 = vmatprep.mubr.bf16.mxu0 %v2418
        %5466 = vmatmul.mubr.bf16.gmra.mxu0 %v2417
        %v5467 = vpop.f32.mrf.mxu0
        %v5468 = vadd.f32 %v5206, %v5467
        %v5469 = vpop.f32.mrf.mxu0
        %v5470 = vadd.f32 %v5210, %v5469
        %v5471 = vpop.f32.mrf.mxu0
        %v5472 = vadd.f32 %v5206, %v5471
        %v5473 = vpop.f32.mrf.mxu0
        %v5474 = vadd.f32 %v5210, %v5473
        %5475 = vmatprep.mubr.bf16.mxu0 %v2420
        %5476 = vmatmul.mubr.bf16.gmra.mxu0 %v2419
        %v5477 = vpop.f32.mrf.mxu0
        %v5478 = vadd.f32 %v5206, %v5477
        %v5479 = vpop.f32.mrf.mxu0
        %v5480 = vadd.f32 %v5210, %v5479
        %v5481 = vpop.f32.mrf.mxu0
        %v5482 = vadd.f32 %v5206, %v5481
        %v5483 = vpop.f32.mrf.mxu0
        %v5484 = vadd.f32 %v5210, %v5483
        %5485 = vmatprep.mubr.bf16.mxu0 %v2422
        %5486 = vmatmul.mubr.bf16.gmra.mxu0 %v2421
        %v5487 = vpop.f32.mrf.mxu0
        %v5488 = vadd.f32 %v5206, %v5487
        %v5489 = vpop.f32.mrf.mxu0
        %v5490 = vadd.f32 %v5210, %v5489
        %v5491 = vpop.f32.mrf.mxu0
        %v5492 = vadd.f32 %v5206, %v5491
        %v5493 = vpop.f32.mrf.mxu0
        %v5494 = vadd.f32 %v5210, %v5493
        %5495 = vmatprep.mubr.bf16.mxu0 %v2424
        %5496 = vmatmul.mubr.bf16.gmra.mxu0 %v2423
        %v5497 = vpop.f32.mrf.mxu0
        %v5498 = vadd.f32 %v5206, %v5497
        %v5499 = vpop.f32.mrf.mxu0
        %v5500 = vadd.f32 %v5210, %v5499
        %v5501 = vpop.f32.mrf.mxu0
        %v5502 = vadd.f32 %v5206, %v5501
        %v5503 = vpop.f32.mrf.mxu0
        %v5504 = vadd.f32 %v5210, %v5503
        %5505 = vmatprep.mubr.bf16.mxu0 %v2426
        %5506 = vmatmul.mubr.bf16.gmra.mxu0 %v2425
        %v5507 = vpop.f32.mrf.mxu0
        %v5508 = vadd.f32 %v5206, %v5507
        %v5509 = vpop.f32.mrf.mxu0
        %v5510 = vadd.f32 %v5210, %v5509
        %v5511 = vpop.f32.mrf.mxu0
        %v5512 = vadd.f32 %v5206, %v5511
        %v5513 = vpop.f32.mrf.mxu0
        %v5514 = vadd.f32 %v5210, %v5513
        %5515 = vmatprep.mubr.bf16.mxu0 %v2428
        %5516 = vmatmul.mubr.bf16.gmra.mxu0 %v2427
        %v5517 = vpop.f32.mrf.mxu0
        %v5518 = vadd.f32 %v5206, %v5517
        %v5519 = vpop.f32.mrf.mxu0
        %v5520 = vadd.f32 %v5210, %v5519
        %v5521 = vpop.f32.mrf.mxu0
        %v5522 = vadd.f32 %v5206, %v5521
        %v5523 = vpop.f32.mrf.mxu0
        %v5524 = vadd.f32 %v5210, %v5523
        %5525 = vmatprep.mubr.bf16.mxu0 %v2430
        %5526 = vmatmul.mubr.bf16.gmra.mxu0 %v2429
        %v5527 = vpop.f32.mrf.mxu0
        %v5528 = vadd.f32 %v5206, %v5527
        %v5529 = vpop.f32.mrf.mxu0
        %v5530 = vadd.f32 %v5210, %v5529
        %v5531 = vpop.f32.mrf.mxu0
        %v5532 = vadd.f32 %v5206, %v5531
        %v5533 = vpop.f32.mrf.mxu0
        %v5534 = vadd.f32 %v5210, %v5533
        %5535 = vmatprep.mubr.bf16.mxu0 %v2432
        %5536 = vmatmul.mubr.bf16.gmra.mxu0 %v2431
        %v5537 = vpop.f32.mrf.mxu0
        %v5538 = vadd.f32 %v5206, %v5537
        %v5539 = vpop.f32.mrf.mxu0
        %v5540 = vadd.f32 %v5210, %v5539
        %v5541 = vpop.f32.mrf.mxu0
        %v5542 = vadd.f32 %v5206, %v5541
        %v5543 = vpop.f32.mrf.mxu0
        %v5544 = vadd.f32 %v5210, %v5543
        %5545 = vmatprep.mubr.bf16.mxu0 %v2434
        %5546 = vmatmul.mubr.bf16.gmra.mxu0 %v2433
        %v5547 = vpop.f32.mrf.mxu0
        %v5548 = vadd.f32 %v5206, %v5547
        %v5549 = vpop.f32.mrf.mxu0
        %v5550 = vadd.f32 %v5210, %v5549
        %v5551 = vpop.f32.mrf.mxu0
        %v5552 = vadd.f32 %v5206, %v5551
        %v5553 = vpop.f32.mrf.mxu0
        %v5554 = vadd.f32 %v5210, %v5553
        %5555 = vmatprep.mubr.bf16.mxu0 %v2436
        %5556 = vmatmul.mubr.bf16.gmra.mxu0 %v2435
        %v5557 = vpop.f32.mrf.mxu0
        %v5558 = vadd.f32 %v5206, %v5557
        %v5559 = vpop.f32.mrf.mxu0
        %v5560 = vadd.f32 %v5210, %v5559
        %v5561 = vpop.f32.mrf.mxu0
        %v5562 = vadd.f32 %v5206, %v5561
        %v5563 = vpop.f32.mrf.mxu0
        %v5564 = vadd.f32 %v5210, %v5563
        %5565 = vdwg.mxu0
        %v5566 = vxor.u32 %v5408, 2147483648
        %v5567 = vxor.u32 %v5410, 2147483648
        %v5568 = vxor.u32 %v5412, 2147483648
        %v5569 = vxor.u32 %v5414, 2147483648
        %v5570 = vxor.u32 %v5418, 2147483648
        %v5571 = vxor.u32 %v5420, 2147483648
        %v5572 = vxor.u32 %v5422, 2147483648
        %v5573 = vxor.u32 %v5424, 2147483648
        %v5574 = vxor.u32 %v5428, 2147483648
        %v5575 = vxor.u32 %v5430, 2147483648
        %v5576 = vxor.u32 %v5432, 2147483648
        %v5577 = vxor.u32 %v5434, 2147483648
        %v5578 = vxor.u32 %v5438, 2147483648
        %v5579 = vxor.u32 %v5440, 2147483648
        %v5580 = vxor.u32 %v5442, 2147483648
        %v5581 = vxor.u32 %v5444, 2147483648
        %v5582 = vxor.u32 %v5448, 2147483648
        %v5583 = vxor.u32 %v5450, 2147483648
        %v5584 = vxor.u32 %v5452, 2147483648
        %v5585 = vxor.u32 %v5454, 2147483648
        %v5586 = vxor.u32 %v5458, 2147483648
        %v5587 = vxor.u32 %v5460, 2147483648
        %v5588 = vxor.u32 %v5462, 2147483648
        %v5589 = vxor.u32 %v5464, 2147483648
        %v5590 = vxor.u32 %v5468, 2147483648
        %v5591 = vxor.u32 %v5470, 2147483648
        %v5592 = vxor.u32 %v5472, 2147483648
        %v5593 = vxor.u32 %v5474, 2147483648
        %v5594 = vxor.u32 %v5478, 2147483648
        %v5595 = vxor.u32 %v5480, 2147483648
        %v5596 = vxor.u32 %v5482, 2147483648
        %v5597 = vxor.u32 %v5484, 2147483648
        %v5598 = vxor.u32 %v5488, 2147483648
        %v5599 = vxor.u32 %v5490, 2147483648
        %v5600 = vxor.u32 %v5492, 2147483648
        %v5601 = vxor.u32 %v5494, 2147483648
        %v5602 = vxor.u32 %v5498, 2147483648
        %v5603 = vxor.u32 %v5500, 2147483648
        %v5604 = vxor.u32 %v5502, 2147483648
        %v5605 = vxor.u32 %v5504, 2147483648
        %v5606 = vxor.u32 %v5508, 2147483648
        %v5607 = vxor.u32 %v5510, 2147483648
        %v5608 = vxor.u32 %v5512, 2147483648
        %v5609 = vxor.u32 %v5514, 2147483648
        %v5610 = vxor.u32 %v5518, 2147483648
        %v5611 = vxor.u32 %v5520, 2147483648
        %v5612 = vxor.u32 %v5522, 2147483648
        %v5613 = vxor.u32 %v5524, 2147483648
        %v5614 = vxor.u32 %v5528, 2147483648
        %v5615 = vxor.u32 %v5530, 2147483648
        %v5616 = vxor.u32 %v5532, 2147483648
        %v5617 = vxor.u32 %v5534, 2147483648
        %v5618 = vxor.u32 %v5538, 2147483648
        %v5619 = vxor.u32 %v5540, 2147483648
        %v5620 = vxor.u32 %v5542, 2147483648
        %v5621 = vxor.u32 %v5544, 2147483648
        %v5622 = vxor.u32 %v5548, 2147483648
        %v5623 = vxor.u32 %v5550, 2147483648
        %v5624 = vxor.u32 %v5552, 2147483648
        %v5625 = vxor.u32 %v5554, 2147483648
        %v5626 = vxor.u32 %v5558, 2147483648
        %v5627 = vxor.u32 %v5560, 2147483648
        %v5628 = vxor.u32 %v5562, 2147483648
        %v5629 = vxor.u32 %v5564, 2147483648
        %v5630 = vmul.f32 %v5566, 1.442695
        %v5631 = vpow.pop %v5630
        %v5632 = vmul.f32 %v5567, 1.442695
        %v5633 = vpow.pop %v5632
        %v5634 = vmul.f32 %v5568, 1.442695
        %v5635 = vpow.pop %v5634
        %v5636 = vmul.f32 %v5569, 1.442695
        %v5637 = vpow.pop %v5636
        %v5638 = vmul.f32 %v5570, 1.442695
        %v5639 = vpow.pop %v5638
        %v5640 = vmul.f32 %v5571, 1.442695
        %v5641 = vpow.pop %v5640
        %v5642 = vmul.f32 %v5572, 1.442695
        %v5643 = vpow.pop %v5642
        %v5644 = vmul.f32 %v5573, 1.442695
        %v5645 = vpow.pop %v5644
        %v5646 = vmul.f32 %v5574, 1.442695
        %v5647 = vpow.pop %v5646
        %v5648 = vmul.f32 %v5575, 1.442695
        %v5649 = vpow.pop %v5648
        %v5650 = vmul.f32 %v5576, 1.442695
        %v5651 = vpow.pop %v5650
        %v5652 = vmul.f32 %v5577, 1.442695
        %v5653 = vpow.pop %v5652
        %v5654 = vmul.f32 %v5578, 1.442695
        %v5655 = vpow.pop %v5654
        %v5656 = vmul.f32 %v5579, 1.442695
        %v5657 = vpow.pop %v5656
        %v5658 = vmul.f32 %v5580, 1.442695
        %v5659 = vpow.pop %v5658
        %v5660 = vmul.f32 %v5581, 1.442695
        %v5661 = vpow.pop %v5660
        %v5662 = vmul.f32 %v5582, 1.442695
        %v5663 = vpow.pop %v5662
        %v5664 = vmul.f32 %v5583, 1.442695
        %v5665 = vpow.pop %v5664
        %v5666 = vmul.f32 %v5584, 1.442695
        %v5667 = vpow.pop %v5666
        %v5668 = vmul.f32 %v5585, 1.442695
        %v5669 = vpow.pop %v5668
        %v5670 = vmul.f32 %v5586, 1.442695
        %v5671 = vpow.pop %v5670
        %v5672 = vmul.f32 %v5587, 1.442695
        %v5673 = vpow.pop %v5672
        %v5674 = vmul.f32 %v5588, 1.442695
        %v5675 = vpow.pop %v5674
        %v5676 = vmul.f32 %v5589, 1.442695
        %v5677 = vpow.pop %v5676
        %v5678 = vmul.f32 %v5590, 1.442695
        %v5679 = vpow.pop %v5678
        %v5680 = vmul.f32 %v5591, 1.442695
        %v5681 = vpow.pop %v5680
        %v5682 = vmul.f32 %v5592, 1.442695
        %v5683 = vpow.pop %v5682
        %v5684 = vmul.f32 %v5593, 1.442695
        %v5685 = vpow.pop %v5684
        %v5686 = vmul.f32 %v5594, 1.442695
        %v5687 = vpow.pop %v5686
        %v5688 = vmul.f32 %v5595, 1.442695
        %v5689 = vpow.pop %v5688
        %v5690 = vmul.f32 %v5596, 1.442695
        %v5691 = vpow.pop %v5690
        %v5692 = vmul.f32 %v5597, 1.442695
        %v5693 = vpow.pop %v5692
        %v5694 = vmul.f32 %v5598, 1.442695
        %v5695 = vpow.pop %v5694
        %v5696 = vmul.f32 %v5599, 1.442695
        %v5697 = vpow.pop %v5696
        %v5698 = vmul.f32 %v5600, 1.442695
        %v5699 = vpow.pop %v5698
        %v5700 = vmul.f32 %v5601, 1.442695
        %v5701 = vpow.pop %v5700
        %v5702 = vmul.f32 %v5602, 1.442695
        %v5703 = vpow.pop %v5702
        %v5704 = vmul.f32 %v5603, 1.442695
        %v5705 = vpow.pop %v5704
        %v5706 = vmul.f32 %v5604, 1.442695
        %v5707 = vpow.pop %v5706
        %v5708 = vmul.f32 %v5605, 1.442695
        %v5709 = vpow.pop %v5708
        %v5710 = vmul.f32 %v5606, 1.442695
        %v5711 = vpow.pop %v5710
        %v5712 = vmul.f32 %v5607, 1.442695
        %v5713 = vpow.pop %v5712
        %v5714 = vmul.f32 %v5608, 1.442695
        %v5715 = vpow.pop %v5714
        %v5716 = vmul.f32 %v5609, 1.442695
        %v5717 = vpow.pop %v5716
        %v5718 = vmul.f32 %v5610, 1.442695
        %v5719 = vpow.pop %v5718
        %v5720 = vmul.f32 %v5611, 1.442695
        %v5721 = vpow.pop %v5720
        %v5722 = vmul.f32 %v5612, 1.442695
        %v5723 = vpow.pop %v5722
        %v5724 = vmul.f32 %v5613, 1.442695
        %v5725 = vpow.pop %v5724
        %v5726 = vmul.f32 %v5614, 1.442695
        %v5727 = vpow.pop %v5726
        %v5728 = vmul.f32 %v5615, 1.442695
        %v5729 = vpow.pop %v5728
        %v5730 = vmul.f32 %v5616, 1.442695
        %v5731 = vpow.pop %v5730
        %v5732 = vmul.f32 %v5617, 1.442695
        %v5733 = vpow.pop %v5732
        %v5734 = vmul.f32 %v5618, 1.442695
        %v5735 = vpow.pop %v5734
        %v5736 = vmul.f32 %v5619, 1.442695
        %v5737 = vpow.pop %v5736
        %v5738 = vmul.f32 %v5620, 1.442695
        %v5739 = vpow.pop %v5738
        %v5740 = vmul.f32 %v5621, 1.442695
        %v5741 = vpow.pop %v5740
        %v5742 = vmul.f32 %v5622, 1.442695
        %v5743 = vpow.pop %v5742
        %v5744 = vmul.f32 %v5623, 1.442695
        %v5745 = vpow.pop %v5744
        %v5746 = vmul.f32 %v5624, 1.442695
        %v5747 = vpow.pop %v5746
        %v5748 = vmul.f32 %v5625, 1.442695
        %v5749 = vpow.pop %v5748
        %v5750 = vmul.f32 %v5626, 1.442695
        %v5751 = vpow.pop %v5750
        %v5752 = vmul.f32 %v5627, 1.442695
        %v5753 = vpow.pop %v5752
        %v5754 = vmul.f32 %v5628, 1.442695
        %v5755 = vpow.pop %v5754
        %v5756 = vmul.f32 %v5629, 1.442695
        %v5757 = vpow.pop %v5756
        %v5758 = vadd.f32 %v5631, 1.0
        %v5759 = vadd.f32 %v5633, 1.0
        %v5760 = vadd.f32 %v5635, 1.0
        %v5761 = vadd.f32 %v5637, 1.0
        %v5762 = vadd.f32 %v5639, 1.0
        %v5763 = vadd.f32 %v5641, 1.0
        %v5764 = vadd.f32 %v5643, 1.0
        %v5765 = vadd.f32 %v5645, 1.0
        %v5766 = vadd.f32 %v5647, 1.0
        %v5767 = vadd.f32 %v5649, 1.0
        %v5768 = vadd.f32 %v5651, 1.0
        %v5769 = vadd.f32 %v5653, 1.0
        %v5770 = vadd.f32 %v5655, 1.0
        %v5771 = vadd.f32 %v5657, 1.0
        %v5772 = vadd.f32 %v5659, 1.0
        %v5773 = vadd.f32 %v5661, 1.0
        %v5774 = vadd.f32 %v5663, 1.0
        %v5775 = vadd.f32 %v5665, 1.0
        %v5776 = vadd.f32 %v5667, 1.0
        %v5777 = vadd.f32 %v5669, 1.0
        %v5778 = vadd.f32 %v5671, 1.0
        %v5779 = vadd.f32 %v5673, 1.0
        %v5780 = vadd.f32 %v5675, 1.0
        %v5781 = vadd.f32 %v5677, 1.0
        %v5782 = vadd.f32 %v5679, 1.0
        %v5783 = vadd.f32 %v5681, 1.0
        %v5784 = vadd.f32 %v5683, 1.0
        %v5785 = vadd.f32 %v5685, 1.0
        %v5786 = vadd.f32 %v5687, 1.0
        %v5787 = vadd.f32 %v5689, 1.0
        %v5788 = vadd.f32 %v5691, 1.0
        %v5789 = vadd.f32 %v5693, 1.0
        %v5790 = vadd.f32 %v5695, 1.0
        %v5791 = vadd.f32 %v5697, 1.0
        %v5792 = vadd.f32 %v5699, 1.0
        %v5793 = vadd.f32 %v5701, 1.0
        %v5794 = vadd.f32 %v5703, 1.0
        %v5795 = vadd.f32 %v5705, 1.0
        %v5796 = vadd.f32 %v5707, 1.0
        %v5797 = vadd.f32 %v5709, 1.0
        %v5798 = vadd.f32 %v5711, 1.0
        %v5799 = vadd.f32 %v5713, 1.0
        %v5800 = vadd.f32 %v5715, 1.0
        %v5801 = vadd.f32 %v5717, 1.0
        %v5802 = vadd.f32 %v5719, 1.0
        %v5803 = vadd.f32 %v5721, 1.0
        %v5804 = vadd.f32 %v5723, 1.0
        %v5805 = vadd.f32 %v5725, 1.0
        %v5806 = vadd.f32 %v5727, 1.0
        %v5807 = vadd.f32 %v5729, 1.0
        %v5808 = vadd.f32 %v5731, 1.0
        %v5809 = vadd.f32 %v5733, 1.0
        %v5810 = vadd.f32 %v5735, 1.0
        %v5811 = vadd.f32 %v5737, 1.0
        %v5812 = vadd.f32 %v5739, 1.0
        %v5813 = vadd.f32 %v5741, 1.0
        %v5814 = vadd.f32 %v5743, 1.0
        %v5815 = vadd.f32 %v5745, 1.0
        %v5816 = vadd.f32 %v5747, 1.0
        %v5817 = vadd.f32 %v5749, 1.0
        %v5818 = vadd.f32 %v5751, 1.0
        %v5819 = vadd.f32 %v5753, 1.0
        %v5820 = vadd.f32 %v5755, 1.0
        %v5821 = vadd.f32 %v5757, 1.0
        %v5822 = vrcp.pop %v5758
        %v5823 = vmul.f32 1.0, %v5822
        %v5824 = vrcp.pop %v5759
        %v5825 = vmul.f32 1.0, %v5824
        %v5826 = vrcp.pop %v5760
        %v5827 = vmul.f32 1.0, %v5826
        %v5828 = vrcp.pop %v5761
        %v5829 = vmul.f32 1.0, %v5828
        %v5830 = vrcp.pop %v5762
        %v5831 = vmul.f32 1.0, %v5830
        %v5832 = vrcp.pop %v5763
        %v5833 = vmul.f32 1.0, %v5832
        %v5834 = vrcp.pop %v5764
        %v5835 = vmul.f32 1.0, %v5834
        %v5836 = vrcp.pop %v5765
        %v5837 = vmul.f32 1.0, %v5836
        %v5838 = vrcp.pop %v5766
        %v5839 = vmul.f32 1.0, %v5838
        %v5840 = vrcp.pop %v5767
        %v5841 = vmul.f32 1.0, %v5840
        %v5842 = vrcp.pop %v5768
        %v5843 = vmul.f32 1.0, %v5842
        %v5844 = vrcp.pop %v5769
        %v5845 = vmul.f32 1.0, %v5844
        %v5846 = vrcp.pop %v5770
        %v5847 = vmul.f32 1.0, %v5846
        %v5848 = vrcp.pop %v5771
        %v5849 = vmul.f32 1.0, %v5848
        %v5850 = vrcp.pop %v5772
        %v5851 = vmul.f32 1.0, %v5850
        %v5852 = vrcp.pop %v5773
        %v5853 = vmul.f32 1.0, %v5852
        %v5854 = vrcp.pop %v5774
        %v5855 = vmul.f32 1.0, %v5854
        %v5856 = vrcp.pop %v5775
        %v5857 = vmul.f32 1.0, %v5856
        %v5858 = vrcp.pop %v5776
        %v5859 = vmul.f32 1.0, %v5858
        %v5860 = vrcp.pop %v5777
        %v5861 = vmul.f32 1.0, %v5860
        %v5862 = vrcp.pop %v5778
        %v5863 = vmul.f32 1.0, %v5862
        %v5864 = vrcp.pop %v5779
        %v5865 = vmul.f32 1.0, %v5864
        %v5866 = vrcp.pop %v5780
        %v5867 = vmul.f32 1.0, %v5866
        %v5868 = vrcp.pop %v5781
        %v5869 = vmul.f32 1.0, %v5868
        %v5870 = vrcp.pop %v5782
        %v5871 = vmul.f32 1.0, %v5870
        %v5872 = vrcp.pop %v5783
        %v5873 = vmul.f32 1.0, %v5872
        %v5874 = vrcp.pop %v5784
        %v5875 = vmul.f32 1.0, %v5874
        %v5876 = vrcp.pop %v5785
        %v5877 = vmul.f32 1.0, %v5876
        %v5878 = vrcp.pop %v5786
        %v5879 = vmul.f32 1.0, %v5878
        %v5880 = vrcp.pop %v5787
        %v5881 = vmul.f32 1.0, %v5880
        %v5882 = vrcp.pop %v5788
        %v5883 = vmul.f32 1.0, %v5882
        %v5884 = vrcp.pop %v5789
        %v5885 = vmul.f32 1.0, %v5884
        %v5886 = vrcp.pop %v5790
        %v5887 = vmul.f32 1.0, %v5886
        %v5888 = vrcp.pop %v5791
        %v5889 = vmul.f32 1.0, %v5888
        %v5890 = vrcp.pop %v5792
        %v5891 = vmul.f32 1.0, %v5890
        %v5892 = vrcp.pop %v5793
        %v5893 = vmul.f32 1.0, %v5892
        %v5894 = vrcp.pop %v5794
        %v5895 = vmul.f32 1.0, %v5894
        %v5896 = vrcp.pop %v5795
        %v5897 = vmul.f32 1.0, %v5896
        %v5898 = vrcp.pop %v5796
        %v5899 = vmul.f32 1.0, %v5898
        %v5900 = vrcp.pop %v5797
        %v5901 = vmul.f32 1.0, %v5900
        %v5902 = vrcp.pop %v5798
        %v5903 = vmul.f32 1.0, %v5902
        %v5904 = vrcp.pop %v5799
        %v5905 = vmul.f32 1.0, %v5904
        %v5906 = vrcp.pop %v5800
        %v5907 = vmul.f32 1.0, %v5906
        %v5908 = vrcp.pop %v5801
        %v5909 = vmul.f32 1.0, %v5908
        %v5910 = vrcp.pop %v5802
        %v5911 = vmul.f32 1.0, %v5910
        %v5912 = vrcp.pop %v5803
        %v5913 = vmul.f32 1.0, %v5912
        %v5914 = vrcp.pop %v5804
        %v5915 = vmul.f32 1.0, %v5914
        %v5916 = vrcp.pop %v5805
        %v5917 = vmul.f32 1.0, %v5916
        %v5918 = vrcp.pop %v5806
        %v5919 = vmul.f32 1.0, %v5918
        %v5920 = vrcp.pop %v5807
        %v5921 = vmul.f32 1.0, %v5920
        %v5922 = vrcp.pop %v5808
        %v5923 = vmul.f32 1.0, %v5922
        %v5924 = vrcp.pop %v5809
        %v5925 = vmul.f32 1.0, %v5924
        %v5926 = vrcp.pop %v5810
        %v5927 = vmul.f32 1.0, %v5926
        %v5928 = vrcp.pop %v5811
        %v5929 = vmul.f32 1.0, %v5928
        %v5930 = vrcp.pop %v5812
        %v5931 = vmul.f32 1.0, %v5930
        %v5932 = vrcp.pop %v5813
        %v5933 = vmul.f32 1.0, %v5932
        %v5934 = vrcp.pop %v5814
        %v5935 = vmul.f32 1.0, %v5934
        %v5936 = vrcp.pop %v5815
        %v5937 = vmul.f32 1.0, %v5936
        %v5938 = vrcp.pop %v5816
        %v5939 = vmul.f32 1.0, %v5938
        %v5940 = vrcp.pop %v5817
        %v5941 = vmul.f32 1.0, %v5940
        %v5942 = vrcp.pop %v5818
        %v5943 = vmul.f32 1.0, %v5942
        %v5944 = vrcp.pop %v5819
        %v5945 = vmul.f32 1.0, %v5944
        %v5946 = vrcp.pop %v5820
        %v5947 = vmul.f32 1.0, %v5946
        %v5948 = vrcp.pop %v5821
        %v5949 = vmul.f32 1.0, %v5948
        %v5950 = vmul.f32 %v5408, %v5823
        %v5951 = vmul.f32 %v5410, %v5825
        %v5952 = vmul.f32 %v5412, %v5827
        %v5953 = vmul.f32 %v5414, %v5829
        %v5954 = vmul.f32 %v5418, %v5831
        %v5955 = vmul.f32 %v5420, %v5833
        %v5956 = vmul.f32 %v5422, %v5835
        %v5957 = vmul.f32 %v5424, %v5837
        %v5958 = vmul.f32 %v5428, %v5839
        %v5959 = vmul.f32 %v5430, %v5841
        %v5960 = vmul.f32 %v5432, %v5843
        %v5961 = vmul.f32 %v5434, %v5845
        %v5962 = vmul.f32 %v5438, %v5847
        %v5963 = vmul.f32 %v5440, %v5849
        %v5964 = vmul.f32 %v5442, %v5851
        %v5965 = vmul.f32 %v5444, %v5853
        %v5966 = vmul.f32 %v5448, %v5855
        %v5967 = vmul.f32 %v5450, %v5857
        %v5968 = vmul.f32 %v5452, %v5859
        %v5969 = vmul.f32 %v5454, %v5861
        %v5970 = vmul.f32 %v5458, %v5863
        %v5971 = vmul.f32 %v5460, %v5865
        %v5972 = vmul.f32 %v5462, %v5867
        %v5973 = vmul.f32 %v5464, %v5869
        %v5974 = vmul.f32 %v5468, %v5871
        %v5975 = vmul.f32 %v5470, %v5873
        %v5976 = vmul.f32 %v5472, %v5875
        %v5977 = vmul.f32 %v5474, %v5877
        %v5978 = vmul.f32 %v5478, %v5879
        %v5979 = vmul.f32 %v5480, %v5881
        %v5980 = vmul.f32 %v5482, %v5883
        %v5981 = vmul.f32 %v5484, %v5885
        %v5982 = vmul.f32 %v5488, %v5887
        %v5983 = vmul.f32 %v5490, %v5889
        %v5984 = vmul.f32 %v5492, %v5891
        %v5985 = vmul.f32 %v5494, %v5893
        %v5986 = vmul.f32 %v5498, %v5895
        %v5987 = vmul.f32 %v5500, %v5897
        %v5988 = vmul.f32 %v5502, %v5899
        %v5989 = vmul.f32 %v5504, %v5901
        %v5990 = vmul.f32 %v5508, %v5903
        %v5991 = vmul.f32 %v5510, %v5905
        %v5992 = vmul.f32 %v5512, %v5907
        %v5993 = vmul.f32 %v5514, %v5909
        %v5994 = vmul.f32 %v5518, %v5911
        %v5995 = vmul.f32 %v5520, %v5913
        %v5996 = vmul.f32 %v5522, %v5915
        %v5997 = vmul.f32 %v5524, %v5917
        %v5998 = vmul.f32 %v5528, %v5919
        %v5999 = vmul.f32 %v5530, %v5921
        %v6000 = vmul.f32 %v5532, %v5923
        %v6001 = vmul.f32 %v5534, %v5925
        %v6002 = vmul.f32 %v5538, %v5927
        %v6003 = vmul.f32 %v5540, %v5929
        %v6004 = vmul.f32 %v5542, %v5931
        %v6005 = vmul.f32 %v5544, %v5933
        %v6006 = vmul.f32 %v5548, %v5935
        %v6007 = vmul.f32 %v5550, %v5937
        %v6008 = vmul.f32 %v5552, %v5939
        %v6009 = vmul.f32 %v5554, %v5941
        %v6010 = vmul.f32 %v5558, %v5943
        %v6011 = vmul.f32 %v5560, %v5945
        %v6012 = vmul.f32 %v5562, %v5947
        %v6013 = vmul.f32 %v5564, %v5949
        %v6014 = vmul.f32 %v5138, %v5950
        %v6015 = vmul.f32 %v5170, %v5951
        %v6016 = vmul.f32 %v5139, %v5952
        %v6017 = vmul.f32 %v5171, %v5953
        %v6018 = vmul.f32 %v5140, %v5954
        %v6019 = vmul.f32 %v5172, %v5955
        %v6020 = vmul.f32 %v5141, %v5956
        %v6021 = vmul.f32 %v5173, %v5957
        %v6022 = vmul.f32 %v5142, %v5958
        %v6023 = vmul.f32 %v5174, %v5959
        %v6024 = vmul.f32 %v5143, %v5960
        %v6025 = vmul.f32 %v5175, %v5961
        %v6026 = vmul.f32 %v5144, %v5962
        %v6027 = vmul.f32 %v5176, %v5963
        %v6028 = vmul.f32 %v5145, %v5964
        %v6029 = vmul.f32 %v5177, %v5965
        %v6030 = vmul.f32 %v5146, %v5966
        %v6031 = vmul.f32 %v5178, %v5967
        %v6032 = vmul.f32 %v5147, %v5968
        %v6033 = vmul.f32 %v5179, %v5969
        %v6034 = vmul.f32 %v5148, %v5970
        %v6035 = vmul.f32 %v5180, %v5971
        %v6036 = vmul.f32 %v5149, %v5972
        %v6037 = vmul.f32 %v5181, %v5973
        %v6038 = vmul.f32 %v5150, %v5974
        %v6039 = vmul.f32 %v5182, %v5975
        %v6040 = vmul.f32 %v5151, %v5976
        %v6041 = vmul.f32 %v5183, %v5977
        %v6042 = vmul.f32 %v5152, %v5978
        %v6043 = vmul.f32 %v5184, %v5979
        %v6044 = vmul.f32 %v5153, %v5980
        %v6045 = vmul.f32 %v5185, %v5981
        %v6046 = vmul.f32 %v5154, %v5982
        %v6047 = vmul.f32 %v5186, %v5983
        %v6048 = vmul.f32 %v5155, %v5984
        %v6049 = vmul.f32 %v5187, %v5985
        %v6050 = vmul.f32 %v5156, %v5986
        %v6051 = vmul.f32 %v5188, %v5987
        %v6052 = vmul.f32 %v5157, %v5988
        %v6053 = vmul.f32 %v5189, %v5989
        %v6054 = vmul.f32 %v5158, %v5990
        %v6055 = vmul.f32 %v5190, %v5991
        %v6056 = vmul.f32 %v5159, %v5992
        %v6057 = vmul.f32 %v5191, %v5993
        %v6058 = vmul.f32 %v5160, %v5994
        %v6059 = vmul.f32 %v5192, %v5995
        %v6060 = vmul.f32 %v5161, %v5996
        %v6061 = vmul.f32 %v5193, %v5997
        %v6062 = vmul.f32 %v5162, %v5998
        %v6063 = vmul.f32 %v5194, %v5999
        %v6064 = vmul.f32 %v5163, %v6000
        %v6065 = vmul.f32 %v5195, %v6001
        %v6066 = vmul.f32 %v5164, %v6002
        %v6067 = vmul.f32 %v5196, %v6003
        %v6068 = vmul.f32 %v5165, %v6004
        %v6069 = vmul.f32 %v5197, %v6005
        %v6070 = vmul.f32 %v5166, %v6006
        %v6071 = vmul.f32 %v5198, %v6007
        %v6072 = vmul.f32 %v5167, %v6008
        %v6073 = vmul.f32 %v5199, %v6009
        %v6074 = vmul.f32 %v5168, %v6010
        %v6075 = vmul.f32 %v5200, %v6011
        %v6076 = vmul.f32 %v5169, %v6012
        %v6077 = vmul.f32 %v5201, %v6013
        %v6078 = vpack.c.bf16 %v6016, %v6014
        %v6079 = vpack.c.bf16 %v6017, %v6015
        %v6080 = vpack.c.bf16 %v6020, %v6018
        %v6081 = vpack.c.bf16 %v6021, %v6019
        %v6082 = vpack.c.bf16 %v6024, %v6022
        %v6083 = vpack.c.bf16 %v6025, %v6023
        %v6084 = vpack.c.bf16 %v6028, %v6026
        %v6085 = vpack.c.bf16 %v6029, %v6027
        %v6086 = vpack.c.bf16 %v6032, %v6030
        %v6087 = vpack.c.bf16 %v6033, %v6031
        %v6088 = vpack.c.bf16 %v6036, %v6034
        %v6089 = vpack.c.bf16 %v6037, %v6035
        %v6090 = vpack.c.bf16 %v6040, %v6038
        %v6091 = vpack.c.bf16 %v6041, %v6039
        %v6092 = vpack.c.bf16 %v6044, %v6042
        %v6093 = vpack.c.bf16 %v6045, %v6043
        %v6094 = vpack.c.bf16 %v6048, %v6046
        %v6095 = vpack.c.bf16 %v6049, %v6047
        %v6096 = vpack.c.bf16 %v6052, %v6050
        %v6097 = vpack.c.bf16 %v6053, %v6051
        %v6098 = vpack.c.bf16 %v6056, %v6054
        %v6099 = vpack.c.bf16 %v6057, %v6055
        %v6100 = vpack.c.bf16 %v6060, %v6058
        %v6101 = vpack.c.bf16 %v6061, %v6059
        %v6102 = vpack.c.bf16 %v6064, %v6062
        %v6103 = vpack.c.bf16 %v6065, %v6063
        %v6104 = vpack.c.bf16 %v6068, %v6066
        %v6105 = vpack.c.bf16 %v6069, %v6067
        %v6106 = vpack.c.bf16 %v6072, %v6070
        %v6107 = vpack.c.bf16 %v6073, %v6071
        %v6108 = vpack.c.bf16 %v6076, %v6074
        %v6109 = vpack.c.bf16 %v6077, %v6075
        %v6111 = vlaneseq
        %v6112 = vshrl.u32 %v6111, 7
        %v6113 = vsub.s32 0, %v6112
        %v6114 = vrot.slane %v1577, %v6113
        %v6115 = vlaneseq
        %v6116 = vshrl.u32 %v6115, 7
        %v6117 = vsub.s32 1, %v6116
        %v6118 = vrot.slane %v1577, %v6117
        %v6153 = vunpack.c.l.b16 %v1545
        %v6154 = vunpack.c.h.b16 %v1545
        %v6155 = vunpack.c.l.b16 %v1546
        %v6156 = vunpack.c.h.b16 %v1546
        %v6157 = vunpack.c.l.b16 %v1547
        %v6158 = vunpack.c.h.b16 %v1547
        %v6159 = vunpack.c.l.b16 %v1548
        %v6160 = vunpack.c.h.b16 %v1548
        %v6161 = vunpack.c.l.b16 %v1549
        %v6162 = vunpack.c.h.b16 %v1549
        %v6163 = vunpack.c.l.b16 %v1550
        %v6164 = vunpack.c.h.b16 %v1550
        %v6165 = vunpack.c.l.b16 %v1551
        %v6166 = vunpack.c.h.b16 %v1551
        %v6167 = vunpack.c.l.b16 %v1552
        %v6168 = vunpack.c.h.b16 %v1552
        %v6169 = vunpack.c.l.b16 %v1553
        %v6170 = vunpack.c.h.b16 %v1553
        %v6171 = vunpack.c.l.b16 %v1554
        %v6172 = vunpack.c.h.b16 %v1554
        %v6173 = vunpack.c.l.b16 %v1555
        %v6174 = vunpack.c.h.b16 %v1555
        %v6175 = vunpack.c.l.b16 %v1556
        %v6176 = vunpack.c.h.b16 %v1556
        %v6177 = vunpack.c.l.b16 %v1557
        %v6178 = vunpack.c.h.b16 %v1557
        %v6179 = vunpack.c.l.b16 %v1558
        %v6180 = vunpack.c.h.b16 %v1558
        %v6181 = vunpack.c.l.b16 %v1559
        %v6182 = vunpack.c.h.b16 %v1559
        %v6183 = vunpack.c.l.b16 %v1560
        %v6184 = vunpack.c.h.b16 %v1560
        %v6185 = vunpack.c.l.b16 %v1561
        %v6186 = vunpack.c.h.b16 %v1561
        %v6187 = vunpack.c.l.b16 %v1562
        %v6188 = vunpack.c.h.b16 %v1562
        %v6189 = vunpack.c.l.b16 %v1563
        %v6190 = vunpack.c.h.b16 %v1563
        %v6191 = vunpack.c.l.b16 %v1564
        %v6192 = vunpack.c.h.b16 %v1564
        %v6193 = vunpack.c.l.b16 %v1565
        %v6194 = vunpack.c.h.b16 %v1565
        %v6195 = vunpack.c.l.b16 %v1566
        %v6196 = vunpack.c.h.b16 %v1566
        %v6197 = vunpack.c.l.b16 %v1567
        %v6198 = vunpack.c.h.b16 %v1567
        %v6199 = vunpack.c.l.b16 %v1568
        %v6200 = vunpack.c.h.b16 %v1568
        %v6201 = vunpack.c.l.b16 %v1569
        %v6202 = vunpack.c.h.b16 %v1569
        %v6203 = vunpack.c.l.b16 %v1570
        %v6204 = vunpack.c.h.b16 %v1570
        %v6205 = vunpack.c.l.b16 %v1571
        %v6206 = vunpack.c.h.b16 %v1571
        %v6207 = vunpack.c.l.b16 %v1572
        %v6208 = vunpack.c.h.b16 %v1572
        %v6209 = vunpack.c.l.b16 %v1573
        %v6210 = vunpack.c.h.b16 %v1573
        %v6211 = vunpack.c.l.b16 %v1574
        %v6212 = vunpack.c.h.b16 %v1574
        %v6213 = vunpack.c.l.b16 %v1575
        %v6214 = vunpack.c.h.b16 %v1575
        %v6215 = vunpack.c.l.b16 %v1576
        %v6216 = vunpack.c.h.b16 %v1576
        %v6217 = vpack.c.b16 %v6155, %v6153
        %v6218 = vpack.c.b16 %v6156, %v6154
        %v6219 = vpack.c.b16 %v6159, %v6157
        %v6220 = vpack.c.b16 %v6160, %v6158
        %v6221 = vpack.c.b16 %v6163, %v6161
        %v6222 = vpack.c.b16 %v6164, %v6162
        %v6223 = vpack.c.b16 %v6167, %v6165
        %v6224 = vpack.c.b16 %v6168, %v6166
        %v6225 = vpack.c.b16 %v6171, %v6169
        %v6226 = vpack.c.b16 %v6172, %v6170
        %v6227 = vpack.c.b16 %v6175, %v6173
        %v6228 = vpack.c.b16 %v6176, %v6174
        %v6229 = vpack.c.b16 %v6179, %v6177
        %v6230 = vpack.c.b16 %v6180, %v6178
        %v6231 = vpack.c.b16 %v6183, %v6181
        %v6232 = vpack.c.b16 %v6184, %v6182
        %v6233 = vpack.c.b16 %v6187, %v6185
        %v6234 = vpack.c.b16 %v6188, %v6186
        %v6235 = vpack.c.b16 %v6191, %v6189
        %v6236 = vpack.c.b16 %v6192, %v6190
        %v6237 = vpack.c.b16 %v6195, %v6193
        %v6238 = vpack.c.b16 %v6196, %v6194
        %v6239 = vpack.c.b16 %v6199, %v6197
        %v6240 = vpack.c.b16 %v6200, %v6198
        %v6241 = vpack.c.b16 %v6203, %v6201
        %v6242 = vpack.c.b16 %v6204, %v6202
        %v6243 = vpack.c.b16 %v6207, %v6205
        %v6244 = vpack.c.b16 %v6208, %v6206
        %v6245 = vpack.c.b16 %v6211, %v6209
        %v6246 = vpack.c.b16 %v6212, %v6210
        %v6247 = vpack.c.b16 %v6215, %v6213
        %v6248 = vpack.c.b16 %v6216, %v6214
        %6281 = vmatprep.subr.bf16.mxu0 %v6232
        %6282 = vmatpush1.bf16.msra.mxu0 %v6231
        %6283 = vmatprep.subr.bf16.mxu0 %v6230
        %6284 = vmatpush1.bf16.msra.mxu0 %v6229
        %6285 = vmatprep.subr.bf16.mxu0 %v6228
        %6286 = vmatpush1.bf16.msra.mxu0 %v6227
        %6287 = vmatprep.subr.bf16.mxu0 %v6226
        %6288 = vmatpush1.bf16.msra.mxu0 %v6225
        %6289 = vmatprep.subr.bf16.mxu0 %v6224
        %6290 = vmatpush1.bf16.msra.mxu0 %v6223
        %6291 = vmatprep.subr.bf16.mxu0 %v6222
        %6292 = vmatpush1.bf16.msra.mxu0 %v6221
        %6293 = vmatprep.subr.bf16.mxu0 %v6220
        %6294 = vmatpush1.bf16.msra.mxu0 %v6219
        %6295 = vmatprep.subr.bf16.mxu0 %v6218
        %6296 = vmatpush1.bf16.msra.mxu0 %v6217
        %6297 = vmatprep.subr.bf16.mxu0 %v6248
        %6298 = vmatpush2.bf16.msra.mxu0 %v6247
        %6299 = vmatprep.subr.bf16.mxu0 %v6246
        %6300 = vmatpush2.bf16.msra.mxu0 %v6245
        %6301 = vmatprep.subr.bf16.mxu0 %v6244
        %6302 = vmatpush2.bf16.msra.mxu0 %v6243
        %6303 = vmatprep.subr.bf16.mxu0 %v6242
        %6304 = vmatpush2.bf16.msra.mxu0 %v6241
        %6305 = vmatprep.subr.bf16.mxu0 %v6240
        %6306 = vmatpush2.bf16.msra.mxu0 %v6239
        %6307 = vmatprep.subr.bf16.mxu0 %v6238
        %6308 = vmatpush2.bf16.msra.mxu0 %v6237
        %6309 = vmatprep.subr.bf16.mxu0 %v6236
        %6310 = vmatpush2.bf16.msra.mxu0 %v6235
        %6311 = vmatprep.subr.bf16.mxu0 %v6234
        %6312 = vmatpush2.bf16.msra.mxu0 %v6233
        %6313 = vmatprep.mubr.bf16.mxu0 %v6079
        %6314 = vmatmul.mubr.bf16.gmra.mxu0 %v6078
        %v6315 = vpop.f32.mrf.mxu0
        %v6316 = vadd.f32 %v6114, %v6315
        %v6317 = vpop.f32.mrf.mxu0
        %v6318 = vadd.f32 %v6118, %v6317
        %v6319 = vpop.f32.mrf.mxu0
        %v6320 = vadd.f32 %v6114, %v6319
        %v6321 = vpop.f32.mrf.mxu0
        %v6322 = vadd.f32 %v6118, %v6321
        %6323 = vmatprep.mubr.bf16.mxu0 %v6081
        %6324 = vmatmul.mubr.bf16.gmra.mxu0 %v6080
        %v6325 = vpop.f32.mrf.mxu0
        %v6326 = vadd.f32 %v6114, %v6325
        %v6327 = vpop.f32.mrf.mxu0
        %v6328 = vadd.f32 %v6118, %v6327
        %v6329 = vpop.f32.mrf.mxu0
        %v6330 = vadd.f32 %v6114, %v6329
        %v6331 = vpop.f32.mrf.mxu0
        %v6332 = vadd.f32 %v6118, %v6331
        %6333 = vmatprep.mubr.bf16.mxu0 %v6083
        %6334 = vmatmul.mubr.bf16.gmra.mxu0 %v6082
        %v6335 = vpop.f32.mrf.mxu0
        %v6336 = vadd.f32 %v6114, %v6335
        %v6337 = vpop.f32.mrf.mxu0
        %v6338 = vadd.f32 %v6118, %v6337
        %v6339 = vpop.f32.mrf.mxu0
        %v6340 = vadd.f32 %v6114, %v6339
        %v6341 = vpop.f32.mrf.mxu0
        %v6342 = vadd.f32 %v6118, %v6341
        %6343 = vmatprep.mubr.bf16.mxu0 %v6085
        %6344 = vmatmul.mubr.bf16.gmra.mxu0 %v6084
        %v6345 = vpop.f32.mrf.mxu0
        %v6346 = vadd.f32 %v6114, %v6345
        %v6347 = vpop.f32.mrf.mxu0
        %v6348 = vadd.f32 %v6118, %v6347
        %v6349 = vpop.f32.mrf.mxu0
        %v6350 = vadd.f32 %v6114, %v6349
        %v6351 = vpop.f32.mrf.mxu0
        %v6352 = vadd.f32 %v6118, %v6351
        %6353 = vmatprep.mubr.bf16.mxu0 %v6087
        %6354 = vmatmul.mubr.bf16.gmra.mxu0 %v6086
        %v6355 = vpop.f32.mrf.mxu0
        %v6356 = vadd.f32 %v6114, %v6355
        %v6357 = vpop.f32.mrf.mxu0
        %v6358 = vadd.f32 %v6118, %v6357
        %v6359 = vpop.f32.mrf.mxu0
        %v6360 = vadd.f32 %v6114, %v6359
        %v6361 = vpop.f32.mrf.mxu0
        %v6362 = vadd.f32 %v6118, %v6361
        %6363 = vmatprep.mubr.bf16.mxu0 %v6089
        %6364 = vmatmul.mubr.bf16.gmra.mxu0 %v6088
        %v6365 = vpop.f32.mrf.mxu0
        %v6366 = vadd.f32 %v6114, %v6365
        %v6367 = vpop.f32.mrf.mxu0
        %v6368 = vadd.f32 %v6118, %v6367
        %v6369 = vpop.f32.mrf.mxu0
        %v6370 = vadd.f32 %v6114, %v6369
        %v6371 = vpop.f32.mrf.mxu0
        %v6372 = vadd.f32 %v6118, %v6371
        %6373 = vmatprep.mubr.bf16.mxu0 %v6091
        %6374 = vmatmul.mubr.bf16.gmra.mxu0 %v6090
        %v6375 = vpop.f32.mrf.mxu0
        %v6376 = vadd.f32 %v6114, %v6375
        %v6377 = vpop.f32.mrf.mxu0
        %v6378 = vadd.f32 %v6118, %v6377
        %v6379 = vpop.f32.mrf.mxu0
        %v6380 = vadd.f32 %v6114, %v6379
        %v6381 = vpop.f32.mrf.mxu0
        %v6382 = vadd.f32 %v6118, %v6381
        %6383 = vmatprep.mubr.bf16.mxu0 %v6093
        %6384 = vmatmul.mubr.bf16.gmra.mxu0 %v6092
        %v6385 = vpop.f32.mrf.mxu0
        %v6386 = vadd.f32 %v6114, %v6385
        %v6387 = vpop.f32.mrf.mxu0
        %v6388 = vadd.f32 %v6118, %v6387
        %v6389 = vpop.f32.mrf.mxu0
        %v6390 = vadd.f32 %v6114, %v6389
        %v6391 = vpop.f32.mrf.mxu0
        %v6392 = vadd.f32 %v6118, %v6391
        %6393 = vmatprep.mubr.bf16.mxu0 %v6095
        %6394 = vmatmul.mubr.bf16.gmra.mxu0 %v6094
        %v6395 = vpop.f32.mrf.mxu0
        %v6396 = vadd.f32 %v6114, %v6395
        %v6397 = vpop.f32.mrf.mxu0
        %v6398 = vadd.f32 %v6118, %v6397
        %v6399 = vpop.f32.mrf.mxu0
        %v6400 = vadd.f32 %v6114, %v6399
        %v6401 = vpop.f32.mrf.mxu0
        %v6402 = vadd.f32 %v6118, %v6401
        %6403 = vmatprep.mubr.bf16.mxu0 %v6097
        %6404 = vmatmul.mubr.bf16.gmra.mxu0 %v6096
        %v6405 = vpop.f32.mrf.mxu0
        %v6406 = vadd.f32 %v6114, %v6405
        %v6407 = vpop.f32.mrf.mxu0
        %v6408 = vadd.f32 %v6118, %v6407
        %v6409 = vpop.f32.mrf.mxu0
        %v6410 = vadd.f32 %v6114, %v6409
        %v6411 = vpop.f32.mrf.mxu0
        %v6412 = vadd.f32 %v6118, %v6411
        %6413 = vmatprep.mubr.bf16.mxu0 %v6099
        %6414 = vmatmul.mubr.bf16.gmra.mxu0 %v6098
        %v6415 = vpop.f32.mrf.mxu0
        %v6416 = vadd.f32 %v6114, %v6415
        %v6417 = vpop.f32.mrf.mxu0
        %v6418 = vadd.f32 %v6118, %v6417
        %v6419 = vpop.f32.mrf.mxu0
        %v6420 = vadd.f32 %v6114, %v6419
        %v6421 = vpop.f32.mrf.mxu0
        %v6422 = vadd.f32 %v6118, %v6421
        %6423 = vmatprep.mubr.bf16.mxu0 %v6101
        %6424 = vmatmul.mubr.bf16.gmra.mxu0 %v6100
        %v6425 = vpop.f32.mrf.mxu0
        %v6426 = vadd.f32 %v6114, %v6425
        %v6427 = vpop.f32.mrf.mxu0
        %v6428 = vadd.f32 %v6118, %v6427
        %v6429 = vpop.f32.mrf.mxu0
        %v6430 = vadd.f32 %v6114, %v6429
        %v6431 = vpop.f32.mrf.mxu0
        %v6432 = vadd.f32 %v6118, %v6431
        %6433 = vmatprep.mubr.bf16.mxu0 %v6103
        %6434 = vmatmul.mubr.bf16.gmra.mxu0 %v6102
        %v6435 = vpop.f32.mrf.mxu0
        %v6436 = vadd.f32 %v6114, %v6435
        %v6437 = vpop.f32.mrf.mxu0
        %v6438 = vadd.f32 %v6118, %v6437
        %v6439 = vpop.f32.mrf.mxu0
        %v6440 = vadd.f32 %v6114, %v6439
        %v6441 = vpop.f32.mrf.mxu0
        %v6442 = vadd.f32 %v6118, %v6441
        %6443 = vmatprep.mubr.bf16.mxu0 %v6105
        %6444 = vmatmul.mubr.bf16.gmra.mxu0 %v6104
        %v6445 = vpop.f32.mrf.mxu0
        %v6446 = vadd.f32 %v6114, %v6445
        %v6447 = vpop.f32.mrf.mxu0
        %v6448 = vadd.f32 %v6118, %v6447
        %v6449 = vpop.f32.mrf.mxu0
        %v6450 = vadd.f32 %v6114, %v6449
        %v6451 = vpop.f32.mrf.mxu0
        %v6452 = vadd.f32 %v6118, %v6451
        %6453 = vmatprep.mubr.bf16.mxu0 %v6107
        %6454 = vmatmul.mubr.bf16.gmra.mxu0 %v6106
        %v6455 = vpop.f32.mrf.mxu0
        %v6456 = vadd.f32 %v6114, %v6455
        %v6457 = vpop.f32.mrf.mxu0
        %v6458 = vadd.f32 %v6118, %v6457
        %v6459 = vpop.f32.mrf.mxu0
        %v6460 = vadd.f32 %v6114, %v6459
        %v6461 = vpop.f32.mrf.mxu0
        %v6462 = vadd.f32 %v6118, %v6461
        %6463 = vmatprep.mubr.bf16.mxu0 %v6109
        %6464 = vmatmul.mubr.bf16.gmra.mxu0 %v6108
        %v6465 = vpop.f32.mrf.mxu0
        %v6466 = vadd.f32 %v6114, %v6465
        %v6467 = vpop.f32.mrf.mxu0
        %v6468 = vadd.f32 %v6118, %v6467
        %v6469 = vpop.f32.mrf.mxu0
        %v6470 = vadd.f32 %v6114, %v6469
        %v6471 = vpop.f32.mrf.mxu0
        %v6472 = vadd.f32 %v6118, %v6471
        %6473 = vdwg.mxu0
        %v6474 = vadd.f32 %v1347, %v6316
        %v6475 = vadd.f32 %v1348, %v6318
        %v6476 = vadd.f32 %v1349, %v6320
        %v6477 = vadd.f32 %v1350, %v6322
        %v6478 = vadd.f32 %v1351, %v6326
        %v6479 = vadd.f32 %v1352, %v6328
        %v6480 = vadd.f32 %v1353, %v6330
        %v6481 = vadd.f32 %v1354, %v6332
        %v6482 = vadd.f32 %v1355, %v6336
        %v6483 = vadd.f32 %v1356, %v6338
        %v6484 = vadd.f32 %v1357, %v6340
        %v6485 = vadd.f32 %v1358, %v6342
        %v6486 = vadd.f32 %v1359, %v6346
        %v6487 = vadd.f32 %v1360, %v6348
        %v6488 = vadd.f32 %v1361, %v6350
        %v6489 = vadd.f32 %v1362, %v6352
        %v6490 = vadd.f32 %v1363, %v6356
        %v6491 = vadd.f32 %v1364, %v6358
        %v6492 = vadd.f32 %v1365, %v6360
        %v6493 = vadd.f32 %v1366, %v6362
        %v6494 = vadd.f32 %v1367, %v6366
        %v6495 = vadd.f32 %v1368, %v6368
        %v6496 = vadd.f32 %v1369, %v6370
        %v6497 = vadd.f32 %v1370, %v6372
        %v6498 = vadd.f32 %v1371, %v6376
        %v6499 = vadd.f32 %v1372, %v6378
        %v6500 = vadd.f32 %v1373, %v6380
        %v6501 = vadd.f32 %v1374, %v6382
        %v6502 = vadd.f32 %v1375, %v6386
        %v6503 = vadd.f32 %v1376, %v6388
        %v6504 = vadd.f32 %v1377, %v6390
        %v6505 = vadd.f32 %v1378, %v6392
        %v6506 = vadd.f32 %v1379, %v6396
        %v6507 = vadd.f32 %v1380, %v6398
        %v6508 = vadd.f32 %v1381, %v6400
        %v6509 = vadd.f32 %v1382, %v6402
        %v6510 = vadd.f32 %v1383, %v6406
        %v6511 = vadd.f32 %v1384, %v6408
        %v6512 = vadd.f32 %v1385, %v6410
        %v6513 = vadd.f32 %v1386, %v6412
        %v6514 = vadd.f32 %v1387, %v6416
        %v6515 = vadd.f32 %v1388, %v6418
        %v6516 = vadd.f32 %v1389, %v6420
        %v6517 = vadd.f32 %v1390, %v6422
        %v6518 = vadd.f32 %v1391, %v6426
        %v6519 = vadd.f32 %v1392, %v6428
        %v6520 = vadd.f32 %v1393, %v6430
        %v6521 = vadd.f32 %v1394, %v6432
        %v6522 = vadd.f32 %v1395, %v6436
        %v6523 = vadd.f32 %v1396, %v6438
        %v6524 = vadd.f32 %v1397, %v6440
        %v6525 = vadd.f32 %v1398, %v6442
        %v6526 = vadd.f32 %v1399, %v6446
        %v6527 = vadd.f32 %v1400, %v6448
        %v6528 = vadd.f32 %v1401, %v6450
        %v6529 = vadd.f32 %v1402, %v6452
        %v6530 = vadd.f32 %v1403, %v6456
        %v6531 = vadd.f32 %v1404, %v6458
        %v6532 = vadd.f32 %v1405, %v6460
        %v6533 = vadd.f32 %v1406, %v6462
        %v6534 = vadd.f32 %v1407, %v6466
        %v6535 = vadd.f32 %v1408, %v6468
        %v6536 = vadd.f32 %v1409, %v6470
        %v6537 = vadd.f32 %v1410, %v6472
        %v6538 = vadd.f32 %v6474, %v6475
        %6539 = vadd.xlane.f32.xlu0 %v6538
        %v6540 = vpop.xlane.xlu0 %6539
        %v6541 = vadd.f32 %v6476, %v6477
        %6542 = vadd.xlane.f32.xlu0 %v6541
        %v6543 = vpop.xlane.xlu0 %6542
        %v6544 = vadd.f32 %v6478, %v6479
        %6545 = vadd.xlane.f32.xlu0 %v6544
        %v6546 = vpop.xlane.xlu0 %6545
        %v6547 = vadd.f32 %v6480, %v6481
        %6548 = vadd.xlane.f32.xlu0 %v6547
        %v6549 = vpop.xlane.xlu0 %6548
        %v6550 = vadd.f32 %v6482, %v6483
        %6551 = vadd.xlane.f32.xlu0 %v6550
        %v6552 = vpop.xlane.xlu0 %6551
        %v6553 = vadd.f32 %v6484, %v6485
        %6554 = vadd.xlane.f32.xlu0 %v6553
        %v6555 = vpop.xlane.xlu0 %6554
        %v6556 = vadd.f32 %v6486, %v6487
        %6557 = vadd.xlane.f32.xlu0 %v6556
        %v6558 = vpop.xlane.xlu0 %6557
        %v6559 = vadd.f32 %v6488, %v6489
        %6560 = vadd.xlane.f32.xlu0 %v6559
        %v6561 = vpop.xlane.xlu0 %6560
        %v6562 = vadd.f32 %v6490, %v6491
        %6563 = vadd.xlane.f32.xlu0 %v6562
        %v6564 = vpop.xlane.xlu0 %6563
        %v6565 = vadd.f32 %v6492, %v6493
        %6566 = vadd.xlane.f32.xlu0 %v6565
        %v6567 = vpop.xlane.xlu0 %6566
        %v6568 = vadd.f32 %v6494, %v6495
        %6569 = vadd.xlane.f32.xlu0 %v6568
        %v6570 = vpop.xlane.xlu0 %6569
        %v6571 = vadd.f32 %v6496, %v6497
        %6572 = vadd.xlane.f32.xlu0 %v6571
        %v6573 = vpop.xlane.xlu0 %6572
        %v6574 = vadd.f32 %v6498, %v6499
        %6575 = vadd.xlane.f32.xlu0 %v6574
        %v6576 = vpop.xlane.xlu0 %6575
        %v6577 = vadd.f32 %v6500, %v6501
        %6578 = vadd.xlane.f32.xlu0 %v6577
        %v6579 = vpop.xlane.xlu0 %6578
        %v6580 = vadd.f32 %v6502, %v6503
        %6581 = vadd.xlane.f32.xlu0 %v6580
        %v6582 = vpop.xlane.xlu0 %6581
        %v6583 = vadd.f32 %v6504, %v6505
        %6584 = vadd.xlane.f32.xlu0 %v6583
        %v6585 = vpop.xlane.xlu0 %6584
        %v6586 = vadd.f32 %v6506, %v6507
        %6587 = vadd.xlane.f32.xlu0 %v6586
        %v6588 = vpop.xlane.xlu0 %6587
        %v6589 = vadd.f32 %v6508, %v6509
        %6590 = vadd.xlane.f32.xlu0 %v6589
        %v6591 = vpop.xlane.xlu0 %6590
        %v6592 = vadd.f32 %v6510, %v6511
        %6593 = vadd.xlane.f32.xlu0 %v6592
        %v6594 = vpop.xlane.xlu0 %6593
        %v6595 = vadd.f32 %v6512, %v6513
        %6596 = vadd.xlane.f32.xlu0 %v6595
        %v6597 = vpop.xlane.xlu0 %6596
        %v6598 = vadd.f32 %v6514, %v6515
        %6599 = vadd.xlane.f32.xlu0 %v6598
        %v6600 = vpop.xlane.xlu0 %6599
        %v6601 = vadd.f32 %v6516, %v6517
        %6602 = vadd.xlane.f32.xlu0 %v6601
        %v6603 = vpop.xlane.xlu0 %6602
        %v6604 = vadd.f32 %v6518, %v6519
        %6605 = vadd.xlane.f32.xlu0 %v6604
        %v6606 = vpop.xlane.xlu0 %6605
        %v6607 = vadd.f32 %v6520, %v6521
        %6608 = vadd.xlane.f32.xlu0 %v6607
        %v6609 = vpop.xlane.xlu0 %6608
        %v6610 = vadd.f32 %v6522, %v6523
        %6611 = vadd.xlane.f32.xlu0 %v6610
        %v6612 = vpop.xlane.xlu0 %6611
        %v6613 = vadd.f32 %v6524, %v6525
        %6614 = vadd.xlane.f32.xlu0 %v6613
        %v6615 = vpop.xlane.xlu0 %6614
        %v6616 = vadd.f32 %v6526, %v6527
        %6617 = vadd.xlane.f32.xlu0 %v6616
        %v6618 = vpop.xlane.xlu0 %6617
        %v6619 = vadd.f32 %v6528, %v6529
        %6620 = vadd.xlane.f32.xlu0 %v6619
        %v6621 = vpop.xlane.xlu0 %6620
        %v6622 = vadd.f32 %v6530, %v6531
        %6623 = vadd.xlane.f32.xlu0 %v6622
        %v6624 = vpop.xlane.xlu0 %6623
        %v6625 = vadd.f32 %v6532, %v6533
        %6626 = vadd.xlane.f32.xlu0 %v6625
        %v6627 = vpop.xlane.xlu0 %6626
        %v6628 = vadd.f32 %v6534, %v6535
        %6629 = vadd.xlane.f32.xlu0 %v6628
        %v6630 = vpop.xlane.xlu0 %6629
        %v6631 = vadd.f32 %v6536, %v6537
        %6632 = vadd.xlane.f32.xlu0 %v6631
        %v6633 = vpop.xlane.xlu0 %6632
        %v6634 = vmul.f32 %v6540, %v1838
        %v6635 = vmul.f32 %v6543, %v1838
        %v6636 = vmul.f32 %v6546, %v1838
        %v6637 = vmul.f32 %v6549, %v1838
        %v6638 = vmul.f32 %v6552, %v1838
        %v6639 = vmul.f32 %v6555, %v1838
        %v6640 = vmul.f32 %v6558, %v1838
        %v6641 = vmul.f32 %v6561, %v1838
        %v6642 = vmul.f32 %v6564, %v1838
        %v6643 = vmul.f32 %v6567, %v1838
        %v6644 = vmul.f32 %v6570, %v1838
        %v6645 = vmul.f32 %v6573, %v1838
        %v6646 = vmul.f32 %v6576, %v1838
        %v6647 = vmul.f32 %v6579, %v1838
        %v6648 = vmul.f32 %v6582, %v1838
        %v6649 = vmul.f32 %v6585, %v1838
        %v6650 = vmul.f32 %v6588, %v1838
        %v6651 = vmul.f32 %v6591, %v1838
        %v6652 = vmul.f32 %v6594, %v1838
        %v6653 = vmul.f32 %v6597, %v1838
        %v6654 = vmul.f32 %v6600, %v1838
        %v6655 = vmul.f32 %v6603, %v1838
        %v6656 = vmul.f32 %v6606, %v1838
        %v6657 = vmul.f32 %v6609, %v1838
        %v6658 = vmul.f32 %v6612, %v1838
        %v6659 = vmul.f32 %v6615, %v1838
        %v6660 = vmul.f32 %v6618, %v1838
        %v6661 = vmul.f32 %v6621, %v1838
        %v6662 = vmul.f32 %v6624, %v1838
        %v6663 = vmul.f32 %v6627, %v1838
        %v6664 = vmul.f32 %v6630, %v1838
        %v6665 = vmul.f32 %v6633, %v1838
        %v6666 = vsub.f32 %v6474, %v6634
        %v6667 = vsub.f32 %v6475, %v6634
        %v6668 = vsub.f32 %v6476, %v6635
        %v6669 = vsub.f32 %v6477, %v6635
        %v6670 = vsub.f32 %v6478, %v6636
        %v6671 = vsub.f32 %v6479, %v6636
        %v6672 = vsub.f32 %v6480, %v6637
        %v6673 = vsub.f32 %v6481, %v6637
        %v6674 = vsub.f32 %v6482, %v6638
        %v6675 = vsub.f32 %v6483, %v6638
        %v6676 = vsub.f32 %v6484, %v6639
        %v6677 = vsub.f32 %v6485, %v6639
        %v6678 = vsub.f32 %v6486, %v6640
        %v6679 = vsub.f32 %v6487, %v6640
        %v6680 = vsub.f32 %v6488, %v6641
        %v6681 = vsub.f32 %v6489, %v6641
        %v6682 = vsub.f32 %v6490, %v6642
        %v6683 = vsub.f32 %v6491, %v6642
        %v6684 = vsub.f32 %v6492, %v6643
        %v6685 = vsub.f32 %v6493, %v6643
        %v6686 = vsub.f32 %v6494, %v6644
        %v6687 = vsub.f32 %v6495, %v6644
        %v6688 = vsub.f32 %v6496, %v6645
        %v6689 = vsub.f32 %v6497, %v6645
        %v6690 = vsub.f32 %v6498, %v6646
        %v6691 = vsub.f32 %v6499, %v6646
        %v6692 = vsub.f32 %v6500, %v6647
        %v6693 = vsub.f32 %v6501, %v6647
        %v6694 = vsub.f32 %v6502, %v6648
        %v6695 = vsub.f32 %v6503, %v6648
        %v6696 = vsub.f32 %v6504, %v6649
        %v6697 = vsub.f32 %v6505, %v6649
        %v6698 = vsub.f32 %v6506, %v6650
        %v6699 = vsub.f32 %v6507, %v6650
        %v6700 = vsub.f32 %v6508, %v6651
        %v6701 = vsub.f32 %v6509, %v6651
        %v6702 = vsub.f32 %v6510, %v6652
        %v6703 = vsub.f32 %v6511, %v6652
        %v6704 = vsub.f32 %v6512, %v6653
        %v6705 = vsub.f32 %v6513, %v6653
        %v6706 = vsub.f32 %v6514, %v6654
        %v6707 = vsub.f32 %v6515, %v6654
        %v6708 = vsub.f32 %v6516, %v6655
        %v6709 = vsub.f32 %v6517, %v6655
        %v6710 = vsub.f32 %v6518, %v6656
        %v6711 = vsub.f32 %v6519, %v6656
        %v6712 = vsub.f32 %v6520, %v6657
        %v6713 = vsub.f32 %v6521, %v6657
        %v6714 = vsub.f32 %v6522, %v6658
        %v6715 = vsub.f32 %v6523, %v6658
        %v6716 = vsub.f32 %v6524, %v6659
        %v6717 = vsub.f32 %v6525, %v6659
        %v6718 = vsub.f32 %v6526, %v6660
        %v6719 = vsub.f32 %v6527, %v6660
        %v6720 = vsub.f32 %v6528, %v6661
        %v6721 = vsub.f32 %v6529, %v6661
        %v6722 = vsub.f32 %v6530, %v6662
        %v6723 = vsub.f32 %v6531, %v6662
        %v6724 = vsub.f32 %v6532, %v6663
        %v6725 = vsub.f32 %v6533, %v6663
        %v6726 = vsub.f32 %v6534, %v6664
        %v6727 = vsub.f32 %v6535, %v6664
        %v6728 = vsub.f32 %v6536, %v6665
        %v6729 = vsub.f32 %v6537, %v6665
        %v6730 = vmul.f32 %v6666, %v6666
        %v6731 = vmul.f32 %v6667, %v6667
        %v6732 = vmul.f32 %v6668, %v6668
        %v6733 = vmul.f32 %v6669, %v6669
        %v6734 = vmul.f32 %v6670, %v6670
        %v6735 = vmul.f32 %v6671, %v6671
        %v6736 = vmul.f32 %v6672, %v6672
        %v6737 = vmul.f32 %v6673, %v6673
        %v6738 = vmul.f32 %v6674, %v6674
        %v6739 = vmul.f32 %v6675, %v6675
        %v6740 = vmul.f32 %v6676, %v6676
        %v6741 = vmul.f32 %v6677, %v6677
        %v6742 = vmul.f32 %v6678, %v6678
        %v6743 = vmul.f32 %v6679, %v6679
        %v6744 = vmul.f32 %v6680, %v6680
        %v6745 = vmul.f32 %v6681, %v6681
        %v6746 = vmul.f32 %v6682, %v6682
        %v6747 = vmul.f32 %v6683, %v6683
        %v6748 = vmul.f32 %v6684, %v6684
        %v6749 = vmul.f32 %v6685, %v6685
        %v6750 = vmul.f32 %v6686, %v6686
        %v6751 = vmul.f32 %v6687, %v6687
        %v6752 = vmul.f32 %v6688, %v6688
        %v6753 = vmul.f32 %v6689, %v6689
        %v6754 = vmul.f32 %v6690, %v6690
        %v6755 = vmul.f32 %v6691, %v6691
        %v6756 = vmul.f32 %v6692, %v6692
        %v6757 = vmul.f32 %v6693, %v6693
        %v6758 = vmul.f32 %v6694, %v6694
        %v6759 = vmul.f32 %v6695, %v6695
        %v6760 = vmul.f32 %v6696, %v6696
        %v6761 = vmul.f32 %v6697, %v6697
        %v6762 = vmul.f32 %v6698, %v6698
        %v6763 = vmul.f32 %v6699, %v6699
        %v6764 = vmul.f32 %v6700, %v6700
        %v6765 = vmul.f32 %v6701, %v6701
        %v6766 = vmul.f32 %v6702, %v6702
        %v6767 = vmul.f32 %v6703, %v6703
        %v6768 = vmul.f32 %v6704, %v6704
        %v6769 = vmul.f32 %v6705, %v6705
        %v6770 = vmul.f32 %v6706, %v6706
        %v6771 = vmul.f32 %v6707, %v6707
        %v6772 = vmul.f32 %v6708, %v6708
        %v6773 = vmul.f32 %v6709, %v6709
        %v6774 = vmul.f32 %v6710, %v6710
        %v6775 = vmul.f32 %v6711, %v6711
        %v6776 = vmul.f32 %v6712, %v6712
        %v6777 = vmul.f32 %v6713, %v6713
        %v6778 = vmul.f32 %v6714, %v6714
        %v6779 = vmul.f32 %v6715, %v6715
        %v6780 = vmul.f32 %v6716, %v6716
        %v6781 = vmul.f32 %v6717, %v6717
        %v6782 = vmul.f32 %v6718, %v6718
        %v6783 = vmul.f32 %v6719, %v6719
        %v6784 = vmul.f32 %v6720, %v6720
        %v6785 = vmul.f32 %v6721, %v6721
        %v6786 = vmul.f32 %v6722, %v6722
        %v6787 = vmul.f32 %v6723, %v6723
        %v6788 = vmul.f32 %v6724, %v6724
        %v6789 = vmul.f32 %v6725, %v6725
        %v6790 = vmul.f32 %v6726, %v6726
        %v6791 = vmul.f32 %v6727, %v6727
        %v6792 = vmul.f32 %v6728, %v6728
        %v6793 = vmul.f32 %v6729, %v6729
        %v6794 = vadd.f32 %v6730, %v6731
        %6795 = vadd.xlane.f32.xlu0 %v6794
        %v6796 = vpop.xlane.xlu0 %6795
        %v6797 = vadd.f32 %v6732, %v6733
        %6798 = vadd.xlane.f32.xlu0 %v6797
        %v6799 = vpop.xlane.xlu0 %6798
        %v6800 = vadd.f32 %v6734, %v6735
        %6801 = vadd.xlane.f32.xlu0 %v6800
        %v6802 = vpop.xlane.xlu0 %6801
        %v6803 = vadd.f32 %v6736, %v6737
        %6804 = vadd.xlane.f32.xlu0 %v6803
        %v6805 = vpop.xlane.xlu0 %6804
        %v6806 = vadd.f32 %v6738, %v6739
        %6807 = vadd.xlane.f32.xlu0 %v6806
        %v6808 = vpop.xlane.xlu0 %6807
        %v6809 = vadd.f32 %v6740, %v6741
        %6810 = vadd.xlane.f32.xlu0 %v6809
        %v6811 = vpop.xlane.xlu0 %6810
        %v6812 = vadd.f32 %v6742, %v6743
        %6813 = vadd.xlane.f32.xlu0 %v6812
        %v6814 = vpop.xlane.xlu0 %6813
        %v6815 = vadd.f32 %v6744, %v6745
        %6816 = vadd.xlane.f32.xlu0 %v6815
        %v6817 = vpop.xlane.xlu0 %6816
        %v6818 = vadd.f32 %v6746, %v6747
        %6819 = vadd.xlane.f32.xlu0 %v6818
        %v6820 = vpop.xlane.xlu0 %6819
        %v6821 = vadd.f32 %v6748, %v6749
        %6822 = vadd.xlane.f32.xlu0 %v6821
        %v6823 = vpop.xlane.xlu0 %6822
        %v6824 = vadd.f32 %v6750, %v6751
        %6825 = vadd.xlane.f32.xlu0 %v6824
        %v6826 = vpop.xlane.xlu0 %6825
        %v6827 = vadd.f32 %v6752, %v6753
        %6828 = vadd.xlane.f32.xlu0 %v6827
        %v6829 = vpop.xlane.xlu0 %6828
        %v6830 = vadd.f32 %v6754, %v6755
        %6831 = vadd.xlane.f32.xlu0 %v6830
        %v6832 = vpop.xlane.xlu0 %6831
        %v6833 = vadd.f32 %v6756, %v6757
        %6834 = vadd.xlane.f32.xlu0 %v6833
        %v6835 = vpop.xlane.xlu0 %6834
        %v6836 = vadd.f32 %v6758, %v6759
        %6837 = vadd.xlane.f32.xlu0 %v6836
        %v6838 = vpop.xlane.xlu0 %6837
        %v6839 = vadd.f32 %v6760, %v6761
        %6840 = vadd.xlane.f32.xlu0 %v6839
        %v6841 = vpop.xlane.xlu0 %6840
        %v6842 = vadd.f32 %v6762, %v6763
        %6843 = vadd.xlane.f32.xlu0 %v6842
        %v6844 = vpop.xlane.xlu0 %6843
        %v6845 = vadd.f32 %v6764, %v6765
        %6846 = vadd.xlane.f32.xlu0 %v6845
        %v6847 = vpop.xlane.xlu0 %6846
        %v6848 = vadd.f32 %v6766, %v6767
        %6849 = vadd.xlane.f32.xlu0 %v6848
        %v6850 = vpop.xlane.xlu0 %6849
        %v6851 = vadd.f32 %v6768, %v6769
        %6852 = vadd.xlane.f32.xlu0 %v6851
        %v6853 = vpop.xlane.xlu0 %6852
        %v6854 = vadd.f32 %v6770, %v6771
        %6855 = vadd.xlane.f32.xlu0 %v6854
        %v6856 = vpop.xlane.xlu0 %6855
        %v6857 = vadd.f32 %v6772, %v6773
        %6858 = vadd.xlane.f32.xlu0 %v6857
        %v6859 = vpop.xlane.xlu0 %6858
        %v6860 = vadd.f32 %v6774, %v6775
        %6861 = vadd.xlane.f32.xlu0 %v6860
        %v6862 = vpop.xlane.xlu0 %6861
        %v6863 = vadd.f32 %v6776, %v6777
        %6864 = vadd.xlane.f32.xlu0 %v6863
        %v6865 = vpop.xlane.xlu0 %6864
        %v6866 = vadd.f32 %v6778, %v6779
        %6867 = vadd.xlane.f32.xlu0 %v6866
        %v6868 = vpop.xlane.xlu0 %6867
        %v6869 = vadd.f32 %v6780, %v6781
        %6870 = vadd.xlane.f32.xlu0 %v6869
        %v6871 = vpop.xlane.xlu0 %6870
        %v6872 = vadd.f32 %v6782, %v6783
        %6873 = vadd.xlane.f32.xlu0 %v6872
        %v6874 = vpop.xlane.xlu0 %6873
        %v6875 = vadd.f32 %v6784, %v6785
        %6876 = vadd.xlane.f32.xlu0 %v6875
        %v6877 = vpop.xlane.xlu0 %6876
        %v6878 = vadd.f32 %v6786, %v6787
        %6879 = vadd.xlane.f32.xlu0 %v6878
        %v6880 = vpop.xlane.xlu0 %6879
        %v6881 = vadd.f32 %v6788, %v6789
        %6882 = vadd.xlane.f32.xlu0 %v6881
        %v6883 = vpop.xlane.xlu0 %6882
        %v6884 = vadd.f32 %v6790, %v6791
        %6885 = vadd.xlane.f32.xlu0 %v6884
        %v6886 = vpop.xlane.xlu0 %6885
        %v6887 = vadd.f32 %v6792, %v6793
        %6888 = vadd.xlane.f32.xlu0 %v6887
        %v6889 = vpop.xlane.xlu0 %6888
        %v6890 = vmul.f32 %v6796, %v1838
        %v6891 = vmul.f32 %v6799, %v1838
        %v6892 = vmul.f32 %v6802, %v1838
        %v6893 = vmul.f32 %v6805, %v1838
        %v6894 = vmul.f32 %v6808, %v1838
        %v6895 = vmul.f32 %v6811, %v1838
        %v6896 = vmul.f32 %v6814, %v1838
        %v6897 = vmul.f32 %v6817, %v1838
        %v6898 = vmul.f32 %v6820, %v1838
        %v6899 = vmul.f32 %v6823, %v1838
        %v6900 = vmul.f32 %v6826, %v1838
        %v6901 = vmul.f32 %v6829, %v1838
        %v6902 = vmul.f32 %v6832, %v1838
        %v6903 = vmul.f32 %v6835, %v1838
        %v6904 = vmul.f32 %v6838, %v1838
        %v6905 = vmul.f32 %v6841, %v1838
        %v6906 = vmul.f32 %v6844, %v1838
        %v6907 = vmul.f32 %v6847, %v1838
        %v6908 = vmul.f32 %v6850, %v1838
        %v6909 = vmul.f32 %v6853, %v1838
        %v6910 = vmul.f32 %v6856, %v1838
        %v6911 = vmul.f32 %v6859, %v1838
        %v6912 = vmul.f32 %v6862, %v1838
        %v6913 = vmul.f32 %v6865, %v1838
        %v6914 = vmul.f32 %v6868, %v1838
        %v6915 = vmul.f32 %v6871, %v1838
        %v6916 = vmul.f32 %v6874, %v1838
        %v6917 = vmul.f32 %v6877, %v1838
        %v6918 = vmul.f32 %v6880, %v1838
        %v6919 = vmul.f32 %v6883, %v1838
        %v6920 = vmul.f32 %v6886, %v1838
        %v6921 = vmul.f32 %v6889, %v1838
        %v6922 = vadd.f32 %v6890, 1e-05
        %v6923 = vadd.f32 %v6891, 1e-05
        %v6924 = vadd.f32 %v6892, 1e-05
        %v6925 = vadd.f32 %v6893, 1e-05
        %v6926 = vadd.f32 %v6894, 1e-05
        %v6927 = vadd.f32 %v6895, 1e-05
        %v6928 = vadd.f32 %v6896, 1e-05
        %v6929 = vadd.f32 %v6897, 1e-05
        %v6930 = vadd.f32 %v6898, 1e-05
        %v6931 = vadd.f32 %v6899, 1e-05
        %v6932 = vadd.f32 %v6900, 1e-05
        %v6933 = vadd.f32 %v6901, 1e-05
        %v6934 = vadd.f32 %v6902, 1e-05
        %v6935 = vadd.f32 %v6903, 1e-05
        %v6936 = vadd.f32 %v6904, 1e-05
        %v6937 = vadd.f32 %v6905, 1e-05
        %v6938 = vadd.f32 %v6906, 1e-05
        %v6939 = vadd.f32 %v6907, 1e-05
        %v6940 = vadd.f32 %v6908, 1e-05
        %v6941 = vadd.f32 %v6909, 1e-05
        %v6942 = vadd.f32 %v6910, 1e-05
        %v6943 = vadd.f32 %v6911, 1e-05
        %v6944 = vadd.f32 %v6912, 1e-05
        %v6945 = vadd.f32 %v6913, 1e-05
        %v6946 = vadd.f32 %v6914, 1e-05
        %v6947 = vadd.f32 %v6915, 1e-05
        %v6948 = vadd.f32 %v6916, 1e-05
        %v6949 = vadd.f32 %v6917, 1e-05
        %v6950 = vadd.f32 %v6918, 1e-05
        %v6951 = vadd.f32 %v6919, 1e-05
        %v6952 = vadd.f32 %v6920, 1e-05
        %v6953 = vadd.f32 %v6921, 1e-05
        %v6954 = vrsqrt.pop %v6922
        %v6955 = vrsqrt.pop %v6923
        %v6956 = vrsqrt.pop %v6924
        %v6957 = vrsqrt.pop %v6925
        %v6958 = vrsqrt.pop %v6926
        %v6959 = vrsqrt.pop %v6927
        %v6960 = vrsqrt.pop %v6928
        %v6961 = vrsqrt.pop %v6929
        %v6962 = vrsqrt.pop %v6930
        %v6963 = vrsqrt.pop %v6931
        %v6964 = vrsqrt.pop %v6932
        %v6965 = vrsqrt.pop %v6933
        %v6966 = vrsqrt.pop %v6934
        %v6967 = vrsqrt.pop %v6935
        %v6968 = vrsqrt.pop %v6936
        %v6969 = vrsqrt.pop %v6937
        %v6970 = vrsqrt.pop %v6938
        %v6971 = vrsqrt.pop %v6939
        %v6972 = vrsqrt.pop %v6940
        %v6973 = vrsqrt.pop %v6941
        %v6974 = vrsqrt.pop %v6942
        %v6975 = vrsqrt.pop %v6943
        %v6976 = vrsqrt.pop %v6944
        %v6977 = vrsqrt.pop %v6945
        %v6978 = vrsqrt.pop %v6946
        %v6979 = vrsqrt.pop %v6947
        %v6980 = vrsqrt.pop %v6948
        %v6981 = vrsqrt.pop %v6949
        %v6982 = vrsqrt.pop %v6950
        %v6983 = vrsqrt.pop %v6951
        %v6984 = vrsqrt.pop %v6952
        %v6985 = vrsqrt.pop %v6953
        %v6986 = vmul.f32 %v6666, %v6954
        %v6987 = vmul.f32 %v6667, %v6954
        %v6988 = vmul.f32 %v6668, %v6955
        %v6989 = vmul.f32 %v6669, %v6955
        %v6990 = vmul.f32 %v6670, %v6956
        %v6991 = vmul.f32 %v6671, %v6956
        %v6992 = vmul.f32 %v6672, %v6957
        %v6993 = vmul.f32 %v6673, %v6957
        %v6994 = vmul.f32 %v6674, %v6958
        %v6995 = vmul.f32 %v6675, %v6958
        %v6996 = vmul.f32 %v6676, %v6959
        %v6997 = vmul.f32 %v6677, %v6959
        %v6998 = vmul.f32 %v6678, %v6960
        %v6999 = vmul.f32 %v6679, %v6960
        %v7000 = vmul.f32 %v6680, %v6961
        %v7001 = vmul.f32 %v6681, %v6961
        %v7002 = vmul.f32 %v6682, %v6962
        %v7003 = vmul.f32 %v6683, %v6962
        %v7004 = vmul.f32 %v6684, %v6963
        %v7005 = vmul.f32 %v6685, %v6963
        %v7006 = vmul.f32 %v6686, %v6964
        %v7007 = vmul.f32 %v6687, %v6964
        %v7008 = vmul.f32 %v6688, %v6965
        %v7009 = vmul.f32 %v6689, %v6965
        %v7010 = vmul.f32 %v6690, %v6966
        %v7011 = vmul.f32 %v6691, %v6966
        %v7012 = vmul.f32 %v6692, %v6967
        %v7013 = vmul.f32 %v6693, %v6967
        %v7014 = vmul.f32 %v6694, %v6968
        %v7015 = vmul.f32 %v6695, %v6968
        %v7016 = vmul.f32 %v6696, %v6969
        %v7017 = vmul.f32 %v6697, %v6969
        %v7018 = vmul.f32 %v6698, %v6970
        %v7019 = vmul.f32 %v6699, %v6970
        %v7020 = vmul.f32 %v6700, %v6971
        %v7021 = vmul.f32 %v6701, %v6971
        %v7022 = vmul.f32 %v6702, %v6972
        %v7023 = vmul.f32 %v6703, %v6972
        %v7024 = vmul.f32 %v6704, %v6973
        %v7025 = vmul.f32 %v6705, %v6973
        %v7026 = vmul.f32 %v6706, %v6974
        %v7027 = vmul.f32 %v6707, %v6974
        %v7028 = vmul.f32 %v6708, %v6975
        %v7029 = vmul.f32 %v6709, %v6975
        %v7030 = vmul.f32 %v6710, %v6976
        %v7031 = vmul.f32 %v6711, %v6976
        %v7032 = vmul.f32 %v6712, %v6977
        %v7033 = vmul.f32 %v6713, %v6977
        %v7034 = vmul.f32 %v6714, %v6978
        %v7035 = vmul.f32 %v6715, %v6978
        %v7036 = vmul.f32 %v6716, %v6979
        %v7037 = vmul.f32 %v6717, %v6979
        %v7038 = vmul.f32 %v6718, %v6980
        %v7039 = vmul.f32 %v6719, %v6980
        %v7040 = vmul.f32 %v6720, %v6981
        %v7041 = vmul.f32 %v6721, %v6981
        %v7042 = vmul.f32 %v6722, %v6982
        %v7043 = vmul.f32 %v6723, %v6982
        %v7044 = vmul.f32 %v6724, %v6983
        %v7045 = vmul.f32 %v6725, %v6983
        %v7046 = vmul.f32 %v6726, %v6984
        %v7047 = vmul.f32 %v6727, %v6984
        %v7048 = vmul.f32 %v6728, %v6985
        %v7049 = vmul.f32 %v6729, %v6985
        %v7051 = vlaneseq
        %v7052 = vshrl.u32 %v7051, 7
        %v7053 = vsub.s32 0, %v7052
        %v7054 = vrot.slane %v1578, %v7053
        %v7055 = vlaneseq
        %v7056 = vshrl.u32 %v7055, 7
        %v7057 = vsub.s32 1, %v7056
        %v7058 = vrot.slane %v1578, %v7057
        %v7061 = vmul.f32 %v6986, %v7054
        %v7062 = vmul.f32 %v6987, %v7058
        %v7063 = vmul.f32 %v6988, %v7054
        %v7064 = vmul.f32 %v6989, %v7058
        %v7065 = vmul.f32 %v6990, %v7054
        %v7066 = vmul.f32 %v6991, %v7058
        %v7067 = vmul.f32 %v6992, %v7054
        %v7068 = vmul.f32 %v6993, %v7058
        %v7069 = vmul.f32 %v6994, %v7054
        %v7070 = vmul.f32 %v6995, %v7058
        %v7071 = vmul.f32 %v6996, %v7054
        %v7072 = vmul.f32 %v6997, %v7058
        %v7073 = vmul.f32 %v6998, %v7054
        %v7074 = vmul.f32 %v6999, %v7058
        %v7075 = vmul.f32 %v7000, %v7054
        %v7076 = vmul.f32 %v7001, %v7058
        %v7077 = vmul.f32 %v7002, %v7054
        %v7078 = vmul.f32 %v7003, %v7058
        %v7079 = vmul.f32 %v7004, %v7054
        %v7080 = vmul.f32 %v7005, %v7058
        %v7081 = vmul.f32 %v7006, %v7054
        %v7082 = vmul.f32 %v7007, %v7058
        %v7083 = vmul.f32 %v7008, %v7054
        %v7084 = vmul.f32 %v7009, %v7058
        %v7085 = vmul.f32 %v7010, %v7054
        %v7086 = vmul.f32 %v7011, %v7058
        %v7087 = vmul.f32 %v7012, %v7054
        %v7088 = vmul.f32 %v7013, %v7058
        %v7089 = vmul.f32 %v7014, %v7054
        %v7090 = vmul.f32 %v7015, %v7058
        %v7091 = vmul.f32 %v7016, %v7054
        %v7092 = vmul.f32 %v7017, %v7058
        %v7093 = vmul.f32 %v7018, %v7054
        %v7094 = vmul.f32 %v7019, %v7058
        %v7095 = vmul.f32 %v7020, %v7054
        %v7096 = vmul.f32 %v7021, %v7058
        %v7097 = vmul.f32 %v7022, %v7054
        %v7098 = vmul.f32 %v7023, %v7058
        %v7099 = vmul.f32 %v7024, %v7054
        %v7100 = vmul.f32 %v7025, %v7058
        %v7101 = vmul.f32 %v7026, %v7054
        %v7102 = vmul.f32 %v7027, %v7058
        %v7103 = vmul.f32 %v7028, %v7054
        %v7104 = vmul.f32 %v7029, %v7058
        %v7105 = vmul.f32 %v7030, %v7054
        %v7106 = vmul.f32 %v7031, %v7058
        %v7107 = vmul.f32 %v7032, %v7054
        %v7108 = vmul.f32 %v7033, %v7058
        %v7109 = vmul.f32 %v7034, %v7054
        %v7110 = vmul.f32 %v7035, %v7058
        %v7111 = vmul.f32 %v7036, %v7054
        %v7112 = vmul.f32 %v7037, %v7058
        %v7113 = vmul.f32 %v7038, %v7054
        %v7114 = vmul.f32 %v7039, %v7058
        %v7115 = vmul.f32 %v7040, %v7054
        %v7116 = vmul.f32 %v7041, %v7058
        %v7117 = vmul.f32 %v7042, %v7054
        %v7118 = vmul.f32 %v7043, %v7058
        %v7119 = vmul.f32 %v7044, %v7054
        %v7120 = vmul.f32 %v7045, %v7058
        %v7121 = vmul.f32 %v7046, %v7054
        %v7122 = vmul.f32 %v7047, %v7058
        %v7123 = vmul.f32 %v7048, %v7054
        %v7124 = vmul.f32 %v7049, %v7058
        %v7126 = vlaneseq
        %v7127 = vshrl.u32 %v7126, 7
        %v7128 = vsub.s32 0, %v7127
        %v7129 = vrot.slane %v1579, %v7128
        %v7130 = vlaneseq
        %v7131 = vshrl.u32 %v7130, 7
        %v7132 = vsub.s32 1, %v7131
        %v7133 = vrot.slane %v1579, %v7132
        %v7136 = vadd.f32 %v7061, %v7129
        %v7137 = vadd.f32 %v7062, %v7133
        %v7138 = vadd.f32 %v7063, %v7129
        %v7139 = vadd.f32 %v7064, %v7133
        %v7140 = vadd.f32 %v7065, %v7129
        %v7141 = vadd.f32 %v7066, %v7133
        %v7142 = vadd.f32 %v7067, %v7129
        %v7143 = vadd.f32 %v7068, %v7133
        %v7144 = vadd.f32 %v7069, %v7129
        %v7145 = vadd.f32 %v7070, %v7133
        %v7146 = vadd.f32 %v7071, %v7129
        %v7147 = vadd.f32 %v7072, %v7133
        %v7148 = vadd.f32 %v7073, %v7129
        %v7149 = vadd.f32 %v7074, %v7133
        %v7150 = vadd.f32 %v7075, %v7129
        %v7151 = vadd.f32 %v7076, %v7133
        %v7152 = vadd.f32 %v7077, %v7129
        %v7153 = vadd.f32 %v7078, %v7133
        %v7154 = vadd.f32 %v7079, %v7129
        %v7155 = vadd.f32 %v7080, %v7133
        %v7156 = vadd.f32 %v7081, %v7129
        %v7157 = vadd.f32 %v7082, %v7133
        %v7158 = vadd.f32 %v7083, %v7129
        %v7159 = vadd.f32 %v7084, %v7133
        %v7160 = vadd.f32 %v7085, %v7129
        %v7161 = vadd.f32 %v7086, %v7133
        %v7162 = vadd.f32 %v7087, %v7129
        %v7163 = vadd.f32 %v7088, %v7133
        %v7164 = vadd.f32 %v7089, %v7129
        %v7165 = vadd.f32 %v7090, %v7133
        %v7166 = vadd.f32 %v7091, %v7129
        %v7167 = vadd.f32 %v7092, %v7133
        %v7168 = vadd.f32 %v7093, %v7129
        %v7169 = vadd.f32 %v7094, %v7133
        %v7170 = vadd.f32 %v7095, %v7129
        %v7171 = vadd.f32 %v7096, %v7133
        %v7172 = vadd.f32 %v7097, %v7129
        %v7173 = vadd.f32 %v7098, %v7133
        %v7174 = vadd.f32 %v7099, %v7129
        %v7175 = vadd.f32 %v7100, %v7133
        %v7176 = vadd.f32 %v7101, %v7129
        %v7177 = vadd.f32 %v7102, %v7133
        %v7178 = vadd.f32 %v7103, %v7129
        %v7179 = vadd.f32 %v7104, %v7133
        %v7180 = vadd.f32 %v7105, %v7129
        %v7181 = vadd.f32 %v7106, %v7133
        %v7182 = vadd.f32 %v7107, %v7129
        %v7183 = vadd.f32 %v7108, %v7133
        %v7184 = vadd.f32 %v7109, %v7129
        %v7185 = vadd.f32 %v7110, %v7133
        %v7186 = vadd.f32 %v7111, %v7129
        %v7187 = vadd.f32 %v7112, %v7133
        %v7188 = vadd.f32 %v7113, %v7129
        %v7189 = vadd.f32 %v7114, %v7133
        %v7190 = vadd.f32 %v7115, %v7129
        %v7191 = vadd.f32 %v7116, %v7133
        %v7192 = vadd.f32 %v7117, %v7129
        %v7193 = vadd.f32 %v7118, %v7133
        %v7194 = vadd.f32 %v7119, %v7129
        %v7195 = vadd.f32 %v7120, %v7133
        %v7196 = vadd.f32 %v7121, %v7129
        %v7197 = vadd.f32 %v7122, %v7133
        %v7198 = vadd.f32 %v7123, %v7129
        %v7199 = vadd.f32 %v7124, %v7133
        %v7200 = vpack.c.bf16 %v7138, %v7136
        %v7201 = vpack.c.bf16 %v7139, %v7137
        %v7202 = vpack.c.bf16 %v7142, %v7140
        %v7203 = vpack.c.bf16 %v7143, %v7141
        %v7204 = vpack.c.bf16 %v7146, %v7144
        %v7205 = vpack.c.bf16 %v7147, %v7145
        %v7206 = vpack.c.bf16 %v7150, %v7148
        %v7207 = vpack.c.bf16 %v7151, %v7149
        %v7208 = vpack.c.bf16 %v7154, %v7152
        %v7209 = vpack.c.bf16 %v7155, %v7153
        %v7210 = vpack.c.bf16 %v7158, %v7156
        %v7211 = vpack.c.bf16 %v7159, %v7157
        %v7212 = vpack.c.bf16 %v7162, %v7160
        %v7213 = vpack.c.bf16 %v7163, %v7161
        %v7214 = vpack.c.bf16 %v7166, %v7164
        %v7215 = vpack.c.bf16 %v7167, %v7165
        %v7216 = vpack.c.bf16 %v7170, %v7168
        %v7217 = vpack.c.bf16 %v7171, %v7169
        %v7218 = vpack.c.bf16 %v7174, %v7172
        %v7219 = vpack.c.bf16 %v7175, %v7173
        %v7220 = vpack.c.bf16 %v7178, %v7176
        %v7221 = vpack.c.bf16 %v7179, %v7177
        %v7222 = vpack.c.bf16 %v7182, %v7180
        %v7223 = vpack.c.bf16 %v7183, %v7181
        %v7224 = vpack.c.bf16 %v7186, %v7184
        %v7225 = vpack.c.bf16 %v7187, %v7185
        %v7226 = vpack.c.bf16 %v7190, %v7188
        %v7227 = vpack.c.bf16 %v7191, %v7189
        %v7228 = vpack.c.bf16 %v7194, %v7192
        %v7229 = vpack.c.bf16 %v7195, %v7193
        %v7230 = vpack.c.bf16 %v7198, %v7196
        %v7231 = vpack.c.bf16 %v7199, %v7197
        %v7233 = vlaneseq
        %v7234 = vshrl.u32 %v7233, 7
        %v7235 = vsub.s32 0, %v7234
        %v7236 = vrot.slane %v1644, %v7235
        %v7237 = vlaneseq
        %v7238 = vshrl.u32 %v7237, 7
        %v7239 = vsub.s32 1, %v7238
        %v7240 = vrot.slane %v1644, %v7239
        %v7241 = vlaneseq
        %v7242 = vshrl.u32 %v7241, 7
        %v7243 = vsub.s32 2, %v7242
        %v7244 = vrot.slane %v1644, %v7243
        %v7245 = vlaneseq
        %v7246 = vshrl.u32 %v7245, 7
        %v7247 = vsub.s32 3, %v7246
        %v7248 = vrot.slane %v1644, %v7247
        %v7317 = vunpack.c.l.b16 %v1580
        %v7318 = vunpack.c.h.b16 %v1580
        %v7319 = vunpack.c.l.b16 %v1581
        %v7320 = vunpack.c.h.b16 %v1581
        %v7321 = vunpack.c.l.b16 %v1582
        %v7322 = vunpack.c.h.b16 %v1582
        %v7323 = vunpack.c.l.b16 %v1583
        %v7324 = vunpack.c.h.b16 %v1583
        %v7325 = vunpack.c.l.b16 %v1584
        %v7326 = vunpack.c.h.b16 %v1584
        %v7327 = vunpack.c.l.b16 %v1585
        %v7328 = vunpack.c.h.b16 %v1585
        %v7329 = vunpack.c.l.b16 %v1586
        %v7330 = vunpack.c.h.b16 %v1586
        %v7331 = vunpack.c.l.b16 %v1587
        %v7332 = vunpack.c.h.b16 %v1587
        %v7333 = vunpack.c.l.b16 %v1588
        %v7334 = vunpack.c.h.b16 %v1588
        %v7335 = vunpack.c.l.b16 %v1589
        %v7336 = vunpack.c.h.b16 %v1589
        %v7337 = vunpack.c.l.b16 %v1590
        %v7338 = vunpack.c.h.b16 %v1590
        %v7339 = vunpack.c.l.b16 %v1591
        %v7340 = vunpack.c.h.b16 %v1591
        %v7341 = vunpack.c.l.b16 %v1592
        %v7342 = vunpack.c.h.b16 %v1592
        %v7343 = vunpack.c.l.b16 %v1593
        %v7344 = vunpack.c.h.b16 %v1593
        %v7345 = vunpack.c.l.b16 %v1594
        %v7346 = vunpack.c.h.b16 %v1594
        %v7347 = vunpack.c.l.b16 %v1595
        %v7348 = vunpack.c.h.b16 %v1595
        %v7349 = vunpack.c.l.b16 %v1596
        %v7350 = vunpack.c.h.b16 %v1596
        %v7351 = vunpack.c.l.b16 %v1597
        %v7352 = vunpack.c.h.b16 %v1597
        %v7353 = vunpack.c.l.b16 %v1598
        %v7354 = vunpack.c.h.b16 %v1598
        %v7355 = vunpack.c.l.b16 %v1599
        %v7356 = vunpack.c.h.b16 %v1599
        %v7357 = vunpack.c.l.b16 %v1600
        %v7358 = vunpack.c.h.b16 %v1600
        %v7359 = vunpack.c.l.b16 %v1601
        %v7360 = vunpack.c.h.b16 %v1601
        %v7361 = vunpack.c.l.b16 %v1602
        %v7362 = vunpack.c.h.b16 %v1602
        %v7363 = vunpack.c.l.b16 %v1603
        %v7364 = vunpack.c.h.b16 %v1603
        %v7365 = vunpack.c.l.b16 %v1604
        %v7366 = vunpack.c.h.b16 %v1604
        %v7367 = vunpack.c.l.b16 %v1605
        %v7368 = vunpack.c.h.b16 %v1605
        %v7369 = vunpack.c.l.b16 %v1606
        %v7370 = vunpack.c.h.b16 %v1606
        %v7371 = vunpack.c.l.b16 %v1607
        %v7372 = vunpack.c.h.b16 %v1607
        %v7373 = vunpack.c.l.b16 %v1608
        %v7374 = vunpack.c.h.b16 %v1608
        %v7375 = vunpack.c.l.b16 %v1609
        %v7376 = vunpack.c.h.b16 %v1609
        %v7377 = vunpack.c.l.b16 %v1610
        %v7378 = vunpack.c.h.b16 %v1610
        %v7379 = vunpack.c.l.b16 %v1611
        %v7380 = vunpack.c.h.b16 %v1611
        %v7381 = vunpack.c.l.b16 %v1612
        %v7382 = vunpack.c.h.b16 %v1612
        %v7383 = vunpack.c.l.b16 %v1613
        %v7384 = vunpack.c.h.b16 %v1613
        %v7385 = vunpack.c.l.b16 %v1614
        %v7386 = vunpack.c.h.b16 %v1614
        %v7387 = vunpack.c.l.b16 %v1615
        %v7388 = vunpack.c.h.b16 %v1615
        %v7389 = vunpack.c.l.b16 %v1616
        %v7390 = vunpack.c.h.b16 %v1616
        %v7391 = vunpack.c.l.b16 %v1617
        %v7392 = vunpack.c.h.b16 %v1617
        %v7393 = vunpack.c.l.b16 %v1618
        %v7394 = vunpack.c.h.b16 %v1618
        %v7395 = vunpack.c.l.b16 %v1619
        %v7396 = vunpack.c.h.b16 %v1619
        %v7397 = vunpack.c.l.b16 %v1620
        %v7398 = vunpack.c.h.b16 %v1620
        %v7399 = vunpack.c.l.b16 %v1621
        %v7400 = vunpack.c.h.b16 %v1621
        %v7401 = vunpack.c.l.b16 %v1622
        %v7402 = vunpack.c.h.b16 %v1622
        %v7403 = vunpack.c.l.b16 %v1623
        %v7404 = vunpack.c.h.b16 %v1623
        %v7405 = vunpack.c.l.b16 %v1624
        %v7406 = vunpack.c.h.b16 %v1624
        %v7407 = vunpack.c.l.b16 %v1625
        %v7408 = vunpack.c.h.b16 %v1625
        %v7409 = vunpack.c.l.b16 %v1626
        %v7410 = vunpack.c.h.b16 %v1626
        %v7411 = vunpack.c.l.b16 %v1627
        %v7412 = vunpack.c.h.b16 %v1627
        %v7413 = vunpack.c.l.b16 %v1628
        %v7414 = vunpack.c.h.b16 %v1628
        %v7415 = vunpack.c.l.b16 %v1629
        %v7416 = vunpack.c.h.b16 %v1629
        %v7417 = vunpack.c.l.b16 %v1630
        %v7418 = vunpack.c.h.b16 %v1630
        %v7419 = vunpack.c.l.b16 %v1631
        %v7420 = vunpack.c.h.b16 %v1631
        %v7421 = vunpack.c.l.b16 %v1632
        %v7422 = vunpack.c.h.b16 %v1632
        %v7423 = vunpack.c.l.b16 %v1633
        %v7424 = vunpack.c.h.b16 %v1633
        %v7425 = vunpack.c.l.b16 %v1634
        %v7426 = vunpack.c.h.b16 %v1634
        %v7427 = vunpack.c.l.b16 %v1635
        %v7428 = vunpack.c.h.b16 %v1635
        %v7429 = vunpack.c.l.b16 %v1636
        %v7430 = vunpack.c.h.b16 %v1636
        %v7431 = vunpack.c.l.b16 %v1637
        %v7432 = vunpack.c.h.b16 %v1637
        %v7433 = vunpack.c.l.b16 %v1638
        %v7434 = vunpack.c.h.b16 %v1638
        %v7435 = vunpack.c.l.b16 %v1639
        %v7436 = vunpack.c.h.b16 %v1639
        %v7437 = vunpack.c.l.b16 %v1640
        %v7438 = vunpack.c.h.b16 %v1640
        %v7439 = vunpack.c.l.b16 %v1641
        %v7440 = vunpack.c.h.b16 %v1641
        %v7441 = vunpack.c.l.b16 %v1642
        %v7442 = vunpack.c.h.b16 %v1642
        %v7443 = vunpack.c.l.b16 %v1643
        %v7444 = vunpack.c.h.b16 %v1643
        %v7445 = vpack.c.b16 %v7321, %v7317
        %v7446 = vpack.c.b16 %v7322, %v7318
        %v7447 = vpack.c.b16 %v7323, %v7319
        %v7448 = vpack.c.b16 %v7324, %v7320
        %v7449 = vpack.c.b16 %v7329, %v7325
        %v7450 = vpack.c.b16 %v7330, %v7326
        %v7451 = vpack.c.b16 %v7331, %v7327
        %v7452 = vpack.c.b16 %v7332, %v7328
        %v7453 = vpack.c.b16 %v7337, %v7333
        %v7454 = vpack.c.b16 %v7338, %v7334
        %v7455 = vpack.c.b16 %v7339, %v7335
        %v7456 = vpack.c.b16 %v7340, %v7336
        %v7457 = vpack.c.b16 %v7345, %v7341
        %v7458 = vpack.c.b16 %v7346, %v7342
        %v7459 = vpack.c.b16 %v7347, %v7343
        %v7460 = vpack.c.b16 %v7348, %v7344
        %v7461 = vpack.c.b16 %v7353, %v7349
        %v7462 = vpack.c.b16 %v7354, %v7350
        %v7463 = vpack.c.b16 %v7355, %v7351
        %v7464 = vpack.c.b16 %v7356, %v7352
        %v7465 = vpack.c.b16 %v7361, %v7357
        %v7466 = vpack.c.b16 %v7362, %v7358
        %v7467 = vpack.c.b16 %v7363, %v7359
        %v7468 = vpack.c.b16 %v7364, %v7360
        %v7469 = vpack.c.b16 %v7369, %v7365
        %v7470 = vpack.c.b16 %v7370, %v7366
        %v7471 = vpack.c.b16 %v7371, %v7367
        %v7472 = vpack.c.b16 %v7372, %v7368
        %v7473 = vpack.c.b16 %v7377, %v7373
        %v7474 = vpack.c.b16 %v7378, %v7374
        %v7475 = vpack.c.b16 %v7379, %v7375
        %v7476 = vpack.c.b16 %v7380, %v7376
        %v7477 = vpack.c.b16 %v7385, %v7381
        %v7478 = vpack.c.b16 %v7386, %v7382
        %v7479 = vpack.c.b16 %v7387, %v7383
        %v7480 = vpack.c.b16 %v7388, %v7384
        %v7481 = vpack.c.b16 %v7393, %v7389
        %v7482 = vpack.c.b16 %v7394, %v7390
        %v7483 = vpack.c.b16 %v7395, %v7391
        %v7484 = vpack.c.b16 %v7396, %v7392
        %v7485 = vpack.c.b16 %v7401, %v7397
        %v7486 = vpack.c.b16 %v7402, %v7398
        %v7487 = vpack.c.b16 %v7403, %v7399
        %v7488 = vpack.c.b16 %v7404, %v7400
        %v7489 = vpack.c.b16 %v7409, %v7405
        %v7490 = vpack.c.b16 %v7410, %v7406
        %v7491 = vpack.c.b16 %v7411, %v7407
        %v7492 = vpack.c.b16 %v7412, %v7408
        %v7493 = vpack.c.b16 %v7417, %v7413
        %v7494 = vpack.c.b16 %v7418, %v7414
        %v7495 = vpack.c.b16 %v7419, %v7415
        %v7496 = vpack.c.b16 %v7420, %v7416
        %v7497 = vpack.c.b16 %v7425, %v7421
        %v7498 = vpack.c.b16 %v7426, %v7422
        %v7499 = vpack.c.b16 %v7427, %v7423
        %v7500 = vpack.c.b16 %v7428, %v7424
        %v7501 = vpack.c.b16 %v7433, %v7429
        %v7502 = vpack.c.b16 %v7434, %v7430
        %v7503 = vpack.c.b16 %v7435, %v7431
        %v7504 = vpack.c.b16 %v7436, %v7432
        %v7505 = vpack.c.b16 %v7441, %v7437
        %v7506 = vpack.c.b16 %v7442, %v7438
        %v7507 = vpack.c.b16 %v7443, %v7439
        %v7508 = vpack.c.b16 %v7444, %v7440
        %7573 = vmatprep.subr.bf16.mxu0 %v7474
        %7574 = vmatpush1.bf16.msra.mxu0 %v7473
        %7575 = vmatprep.subr.bf16.mxu0 %v7470
        %7576 = vmatpush1.bf16.msra.mxu0 %v7469
        %7577 = vmatprep.subr.bf16.mxu0 %v7466
        %7578 = vmatpush1.bf16.msra.mxu0 %v7465
        %7579 = vmatprep.subr.bf16.mxu0 %v7462
        %7580 = vmatpush1.bf16.msra.mxu0 %v7461
        %7581 = vmatprep.subr.bf16.mxu0 %v7458
        %7582 = vmatpush1.bf16.msra.mxu0 %v7457
        %7583 = vmatprep.subr.bf16.mxu0 %v7454
        %7584 = vmatpush1.bf16.msra.mxu0 %v7453
        %7585 = vmatprep.subr.bf16.mxu0 %v7450
        %7586 = vmatpush1.bf16.msra.mxu0 %v7449
        %7587 = vmatprep.subr.bf16.mxu0 %v7446
        %7588 = vmatpush1.bf16.msra.mxu0 %v7445
        %7589 = vmatprep.subr.bf16.mxu0 %v7506
        %7590 = vmatpush2.bf16.msra.mxu0 %v7505
        %7591 = vmatprep.subr.bf16.mxu0 %v7502
        %7592 = vmatpush2.bf16.msra.mxu0 %v7501
        %7593 = vmatprep.subr.bf16.mxu0 %v7498
        %7594 = vmatpush2.bf16.msra.mxu0 %v7497
        %7595 = vmatprep.subr.bf16.mxu0 %v7494
        %7596 = vmatpush2.bf16.msra.mxu0 %v7493
        %7597 = vmatprep.subr.bf16.mxu0 %v7490
        %7598 = vmatpush2.bf16.msra.mxu0 %v7489
        %7599 = vmatprep.subr.bf16.mxu0 %v7486
        %7600 = vmatpush2.bf16.msra.mxu0 %v7485
        %7601 = vmatprep.subr.bf16.mxu0 %v7482
        %7602 = vmatpush2.bf16.msra.mxu0 %v7481
        %7603 = vmatprep.subr.bf16.mxu0 %v7478
        %7604 = vmatpush2.bf16.msra.mxu0 %v7477
        %7605 = vmatprep.mubr.bf16.mxu0 %v7201
        %7606 = vmatmul.mubr.bf16.gmra.mxu0 %v7200
        %v7607 = vpop.f32.mrf.mxu0
        %v7608 = vadd.f32 %v7236, %v7607
        %v7609 = vpop.f32.mrf.mxu0
        %v7610 = vadd.f32 %v7240, %v7609
        %v7611 = vpop.f32.mrf.mxu0
        %v7612 = vadd.f32 %v7236, %v7611
        %v7613 = vpop.f32.mrf.mxu0
        %v7614 = vadd.f32 %v7240, %v7613
        %7615 = vmatprep.mubr.bf16.mxu0 %v7203
        %7616 = vmatmul.mubr.bf16.gmra.mxu0 %v7202
        %v7617 = vpop.f32.mrf.mxu0
        %v7618 = vadd.f32 %v7236, %v7617
        %v7619 = vpop.f32.mrf.mxu0
        %v7620 = vadd.f32 %v7240, %v7619
        %v7621 = vpop.f32.mrf.mxu0
        %v7622 = vadd.f32 %v7236, %v7621
        %v7623 = vpop.f32.mrf.mxu0
        %v7624 = vadd.f32 %v7240, %v7623
        %7625 = vmatprep.mubr.bf16.mxu0 %v7205
        %7626 = vmatmul.mubr.bf16.gmra.mxu0 %v7204
        %v7627 = vpop.f32.mrf.mxu0
        %v7628 = vadd.f32 %v7236, %v7627
        %v7629 = vpop.f32.mrf.mxu0
        %v7630 = vadd.f32 %v7240, %v7629
        %v7631 = vpop.f32.mrf.mxu0
        %v7632 = vadd.f32 %v7236, %v7631
        %v7633 = vpop.f32.mrf.mxu0
        %v7634 = vadd.f32 %v7240, %v7633
        %7635 = vmatprep.mubr.bf16.mxu0 %v7207
        %7636 = vmatmul.mubr.bf16.gmra.mxu0 %v7206
        %v7637 = vpop.f32.mrf.mxu0
        %v7638 = vadd.f32 %v7236, %v7637
        %v7639 = vpop.f32.mrf.mxu0
        %v7640 = vadd.f32 %v7240, %v7639
        %v7641 = vpop.f32.mrf.mxu0
        %v7642 = vadd.f32 %v7236, %v7641
        %v7643 = vpop.f32.mrf.mxu0
        %v7644 = vadd.f32 %v7240, %v7643
        %7645 = vmatprep.mubr.bf16.mxu0 %v7209
        %7646 = vmatmul.mubr.bf16.gmra.mxu0 %v7208
        %v7647 = vpop.f32.mrf.mxu0
        %v7648 = vadd.f32 %v7236, %v7647
        %v7649 = vpop.f32.mrf.mxu0
        %v7650 = vadd.f32 %v7240, %v7649
        %v7651 = vpop.f32.mrf.mxu0
        %v7652 = vadd.f32 %v7236, %v7651
        %v7653 = vpop.f32.mrf.mxu0
        %v7654 = vadd.f32 %v7240, %v7653
        %7655 = vmatprep.mubr.bf16.mxu0 %v7211
        %7656 = vmatmul.mubr.bf16.gmra.mxu0 %v7210
        %v7657 = vpop.f32.mrf.mxu0
        %v7658 = vadd.f32 %v7236, %v7657
        %v7659 = vpop.f32.mrf.mxu0
        %v7660 = vadd.f32 %v7240, %v7659
        %v7661 = vpop.f32.mrf.mxu0
        %v7662 = vadd.f32 %v7236, %v7661
        %v7663 = vpop.f32.mrf.mxu0
        %v7664 = vadd.f32 %v7240, %v7663
        %7665 = vmatprep.mubr.bf16.mxu0 %v7213
        %7666 = vmatmul.mubr.bf16.gmra.mxu0 %v7212
        %v7667 = vpop.f32.mrf.mxu0
        %v7668 = vadd.f32 %v7236, %v7667
        %v7669 = vpop.f32.mrf.mxu0
        %v7670 = vadd.f32 %v7240, %v7669
        %v7671 = vpop.f32.mrf.mxu0
        %v7672 = vadd.f32 %v7236, %v7671
        %v7673 = vpop.f32.mrf.mxu0
        %v7674 = vadd.f32 %v7240, %v7673
        %7675 = vmatprep.mubr.bf16.mxu0 %v7215
        %7676 = vmatmul.mubr.bf16.gmra.mxu0 %v7214
        %v7677 = vpop.f32.mrf.mxu0
        %v7678 = vadd.f32 %v7236, %v7677
        %v7679 = vpop.f32.mrf.mxu0
        %v7680 = vadd.f32 %v7240, %v7679
        %v7681 = vpop.f32.mrf.mxu0
        %v7682 = vadd.f32 %v7236, %v7681
        %v7683 = vpop.f32.mrf.mxu0
        %v7684 = vadd.f32 %v7240, %v7683
        %7685 = vmatprep.mubr.bf16.mxu0 %v7217
        %7686 = vmatmul.mubr.bf16.gmra.mxu0 %v7216
        %v7687 = vpop.f32.mrf.mxu0
        %v7688 = vadd.f32 %v7236, %v7687
        %v7689 = vpop.f32.mrf.mxu0
        %v7690 = vadd.f32 %v7240, %v7689
        %v7691 = vpop.f32.mrf.mxu0
        %v7692 = vadd.f32 %v7236, %v7691
        %v7693 = vpop.f32.mrf.mxu0
        %v7694 = vadd.f32 %v7240, %v7693
        %7695 = vmatprep.mubr.bf16.mxu0 %v7219
        %7696 = vmatmul.mubr.bf16.gmra.mxu0 %v7218
        %v7697 = vpop.f32.mrf.mxu0
        %v7698 = vadd.f32 %v7236, %v7697
        %v7699 = vpop.f32.mrf.mxu0
        %v7700 = vadd.f32 %v7240, %v7699
        %v7701 = vpop.f32.mrf.mxu0
        %v7702 = vadd.f32 %v7236, %v7701
        %v7703 = vpop.f32.mrf.mxu0
        %v7704 = vadd.f32 %v7240, %v7703
        %7705 = vmatprep.mubr.bf16.mxu0 %v7221
        %7706 = vmatmul.mubr.bf16.gmra.mxu0 %v7220
        %v7707 = vpop.f32.mrf.mxu0
        %v7708 = vadd.f32 %v7236, %v7707
        %v7709 = vpop.f32.mrf.mxu0
        %v7710 = vadd.f32 %v7240, %v7709
        %v7711 = vpop.f32.mrf.mxu0
        %v7712 = vadd.f32 %v7236, %v7711
        %v7713 = vpop.f32.mrf.mxu0
        %v7714 = vadd.f32 %v7240, %v7713
        %7715 = vmatprep.mubr.bf16.mxu0 %v7223
        %7716 = vmatmul.mubr.bf16.gmra.mxu0 %v7222
        %v7717 = vpop.f32.mrf.mxu0
        %v7718 = vadd.f32 %v7236, %v7717
        %v7719 = vpop.f32.mrf.mxu0
        %v7720 = vadd.f32 %v7240, %v7719
        %v7721 = vpop.f32.mrf.mxu0
        %v7722 = vadd.f32 %v7236, %v7721
        %v7723 = vpop.f32.mrf.mxu0
        %v7724 = vadd.f32 %v7240, %v7723
        %7725 = vmatprep.mubr.bf16.mxu0 %v7225
        %7726 = vmatmul.mubr.bf16.gmra.mxu0 %v7224
        %v7727 = vpop.f32.mrf.mxu0
        %v7728 = vadd.f32 %v7236, %v7727
        %v7729 = vpop.f32.mrf.mxu0
        %v7730 = vadd.f32 %v7240, %v7729
        %v7731 = vpop.f32.mrf.mxu0
        %v7732 = vadd.f32 %v7236, %v7731
        %v7733 = vpop.f32.mrf.mxu0
        %v7734 = vadd.f32 %v7240, %v7733
        %7735 = vmatprep.mubr.bf16.mxu0 %v7227
        %7736 = vmatmul.mubr.bf16.gmra.mxu0 %v7226
        %v7737 = vpop.f32.mrf.mxu0
        %v7738 = vadd.f32 %v7236, %v7737
        %v7739 = vpop.f32.mrf.mxu0
        %v7740 = vadd.f32 %v7240, %v7739
        %v7741 = vpop.f32.mrf.mxu0
        %v7742 = vadd.f32 %v7236, %v7741
        %v7743 = vpop.f32.mrf.mxu0
        %v7744 = vadd.f32 %v7240, %v7743
        %7745 = vmatprep.mubr.bf16.mxu0 %v7229
        %7746 = vmatmul.mubr.bf16.gmra.mxu0 %v7228
        %v7747 = vpop.f32.mrf.mxu0
        %v7748 = vadd.f32 %v7236, %v7747
        %v7749 = vpop.f32.mrf.mxu0
        %v7750 = vadd.f32 %v7240, %v7749
        %v7751 = vpop.f32.mrf.mxu0
        %v7752 = vadd.f32 %v7236, %v7751
        %v7753 = vpop.f32.mrf.mxu0
        %v7754 = vadd.f32 %v7240, %v7753
        %7755 = vmatprep.mubr.bf16.mxu0 %v7231
        %7756 = vmatmul.mubr.bf16.gmra.mxu0 %v7230
        %v7757 = vpop.f32.mrf.mxu0
        %v7758 = vadd.f32 %v7236, %v7757
        %v7759 = vpop.f32.mrf.mxu0
        %v7760 = vadd.f32 %v7240, %v7759
        %v7761 = vpop.f32.mrf.mxu0
        %v7762 = vadd.f32 %v7236, %v7761
        %v7763 = vpop.f32.mrf.mxu0
        %v7764 = vadd.f32 %v7240, %v7763
        %7765 = vdwg.mxu0
        %7766 = vmatprep.subr.bf16.mxu0 %v7476
        %7767 = vmatpush1.bf16.msra.mxu0 %v7475
        %7768 = vmatprep.subr.bf16.mxu0 %v7472
        %7769 = vmatpush1.bf16.msra.mxu0 %v7471
        %7770 = vmatprep.subr.bf16.mxu0 %v7468
        %7771 = vmatpush1.bf16.msra.mxu0 %v7467
        %7772 = vmatprep.subr.bf16.mxu0 %v7464
        %7773 = vmatpush1.bf16.msra.mxu0 %v7463
        %7774 = vmatprep.subr.bf16.mxu0 %v7460
        %7775 = vmatpush1.bf16.msra.mxu0 %v7459
        %7776 = vmatprep.subr.bf16.mxu0 %v7456
        %7777 = vmatpush1.bf16.msra.mxu0 %v7455
        %7778 = vmatprep.subr.bf16.mxu0 %v7452
        %7779 = vmatpush1.bf16.msra.mxu0 %v7451
        %7780 = vmatprep.subr.bf16.mxu0 %v7448
        %7781 = vmatpush1.bf16.msra.mxu0 %v7447
        %7782 = vmatprep.subr.bf16.mxu0 %v7508
        %7783 = vmatpush2.bf16.msra.mxu0 %v7507
        %7784 = vmatprep.subr.bf16.mxu0 %v7504
        %7785 = vmatpush2.bf16.msra.mxu0 %v7503
        %7786 = vmatprep.subr.bf16.mxu0 %v7500
        %7787 = vmatpush2.bf16.msra.mxu0 %v7499
        %7788 = vmatprep.subr.bf16.mxu0 %v7496
        %7789 = vmatpush2.bf16.msra.mxu0 %v7495
        %7790 = vmatprep.subr.bf16.mxu0 %v7492
        %7791 = vmatpush2.bf16.msra.mxu0 %v7491
        %7792 = vmatprep.subr.bf16.mxu0 %v7488
        %7793 = vmatpush2.bf16.msra.mxu0 %v7487
        %7794 = vmatprep.subr.bf16.mxu0 %v7484
        %7795 = vmatpush2.bf16.msra.mxu0 %v7483
        %7796 = vmatprep.subr.bf16.mxu0 %v7480
        %7797 = vmatpush2.bf16.msra.mxu0 %v7479
        %7798 = vmatprep.mubr.bf16.mxu0 %v7201
        %7799 = vmatmul.mubr.bf16.gmra.mxu0 %v7200
        %v7800 = vpop.f32.mrf.mxu0
        %v7801 = vadd.f32 %v7244, %v7800
        %v7802 = vpop.f32.mrf.mxu0
        %v7803 = vadd.f32 %v7248, %v7802
        %v7804 = vpop.f32.mrf.mxu0
        %v7805 = vadd.f32 %v7244, %v7804
        %v7806 = vpop.f32.mrf.mxu0
        %v7807 = vadd.f32 %v7248, %v7806
        %7808 = vmatprep.mubr.bf16.mxu0 %v7203
        %7809 = vmatmul.mubr.bf16.gmra.mxu0 %v7202
        %v7810 = vpop.f32.mrf.mxu0
        %v7811 = vadd.f32 %v7244, %v7810
        %v7812 = vpop.f32.mrf.mxu0
        %v7813 = vadd.f32 %v7248, %v7812
        %v7814 = vpop.f32.mrf.mxu0
        %v7815 = vadd.f32 %v7244, %v7814
        %v7816 = vpop.f32.mrf.mxu0
        %v7817 = vadd.f32 %v7248, %v7816
        %7818 = vmatprep.mubr.bf16.mxu0 %v7205
        %7819 = vmatmul.mubr.bf16.gmra.mxu0 %v7204
        %v7820 = vpop.f32.mrf.mxu0
        %v7821 = vadd.f32 %v7244, %v7820
        %v7822 = vpop.f32.mrf.mxu0
        %v7823 = vadd.f32 %v7248, %v7822
        %v7824 = vpop.f32.mrf.mxu0
        %v7825 = vadd.f32 %v7244, %v7824
        %v7826 = vpop.f32.mrf.mxu0
        %v7827 = vadd.f32 %v7248, %v7826
        %7828 = vmatprep.mubr.bf16.mxu0 %v7207
        %7829 = vmatmul.mubr.bf16.gmra.mxu0 %v7206
        %v7830 = vpop.f32.mrf.mxu0
        %v7831 = vadd.f32 %v7244, %v7830
        %v7832 = vpop.f32.mrf.mxu0
        %v7833 = vadd.f32 %v7248, %v7832
        %v7834 = vpop.f32.mrf.mxu0
        %v7835 = vadd.f32 %v7244, %v7834
        %v7836 = vpop.f32.mrf.mxu0
        %v7837 = vadd.f32 %v7248, %v7836
        %7838 = vmatprep.mubr.bf16.mxu0 %v7209
        %7839 = vmatmul.mubr.bf16.gmra.mxu0 %v7208
        %v7840 = vpop.f32.mrf.mxu0
        %v7841 = vadd.f32 %v7244, %v7840
        %v7842 = vpop.f32.mrf.mxu0
        %v7843 = vadd.f32 %v7248, %v7842
        %v7844 = vpop.f32.mrf.mxu0
        %v7845 = vadd.f32 %v7244, %v7844
        %v7846 = vpop.f32.mrf.mxu0
        %v7847 = vadd.f32 %v7248, %v7846
        %7848 = vmatprep.mubr.bf16.mxu0 %v7211
        %7849 = vmatmul.mubr.bf16.gmra.mxu0 %v7210
        %v7850 = vpop.f32.mrf.mxu0
        %v7851 = vadd.f32 %v7244, %v7850
        %v7852 = vpop.f32.mrf.mxu0
        %v7853 = vadd.f32 %v7248, %v7852
        %v7854 = vpop.f32.mrf.mxu0
        %v7855 = vadd.f32 %v7244, %v7854
        %v7856 = vpop.f32.mrf.mxu0
        %v7857 = vadd.f32 %v7248, %v7856
        %7858 = vmatprep.mubr.bf16.mxu0 %v7213
        %7859 = vmatmul.mubr.bf16.gmra.mxu0 %v7212
        %v7860 = vpop.f32.mrf.mxu0
        %v7861 = vadd.f32 %v7244, %v7860
        %v7862 = vpop.f32.mrf.mxu0
        %v7863 = vadd.f32 %v7248, %v7862
        %v7864 = vpop.f32.mrf.mxu0
        %v7865 = vadd.f32 %v7244, %v7864
        %v7866 = vpop.f32.mrf.mxu0
        %v7867 = vadd.f32 %v7248, %v7866
        %7868 = vmatprep.mubr.bf16.mxu0 %v7215
        %7869 = vmatmul.mubr.bf16.gmra.mxu0 %v7214
        %v7870 = vpop.f32.mrf.mxu0
        %v7871 = vadd.f32 %v7244, %v7870
        %v7872 = vpop.f32.mrf.mxu0
        %v7873 = vadd.f32 %v7248, %v7872
        %v7874 = vpop.f32.mrf.mxu0
        %v7875 = vadd.f32 %v7244, %v7874
        %v7876 = vpop.f32.mrf.mxu0
        %v7877 = vadd.f32 %v7248, %v7876
        %7878 = vmatprep.mubr.bf16.mxu0 %v7217
        %7879 = vmatmul.mubr.bf16.gmra.mxu0 %v7216
        %v7880 = vpop.f32.mrf.mxu0
        %v7881 = vadd.f32 %v7244, %v7880
        %v7882 = vpop.f32.mrf.mxu0
        %v7883 = vadd.f32 %v7248, %v7882
        %v7884 = vpop.f32.mrf.mxu0
        %v7885 = vadd.f32 %v7244, %v7884
        %v7886 = vpop.f32.mrf.mxu0
        %v7887 = vadd.f32 %v7248, %v7886
        %7888 = vmatprep.mubr.bf16.mxu0 %v7219
        %7889 = vmatmul.mubr.bf16.gmra.mxu0 %v7218
        %v7890 = vpop.f32.mrf.mxu0
        %v7891 = vadd.f32 %v7244, %v7890
        %v7892 = vpop.f32.mrf.mxu0
        %v7893 = vadd.f32 %v7248, %v7892
        %v7894 = vpop.f32.mrf.mxu0
        %v7895 = vadd.f32 %v7244, %v7894
        %v7896 = vpop.f32.mrf.mxu0
        %v7897 = vadd.f32 %v7248, %v7896
        %7898 = vmatprep.mubr.bf16.mxu0 %v7221
        %7899 = vmatmul.mubr.bf16.gmra.mxu0 %v7220
        %v7900 = vpop.f32.mrf.mxu0
        %v7901 = vadd.f32 %v7244, %v7900
        %v7902 = vpop.f32.mrf.mxu0
        %v7903 = vadd.f32 %v7248, %v7902
        %v7904 = vpop.f32.mrf.mxu0
        %v7905 = vadd.f32 %v7244, %v7904
        %v7906 = vpop.f32.mrf.mxu0
        %v7907 = vadd.f32 %v7248, %v7906
        %7908 = vmatprep.mubr.bf16.mxu0 %v7223
        %7909 = vmatmul.mubr.bf16.gmra.mxu0 %v7222
        %v7910 = vpop.f32.mrf.mxu0
        %v7911 = vadd.f32 %v7244, %v7910
        %v7912 = vpop.f32.mrf.mxu0
        %v7913 = vadd.f32 %v7248, %v7912
        %v7914 = vpop.f32.mrf.mxu0
        %v7915 = vadd.f32 %v7244, %v7914
        %v7916 = vpop.f32.mrf.mxu0
        %v7917 = vadd.f32 %v7248, %v7916
        %7918 = vmatprep.mubr.bf16.mxu0 %v7225
        %7919 = vmatmul.mubr.bf16.gmra.mxu0 %v7224
        %v7920 = vpop.f32.mrf.mxu0
        %v7921 = vadd.f32 %v7244, %v7920
        %v7922 = vpop.f32.mrf.mxu0
        %v7923 = vadd.f32 %v7248, %v7922
        %v7924 = vpop.f32.mrf.mxu0
        %v7925 = vadd.f32 %v7244, %v7924
        %v7926 = vpop.f32.mrf.mxu0
        %v7927 = vadd.f32 %v7248, %v7926
        %7928 = vmatprep.mubr.bf16.mxu0 %v7227
        %7929 = vmatmul.mubr.bf16.gmra.mxu0 %v7226
        %v7930 = vpop.f32.mrf.mxu0
        %v7931 = vadd.f32 %v7244, %v7930
        %v7932 = vpop.f32.mrf.mxu0
        %v7933 = vadd.f32 %v7248, %v7932
        %v7934 = vpop.f32.mrf.mxu0
        %v7935 = vadd.f32 %v7244, %v7934
        %v7936 = vpop.f32.mrf.mxu0
        %v7937 = vadd.f32 %v7248, %v7936
        %7938 = vmatprep.mubr.bf16.mxu0 %v7229
        %7939 = vmatmul.mubr.bf16.gmra.mxu0 %v7228
        %v7940 = vpop.f32.mrf.mxu0
        %v7941 = vadd.f32 %v7244, %v7940
        %v7942 = vpop.f32.mrf.mxu0
        %v7943 = vadd.f32 %v7248, %v7942
        %v7944 = vpop.f32.mrf.mxu0
        %v7945 = vadd.f32 %v7244, %v7944
        %v7946 = vpop.f32.mrf.mxu0
        %v7947 = vadd.f32 %v7248, %v7946
        %7948 = vmatprep.mubr.bf16.mxu0 %v7231
        %7949 = vmatmul.mubr.bf16.gmra.mxu0 %v7230
        %v7950 = vpop.f32.mrf.mxu0
        %v7951 = vadd.f32 %v7244, %v7950
        %v7952 = vpop.f32.mrf.mxu0
        %v7953 = vadd.f32 %v7248, %v7952
        %v7954 = vpop.f32.mrf.mxu0
        %v7955 = vadd.f32 %v7244, %v7954
        %v7956 = vpop.f32.mrf.mxu0
        %v7957 = vadd.f32 %v7248, %v7956
        %7958 = vdwg.mxu0
        %v7959 = vxor.u32 %v7608, 2147483648
        %v7960 = vxor.u32 %v7610, 2147483648
        %v7961 = vxor.u32 %v7801, 2147483648
        %v7962 = vxor.u32 %v7803, 2147483648
        %v7963 = vxor.u32 %v7612, 2147483648
        %v7964 = vxor.u32 %v7614, 2147483648
        %v7965 = vxor.u32 %v7805, 2147483648
        %v7966 = vxor.u32 %v7807, 2147483648
        %v7967 = vxor.u32 %v7618, 2147483648
        %v7968 = vxor.u32 %v7620, 2147483648
        %v7969 = vxor.u32 %v7811, 2147483648
        %v7970 = vxor.u32 %v7813, 2147483648
        %v7971 = vxor.u32 %v7622, 2147483648
        %v7972 = vxor.u32 %v7624, 2147483648
        %v7973 = vxor.u32 %v7815, 2147483648
        %v7974 = vxor.u32 %v7817, 2147483648
        %v7975 = vxor.u32 %v7628, 2147483648
        %v7976 = vxor.u32 %v7630, 2147483648
        %v7977 = vxor.u32 %v7821, 2147483648
        %v7978 = vxor.u32 %v7823, 2147483648
        %v7979 = vxor.u32 %v7632, 2147483648
        %v7980 = vxor.u32 %v7634, 2147483648
        %v7981 = vxor.u32 %v7825, 2147483648
        %v7982 = vxor.u32 %v7827, 2147483648
        %v7983 = vxor.u32 %v7638, 2147483648
        %v7984 = vxor.u32 %v7640, 2147483648
        %v7985 = vxor.u32 %v7831, 2147483648
        %v7986 = vxor.u32 %v7833, 2147483648
        %v7987 = vxor.u32 %v7642, 2147483648
        %v7988 = vxor.u32 %v7644, 2147483648
        %v7989 = vxor.u32 %v7835, 2147483648
        %v7990 = vxor.u32 %v7837, 2147483648
        %v7991 = vxor.u32 %v7648, 2147483648
        %v7992 = vxor.u32 %v7650, 2147483648
        %v7993 = vxor.u32 %v7841, 2147483648
        %v7994 = vxor.u32 %v7843, 2147483648
        %v7995 = vxor.u32 %v7652, 2147483648
        %v7996 = vxor.u32 %v7654, 2147483648
        %v7997 = vxor.u32 %v7845, 2147483648
        %v7998 = vxor.u32 %v7847, 2147483648
        %v7999 = vxor.u32 %v7658, 2147483648
        %v8000 = vxor.u32 %v7660, 2147483648
        %v8001 = vxor.u32 %v7851, 2147483648
        %v8002 = vxor.u32 %v7853, 2147483648
        %v8003 = vxor.u32 %v7662, 2147483648
        %v8004 = vxor.u32 %v7664, 2147483648
        %v8005 = vxor.u32 %v7855, 2147483648
        %v8006 = vxor.u32 %v7857, 2147483648
        %v8007 = vxor.u32 %v7668, 2147483648
        %v8008 = vxor.u32 %v7670, 2147483648
        %v8009 = vxor.u32 %v7861, 2147483648
        %v8010 = vxor.u32 %v7863, 2147483648
        %v8011 = vxor.u32 %v7672, 2147483648
        %v8012 = vxor.u32 %v7674, 2147483648
        %v8013 = vxor.u32 %v7865, 2147483648
        %v8014 = vxor.u32 %v7867, 2147483648
        %v8015 = vxor.u32 %v7678, 2147483648
        %v8016 = vxor.u32 %v7680, 2147483648
        %v8017 = vxor.u32 %v7871, 2147483648
        %v8018 = vxor.u32 %v7873, 2147483648
        %v8019 = vxor.u32 %v7682, 2147483648
        %v8020 = vxor.u32 %v7684, 2147483648
        %v8021 = vxor.u32 %v7875, 2147483648
        %v8022 = vxor.u32 %v7877, 2147483648
        %v8023 = vxor.u32 %v7688, 2147483648
        %v8024 = vxor.u32 %v7690, 2147483648
        %v8025 = vxor.u32 %v7881, 2147483648
        %v8026 = vxor.u32 %v7883, 2147483648
        %v8027 = vxor.u32 %v7692, 2147483648
        %v8028 = vxor.u32 %v7694, 2147483648
        %v8029 = vxor.u32 %v7885, 2147483648
        %v8030 = vxor.u32 %v7887, 2147483648
        %v8031 = vxor.u32 %v7698, 2147483648
        %v8032 = vxor.u32 %v7700, 2147483648
        %v8033 = vxor.u32 %v7891, 2147483648
        %v8034 = vxor.u32 %v7893, 2147483648
        %v8035 = vxor.u32 %v7702, 2147483648
        %v8036 = vxor.u32 %v7704, 2147483648
        %v8037 = vxor.u32 %v7895, 2147483648
        %v8038 = vxor.u32 %v7897, 2147483648
        %v8039 = vxor.u32 %v7708, 2147483648
        %v8040 = vxor.u32 %v7710, 2147483648
        %v8041 = vxor.u32 %v7901, 2147483648
        %v8042 = vxor.u32 %v7903, 2147483648
        %v8043 = vxor.u32 %v7712, 2147483648
        %v8044 = vxor.u32 %v7714, 2147483648
        %v8045 = vxor.u32 %v7905, 2147483648
        %v8046 = vxor.u32 %v7907, 2147483648
        %v8047 = vxor.u32 %v7718, 2147483648
        %v8048 = vxor.u32 %v7720, 2147483648
        %v8049 = vxor.u32 %v7911, 2147483648
        %v8050 = vxor.u32 %v7913, 2147483648
        %v8051 = vxor.u32 %v7722, 2147483648
        %v8052 = vxor.u32 %v7724, 2147483648
        %v8053 = vxor.u32 %v7915, 2147483648
        %v8054 = vxor.u32 %v7917, 2147483648
        %v8055 = vxor.u32 %v7728, 2147483648
        %v8056 = vxor.u32 %v7730, 2147483648
        %v8057 = vxor.u32 %v7921, 2147483648
        %v8058 = vxor.u32 %v7923, 2147483648
        %v8059 = vxor.u32 %v7732, 2147483648
        %v8060 = vxor.u32 %v7734, 2147483648
        %v8061 = vxor.u32 %v7925, 2147483648
        %v8062 = vxor.u32 %v7927, 2147483648
        %v8063 = vxor.u32 %v7738, 2147483648
        %v8064 = vxor.u32 %v7740, 2147483648
        %v8065 = vxor.u32 %v7931, 2147483648
        %v8066 = vxor.u32 %v7933, 2147483648
        %v8067 = vxor.u32 %v7742, 2147483648
        %v8068 = vxor.u32 %v7744, 2147483648
        %v8069 = vxor.u32 %v7935, 2147483648
        %v8070 = vxor.u32 %v7937, 2147483648
        %v8071 = vxor.u32 %v7748, 2147483648
        %v8072 = vxor.u32 %v7750, 2147483648
        %v8073 = vxor.u32 %v7941, 2147483648
        %v8074 = vxor.u32 %v7943, 2147483648
        %v8075 = vxor.u32 %v7752, 2147483648
        %v8076 = vxor.u32 %v7754, 2147483648
        %v8077 = vxor.u32 %v7945, 2147483648
        %v8078 = vxor.u32 %v7947, 2147483648
        %v8079 = vxor.u32 %v7758, 2147483648
        %v8080 = vxor.u32 %v7760, 2147483648
        %v8081 = vxor.u32 %v7951, 2147483648
        %v8082 = vxor.u32 %v7953, 2147483648
        %v8083 = vxor.u32 %v7762, 2147483648
        %v8084 = vxor.u32 %v7764, 2147483648
        %v8085 = vxor.u32 %v7955, 2147483648
        %v8086 = vxor.u32 %v7957, 2147483648
        %v8087 = vmul.f32 %v7959, 1.442695
        %v8088 = vpow.pop %v8087
        %v8089 = vmul.f32 %v7960, 1.442695
        %v8090 = vpow.pop %v8089
        %v8091 = vmul.f32 %v7961, 1.442695
        %v8092 = vpow.pop %v8091
        %v8093 = vmul.f32 %v7962, 1.442695
        %v8094 = vpow.pop %v8093
        %v8095 = vmul.f32 %v7963, 1.442695
        %v8096 = vpow.pop %v8095
        %v8097 = vmul.f32 %v7964, 1.442695
        %v8098 = vpow.pop %v8097
        %v8099 = vmul.f32 %v7965, 1.442695
        %v8100 = vpow.pop %v8099
        %v8101 = vmul.f32 %v7966, 1.442695
        %v8102 = vpow.pop %v8101
        %v8103 = vmul.f32 %v7967, 1.442695
        %v8104 = vpow.pop %v8103
        %v8105 = vmul.f32 %v7968, 1.442695
        %v8106 = vpow.pop %v8105
        %v8107 = vmul.f32 %v7969, 1.442695
        %v8108 = vpow.pop %v8107
        %v8109 = vmul.f32 %v7970, 1.442695
        %v8110 = vpow.pop %v8109
        %v8111 = vmul.f32 %v7971, 1.442695
        %v8112 = vpow.pop %v8111
        %v8113 = vmul.f32 %v7972, 1.442695
        %v8114 = vpow.pop %v8113
        %v8115 = vmul.f32 %v7973, 1.442695
        %v8116 = vpow.pop %v8115
        %v8117 = vmul.f32 %v7974, 1.442695
        %v8118 = vpow.pop %v8117
        %v8119 = vmul.f32 %v7975, 1.442695
        %v8120 = vpow.pop %v8119
        %v8121 = vmul.f32 %v7976, 1.442695
        %v8122 = vpow.pop %v8121
        %v8123 = vmul.f32 %v7977, 1.442695
        %v8124 = vpow.pop %v8123
        %v8125 = vmul.f32 %v7978, 1.442695
        %v8126 = vpow.pop %v8125
        %v8127 = vmul.f32 %v7979, 1.442695
        %v8128 = vpow.pop %v8127
        %v8129 = vmul.f32 %v7980, 1.442695
        %v8130 = vpow.pop %v8129
        %v8131 = vmul.f32 %v7981, 1.442695
        %v8132 = vpow.pop %v8131
        %v8133 = vmul.f32 %v7982, 1.442695
        %v8134 = vpow.pop %v8133
        %v8135 = vmul.f32 %v7983, 1.442695
        %v8136 = vpow.pop %v8135
        %v8137 = vmul.f32 %v7984, 1.442695
        %v8138 = vpow.pop %v8137
        %v8139 = vmul.f32 %v7985, 1.442695
        %v8140 = vpow.pop %v8139
        %v8141 = vmul.f32 %v7986, 1.442695
        %v8142 = vpow.pop %v8141
        %v8143 = vmul.f32 %v7987, 1.442695
        %v8144 = vpow.pop %v8143
        %v8145 = vmul.f32 %v7988, 1.442695
        %v8146 = vpow.pop %v8145
        %v8147 = vmul.f32 %v7989, 1.442695
        %v8148 = vpow.pop %v8147
        %v8149 = vmul.f32 %v7990, 1.442695
        %v8150 = vpow.pop %v8149
        %v8151 = vmul.f32 %v7991, 1.442695
        %v8152 = vpow.pop %v8151
        %v8153 = vmul.f32 %v7992, 1.442695
        %v8154 = vpow.pop %v8153
        %v8155 = vmul.f32 %v7993, 1.442695
        %v8156 = vpow.pop %v8155
        %v8157 = vmul.f32 %v7994, 1.442695
        %v8158 = vpow.pop %v8157
        %v8159 = vmul.f32 %v7995, 1.442695
        %v8160 = vpow.pop %v8159
        %v8161 = vmul.f32 %v7996, 1.442695
        %v8162 = vpow.pop %v8161
        %v8163 = vmul.f32 %v7997, 1.442695
        %v8164 = vpow.pop %v8163
        %v8165 = vmul.f32 %v7998, 1.442695
        %v8166 = vpow.pop %v8165
        %v8167 = vmul.f32 %v7999, 1.442695
        %v8168 = vpow.pop %v8167
        %v8169 = vmul.f32 %v8000, 1.442695
        %v8170 = vpow.pop %v8169
        %v8171 = vmul.f32 %v8001, 1.442695
        %v8172 = vpow.pop %v8171
        %v8173 = vmul.f32 %v8002, 1.442695
        %v8174 = vpow.pop %v8173
        %v8175 = vmul.f32 %v8003, 1.442695
        %v8176 = vpow.pop %v8175
        %v8177 = vmul.f32 %v8004, 1.442695
        %v8178 = vpow.pop %v8177
        %v8179 = vmul.f32 %v8005, 1.442695
        %v8180 = vpow.pop %v8179
        %v8181 = vmul.f32 %v8006, 1.442695
        %v8182 = vpow.pop %v8181
        %v8183 = vmul.f32 %v8007, 1.442695
        %v8184 = vpow.pop %v8183
        %v8185 = vmul.f32 %v8008, 1.442695
        %v8186 = vpow.pop %v8185
        %v8187 = vmul.f32 %v8009, 1.442695
        %v8188 = vpow.pop %v8187
        %v8189 = vmul.f32 %v8010, 1.442695
        %v8190 = vpow.pop %v8189
        %v8191 = vmul.f32 %v8011, 1.442695
        %v8192 = vpow.pop %v8191
        %v8193 = vmul.f32 %v8012, 1.442695
        %v8194 = vpow.pop %v8193
        %v8195 = vmul.f32 %v8013, 1.442695
        %v8196 = vpow.pop %v8195
        %v8197 = vmul.f32 %v8014, 1.442695
        %v8198 = vpow.pop %v8197
        %v8199 = vmul.f32 %v8015, 1.442695
        %v8200 = vpow.pop %v8199
        %v8201 = vmul.f32 %v8016, 1.442695
        %v8202 = vpow.pop %v8201
        %v8203 = vmul.f32 %v8017, 1.442695
        %v8204 = vpow.pop %v8203
        %v8205 = vmul.f32 %v8018, 1.442695
        %v8206 = vpow.pop %v8205
        %v8207 = vmul.f32 %v8019, 1.442695
        %v8208 = vpow.pop %v8207
        %v8209 = vmul.f32 %v8020, 1.442695
        %v8210 = vpow.pop %v8209
        %v8211 = vmul.f32 %v8021, 1.442695
        %v8212 = vpow.pop %v8211
        %v8213 = vmul.f32 %v8022, 1.442695
        %v8214 = vpow.pop %v8213
        %v8215 = vmul.f32 %v8023, 1.442695
        %v8216 = vpow.pop %v8215
        %v8217 = vmul.f32 %v8024, 1.442695
        %v8218 = vpow.pop %v8217
        %v8219 = vmul.f32 %v8025, 1.442695
        %v8220 = vpow.pop %v8219
        %v8221 = vmul.f32 %v8026, 1.442695
        %v8222 = vpow.pop %v8221
        %v8223 = vmul.f32 %v8027, 1.442695
        %v8224 = vpow.pop %v8223
        %v8225 = vmul.f32 %v8028, 1.442695
        %v8226 = vpow.pop %v8225
        %v8227 = vmul.f32 %v8029, 1.442695
        %v8228 = vpow.pop %v8227
        %v8229 = vmul.f32 %v8030, 1.442695
        %v8230 = vpow.pop %v8229
        %v8231 = vmul.f32 %v8031, 1.442695
        %v8232 = vpow.pop %v8231
        %v8233 = vmul.f32 %v8032, 1.442695
        %v8234 = vpow.pop %v8233
        %v8235 = vmul.f32 %v8033, 1.442695
        %v8236 = vpow.pop %v8235
        %v8237 = vmul.f32 %v8034, 1.442695
        %v8238 = vpow.pop %v8237
        %v8239 = vmul.f32 %v8035, 1.442695
        %v8240 = vpow.pop %v8239
        %v8241 = vmul.f32 %v8036, 1.442695
        %v8242 = vpow.pop %v8241
        %v8243 = vmul.f32 %v8037, 1.442695
        %v8244 = vpow.pop %v8243
        %v8245 = vmul.f32 %v8038, 1.442695
        %v8246 = vpow.pop %v8245
        %v8247 = vmul.f32 %v8039, 1.442695
        %v8248 = vpow.pop %v8247
        %v8249 = vmul.f32 %v8040, 1.442695
        %v8250 = vpow.pop %v8249
        %v8251 = vmul.f32 %v8041, 1.442695
        %v8252 = vpow.pop %v8251
        %v8253 = vmul.f32 %v8042, 1.442695
        %v8254 = vpow.pop %v8253
        %v8255 = vmul.f32 %v8043, 1.442695
        %v8256 = vpow.pop %v8255
        %v8257 = vmul.f32 %v8044, 1.442695
        %v8258 = vpow.pop %v8257
        %v8259 = vmul.f32 %v8045, 1.442695
        %v8260 = vpow.pop %v8259
        %v8261 = vmul.f32 %v8046, 1.442695
        %v8262 = vpow.pop %v8261
        %v8263 = vmul.f32 %v8047, 1.442695
        %v8264 = vpow.pop %v8263
        %v8265 = vmul.f32 %v8048, 1.442695
        %v8266 = vpow.pop %v8265
        %v8267 = vmul.f32 %v8049, 1.442695
        %v8268 = vpow.pop %v8267
        %v8269 = vmul.f32 %v8050, 1.442695
        %v8270 = vpow.pop %v8269
        %v8271 = vmul.f32 %v8051, 1.442695
        %v8272 = vpow.pop %v8271
        %v8273 = vmul.f32 %v8052, 1.442695
        %v8274 = vpow.pop %v8273
        %v8275 = vmul.f32 %v8053, 1.442695
        %v8276 = vpow.pop %v8275
        %v8277 = vmul.f32 %v8054, 1.442695
        %v8278 = vpow.pop %v8277
        %v8279 = vmul.f32 %v8055, 1.442695
        %v8280 = vpow.pop %v8279
        %v8281 = vmul.f32 %v8056, 1.442695
        %v8282 = vpow.pop %v8281
        %v8283 = vmul.f32 %v8057, 1.442695
        %v8284 = vpow.pop %v8283
        %v8285 = vmul.f32 %v8058, 1.442695
        %v8286 = vpow.pop %v8285
        %v8287 = vmul.f32 %v8059, 1.442695
        %v8288 = vpow.pop %v8287
        %v8289 = vmul.f32 %v8060, 1.442695
        %v8290 = vpow.pop %v8289
        %v8291 = vmul.f32 %v8061, 1.442695
        %v8292 = vpow.pop %v8291
        %v8293 = vmul.f32 %v8062, 1.442695
        %v8294 = vpow.pop %v8293
        %v8295 = vmul.f32 %v8063, 1.442695
        %v8296 = vpow.pop %v8295
        %v8297 = vmul.f32 %v8064, 1.442695
        %v8298 = vpow.pop %v8297
        %v8299 = vmul.f32 %v8065, 1.442695
        %v8300 = vpow.pop %v8299
        %v8301 = vmul.f32 %v8066, 1.442695
        %v8302 = vpow.pop %v8301
        %v8303 = vmul.f32 %v8067, 1.442695
        %v8304 = vpow.pop %v8303
        %v8305 = vmul.f32 %v8068, 1.442695
        %v8306 = vpow.pop %v8305
        %v8307 = vmul.f32 %v8069, 1.442695
        %v8308 = vpow.pop %v8307
        %v8309 = vmul.f32 %v8070, 1.442695
        %v8310 = vpow.pop %v8309
        %v8311 = vmul.f32 %v8071, 1.442695
        %v8312 = vpow.pop %v8311
        %v8313 = vmul.f32 %v8072, 1.442695
        %v8314 = vpow.pop %v8313
        %v8315 = vmul.f32 %v8073, 1.442695
        %v8316 = vpow.pop %v8315
        %v8317 = vmul.f32 %v8074, 1.442695
        %v8318 = vpow.pop %v8317
        %v8319 = vmul.f32 %v8075, 1.442695
        %v8320 = vpow.pop %v8319
        %v8321 = vmul.f32 %v8076, 1.442695
        %v8322 = vpow.pop %v8321
        %v8323 = vmul.f32 %v8077, 1.442695
        %v8324 = vpow.pop %v8323
        %v8325 = vmul.f32 %v8078, 1.442695
        %v8326 = vpow.pop %v8325
        %v8327 = vmul.f32 %v8079, 1.442695
        %v8328 = vpow.pop %v8327
        %v8329 = vmul.f32 %v8080, 1.442695
        %v8330 = vpow.pop %v8329
        %v8331 = vmul.f32 %v8081, 1.442695
        %v8332 = vpow.pop %v8331
        %v8333 = vmul.f32 %v8082, 1.442695
        %v8334 = vpow.pop %v8333
        %v8335 = vmul.f32 %v8083, 1.442695
        %v8336 = vpow.pop %v8335
        %v8337 = vmul.f32 %v8084, 1.442695
        %v8338 = vpow.pop %v8337
        %v8339 = vmul.f32 %v8085, 1.442695
        %v8340 = vpow.pop %v8339
        %v8341 = vmul.f32 %v8086, 1.442695
        %v8342 = vpow.pop %v8341
        %v8343 = vadd.f32 %v8088, 1.0
        %v8344 = vadd.f32 %v8090, 1.0
        %v8345 = vadd.f32 %v8092, 1.0
        %v8346 = vadd.f32 %v8094, 1.0
        %v8347 = vadd.f32 %v8096, 1.0
        %v8348 = vadd.f32 %v8098, 1.0
        %v8349 = vadd.f32 %v8100, 1.0
        %v8350 = vadd.f32 %v8102, 1.0
        %v8351 = vadd.f32 %v8104, 1.0
        %v8352 = vadd.f32 %v8106, 1.0
        %v8353 = vadd.f32 %v8108, 1.0
        %v8354 = vadd.f32 %v8110, 1.0
        %v8355 = vadd.f32 %v8112, 1.0
        %v8356 = vadd.f32 %v8114, 1.0
        %v8357 = vadd.f32 %v8116, 1.0
        %v8358 = vadd.f32 %v8118, 1.0
        %v8359 = vadd.f32 %v8120, 1.0
        %v8360 = vadd.f32 %v8122, 1.0
        %v8361 = vadd.f32 %v8124, 1.0
        %v8362 = vadd.f32 %v8126, 1.0
        %v8363 = vadd.f32 %v8128, 1.0
        %v8364 = vadd.f32 %v8130, 1.0
        %v8365 = vadd.f32 %v8132, 1.0
        %v8366 = vadd.f32 %v8134, 1.0
        %v8367 = vadd.f32 %v8136, 1.0
        %v8368 = vadd.f32 %v8138, 1.0
        %v8369 = vadd.f32 %v8140, 1.0
        %v8370 = vadd.f32 %v8142, 1.0
        %v8371 = vadd.f32 %v8144, 1.0
        %v8372 = vadd.f32 %v8146, 1.0
        %v8373 = vadd.f32 %v8148, 1.0
        %v8374 = vadd.f32 %v8150, 1.0
        %v8375 = vadd.f32 %v8152, 1.0
        %v8376 = vadd.f32 %v8154, 1.0
        %v8377 = vadd.f32 %v8156, 1.0
        %v8378 = vadd.f32 %v8158, 1.0
        %v8379 = vadd.f32 %v8160, 1.0
        %v8380 = vadd.f32 %v8162, 1.0
        %v8381 = vadd.f32 %v8164, 1.0
        %v8382 = vadd.f32 %v8166, 1.0
        %v8383 = vadd.f32 %v8168, 1.0
        %v8384 = vadd.f32 %v8170, 1.0
        %v8385 = vadd.f32 %v8172, 1.0
        %v8386 = vadd.f32 %v8174, 1.0
        %v8387 = vadd.f32 %v8176, 1.0
        %v8388 = vadd.f32 %v8178, 1.0
        %v8389 = vadd.f32 %v8180, 1.0
        %v8390 = vadd.f32 %v8182, 1.0
        %v8391 = vadd.f32 %v8184, 1.0
        %v8392 = vadd.f32 %v8186, 1.0
        %v8393 = vadd.f32 %v8188, 1.0
        %v8394 = vadd.f32 %v8190, 1.0
        %v8395 = vadd.f32 %v8192, 1.0
        %v8396 = vadd.f32 %v8194, 1.0
        %v8397 = vadd.f32 %v8196, 1.0
        %v8398 = vadd.f32 %v8198, 1.0
        %v8399 = vadd.f32 %v8200, 1.0
        %v8400 = vadd.f32 %v8202, 1.0
        %v8401 = vadd.f32 %v8204, 1.0
        %v8402 = vadd.f32 %v8206, 1.0
        %v8403 = vadd.f32 %v8208, 1.0
        %v8404 = vadd.f32 %v8210, 1.0
        %v8405 = vadd.f32 %v8212, 1.0
        %v8406 = vadd.f32 %v8214, 1.0
        %v8407 = vadd.f32 %v8216, 1.0
        %v8408 = vadd.f32 %v8218, 1.0
        %v8409 = vadd.f32 %v8220, 1.0
        %v8410 = vadd.f32 %v8222, 1.0
        %v8411 = vadd.f32 %v8224, 1.0
        %v8412 = vadd.f32 %v8226, 1.0
        %v8413 = vadd.f32 %v8228, 1.0
        %v8414 = vadd.f32 %v8230, 1.0
        %v8415 = vadd.f32 %v8232, 1.0
        %v8416 = vadd.f32 %v8234, 1.0
        %v8417 = vadd.f32 %v8236, 1.0
        %v8418 = vadd.f32 %v8238, 1.0
        %v8419 = vadd.f32 %v8240, 1.0
        %v8420 = vadd.f32 %v8242, 1.0
        %v8421 = vadd.f32 %v8244, 1.0
        %v8422 = vadd.f32 %v8246, 1.0
        %v8423 = vadd.f32 %v8248, 1.0
        %v8424 = vadd.f32 %v8250, 1.0
        %v8425 = vadd.f32 %v8252, 1.0
        %v8426 = vadd.f32 %v8254, 1.0
        %v8427 = vadd.f32 %v8256, 1.0
        %v8428 = vadd.f32 %v8258, 1.0
        %v8429 = vadd.f32 %v8260, 1.0
        %v8430 = vadd.f32 %v8262, 1.0
        %v8431 = vadd.f32 %v8264, 1.0
        %v8432 = vadd.f32 %v8266, 1.0
        %v8433 = vadd.f32 %v8268, 1.0
        %v8434 = vadd.f32 %v8270, 1.0
        %v8435 = vadd.f32 %v8272, 1.0
        %v8436 = vadd.f32 %v8274, 1.0
        %v8437 = vadd.f32 %v8276, 1.0
        %v8438 = vadd.f32 %v8278, 1.0
        %v8439 = vadd.f32 %v8280, 1.0
        %v8440 = vadd.f32 %v8282, 1.0
        %v8441 = vadd.f32 %v8284, 1.0
        %v8442 = vadd.f32 %v8286, 1.0
        %v8443 = vadd.f32 %v8288, 1.0
        %v8444 = vadd.f32 %v8290, 1.0
        %v8445 = vadd.f32 %v8292, 1.0
        %v8446 = vadd.f32 %v8294, 1.0
        %v8447 = vadd.f32 %v8296, 1.0
        %v8448 = vadd.f32 %v8298, 1.0
        %v8449 = vadd.f32 %v8300, 1.0
        %v8450 = vadd.f32 %v8302, 1.0
        %v8451 = vadd.f32 %v8304, 1.0
        %v8452 = vadd.f32 %v8306, 1.0
        %v8453 = vadd.f32 %v8308, 1.0
        %v8454 = vadd.f32 %v8310, 1.0
        %v8455 = vadd.f32 %v8312, 1.0
        %v8456 = vadd.f32 %v8314, 1.0
        %v8457 = vadd.f32 %v8316, 1.0
        %v8458 = vadd.f32 %v8318, 1.0
        %v8459 = vadd.f32 %v8320, 1.0
        %v8460 = vadd.f32 %v8322, 1.0
        %v8461 = vadd.f32 %v8324, 1.0
        %v8462 = vadd.f32 %v8326, 1.0
        %v8463 = vadd.f32 %v8328, 1.0
        %v8464 = vadd.f32 %v8330, 1.0
        %v8465 = vadd.f32 %v8332, 1.0
        %v8466 = vadd.f32 %v8334, 1.0
        %v8467 = vadd.f32 %v8336, 1.0
        %v8468 = vadd.f32 %v8338, 1.0
        %v8469 = vadd.f32 %v8340, 1.0
        %v8470 = vadd.f32 %v8342, 1.0
        %v8471 = vrcp.pop %v8343
        %v8472 = vmul.f32 1.0, %v8471
        %v8473 = vrcp.pop %v8344
        %v8474 = vmul.f32 1.0, %v8473
        %v8475 = vrcp.pop %v8345
        %v8476 = vmul.f32 1.0, %v8475
        %v8477 = vrcp.pop %v8346
        %v8478 = vmul.f32 1.0, %v8477
        %v8479 = vrcp.pop %v8347
        %v8480 = vmul.f32 1.0, %v8479
        %v8481 = vrcp.pop %v8348
        %v8482 = vmul.f32 1.0, %v8481
        %v8483 = vrcp.pop %v8349
        %v8484 = vmul.f32 1.0, %v8483
        %v8485 = vrcp.pop %v8350
        %v8486 = vmul.f32 1.0, %v8485
        %v8487 = vrcp.pop %v8351
        %v8488 = vmul.f32 1.0, %v8487
        %v8489 = vrcp.pop %v8352
        %v8490 = vmul.f32 1.0, %v8489
        %v8491 = vrcp.pop %v8353
        %v8492 = vmul.f32 1.0, %v8491
        %v8493 = vrcp.pop %v8354
        %v8494 = vmul.f32 1.0, %v8493
        %v8495 = vrcp.pop %v8355
        %v8496 = vmul.f32 1.0, %v8495
        %v8497 = vrcp.pop %v8356
        %v8498 = vmul.f32 1.0, %v8497
        %v8499 = vrcp.pop %v8357
        %v8500 = vmul.f32 1.0, %v8499
        %v8501 = vrcp.pop %v8358
        %v8502 = vmul.f32 1.0, %v8501
        %v8503 = vrcp.pop %v8359
        %v8504 = vmul.f32 1.0, %v8503
        %v8505 = vrcp.pop %v8360
        %v8506 = vmul.f32 1.0, %v8505
        %v8507 = vrcp.pop %v8361
        %v8508 = vmul.f32 1.0, %v8507
        %v8509 = vrcp.pop %v8362
        %v8510 = vmul.f32 1.0, %v8509
        %v8511 = vrcp.pop %v8363
        %v8512 = vmul.f32 1.0, %v8511
        %v8513 = vrcp.pop %v8364
        %v8514 = vmul.f32 1.0, %v8513
        %v8515 = vrcp.pop %v8365
        %v8516 = vmul.f32 1.0, %v8515
        %v8517 = vrcp.pop %v8366
        %v8518 = vmul.f32 1.0, %v8517
        %v8519 = vrcp.pop %v8367
        %v8520 = vmul.f32 1.0, %v8519
        %v8521 = vrcp.pop %v8368
        %v8522 = vmul.f32 1.0, %v8521
        %v8523 = vrcp.pop %v8369
        %v8524 = vmul.f32 1.0, %v8523
        %v8525 = vrcp.pop %v8370
        %v8526 = vmul.f32 1.0, %v8525
        %v8527 = vrcp.pop %v8371
        %v8528 = vmul.f32 1.0, %v8527
        %v8529 = vrcp.pop %v8372
        %v8530 = vmul.f32 1.0, %v8529
        %v8531 = vrcp.pop %v8373
        %v8532 = vmul.f32 1.0, %v8531
        %v8533 = vrcp.pop %v8374
        %v8534 = vmul.f32 1.0, %v8533
        %v8535 = vrcp.pop %v8375
        %v8536 = vmul.f32 1.0, %v8535
        %v8537 = vrcp.pop %v8376
        %v8538 = vmul.f32 1.0, %v8537
        %v8539 = vrcp.pop %v8377
        %v8540 = vmul.f32 1.0, %v8539
        %v8541 = vrcp.pop %v8378
        %v8542 = vmul.f32 1.0, %v8541
        %v8543 = vrcp.pop %v8379
        %v8544 = vmul.f32 1.0, %v8543
        %v8545 = vrcp.pop %v8380
        %v8546 = vmul.f32 1.0, %v8545
        %v8547 = vrcp.pop %v8381
        %v8548 = vmul.f32 1.0, %v8547
        %v8549 = vrcp.pop %v8382
        %v8550 = vmul.f32 1.0, %v8549
        %v8551 = vrcp.pop %v8383
        %v8552 = vmul.f32 1.0, %v8551
        %v8553 = vrcp.pop %v8384
        %v8554 = vmul.f32 1.0, %v8553
        %v8555 = vrcp.pop %v8385
        %v8556 = vmul.f32 1.0, %v8555
        %v8557 = vrcp.pop %v8386
        %v8558 = vmul.f32 1.0, %v8557
        %v8559 = vrcp.pop %v8387
        %v8560 = vmul.f32 1.0, %v8559
        %v8561 = vrcp.pop %v8388
        %v8562 = vmul.f32 1.0, %v8561
        %v8563 = vrcp.pop %v8389
        %v8564 = vmul.f32 1.0, %v8563
        %v8565 = vrcp.pop %v8390
        %v8566 = vmul.f32 1.0, %v8565
        %v8567 = vrcp.pop %v8391
        %v8568 = vmul.f32 1.0, %v8567
        %v8569 = vrcp.pop %v8392
        %v8570 = vmul.f32 1.0, %v8569
        %v8571 = vrcp.pop %v8393
        %v8572 = vmul.f32 1.0, %v8571
        %v8573 = vrcp.pop %v8394
        %v8574 = vmul.f32 1.0, %v8573
        %v8575 = vrcp.pop %v8395
        %v8576 = vmul.f32 1.0, %v8575
        %v8577 = vrcp.pop %v8396
        %v8578 = vmul.f32 1.0, %v8577
        %v8579 = vrcp.pop %v8397
        %v8580 = vmul.f32 1.0, %v8579
        %v8581 = vrcp.pop %v8398
        %v8582 = vmul.f32 1.0, %v8581
        %v8583 = vrcp.pop %v8399
        %v8584 = vmul.f32 1.0, %v8583
        %v8585 = vrcp.pop %v8400
        %v8586 = vmul.f32 1.0, %v8585
        %v8587 = vrcp.pop %v8401
        %v8588 = vmul.f32 1.0, %v8587
        %v8589 = vrcp.pop %v8402
        %v8590 = vmul.f32 1.0, %v8589
        %v8591 = vrcp.pop %v8403
        %v8592 = vmul.f32 1.0, %v8591
        %v8593 = vrcp.pop %v8404
        %v8594 = vmul.f32 1.0, %v8593
        %v8595 = vrcp.pop %v8405
        %v8596 = vmul.f32 1.0, %v8595
        %v8597 = vrcp.pop %v8406
        %v8598 = vmul.f32 1.0, %v8597
        %v8599 = vrcp.pop %v8407
        %v8600 = vmul.f32 1.0, %v8599
        %v8601 = vrcp.pop %v8408
        %v8602 = vmul.f32 1.0, %v8601
        %v8603 = vrcp.pop %v8409
        %v8604 = vmul.f32 1.0, %v8603
        %v8605 = vrcp.pop %v8410
        %v8606 = vmul.f32 1.0, %v8605
        %v8607 = vrcp.pop %v8411
        %v8608 = vmul.f32 1.0, %v8607
        %v8609 = vrcp.pop %v8412
        %v8610 = vmul.f32 1.0, %v8609
        %v8611 = vrcp.pop %v8413
        %v8612 = vmul.f32 1.0, %v8611
        %v8613 = vrcp.pop %v8414
        %v8614 = vmul.f32 1.0, %v8613
        %v8615 = vrcp.pop %v8415
        %v8616 = vmul.f32 1.0, %v8615
        %v8617 = vrcp.pop %v8416
        %v8618 = vmul.f32 1.0, %v8617
        %v8619 = vrcp.pop %v8417
        %v8620 = vmul.f32 1.0, %v8619
        %v8621 = vrcp.pop %v8418
        %v8622 = vmul.f32 1.0, %v8621
        %v8623 = vrcp.pop %v8419
        %v8624 = vmul.f32 1.0, %v8623
        %v8625 = vrcp.pop %v8420
        %v8626 = vmul.f32 1.0, %v8625
        %v8627 = vrcp.pop %v8421
        %v8628 = vmul.f32 1.0, %v8627
        %v8629 = vrcp.pop %v8422
        %v8630 = vmul.f32 1.0, %v8629
        %v8631 = vrcp.pop %v8423
        %v8632 = vmul.f32 1.0, %v8631
        %v8633 = vrcp.pop %v8424
        %v8634 = vmul.f32 1.0, %v8633
        %v8635 = vrcp.pop %v8425
        %v8636 = vmul.f32 1.0, %v8635
        %v8637 = vrcp.pop %v8426
        %v8638 = vmul.f32 1.0, %v8637
        %v8639 = vrcp.pop %v8427
        %v8640 = vmul.f32 1.0, %v8639
        %v8641 = vrcp.pop %v8428
        %v8642 = vmul.f32 1.0, %v8641
        %v8643 = vrcp.pop %v8429
        %v8644 = vmul.f32 1.0, %v8643
        %v8645 = vrcp.pop %v8430
        %v8646 = vmul.f32 1.0, %v8645
        %v8647 = vrcp.pop %v8431
        %v8648 = vmul.f32 1.0, %v8647
        %v8649 = vrcp.pop %v8432
        %v8650 = vmul.f32 1.0, %v8649
        %v8651 = vrcp.pop %v8433
        %v8652 = vmul.f32 1.0, %v8651
        %v8653 = vrcp.pop %v8434
        %v8654 = vmul.f32 1.0, %v8653
        %v8655 = vrcp.pop %v8435
        %v8656 = vmul.f32 1.0, %v8655
        %v8657 = vrcp.pop %v8436
        %v8658 = vmul.f32 1.0, %v8657
        %v8659 = vrcp.pop %v8437
        %v8660 = vmul.f32 1.0, %v8659
        %v8661 = vrcp.pop %v8438
        %v8662 = vmul.f32 1.0, %v8661
        %v8663 = vrcp.pop %v8439
        %v8664 = vmul.f32 1.0, %v8663
        %v8665 = vrcp.pop %v8440
        %v8666 = vmul.f32 1.0, %v8665
        %v8667 = vrcp.pop %v8441
        %v8668 = vmul.f32 1.0, %v8667
        %v8669 = vrcp.pop %v8442
        %v8670 = vmul.f32 1.0, %v8669
        %v8671 = vrcp.pop %v8443
        %v8672 = vmul.f32 1.0, %v8671
        %v8673 = vrcp.pop %v8444
        %v8674 = vmul.f32 1.0, %v8673
        %v8675 = vrcp.pop %v8445
        %v8676 = vmul.f32 1.0, %v8675
        %v8677 = vrcp.pop %v8446
        %v8678 = vmul.f32 1.0, %v8677
        %v8679 = vrcp.pop %v8447
        %v8680 = vmul.f32 1.0, %v8679
        %v8681 = vrcp.pop %v8448
        %v8682 = vmul.f32 1.0, %v8681
        %v8683 = vrcp.pop %v8449
        %v8684 = vmul.f32 1.0, %v8683
        %v8685 = vrcp.pop %v8450
        %v8686 = vmul.f32 1.0, %v8685
        %v8687 = vrcp.pop %v8451
        %v8688 = vmul.f32 1.0, %v8687
        %v8689 = vrcp.pop %v8452
        %v8690 = vmul.f32 1.0, %v8689
        %v8691 = vrcp.pop %v8453
        %v8692 = vmul.f32 1.0, %v8691
        %v8693 = vrcp.pop %v8454
        %v8694 = vmul.f32 1.0, %v8693
        %v8695 = vrcp.pop %v8455
        %v8696 = vmul.f32 1.0, %v8695
        %v8697 = vrcp.pop %v8456
        %v8698 = vmul.f32 1.0, %v8697
        %v8699 = vrcp.pop %v8457
        %v8700 = vmul.f32 1.0, %v8699
        %v8701 = vrcp.pop %v8458
        %v8702 = vmul.f32 1.0, %v8701
        %v8703 = vrcp.pop %v8459
        %v8704 = vmul.f32 1.0, %v8703
        %v8705 = vrcp.pop %v8460
        %v8706 = vmul.f32 1.0, %v8705
        %v8707 = vrcp.pop %v8461
        %v8708 = vmul.f32 1.0, %v8707
        %v8709 = vrcp.pop %v8462
        %v8710 = vmul.f32 1.0, %v8709
        %v8711 = vrcp.pop %v8463
        %v8712 = vmul.f32 1.0, %v8711
        %v8713 = vrcp.pop %v8464
        %v8714 = vmul.f32 1.0, %v8713
        %v8715 = vrcp.pop %v8465
        %v8716 = vmul.f32 1.0, %v8715
        %v8717 = vrcp.pop %v8466
        %v8718 = vmul.f32 1.0, %v8717
        %v8719 = vrcp.pop %v8467
        %v8720 = vmul.f32 1.0, %v8719
        %v8721 = vrcp.pop %v8468
        %v8722 = vmul.f32 1.0, %v8721
        %v8723 = vrcp.pop %v8469
        %v8724 = vmul.f32 1.0, %v8723
        %v8725 = vrcp.pop %v8470
        %v8726 = vmul.f32 1.0, %v8725
        %v8727 = vmul.f32 %v7608, %v8472
        %v8728 = vmul.f32 %v7610, %v8474
        %v8729 = vmul.f32 %v7801, %v8476
        %v8730 = vmul.f32 %v7803, %v8478
        %v8731 = vmul.f32 %v7612, %v8480
        %v8732 = vmul.f32 %v7614, %v8482
        %v8733 = vmul.f32 %v7805, %v8484
        %v8734 = vmul.f32 %v7807, %v8486
        %v8735 = vmul.f32 %v7618, %v8488
        %v8736 = vmul.f32 %v7620, %v8490
        %v8737 = vmul.f32 %v7811, %v8492
        %v8738 = vmul.f32 %v7813, %v8494
        %v8739 = vmul.f32 %v7622, %v8496
        %v8740 = vmul.f32 %v7624, %v8498
        %v8741 = vmul.f32 %v7815, %v8500
        %v8742 = vmul.f32 %v7817, %v8502
        %v8743 = vmul.f32 %v7628, %v8504
        %v8744 = vmul.f32 %v7630, %v8506
        %v8745 = vmul.f32 %v7821, %v8508
        %v8746 = vmul.f32 %v7823, %v8510
        %v8747 = vmul.f32 %v7632, %v8512
        %v8748 = vmul.f32 %v7634, %v8514
        %v8749 = vmul.f32 %v7825, %v8516
        %v8750 = vmul.f32 %v7827, %v8518
        %v8751 = vmul.f32 %v7638, %v8520
        %v8752 = vmul.f32 %v7640, %v8522
        %v8753 = vmul.f32 %v7831, %v8524
        %v8754 = vmul.f32 %v7833, %v8526
        %v8755 = vmul.f32 %v7642, %v8528
        %v8756 = vmul.f32 %v7644, %v8530
        %v8757 = vmul.f32 %v7835, %v8532
        %v8758 = vmul.f32 %v7837, %v8534
        %v8759 = vmul.f32 %v7648, %v8536
        %v8760 = vmul.f32 %v7650, %v8538
        %v8761 = vmul.f32 %v7841, %v8540
        %v8762 = vmul.f32 %v7843, %v8542
        %v8763 = vmul.f32 %v7652, %v8544
        %v8764 = vmul.f32 %v7654, %v8546
        %v8765 = vmul.f32 %v7845, %v8548
        %v8766 = vmul.f32 %v7847, %v8550
        %v8767 = vmul.f32 %v7658, %v8552
        %v8768 = vmul.f32 %v7660, %v8554
        %v8769 = vmul.f32 %v7851, %v8556
        %v8770 = vmul.f32 %v7853, %v8558
        %v8771 = vmul.f32 %v7662, %v8560
        %v8772 = vmul.f32 %v7664, %v8562
        %v8773 = vmul.f32 %v7855, %v8564
        %v8774 = vmul.f32 %v7857, %v8566
        %v8775 = vmul.f32 %v7668, %v8568
        %v8776 = vmul.f32 %v7670, %v8570
        %v8777 = vmul.f32 %v7861, %v8572
        %v8778 = vmul.f32 %v7863, %v8574
        %v8779 = vmul.f32 %v7672, %v8576
        %v8780 = vmul.f32 %v7674, %v8578
        %v8781 = vmul.f32 %v7865, %v8580
        %v8782 = vmul.f32 %v7867, %v8582
        %v8783 = vmul.f32 %v7678, %v8584
        %v8784 = vmul.f32 %v7680, %v8586
        %v8785 = vmul.f32 %v7871, %v8588
        %v8786 = vmul.f32 %v7873, %v8590
        %v8787 = vmul.f32 %v7682, %v8592
        %v8788 = vmul.f32 %v7684, %v8594
        %v8789 = vmul.f32 %v7875, %v8596
        %v8790 = vmul.f32 %v7877, %v8598
        %v8791 = vmul.f32 %v7688, %v8600
        %v8792 = vmul.f32 %v7690, %v8602
        %v8793 = vmul.f32 %v7881, %v8604
        %v8794 = vmul.f32 %v7883, %v8606
        %v8795 = vmul.f32 %v7692, %v8608
        %v8796 = vmul.f32 %v7694, %v8610
        %v8797 = vmul.f32 %v7885, %v8612
        %v8798 = vmul.f32 %v7887, %v8614
        %v8799 = vmul.f32 %v7698, %v8616
        %v8800 = vmul.f32 %v7700, %v8618
        %v8801 = vmul.f32 %v7891, %v8620
        %v8802 = vmul.f32 %v7893, %v8622
        %v8803 = vmul.f32 %v7702, %v8624
        %v8804 = vmul.f32 %v7704, %v8626
        %v8805 = vmul.f32 %v7895, %v8628
        %v8806 = vmul.f32 %v7897, %v8630
        %v8807 = vmul.f32 %v7708, %v8632
        %v8808 = vmul.f32 %v7710, %v8634
        %v8809 = vmul.f32 %v7901, %v8636
        %v8810 = vmul.f32 %v7903, %v8638
        %v8811 = vmul.f32 %v7712, %v8640
        %v8812 = vmul.f32 %v7714, %v8642
        %v8813 = vmul.f32 %v7905, %v8644
        %v8814 = vmul.f32 %v7907, %v8646
        %v8815 = vmul.f32 %v7718, %v8648
        %v8816 = vmul.f32 %v7720, %v8650
        %v8817 = vmul.f32 %v7911, %v8652
        %v8818 = vmul.f32 %v7913, %v8654
        %v8819 = vmul.f32 %v7722, %v8656
        %v8820 = vmul.f32 %v7724, %v8658
        %v8821 = vmul.f32 %v7915, %v8660
        %v8822 = vmul.f32 %v7917, %v8662
        %v8823 = vmul.f32 %v7728, %v8664
        %v8824 = vmul.f32 %v7730, %v8666
        %v8825 = vmul.f32 %v7921, %v8668
        %v8826 = vmul.f32 %v7923, %v8670
        %v8827 = vmul.f32 %v7732, %v8672
        %v8828 = vmul.f32 %v7734, %v8674
        %v8829 = vmul.f32 %v7925, %v8676
        %v8830 = vmul.f32 %v7927, %v8678
        %v8831 = vmul.f32 %v7738, %v8680
        %v8832 = vmul.f32 %v7740, %v8682
        %v8833 = vmul.f32 %v7931, %v8684
        %v8834 = vmul.f32 %v7933, %v8686
        %v8835 = vmul.f32 %v7742, %v8688
        %v8836 = vmul.f32 %v7744, %v8690
        %v8837 = vmul.f32 %v7935, %v8692
        %v8838 = vmul.f32 %v7937, %v8694
        %v8839 = vmul.f32 %v7748, %v8696
        %v8840 = vmul.f32 %v7750, %v8698
        %v8841 = vmul.f32 %v7941, %v8700
        %v8842 = vmul.f32 %v7943, %v8702
        %v8843 = vmul.f32 %v7752, %v8704
        %v8844 = vmul.f32 %v7754, %v8706
        %v8845 = vmul.f32 %v7945, %v8708
        %v8846 = vmul.f32 %v7947, %v8710
        %v8847 = vmul.f32 %v7758, %v8712
        %v8848 = vmul.f32 %v7760, %v8714
        %v8849 = vmul.f32 %v7951, %v8716
        %v8850 = vmul.f32 %v7953, %v8718
        %v8851 = vmul.f32 %v7762, %v8720
        %v8852 = vmul.f32 %v7764, %v8722
        %v8853 = vmul.f32 %v7955, %v8724
        %v8854 = vmul.f32 %v7957, %v8726
        %v8855 = vpack.c.bf16 %v8731, %v8727
        %v8856 = vpack.c.bf16 %v8732, %v8728
        %v8857 = vpack.c.bf16 %v8733, %v8729
        %v8858 = vpack.c.bf16 %v8734, %v8730
        %v8859 = vpack.c.bf16 %v8739, %v8735
        %v8860 = vpack.c.bf16 %v8740, %v8736
        %v8861 = vpack.c.bf16 %v8741, %v8737
        %v8862 = vpack.c.bf16 %v8742, %v8738
        %v8863 = vpack.c.bf16 %v8747, %v8743
        %v8864 = vpack.c.bf16 %v8748, %v8744
        %v8865 = vpack.c.bf16 %v8749, %v8745
        %v8866 = vpack.c.bf16 %v8750, %v8746
        %v8867 = vpack.c.bf16 %v8755, %v8751
        %v8868 = vpack.c.bf16 %v8756, %v8752
        %v8869 = vpack.c.bf16 %v8757, %v8753
        %v8870 = vpack.c.bf16 %v8758, %v8754
        %v8871 = vpack.c.bf16 %v8763, %v8759
        %v8872 = vpack.c.bf16 %v8764, %v8760
        %v8873 = vpack.c.bf16 %v8765, %v8761
        %v8874 = vpack.c.bf16 %v8766, %v8762
        %v8875 = vpack.c.bf16 %v8771, %v8767
        %v8876 = vpack.c.bf16 %v8772, %v8768
        %v8877 = vpack.c.bf16 %v8773, %v8769
        %v8878 = vpack.c.bf16 %v8774, %v8770
        %v8879 = vpack.c.bf16 %v8779, %v8775
        %v8880 = vpack.c.bf16 %v8780, %v8776
        %v8881 = vpack.c.bf16 %v8781, %v8777
        %v8882 = vpack.c.bf16 %v8782, %v8778
        %v8883 = vpack.c.bf16 %v8787, %v8783
        %v8884 = vpack.c.bf16 %v8788, %v8784
        %v8885 = vpack.c.bf16 %v8789, %v8785
        %v8886 = vpack.c.bf16 %v8790, %v8786
        %v8887 = vpack.c.bf16 %v8795, %v8791
        %v8888 = vpack.c.bf16 %v8796, %v8792
        %v8889 = vpack.c.bf16 %v8797, %v8793
        %v8890 = vpack.c.bf16 %v8798, %v8794
        %v8891 = vpack.c.bf16 %v8803, %v8799
        %v8892 = vpack.c.bf16 %v8804, %v8800
        %v8893 = vpack.c.bf16 %v8805, %v8801
        %v8894 = vpack.c.bf16 %v8806, %v8802
        %v8895 = vpack.c.bf16 %v8811, %v8807
        %v8896 = vpack.c.bf16 %v8812, %v8808
        %v8897 = vpack.c.bf16 %v8813, %v8809
        %v8898 = vpack.c.bf16 %v8814, %v8810
        %v8899 = vpack.c.bf16 %v8819, %v8815
        %v8900 = vpack.c.bf16 %v8820, %v8816
        %v8901 = vpack.c.bf16 %v8821, %v8817
        %v8902 = vpack.c.bf16 %v8822, %v8818
        %v8903 = vpack.c.bf16 %v8827, %v8823
        %v8904 = vpack.c.bf16 %v8828, %v8824
        %v8905 = vpack.c.bf16 %v8829, %v8825
        %v8906 = vpack.c.bf16 %v8830, %v8826
        %v8907 = vpack.c.bf16 %v8835, %v8831
        %v8908 = vpack.c.bf16 %v8836, %v8832
        %v8909 = vpack.c.bf16 %v8837, %v8833
        %v8910 = vpack.c.bf16 %v8838, %v8834
        %v8911 = vpack.c.bf16 %v8843, %v8839
        %v8912 = vpack.c.bf16 %v8844, %v8840
        %v8913 = vpack.c.bf16 %v8845, %v8841
        %v8914 = vpack.c.bf16 %v8846, %v8842
        %v8915 = vpack.c.bf16 %v8851, %v8847
        %v8916 = vpack.c.bf16 %v8852, %v8848
        %v8917 = vpack.c.bf16 %v8853, %v8849
        %v8918 = vpack.c.bf16 %v8854, %v8850
        %v8920 = vlaneseq
        %v8921 = vshrl.u32 %v8920, 7
        %v8922 = vsub.s32 0, %v8921
        %v8923 = vrot.slane %v1709, %v8922
        %v8924 = vlaneseq
        %v8925 = vshrl.u32 %v8924, 7
        %v8926 = vsub.s32 1, %v8925
        %v8927 = vrot.slane %v1709, %v8926
        %v8994 = vunpack.c.l.b16 %v1645
        %v8995 = vunpack.c.h.b16 %v1645
        %v8996 = vunpack.c.l.b16 %v1646
        %v8997 = vunpack.c.h.b16 %v1646
        %v8998 = vunpack.c.l.b16 %v1647
        %v8999 = vunpack.c.h.b16 %v1647
        %v9000 = vunpack.c.l.b16 %v1648
        %v9001 = vunpack.c.h.b16 %v1648
        %v9002 = vunpack.c.l.b16 %v1649
        %v9003 = vunpack.c.h.b16 %v1649
        %v9004 = vunpack.c.l.b16 %v1650
        %v9005 = vunpack.c.h.b16 %v1650
        %v9006 = vunpack.c.l.b16 %v1651
        %v9007 = vunpack.c.h.b16 %v1651
        %v9008 = vunpack.c.l.b16 %v1652
        %v9009 = vunpack.c.h.b16 %v1652
        %v9010 = vunpack.c.l.b16 %v1653
        %v9011 = vunpack.c.h.b16 %v1653
        %v9012 = vunpack.c.l.b16 %v1654
        %v9013 = vunpack.c.h.b16 %v1654
        %v9014 = vunpack.c.l.b16 %v1655
        %v9015 = vunpack.c.h.b16 %v1655
        %v9016 = vunpack.c.l.b16 %v1656
        %v9017 = vunpack.c.h.b16 %v1656
        %v9018 = vunpack.c.l.b16 %v1657
        %v9019 = vunpack.c.h.b16 %v1657
        %v9020 = vunpack.c.l.b16 %v1658
        %v9021 = vunpack.c.h.b16 %v1658
        %v9022 = vunpack.c.l.b16 %v1659
        %v9023 = vunpack.c.h.b16 %v1659
        %v9024 = vunpack.c.l.b16 %v1660
        %v9025 = vunpack.c.h.b16 %v1660
        %v9026 = vunpack.c.l.b16 %v1661
        %v9027 = vunpack.c.h.b16 %v1661
        %v9028 = vunpack.c.l.b16 %v1662
        %v9029 = vunpack.c.h.b16 %v1662
        %v9030 = vunpack.c.l.b16 %v1663
        %v9031 = vunpack.c.h.b16 %v1663
        %v9032 = vunpack.c.l.b16 %v1664
        %v9033 = vunpack.c.h.b16 %v1664
        %v9034 = vunpack.c.l.b16 %v1665
        %v9035 = vunpack.c.h.b16 %v1665
        %v9036 = vunpack.c.l.b16 %v1666
        %v9037 = vunpack.c.h.b16 %v1666
        %v9038 = vunpack.c.l.b16 %v1667
        %v9039 = vunpack.c.h.b16 %v1667
        %v9040 = vunpack.c.l.b16 %v1668
        %v9041 = vunpack.c.h.b16 %v1668
        %v9042 = vunpack.c.l.b16 %v1669
        %v9043 = vunpack.c.h.b16 %v1669
        %v9044 = vunpack.c.l.b16 %v1670
        %v9045 = vunpack.c.h.b16 %v1670
        %v9046 = vunpack.c.l.b16 %v1671
        %v9047 = vunpack.c.h.b16 %v1671
        %v9048 = vunpack.c.l.b16 %v1672
        %v9049 = vunpack.c.h.b16 %v1672
        %v9050 = vunpack.c.l.b16 %v1673
        %v9051 = vunpack.c.h.b16 %v1673
        %v9052 = vunpack.c.l.b16 %v1674
        %v9053 = vunpack.c.h.b16 %v1674
        %v9054 = vunpack.c.l.b16 %v1675
        %v9055 = vunpack.c.h.b16 %v1675
        %v9056 = vunpack.c.l.b16 %v1676
        %v9057 = vunpack.c.h.b16 %v1676
        %v9058 = vunpack.c.l.b16 %v1677
        %v9059 = vunpack.c.h.b16 %v1677
        %v9060 = vunpack.c.l.b16 %v1678
        %v9061 = vunpack.c.h.b16 %v1678
        %v9062 = vunpack.c.l.b16 %v1679
        %v9063 = vunpack.c.h.b16 %v1679
        %v9064 = vunpack.c.l.b16 %v1680
        %v9065 = vunpack.c.h.b16 %v1680
        %v9066 = vunpack.c.l.b16 %v1681
        %v9067 = vunpack.c.h.b16 %v1681
        %v9068 = vunpack.c.l.b16 %v1682
        %v9069 = vunpack.c.h.b16 %v1682
        %v9070 = vunpack.c.l.b16 %v1683
        %v9071 = vunpack.c.h.b16 %v1683
        %v9072 = vunpack.c.l.b16 %v1684
        %v9073 = vunpack.c.h.b16 %v1684
        %v9074 = vunpack.c.l.b16 %v1685
        %v9075 = vunpack.c.h.b16 %v1685
        %v9076 = vunpack.c.l.b16 %v1686
        %v9077 = vunpack.c.h.b16 %v1686
        %v9078 = vunpack.c.l.b16 %v1687
        %v9079 = vunpack.c.h.b16 %v1687
        %v9080 = vunpack.c.l.b16 %v1688
        %v9081 = vunpack.c.h.b16 %v1688
        %v9082 = vunpack.c.l.b16 %v1689
        %v9083 = vunpack.c.h.b16 %v1689
        %v9084 = vunpack.c.l.b16 %v1690
        %v9085 = vunpack.c.h.b16 %v1690
        %v9086 = vunpack.c.l.b16 %v1691
        %v9087 = vunpack.c.h.b16 %v1691
        %v9088 = vunpack.c.l.b16 %v1692
        %v9089 = vunpack.c.h.b16 %v1692
        %v9090 = vunpack.c.l.b16 %v1693
        %v9091 = vunpack.c.h.b16 %v1693
        %v9092 = vunpack.c.l.b16 %v1694
        %v9093 = vunpack.c.h.b16 %v1694
        %v9094 = vunpack.c.l.b16 %v1695
        %v9095 = vunpack.c.h.b16 %v1695
        %v9096 = vunpack.c.l.b16 %v1696
        %v9097 = vunpack.c.h.b16 %v1696
        %v9098 = vunpack.c.l.b16 %v1697
        %v9099 = vunpack.c.h.b16 %v1697
        %v9100 = vunpack.c.l.b16 %v1698
        %v9101 = vunpack.c.h.b16 %v1698
        %v9102 = vunpack.c.l.b16 %v1699
        %v9103 = vunpack.c.h.b16 %v1699
        %v9104 = vunpack.c.l.b16 %v1700
        %v9105 = vunpack.c.h.b16 %v1700
        %v9106 = vunpack.c.l.b16 %v1701
        %v9107 = vunpack.c.h.b16 %v1701
        %v9108 = vunpack.c.l.b16 %v1702
        %v9109 = vunpack.c.h.b16 %v1702
        %v9110 = vunpack.c.l.b16 %v1703
        %v9111 = vunpack.c.h.b16 %v1703
        %v9112 = vunpack.c.l.b16 %v1704
        %v9113 = vunpack.c.h.b16 %v1704
        %v9114 = vunpack.c.l.b16 %v1705
        %v9115 = vunpack.c.h.b16 %v1705
        %v9116 = vunpack.c.l.b16 %v1706
        %v9117 = vunpack.c.h.b16 %v1706
        %v9118 = vunpack.c.l.b16 %v1707
        %v9119 = vunpack.c.h.b16 %v1707
        %v9120 = vunpack.c.l.b16 %v1708
        %v9121 = vunpack.c.h.b16 %v1708
        %v9122 = vpack.c.b16 %v8996, %v8994
        %v9123 = vpack.c.b16 %v8997, %v8995
        %v9124 = vpack.c.b16 %v9000, %v8998
        %v9125 = vpack.c.b16 %v9001, %v8999
        %v9126 = vpack.c.b16 %v9004, %v9002
        %v9127 = vpack.c.b16 %v9005, %v9003
        %v9128 = vpack.c.b16 %v9008, %v9006
        %v9129 = vpack.c.b16 %v9009, %v9007
        %v9130 = vpack.c.b16 %v9012, %v9010
        %v9131 = vpack.c.b16 %v9013, %v9011
        %v9132 = vpack.c.b16 %v9016, %v9014
        %v9133 = vpack.c.b16 %v9017, %v9015
        %v9134 = vpack.c.b16 %v9020, %v9018
        %v9135 = vpack.c.b16 %v9021, %v9019
        %v9136 = vpack.c.b16 %v9024, %v9022
        %v9137 = vpack.c.b16 %v9025, %v9023
        %v9138 = vpack.c.b16 %v9028, %v9026
        %v9139 = vpack.c.b16 %v9029, %v9027
        %v9140 = vpack.c.b16 %v9032, %v9030
        %v9141 = vpack.c.b16 %v9033, %v9031
        %v9142 = vpack.c.b16 %v9036, %v9034
        %v9143 = vpack.c.b16 %v9037, %v9035
        %v9144 = vpack.c.b16 %v9040, %v9038
        %v9145 = vpack.c.b16 %v9041, %v9039
        %v9146 = vpack.c.b16 %v9044, %v9042
        %v9147 = vpack.c.b16 %v9045, %v9043
        %v9148 = vpack.c.b16 %v9048, %v9046
        %v9149 = vpack.c.b16 %v9049, %v9047
        %v9150 = vpack.c.b16 %v9052, %v9050
        %v9151 = vpack.c.b16 %v9053, %v9051
        %v9152 = vpack.c.b16 %v9056, %v9054
        %v9153 = vpack.c.b16 %v9057, %v9055
        %v9154 = vpack.c.b16 %v9060, %v9058
        %v9155 = vpack.c.b16 %v9061, %v9059
        %v9156 = vpack.c.b16 %v9064, %v9062
        %v9157 = vpack.c.b16 %v9065, %v9063
        %v9158 = vpack.c.b16 %v9068, %v9066
        %v9159 = vpack.c.b16 %v9069, %v9067
        %v9160 = vpack.c.b16 %v9072, %v9070
        %v9161 = vpack.c.b16 %v9073, %v9071
        %v9162 = vpack.c.b16 %v9076, %v9074
        %v9163 = vpack.c.b16 %v9077, %v9075
        %v9164 = vpack.c.b16 %v9080, %v9078
        %v9165 = vpack.c.b16 %v9081, %v9079
        %v9166 = vpack.c.b16 %v9084, %v9082
        %v9167 = vpack.c.b16 %v9085, %v9083
        %v9168 = vpack.c.b16 %v9088, %v9086
        %v9169 = vpack.c.b16 %v9089, %v9087
        %v9170 = vpack.c.b16 %v9092, %v9090
        %v9171 = vpack.c.b16 %v9093, %v9091
        %v9172 = vpack.c.b16 %v9096, %v9094
        %v9173 = vpack.c.b16 %v9097, %v9095
        %v9174 = vpack.c.b16 %v9100, %v9098
        %v9175 = vpack.c.b16 %v9101, %v9099
        %v9176 = vpack.c.b16 %v9104, %v9102
        %v9177 = vpack.c.b16 %v9105, %v9103
        %v9178 = vpack.c.b16 %v9108, %v9106
        %v9179 = vpack.c.b16 %v9109, %v9107
        %v9180 = vpack.c.b16 %v9112, %v9110
        %v9181 = vpack.c.b16 %v9113, %v9111
        %v9182 = vpack.c.b16 %v9116, %v9114
        %v9183 = vpack.c.b16 %v9117, %v9115
        %v9184 = vpack.c.b16 %v9120, %v9118
        %v9185 = vpack.c.b16 %v9121, %v9119
        %9250 = vmatprep.subr.bf16.mxu0 %v9137
        %9251 = vmatpush1.bf16.msra.mxu0 %v9136
        %9252 = vmatprep.subr.bf16.mxu0 %v9135
        %9253 = vmatpush1.bf16.msra.mxu0 %v9134
        %9254 = vmatprep.subr.bf16.mxu0 %v9133
        %9255 = vmatpush1.bf16.msra.mxu0 %v9132
        %9256 = vmatprep.subr.bf16.mxu0 %v9131
        %9257 = vmatpush1.bf16.msra.mxu0 %v9130
        %9258 = vmatprep.subr.bf16.mxu0 %v9129
        %9259 = vmatpush1.bf16.msra.mxu0 %v9128
        %9260 = vmatprep.subr.bf16.mxu0 %v9127
        %9261 = vmatpush1.bf16.msra.mxu0 %v9126
        %9262 = vmatprep.subr.bf16.mxu0 %v9125
        %9263 = vmatpush1.bf16.msra.mxu0 %v9124
        %9264 = vmatprep.subr.bf16.mxu0 %v9123
        %9265 = vmatpush1.bf16.msra.mxu0 %v9122
        %9266 = vmatprep.subr.bf16.mxu0 %v9153
        %9267 = vmatpush2.bf16.msra.mxu0 %v9152
        %9268 = vmatprep.subr.bf16.mxu0 %v9151
        %9269 = vmatpush2.bf16.msra.mxu0 %v9150
        %9270 = vmatprep.subr.bf16.mxu0 %v9149
        %9271 = vmatpush2.bf16.msra.mxu0 %v9148
        %9272 = vmatprep.subr.bf16.mxu0 %v9147
        %9273 = vmatpush2.bf16.msra.mxu0 %v9146
        %9274 = vmatprep.subr.bf16.mxu0 %v9145
        %9275 = vmatpush2.bf16.msra.mxu0 %v9144
        %9276 = vmatprep.subr.bf16.mxu0 %v9143
        %9277 = vmatpush2.bf16.msra.mxu0 %v9142
        %9278 = vmatprep.subr.bf16.mxu0 %v9141
        %9279 = vmatpush2.bf16.msra.mxu0 %v9140
        %9280 = vmatprep.subr.bf16.mxu0 %v9139
        %9281 = vmatpush2.bf16.msra.mxu0 %v9138
        %9282 = vmatprep.mubr.bf16.mxu0 %v8856
        %9283 = vmatmul.mubr.bf16.gmra.mxu0 %v8855
        %v9284 = vpop.f32.mrf.mxu0
        %v9285 = vadd.f32 %v8923, %v9284
        %v9286 = vpop.f32.mrf.mxu0
        %v9287 = vadd.f32 %v8927, %v9286
        %v9288 = vpop.f32.mrf.mxu0
        %v9289 = vadd.f32 %v8923, %v9288
        %v9290 = vpop.f32.mrf.mxu0
        %v9291 = vadd.f32 %v8927, %v9290
        %9292 = vmatprep.mubr.bf16.mxu0 %v8860
        %9293 = vmatmul.mubr.bf16.gmra.mxu0 %v8859
        %v9294 = vpop.f32.mrf.mxu0
        %v9295 = vadd.f32 %v8923, %v9294
        %v9296 = vpop.f32.mrf.mxu0
        %v9297 = vadd.f32 %v8927, %v9296
        %v9298 = vpop.f32.mrf.mxu0
        %v9299 = vadd.f32 %v8923, %v9298
        %v9300 = vpop.f32.mrf.mxu0
        %v9301 = vadd.f32 %v8927, %v9300
        %9302 = vmatprep.mubr.bf16.mxu0 %v8864
        %9303 = vmatmul.mubr.bf16.gmra.mxu0 %v8863
        %v9304 = vpop.f32.mrf.mxu0
        %v9305 = vadd.f32 %v8923, %v9304
        %v9306 = vpop.f32.mrf.mxu0
        %v9307 = vadd.f32 %v8927, %v9306
        %v9308 = vpop.f32.mrf.mxu0
        %v9309 = vadd.f32 %v8923, %v9308
        %v9310 = vpop.f32.mrf.mxu0
        %v9311 = vadd.f32 %v8927, %v9310
        %9312 = vmatprep.mubr.bf16.mxu0 %v8868
        %9313 = vmatmul.mubr.bf16.gmra.mxu0 %v8867
        %v9314 = vpop.f32.mrf.mxu0
        %v9315 = vadd.f32 %v8923, %v9314
        %v9316 = vpop.f32.mrf.mxu0
        %v9317 = vadd.f32 %v8927, %v9316
        %v9318 = vpop.f32.mrf.mxu0
        %v9319 = vadd.f32 %v8923, %v9318
        %v9320 = vpop.f32.mrf.mxu0
        %v9321 = vadd.f32 %v8927, %v9320
        %9322 = vmatprep.mubr.bf16.mxu0 %v8872
        %9323 = vmatmul.mubr.bf16.gmra.mxu0 %v8871
        %v9324 = vpop.f32.mrf.mxu0
        %v9325 = vadd.f32 %v8923, %v9324
        %v9326 = vpop.f32.mrf.mxu0
        %v9327 = vadd.f32 %v8927, %v9326
        %v9328 = vpop.f32.mrf.mxu0
        %v9329 = vadd.f32 %v8923, %v9328
        %v9330 = vpop.f32.mrf.mxu0
        %v9331 = vadd.f32 %v8927, %v9330
        %9332 = vmatprep.mubr.bf16.mxu0 %v8876
        %9333 = vmatmul.mubr.bf16.gmra.mxu0 %v8875
        %v9334 = vpop.f32.mrf.mxu0
        %v9335 = vadd.f32 %v8923, %v9334
        %v9336 = vpop.f32.mrf.mxu0
        %v9337 = vadd.f32 %v8927, %v9336
        %v9338 = vpop.f32.mrf.mxu0
        %v9339 = vadd.f32 %v8923, %v9338
        %v9340 = vpop.f32.mrf.mxu0
        %v9341 = vadd.f32 %v8927, %v9340
        %9342 = vmatprep.mubr.bf16.mxu0 %v8880
        %9343 = vmatmul.mubr.bf16.gmra.mxu0 %v8879
        %v9344 = vpop.f32.mrf.mxu0
        %v9345 = vadd.f32 %v8923, %v9344
        %v9346 = vpop.f32.mrf.mxu0
        %v9347 = vadd.f32 %v8927, %v9346
        %v9348 = vpop.f32.mrf.mxu0
        %v9349 = vadd.f32 %v8923, %v9348
        %v9350 = vpop.f32.mrf.mxu0
        %v9351 = vadd.f32 %v8927, %v9350
        %9352 = vmatprep.mubr.bf16.mxu0 %v8884
        %9353 = vmatmul.mubr.bf16.gmra.mxu0 %v8883
        %v9354 = vpop.f32.mrf.mxu0
        %v9355 = vadd.f32 %v8923, %v9354
        %v9356 = vpop.f32.mrf.mxu0
        %v9357 = vadd.f32 %v8927, %v9356
        %v9358 = vpop.f32.mrf.mxu0
        %v9359 = vadd.f32 %v8923, %v9358
        %v9360 = vpop.f32.mrf.mxu0
        %v9361 = vadd.f32 %v8927, %v9360
        %9362 = vmatprep.mubr.bf16.mxu0 %v8888
        %9363 = vmatmul.mubr.bf16.gmra.mxu0 %v8887
        %v9364 = vpop.f32.mrf.mxu0
        %v9365 = vadd.f32 %v8923, %v9364
        %v9366 = vpop.f32.mrf.mxu0
        %v9367 = vadd.f32 %v8927, %v9366
        %v9368 = vpop.f32.mrf.mxu0
        %v9369 = vadd.f32 %v8923, %v9368
        %v9370 = vpop.f32.mrf.mxu0
        %v9371 = vadd.f32 %v8927, %v9370
        %9372 = vmatprep.mubr.bf16.mxu0 %v8892
        %9373 = vmatmul.mubr.bf16.gmra.mxu0 %v8891
        %v9374 = vpop.f32.mrf.mxu0
        %v9375 = vadd.f32 %v8923, %v9374
        %v9376 = vpop.f32.mrf.mxu0
        %v9377 = vadd.f32 %v8927, %v9376
        %v9378 = vpop.f32.mrf.mxu0
        %v9379 = vadd.f32 %v8923, %v9378
        %v9380 = vpop.f32.mrf.mxu0
        %v9381 = vadd.f32 %v8927, %v9380
        %9382 = vmatprep.mubr.bf16.mxu0 %v8896
        %9383 = vmatmul.mubr.bf16.gmra.mxu0 %v8895
        %v9384 = vpop.f32.mrf.mxu0
        %v9385 = vadd.f32 %v8923, %v9384
        %v9386 = vpop.f32.mrf.mxu0
        %v9387 = vadd.f32 %v8927, %v9386
        %v9388 = vpop.f32.mrf.mxu0
        %v9389 = vadd.f32 %v8923, %v9388
        %v9390 = vpop.f32.mrf.mxu0
        %v9391 = vadd.f32 %v8927, %v9390
        %9392 = vmatprep.mubr.bf16.mxu0 %v8900
        %9393 = vmatmul.mubr.bf16.gmra.mxu0 %v8899
        %v9394 = vpop.f32.mrf.mxu0
        %v9395 = vadd.f32 %v8923, %v9394
        %v9396 = vpop.f32.mrf.mxu0
        %v9397 = vadd.f32 %v8927, %v9396
        %v9398 = vpop.f32.mrf.mxu0
        %v9399 = vadd.f32 %v8923, %v9398
        %v9400 = vpop.f32.mrf.mxu0
        %v9401 = vadd.f32 %v8927, %v9400
        %9402 = vmatprep.mubr.bf16.mxu0 %v8904
        %9403 = vmatmul.mubr.bf16.gmra.mxu0 %v8903
        %v9404 = vpop.f32.mrf.mxu0
        %v9405 = vadd.f32 %v8923, %v9404
        %v9406 = vpop.f32.mrf.mxu0
        %v9407 = vadd.f32 %v8927, %v9406
        %v9408 = vpop.f32.mrf.mxu0
        %v9409 = vadd.f32 %v8923, %v9408
        %v9410 = vpop.f32.mrf.mxu0
        %v9411 = vadd.f32 %v8927, %v9410
        %9412 = vmatprep.mubr.bf16.mxu0 %v8908
        %9413 = vmatmul.mubr.bf16.gmra.mxu0 %v8907
        %v9414 = vpop.f32.mrf.mxu0
        %v9415 = vadd.f32 %v8923, %v9414
        %v9416 = vpop.f32.mrf.mxu0
        %v9417 = vadd.f32 %v8927, %v9416
        %v9418 = vpop.f32.mrf.mxu0
        %v9419 = vadd.f32 %v8923, %v9418
        %v9420 = vpop.f32.mrf.mxu0
        %v9421 = vadd.f32 %v8927, %v9420
        %9422 = vmatprep.mubr.bf16.mxu0 %v8912
        %9423 = vmatmul.mubr.bf16.gmra.mxu0 %v8911
        %v9424 = vpop.f32.mrf.mxu0
        %v9425 = vadd.f32 %v8923, %v9424
        %v9426 = vpop.f32.mrf.mxu0
        %v9427 = vadd.f32 %v8927, %v9426
        %v9428 = vpop.f32.mrf.mxu0
        %v9429 = vadd.f32 %v8923, %v9428
        %v9430 = vpop.f32.mrf.mxu0
        %v9431 = vadd.f32 %v8927, %v9430
        %9432 = vmatprep.mubr.bf16.mxu0 %v8916
        %9433 = vmatmul.mubr.bf16.gmra.mxu0 %v8915
        %v9434 = vpop.f32.mrf.mxu0
        %v9435 = vadd.f32 %v8923, %v9434
        %v9436 = vpop.f32.mrf.mxu0
        %v9437 = vadd.f32 %v8927, %v9436
        %v9438 = vpop.f32.mrf.mxu0
        %v9439 = vadd.f32 %v8923, %v9438
        %v9440 = vpop.f32.mrf.mxu0
        %v9441 = vadd.f32 %v8927, %v9440
        %9442 = vdwg.mxu0
        %9443 = vmatprep.subr.bf16.mxu0 %v9169
        %9444 = vmatpush1.bf16.msra.mxu0 %v9168
        %9445 = vmatprep.subr.bf16.mxu0 %v9167
        %9446 = vmatpush1.bf16.msra.mxu0 %v9166
        %9447 = vmatprep.subr.bf16.mxu0 %v9165
        %9448 = vmatpush1.bf16.msra.mxu0 %v9164
        %9449 = vmatprep.subr.bf16.mxu0 %v9163
        %9450 = vmatpush1.bf16.msra.mxu0 %v9162
        %9451 = vmatprep.subr.bf16.mxu0 %v9161
        %9452 = vmatpush1.bf16.msra.mxu0 %v9160
        %9453 = vmatprep.subr.bf16.mxu0 %v9159
        %9454 = vmatpush1.bf16.msra.mxu0 %v9158
        %9455 = vmatprep.subr.bf16.mxu0 %v9157
        %9456 = vmatpush1.bf16.msra.mxu0 %v9156
        %9457 = vmatprep.subr.bf16.mxu0 %v9155
        %9458 = vmatpush1.bf16.msra.mxu0 %v9154
        %9459 = vmatprep.subr.bf16.mxu0 %v9185
        %9460 = vmatpush2.bf16.msra.mxu0 %v9184
        %9461 = vmatprep.subr.bf16.mxu0 %v9183
        %9462 = vmatpush2.bf16.msra.mxu0 %v9182
        %9463 = vmatprep.subr.bf16.mxu0 %v9181
        %9464 = vmatpush2.bf16.msra.mxu0 %v9180
        %9465 = vmatprep.subr.bf16.mxu0 %v9179
        %9466 = vmatpush2.bf16.msra.mxu0 %v9178
        %9467 = vmatprep.subr.bf16.mxu0 %v9177
        %9468 = vmatpush2.bf16.msra.mxu0 %v9176
        %9469 = vmatprep.subr.bf16.mxu0 %v9175
        %9470 = vmatpush2.bf16.msra.mxu0 %v9174
        %9471 = vmatprep.subr.bf16.mxu0 %v9173
        %9472 = vmatpush2.bf16.msra.mxu0 %v9172
        %9473 = vmatprep.subr.bf16.mxu0 %v9171
        %9474 = vmatpush2.bf16.msra.mxu0 %v9170
        %9475 = vmatprep.mubr.bf16.mxu0 %v8858
        %9476 = vmatmul.mubr.bf16.gmra.mxu0 %v8857
        %v9477 = vpop.f32.mrf.mxu0
        %v9478 = vadd.f32 %v9285, %v9477
        %v9479 = vpop.f32.mrf.mxu0
        %v9480 = vadd.f32 %v9287, %v9479
        %v9481 = vpop.f32.mrf.mxu0
        %v9482 = vadd.f32 %v9289, %v9481
        %v9483 = vpop.f32.mrf.mxu0
        %v9484 = vadd.f32 %v9291, %v9483
        %9485 = vmatprep.mubr.bf16.mxu0 %v8862
        %9486 = vmatmul.mubr.bf16.gmra.mxu0 %v8861
        %v9487 = vpop.f32.mrf.mxu0
        %v9488 = vadd.f32 %v9295, %v9487
        %v9489 = vpop.f32.mrf.mxu0
        %v9490 = vadd.f32 %v9297, %v9489
        %v9491 = vpop.f32.mrf.mxu0
        %v9492 = vadd.f32 %v9299, %v9491
        %v9493 = vpop.f32.mrf.mxu0
        %v9494 = vadd.f32 %v9301, %v9493
        %9495 = vmatprep.mubr.bf16.mxu0 %v8866
        %9496 = vmatmul.mubr.bf16.gmra.mxu0 %v8865
        %v9497 = vpop.f32.mrf.mxu0
        %v9498 = vadd.f32 %v9305, %v9497
        %v9499 = vpop.f32.mrf.mxu0
        %v9500 = vadd.f32 %v9307, %v9499
        %v9501 = vpop.f32.mrf.mxu0
        %v9502 = vadd.f32 %v9309, %v9501
        %v9503 = vpop.f32.mrf.mxu0
        %v9504 = vadd.f32 %v9311, %v9503
        %9505 = vmatprep.mubr.bf16.mxu0 %v8870
        %9506 = vmatmul.mubr.bf16.gmra.mxu0 %v8869
        %v9507 = vpop.f32.mrf.mxu0
        %v9508 = vadd.f32 %v9315, %v9507
        %v9509 = vpop.f32.mrf.mxu0
        %v9510 = vadd.f32 %v9317, %v9509
        %v9511 = vpop.f32.mrf.mxu0
        %v9512 = vadd.f32 %v9319, %v9511
        %v9513 = vpop.f32.mrf.mxu0
        %v9514 = vadd.f32 %v9321, %v9513
        %9515 = vmatprep.mubr.bf16.mxu0 %v8874
        %9516 = vmatmul.mubr.bf16.gmra.mxu0 %v8873
        %v9517 = vpop.f32.mrf.mxu0
        %v9518 = vadd.f32 %v9325, %v9517
        %v9519 = vpop.f32.mrf.mxu0
        %v9520 = vadd.f32 %v9327, %v9519
        %v9521 = vpop.f32.mrf.mxu0
        %v9522 = vadd.f32 %v9329, %v9521
        %v9523 = vpop.f32.mrf.mxu0
        %v9524 = vadd.f32 %v9331, %v9523
        %9525 = vmatprep.mubr.bf16.mxu0 %v8878
        %9526 = vmatmul.mubr.bf16.gmra.mxu0 %v8877
        %v9527 = vpop.f32.mrf.mxu0
        %v9528 = vadd.f32 %v9335, %v9527
        %v9529 = vpop.f32.mrf.mxu0
        %v9530 = vadd.f32 %v9337, %v9529
        %v9531 = vpop.f32.mrf.mxu0
        %v9532 = vadd.f32 %v9339, %v9531
        %v9533 = vpop.f32.mrf.mxu0
        %v9534 = vadd.f32 %v9341, %v9533
        %9535 = vmatprep.mubr.bf16.mxu0 %v8882
        %9536 = vmatmul.mubr.bf16.gmra.mxu0 %v8881
        %v9537 = vpop.f32.mrf.mxu0
        %v9538 = vadd.f32 %v9345, %v9537
        %v9539 = vpop.f32.mrf.mxu0
        %v9540 = vadd.f32 %v9347, %v9539
        %v9541 = vpop.f32.mrf.mxu0
        %v9542 = vadd.f32 %v9349, %v9541
        %v9543 = vpop.f32.mrf.mxu0
        %v9544 = vadd.f32 %v9351, %v9543
        %9545 = vmatprep.mubr.bf16.mxu0 %v8886
        %9546 = vmatmul.mubr.bf16.gmra.mxu0 %v8885
        %v9547 = vpop.f32.mrf.mxu0
        %v9548 = vadd.f32 %v9355, %v9547
        %v9549 = vpop.f32.mrf.mxu0
        %v9550 = vadd.f32 %v9357, %v9549
        %v9551 = vpop.f32.mrf.mxu0
        %v9552 = vadd.f32 %v9359, %v9551
        %v9553 = vpop.f32.mrf.mxu0
        %v9554 = vadd.f32 %v9361, %v9553
        %9555 = vmatprep.mubr.bf16.mxu0 %v8890
        %9556 = vmatmul.mubr.bf16.gmra.mxu0 %v8889
        %v9557 = vpop.f32.mrf.mxu0
        %v9558 = vadd.f32 %v9365, %v9557
        %v9559 = vpop.f32.mrf.mxu0
        %v9560 = vadd.f32 %v9367, %v9559
        %v9561 = vpop.f32.mrf.mxu0
        %v9562 = vadd.f32 %v9369, %v9561
        %v9563 = vpop.f32.mrf.mxu0
        %v9564 = vadd.f32 %v9371, %v9563
        %9565 = vmatprep.mubr.bf16.mxu0 %v8894
        %9566 = vmatmul.mubr.bf16.gmra.mxu0 %v8893
        %v9567 = vpop.f32.mrf.mxu0
        %v9568 = vadd.f32 %v9375, %v9567
        %v9569 = vpop.f32.mrf.mxu0
        %v9570 = vadd.f32 %v9377, %v9569
        %v9571 = vpop.f32.mrf.mxu0
        %v9572 = vadd.f32 %v9379, %v9571
        %v9573 = vpop.f32.mrf.mxu0
        %v9574 = vadd.f32 %v9381, %v9573
        %9575 = vmatprep.mubr.bf16.mxu0 %v8898
        %9576 = vmatmul.mubr.bf16.gmra.mxu0 %v8897
        %v9577 = vpop.f32.mrf.mxu0
        %v9578 = vadd.f32 %v9385, %v9577
        %v9579 = vpop.f32.mrf.mxu0
        %v9580 = vadd.f32 %v9387, %v9579
        %v9581 = vpop.f32.mrf.mxu0
        %v9582 = vadd.f32 %v9389, %v9581
        %v9583 = vpop.f32.mrf.mxu0
        %v9584 = vadd.f32 %v9391, %v9583
        %9585 = vmatprep.mubr.bf16.mxu0 %v8902
        %9586 = vmatmul.mubr.bf16.gmra.mxu0 %v8901
        %v9587 = vpop.f32.mrf.mxu0
        %v9588 = vadd.f32 %v9395, %v9587
        %v9589 = vpop.f32.mrf.mxu0
        %v9590 = vadd.f32 %v9397, %v9589
        %v9591 = vpop.f32.mrf.mxu0
        %v9592 = vadd.f32 %v9399, %v9591
        %v9593 = vpop.f32.mrf.mxu0
        %v9594 = vadd.f32 %v9401, %v9593
        %9595 = vmatprep.mubr.bf16.mxu0 %v8906
        %9596 = vmatmul.mubr.bf16.gmra.mxu0 %v8905
        %v9597 = vpop.f32.mrf.mxu0
        %v9598 = vadd.f32 %v9405, %v9597
        %v9599 = vpop.f32.mrf.mxu0
        %v9600 = vadd.f32 %v9407, %v9599
        %v9601 = vpop.f32.mrf.mxu0
        %v9602 = vadd.f32 %v9409, %v9601
        %v9603 = vpop.f32.mrf.mxu0
        %v9604 = vadd.f32 %v9411, %v9603
        %9605 = vmatprep.mubr.bf16.mxu0 %v8910
        %9606 = vmatmul.mubr.bf16.gmra.mxu0 %v8909
        %v9607 = vpop.f32.mrf.mxu0
        %v9608 = vadd.f32 %v9415, %v9607
        %v9609 = vpop.f32.mrf.mxu0
        %v9610 = vadd.f32 %v9417, %v9609
        %v9611 = vpop.f32.mrf.mxu0
        %v9612 = vadd.f32 %v9419, %v9611
        %v9613 = vpop.f32.mrf.mxu0
        %v9614 = vadd.f32 %v9421, %v9613
        %9615 = vmatprep.mubr.bf16.mxu0 %v8914
        %9616 = vmatmul.mubr.bf16.gmra.mxu0 %v8913
        %v9617 = vpop.f32.mrf.mxu0
        %v9618 = vadd.f32 %v9425, %v9617
        %v9619 = vpop.f32.mrf.mxu0
        %v9620 = vadd.f32 %v9427, %v9619
        %v9621 = vpop.f32.mrf.mxu0
        %v9622 = vadd.f32 %v9429, %v9621
        %v9623 = vpop.f32.mrf.mxu0
        %v9624 = vadd.f32 %v9431, %v9623
        %9625 = vmatprep.mubr.bf16.mxu0 %v8918
        %9626 = vmatmul.mubr.bf16.gmra.mxu0 %v8917
        %v9627 = vpop.f32.mrf.mxu0
        %v9628 = vadd.f32 %v9435, %v9627
        %v9629 = vpop.f32.mrf.mxu0
        %v9630 = vadd.f32 %v9437, %v9629
        %v9631 = vpop.f32.mrf.mxu0
        %v9632 = vadd.f32 %v9439, %v9631
        %v9633 = vpop.f32.mrf.mxu0
        %v9634 = vadd.f32 %v9441, %v9633
        %9635 = vdwg.mxu0
        %v9636 = vadd.f32 %v6474, %v9478
        %v9637 = vadd.f32 %v6475, %v9480
        %v9638 = vadd.f32 %v6476, %v9482
        %v9639 = vadd.f32 %v6477, %v9484
        %v9640 = vadd.f32 %v6478, %v9488
        %v9641 = vadd.f32 %v6479, %v9490
        %v9642 = vadd.f32 %v6480, %v9492
        %v9643 = vadd.f32 %v6481, %v9494
        %v9644 = vadd.f32 %v6482, %v9498
        %v9645 = vadd.f32 %v6483, %v9500
        %v9646 = vadd.f32 %v6484, %v9502
        %v9647 = vadd.f32 %v6485, %v9504
        %v9648 = vadd.f32 %v6486, %v9508
        %v9649 = vadd.f32 %v6487, %v9510
        %v9650 = vadd.f32 %v6488, %v9512
        %v9651 = vadd.f32 %v6489, %v9514
        %v9652 = vadd.f32 %v6490, %v9518
        %v9653 = vadd.f32 %v6491, %v9520
        %v9654 = vadd.f32 %v6492, %v9522
        %v9655 = vadd.f32 %v6493, %v9524
        %v9656 = vadd.f32 %v6494, %v9528
        %v9657 = vadd.f32 %v6495, %v9530
        %v9658 = vadd.f32 %v6496, %v9532
        %v9659 = vadd.f32 %v6497, %v9534
        %v9660 = vadd.f32 %v6498, %v9538
        %v9661 = vadd.f32 %v6499, %v9540
        %v9662 = vadd.f32 %v6500, %v9542
        %v9663 = vadd.f32 %v6501, %v9544
        %v9664 = vadd.f32 %v6502, %v9548
        %v9665 = vadd.f32 %v6503, %v9550
        %v9666 = vadd.f32 %v6504, %v9552
        %v9667 = vadd.f32 %v6505, %v9554
        %v9668 = vadd.f32 %v6506, %v9558
        %v9669 = vadd.f32 %v6507, %v9560
        %v9670 = vadd.f32 %v6508, %v9562
        %v9671 = vadd.f32 %v6509, %v9564
        %v9672 = vadd.f32 %v6510, %v9568
        %v9673 = vadd.f32 %v6511, %v9570
        %v9674 = vadd.f32 %v6512, %v9572
        %v9675 = vadd.f32 %v6513, %v9574
        %v9676 = vadd.f32 %v6514, %v9578
        %v9677 = vadd.f32 %v6515, %v9580
        %v9678 = vadd.f32 %v6516, %v9582
        %v9679 = vadd.f32 %v6517, %v9584
        %v9680 = vadd.f32 %v6518, %v9588
        %v9681 = vadd.f32 %v6519, %v9590
        %v9682 = vadd.f32 %v6520, %v9592
        %v9683 = vadd.f32 %v6521, %v9594
        %v9684 = vadd.f32 %v6522, %v9598
        %v9685 = vadd.f32 %v6523, %v9600
        %v9686 = vadd.f32 %v6524, %v9602
        %v9687 = vadd.f32 %v6525, %v9604
        %v9688 = vadd.f32 %v6526, %v9608
        %v9689 = vadd.f32 %v6527, %v9610
        %v9690 = vadd.f32 %v6528, %v9612
        %v9691 = vadd.f32 %v6529, %v9614
        %v9692 = vadd.f32 %v6530, %v9618
        %v9693 = vadd.f32 %v6531, %v9620
        %v9694 = vadd.f32 %v6532, %v9622
        %v9695 = vadd.f32 %v6533, %v9624
        %v9696 = vadd.f32 %v6534, %v9628
        %v9697 = vadd.f32 %v6535, %v9630
        %v9698 = vadd.f32 %v6536, %v9632
        %v9699 = vadd.f32 %v6537, %v9634
        %9700 = vst [vmem:[%s1187] sm:$0xff] %v9636
        %9701 = vst [vmem:[%s1187 + $0x8] sm:$0xff] %v9637
        %9702 = vst [vmem:[%s1187 + $0x10] sm:$0xff] %v9638
        %9703 = vst [vmem:[%s1187 + $0x18] sm:$0xff] %v9639
        %9704 = vst [vmem:[%s1187 + $0x20] sm:$0xff] %v9640
        %9705 = vst [vmem:[%s1187 + $0x28] sm:$0xff] %v9641
        %9706 = vst [vmem:[%s1187 + $0x30] sm:$0xff] %v9642
        %9707 = vst [vmem:[%s1187 + $0x38] sm:$0xff] %v9643
        %9708 = vst [vmem:[%s1187 + $0x40] sm:$0xff] %v9644
        %9709 = vst [vmem:[%s1187 + $0x48] sm:$0xff] %v9645
        %9710 = vst [vmem:[%s1187 + $0x50] sm:$0xff] %v9646
        %9711 = vst [vmem:[%s1187 + $0x58] sm:$0xff] %v9647
        %9712 = vst [vmem:[%s1187 + $0x60] sm:$0xff] %v9648
        %9713 = vst [vmem:[%s1187 + $0x68] sm:$0xff] %v9649
        %9714 = vst [vmem:[%s1187 + $0x70] sm:$0xff] %v9650
        %9715 = vst [vmem:[%s1187 + $0x78] sm:$0xff] %v9651
        %9716 = vst [vmem:[%s1187 + $0x80] sm:$0xff] %v9652
        %9717 = vst [vmem:[%s1187 + $0x88] sm:$0xff] %v9653
        %9718 = vst [vmem:[%s1187 + $0x90] sm:$0xff] %v9654
        %9719 = vst [vmem:[%s1187 + $0x98] sm:$0xff] %v9655
        %9720 = vst [vmem:[%s1187 + $0xa0] sm:$0xff] %v9656
        %9721 = vst [vmem:[%s1187 + $0xa8] sm:$0xff] %v9657
        %9722 = vst [vmem:[%s1187 + $0xb0] sm:$0xff] %v9658
        %9723 = vst [vmem:[%s1187 + $0xb8] sm:$0xff] %v9659
        %9724 = vst [vmem:[%s1187 + $0xc0] sm:$0xff] %v9660
        %9725 = vst [vmem:[%s1187 + $0xc8] sm:$0xff] %v9661
        %9726 = vst [vmem:[%s1187 + $0xd0] sm:$0xff] %v9662
        %9727 = vst [vmem:[%s1187 + $0xd8] sm:$0xff] %v9663
        %9728 = vst [vmem:[%s1187 + $0xe0] sm:$0xff] %v9664
        %9729 = vst [vmem:[%s1187 + $0xe8] sm:$0xff] %v9665
        %9730 = vst [vmem:[%s1187 + $0xf0] sm:$0xff] %v9666
        %9731 = vst [vmem:[%s1187 + $0xf8] sm:$0xff] %v9667
        %9732 = vst [vmem:[%s1187 + $0x100] sm:$0xff] %v9668
        %9733 = vst [vmem:[%s1187 + $0x108] sm:$0xff] %v9669
        %9734 = vst [vmem:[%s1187 + $0x110] sm:$0xff] %v9670
        %9735 = vst [vmem:[%s1187 + $0x118] sm:$0xff] %v9671
        %9736 = vst [vmem:[%s1187 + $0x120] sm:$0xff] %v9672
        %9737 = vst [vmem:[%s1187 + $0x128] sm:$0xff] %v9673
        %9738 = vst [vmem:[%s1187 + $0x130] sm:$0xff] %v9674
        %9739 = vst [vmem:[%s1187 + $0x138] sm:$0xff] %v9675
        %9740 = vst [vmem:[%s1187 + $0x140] sm:$0xff] %v9676
        %9741 = vst [vmem:[%s1187 + $0x148] sm:$0xff] %v9677
        %9742 = vst [vmem:[%s1187 + $0x150] sm:$0xff] %v9678
        %9743 = vst [vmem:[%s1187 + $0x158] sm:$0xff] %v9679
        %9744 = vst [vmem:[%s1187 + $0x160] sm:$0xff] %v9680
        %9745 = vst [vmem:[%s1187 + $0x168] sm:$0xff] %v9681
        %9746 = vst [vmem:[%s1187 + $0x170] sm:$0xff] %v9682
        %9747 = vst [vmem:[%s1187 + $0x178] sm:$0xff] %v9683
        %9748 = vst [vmem:[%s1187 + $0x180] sm:$0xff] %v9684
        %9749 = vst [vmem:[%s1187 + $0x188] sm:$0xff] %v9685
        %9750 = vst [vmem:[%s1187 + $0x190] sm:$0xff] %v9686
        %9751 = vst [vmem:[%s1187 + $0x198] sm:$0xff] %v9687
        %9752 = vst [vmem:[%s1187 + $0x1a0] sm:$0xff] %v9688
        %9753 = vst [vmem:[%s1187 + $0x1a8] sm:$0xff] %v9689
        %9754 = vst [vmem:[%s1187 + $0x1b0] sm:$0xff] %v9690
        %9755 = vst [vmem:[%s1187 + $0x1b8] sm:$0xff] %v9691
        %9756 = vst [vmem:[%s1187 + $0x1c0] sm:$0xff] %v9692
        %9757 = vst [vmem:[%s1187 + $0x1c8] sm:$0xff] %v9693
        %9758 = vst [vmem:[%s1187 + $0x1d0] sm:$0xff] %v9694
        %9759 = vst [vmem:[%s1187 + $0x1d8] sm:$0xff] %v9695
        %9760 = vst [vmem:[%s1187 + $0x1e0] sm:$0xff] %v9696
        %9761 = vst [vmem:[%s1187 + $0x1e8] sm:$0xff] %v9697
        %9762 = vst [vmem:[%s1187 + $0x1f0] sm:$0xff] %v9698
        %9763 = vst [vmem:[%s1187 + $0x1f8] sm:$0xff] %v9699
        %s9764 = sand.u32 %s573, 1
        %s9765 = scalar_lea.sflag [#allocation4], %s9764
        %s9766 = sand.u32 %s573, 1
        %s9767 = smul.addr %s9766, 512
        %s9768 = scalar_lea.vmem [#allocation19], %s9767
        // Predicated region
        $region161: #{tpu_custom_call.1} parent=99 // pred_check
          %p9769 = pneg %p583
        $region162: #{tpu_custom_call.1} parent=99 // pred_check_branch
          %9771 = sbr.rel (%p9769) target = $region164
        $region163: #{tpu_custom_call.1} parent=99 // pred_region
          %s9772 = smul.u32 2, %s42
          %s9774 = ssub.s32 8192, 8192
          %9775 = vsyncadd %s9765, %s9774
          %s9776 = smul.addr %s9772, 32
          %s9777 = smul.addr %s9776, 128
          %s9778 = scalar_lea.hbm %s20, %s9777
          %s9779 = sshll.u32 %s9768, 4
          %s9780 = int_to_ptr.vmem [resolvable:$true] %s9779
          %9785 = dma.vmem_to_hbm [thread:$0]  %s9780, 8192, %s9778, %s9765, 256, 256, 16
        $region164: #{tpu_custom_call.1} parent=99 // pred_fallthru
          _
      $region100: #{tpu_custom_call.1} parent=5 // pred_fallthru
        _
      %p9786 = scmp.le.s32.totalorder 2, %s33
      // Predicated region
      $region165: #{tpu_custom_call.1} parent=5 // pred_check
        %p9787 = pneg %p9786
      $region166: #{tpu_custom_call.1} parent=5 // pred_check_branch
        %9789 = sbr.rel (%p9787) target = $region168
      $region167: #{tpu_custom_call.1} parent=5 // pred_region
        %s9790 = ssub.s32 %s33, 2
        // Predicated region
        $region169: #{tpu_custom_call.1} parent=167 // pred_check
          %p9791 = pneg %p589
        $region170: #{tpu_custom_call.1} parent=167 // pred_check_branch
          %9793 = sbr.rel (%p9791) target = $region172
        $region171: #{tpu_custom_call.1} parent=167 // pred_region
          %s9794 = sand.u32 %s574, 1
          %s9795 = scalar_lea.sflag [#allocation4], %s9794
          %s9796 = sand.u32 %s574, 1
          %s9797 = smul.addr %s9796, 512
          %s9798 = scalar_lea.vmem [#allocation19], %s9797
          %9799 = dma.done %s9795, 8192
        $region172: #{tpu_custom_call.1} parent=167 // pred_fallthru
          _
      $region168: #{tpu_custom_call.1} parent=5 // pred_fallthru
        _
    $region6: #{tpu_custom_call.1} parent=1 // loop_footer
      %s37 = sadd.s32 1, %s33
    $region7: #{tpu_custom_call.1} parent=1 // loop_footer_branch
      %32 = sbr.rel target = $region3
    $region8: #{tpu_custom_call.1} parent=1 // loop_exit
      _
    %9800 = vsyncpa [#allocation3], 1
    %s9801 = scalar_lea.sflag [#allocation3], 1
    %9802 = vsyncpa %s9801, 1
    %9803 = vsyncpa [#allocation6], 1
    %9804 = vsyncpa [#allocation4], 1
    %s9805 = scalar_lea.sflag [#allocation4], 1
    %9806 = vsyncpa %s9805, 1

</llo_original>
